<compile_context>
chip_gen: v7x
topology: tpu7x:2x2x1
jax: 0.10.0
libtpu: 0.0.40
codegen_flags: <defaults>
</compile_context>

<pallas_src>
import numpy as np
import jax
import jax.numpy as jnp
from jax import lax
from jax.experimental import pallas as pl
from jax.experimental.pallas import tpu as pltpu

MXU_DTYPE = jnp.bfloat16   # MXU operand dtype; accumulation stays f32
LANES = 128


def _round_up(x, m):
    return (x + m - 1) // m * m


def _pad_axis(a, axis, target):
    pad = target - a.shape[axis]
    if pad == 0:
        return a
    widths = [(0, 0)] * a.ndim
    widths[axis] = (0, pad)
    return jnp.pad(a, widths)


def _pad_last(a, target):
    return _pad_axis(a, a.ndim - 1, target)


def make_kernel(H, Wm, Cm, Cbp, stride, Ho, Wo, R):
    """Fused residual-block kernel for one image.

    stride == 1: kernel input is (H*W, Cp)   with Cm = Cp, Wm = W.
    stride  > 1: `stride` adjacent columns are packed onto the lane axis by
                 the wrapper, so the input is (H*(W/stride), stride*Cp).
    """
    s = stride
    n_strips = -(-Ho // R)

    def kernel(*refs):
        if s > 1:
            (x_ref, w1_ref, b1_ref, w2_ref, b2_ref, w3_ref, b3_ref,
             wres_ref, bres_ref, o_ref, pad_ref) = refs
        else:
            (x_ref, w1_ref, b1_ref, w2_ref, b2_ref, w3_ref, b3_ref,
             o_ref, pad_ref) = refs

        Hp, Wp, _ = pad_ref.shape          # (H+2, Wm+4) or (H+2, Wo+2)
        pdt = pad_ref.dtype                # bf16

        # ---------------- conv1 (1x1) + ReLU: one matmul over all pixels ----
        x2 = x_ref[0]                                           # (H*Wm, Cm) bf16
        v1 = jnp.dot(x2, w1_ref[...],
                     preferred_element_type=jnp.float32) + b1_ref[...]
        v1 = jnp.maximum(v1, 0.0)                               # (H*Wm, Cm) f32

        # ------- zero-padded conv1 output in bf16 VMEM scratch ---------------
        # Interior at (row 1, col 2) -> all stores are pack-aligned for bf16.
        # Only the thin halo is zeroed; the interior is overwritten each step.
        pad_ref[pl.ds(1, H), pl.ds(2, Wm), :] = (
            v1.reshape(H, Wm, Cm).astype(pdt))
        zrow = jnp.zeros((1, Wp, Cm), pdt)
        pad_ref[pl.ds(0, 1), :, :] = zrow                       # input row -1
        pad_ref[pl.ds(Hp - 1, 1), :, :] = zrow                  # input row  H
        zcol = jnp.zeros((Hp, 2, Cm), pdt)
        pad_ref[:, pl.ds(0, 2), :] = zcol                       # input col -1
        if s == 1:
            pad_ref[:, pl.ds(Wp - 2, 2), :] = zcol              # input col  W

        # Small operands hoisted once (few vregs); the large per-tap conv2
        # weights are streamed from VMEM inside the loop (bounded live ranges).
        b2 = b2_ref[...]                 # (1, Cbp) f32
        w3 = w3_ref[...]                 # (Cbp, Cp) bf16
        b3 = b3_ref[...]                 # (1, Cp)  f32
        if s > 1:
            bres = bres_ref[...]         # (1, Cp)  f32

        # -------- conv2 (3x3) + conv3 (1x1) + residual, per row strip --------
        for t in range(n_strips):
            ho0 = t * R
            rows = min(R, Ho - ho0)
            m = rows * Wo

            # conv2 as accumulating per-tap MXU dots (no im2col concat).
            acc = jnp.zeros((m, Cbp), jnp.float32)
            if s == 1:
                for ky in range(3):
                    for kx in range(3):
                        tap = pad_ref[pl.ds(ho0 + ky, rows),
                                      pl.ds(kx + 1, Wo), :]      # (rows,Wo,Cm)
                        acc = acc + jnp.dot(
                            tap.reshape(m, Cm), w2_ref[3 * ky + kx],
                            preferred_element_type=jnp.float32)
            else:
                for ky in range(3):
                    for j in range(2):          # j=0: left tap, j=1: centre+right
                        blk = pad_ref[pl.ds(s * ho0 + ky, s * rows),
                                      pl.ds(j + 1, Wo), :]       # (s*rows,Wo,Cm)
                        tap = blk.reshape(rows, s, Wo, Cm)[:, 0]  # row subsample
                        acc = acc + jnp.dot(
                            tap.reshape(m, Cm), w2_ref[2 * ky + j],
                            preferred_element_type=jnp.float32)
            v2 = jnp.maximum(acc + b2, 0.0)                       # (m, Cbp) f32

            # conv3 (1x1) + ReLU
            v3 = jnp.dot(v2.astype(MXU_DTYPE), w3,
                         preferred_element_type=jnp.float32) + b3
            v3 = jnp.maximum(v3, 0.0)                             # (m, Cp) f32

            # residual, re-sliced from the input ref per strip
            if s == 1:
                res = x_ref[0, pl.ds(ho0 * Wo, m), :].astype(jnp.float32)
            else:
                xr = x_ref[0, pl.ds(s * ho0 * Wm, s * rows * Wm), :]
                xr = xr.reshape(rows, s, Wm, Cm)[:, 0].reshape(m, Cm)
                res = jnp.dot(xr, wres_ref[...],
                              preferred_element_type=jnp.float32) + bres

            # lane-dense slab store (last dim is a multiple of 128)
            o_ref[0, pl.ds(ho0 * Wo, m), :] = v3 + res

    return kernel


def residual_block_pallas(x_nchw, p, stride):
    """NCHW in / NCHW out (matching the PyTorch module)."""
    # TODO(synk): if several residual blocks are chained, keep tensors in the
    # lane-dense (pixels, channels) layout between blocks instead of
    # transposing around every pallas_call.
    s = int(stride)
    x = jnp.transpose(x_nchw, (0, 2, 3, 1))                      # NHWC
    N, H, W, C = x.shape
    Cb = p["w2"].shape[-1]
    if s > 1:
        # TODO(synk): pad H/W to a multiple of `stride` to lift this restriction.
        assert H % s == 0 and W % s == 0, "stride must divide H and W"
    Ho = (H - 1) // s + 1
    Wo = (W - 1) // s + 1
    f32 = jnp.float32

    # Pad channel dims to the 128-lane quantum: lane-dense operands everywhere,
    # zero extra MXU cycles (MXU tiles are >= 128 wide anyway).
    Cp = _round_up(C, LANES)
    Cbp = _round_up(Cb, LANES)

    w1p = _pad_last(_pad_axis(p["w1"], 0, Cp), Cp)               # (Cp, Cp)
    b1p = _pad_last(p["b1"], Cp)                                 # (1, Cp)
    w2p = _pad_last(_pad_axis(p["w2"], 2, Cp), Cbp)              # (3,3,Cp,Cbp)
    b2p = _pad_last(p["b2"], Cbp)                                # (1, Cbp)
    w3p = _pad_last(_pad_axis(p["w3"], 0, Cbp), Cp)              # (Cbp, Cp)
    b3p = _pad_last(p["b3"], Cp)                                 # (1, Cp)

    xpad = _pad_last(x, Cp).astype(MXU_DTYPE)                    # (N,H,W,Cp) bf16

    if s == 1:
        Wm, Cm = W, Cp
        x_k = xpad.reshape(N, H * W, Cp)                         # lane-dense slab
        w1k, b1k = w1p, b1p
        w2k = w2p.reshape(9, Cp, Cbp)                            # one weight / tap
        pad_shape = (H + 2, W + 4, Cp)                           # 2-wide col halo
        wresp = bresp = None
    else:
        # Pack `s` adjacent input columns onto the lane axis (free reshape):
        # column subsampling becomes zero-padded tap weights, no strided loads.
        Wm, Cm = W // s, s * Cp
        x_k = xpad.reshape(N, H * Wm, Cm)
        # conv1 acts per packed column -> block-diagonal weight.
        # TODO(synk): on v5e with large C, run conv1 unpacked to avoid the
        # s-fold block-diagonal MXU waste.
        w1k = jnp.kron(jnp.eye(s, dtype=f32), w1p)               # (sCp, sCp)
        b1k = jnp.tile(b1p, (1, s))                              # (1, sCp)
        # conv2: output col wo reads packed group wo-1 (element s-1) and group
        # wo (elements 0,1); fold element selection into zero-padded weights.
        taps = []
        for ky in range(3):
            left = jnp.concatenate(
                [jnp.zeros(((s - 1) * Cp, Cbp), f32), w2p[ky, 0]], axis=0)
            right_parts = [w2p[ky, 1], w2p[ky, 2]]
            if s > 2:
                right_parts.append(jnp.zeros(((s - 2) * Cp, Cbp), f32))
            right = jnp.concatenate(right_parts, axis=0)
            taps += [left, right]
        w2k = jnp.stack(taps, axis=0)                            # (6, sCp, Cbp)
        # stride-s residual 1x1 conv reads element 0 of each packed group.
        wresp = jnp.concatenate(
            [_pad_last(_pad_axis(p["wres"], 0, Cp), Cp),
             jnp.zeros(((s - 1) * Cp, Cp), f32)], axis=0)        # (sCp, Cp)
        bresp = _pad_last(p["bres"], Cp)                         # (1, Cp)
        pad_shape = (H + 2, Wo + 2, Cm)

    # Row-strip size: each MXU dot gets M = rows*Wo ~ 512; prefer a strip that
    # divides Ho (no ragged, sub-8-sublane last strip) when one is close.
    R0 = max(1, min(Ho, max(1, 512 // max(1, Wo))))
    R = R0
    for r in range(R0, 0, -1):
        if Ho % r == 0:
            if 2 * r >= R0:
                R = r
            break

    kernel = make_kernel(H, Wm, Cm, Cbp, s, Ho, Wo, R)

    def rep(a):
        return pl.BlockSpec(a.shape, lambda n, _r=a.ndim: (0,) * _r)

    args = [x_k,
            w1k.astype(MXU_DTYPE), b1k.astype(f32),
            w2k.astype(MXU_DTYPE), b2p.astype(f32),
            w3p.astype(MXU_DTYPE), b3p.astype(f32)]
    in_specs = ([pl.BlockSpec((1, H * Wm, Cm), lambda n: (n, 0, 0))]
                + [rep(a) for a in args[1:]])
    if s > 1:
        extra = [wresp.astype(MXU_DTYPE), bresp.astype(f32)]
        args += extra
        in_specs += [rep(a) for a in extra]

    out = pl.pallas_call(
        kernel,
        out_shape=jax.ShapeDtypeStruct((N, Ho * Wo, Cp), f32),
        grid=(N,),
        in_specs=in_specs,
        out_specs=pl.BlockSpec((1, Ho * Wo, Cp), lambda n: (n, 0, 0)),
        scratch_shapes=[pltpu.VMEM(pad_shape, MXU_DTYPE)],
        # TODO(synk): for large images, tile H with a second ("parallel") grid
        # axis + 1-row halo so VMEM use is O(strip) instead of O(image) and
        # both v7x TensorCores stay busy even for N=1.
        compiler_params=pltpu.CompilerParams(
            dimension_semantics=("parallel",),      # shard batch across cores
            vmem_limit_bytes=48 * 1024 * 1024),     # leave v7x headroom (<64MiB)
    )(*args)

    out = out.reshape(N, Ho, Wo, Cp)[..., :C]
    return jnp.transpose(out, (0, 3, 1, 2))                      # back to NCHW


def init_params(key, depth, bottleneck, stride):
    """Deterministic synthetic params (weights ~ N(0, 0.01), as in __init__)."""
    ks = jax.random.split(key, 8)
    std = 0.01

    def bias(k, fan_in, n):
        bound = 1.0 / np.sqrt(fan_in)
        return jax.random.uniform(k, (1, n), jnp.float32, -bound, bound)

    p = {
        "w1": std * jax.random.normal(ks[0], (depth, depth), jnp.float32),
        "b1": bias(ks[1], depth, depth),
        "w2": std * jax.random.normal(ks[2], (3, 3, depth, bottleneck), jnp.float32),
        "b2": bias(ks[3], depth * 9, bottleneck),
        "w3": std * jax.random.normal(ks[4], (bottleneck, depth), jnp.float32),
        "b3": bias(ks[5], bottleneck, depth),
    }
    if stride > 1:
        p["wres"] = std * jax.random.normal(ks[6], (depth, depth), jnp.float32)
        p["bres"] = bias(ks[7], depth, depth)
    return p


def ref_forward_nhwc(x, p, stride):
    """Pure-JAX reference (NHWC, f32) for correctness check."""
    dn = ("NHWC", "HWIO", "NHWC")

    def conv(v, w, b, strides, padding):
        y = lax.conv_general_dilated(v, w, window_strides=strides,
                                     padding=padding, dimension_numbers=dn)
        return y + b.reshape(1, 1, 1, -1)

    v = jax.nn.relu(conv(x, p["w1"][None, None], p["b1"], (1, 1), "VALID"))
    v = jax.nn.relu(conv(v, p["w2"], p["b2"], (stride, stride), [(1, 1), (1, 1)]))
    v = jax.nn.relu(conv(v, p["w3"][None, None], p["b3"], (1, 1), "VALID"))
    if stride > 1:
        res = conv(x, p["wres"][None, None], p["bres"], (stride, stride), "VALID")
    else:
        res = x
    return v + res


if __name__ == "__main__":
    key = jax.random.PRNGKey(0)
    kx, kp1, kp2 = jax.random.split(key, 3)

    N, C, H, W = 2, 4, 16, 16          # depth = 4
    Cb = 8                             # bottleneck_depth = 8
    x = jax.random.normal(kx, (N, C, H, W), jnp.float32)   # NCHW, like PyTorch

    for stride, kp in ((1, kp1), (2, kp2)):
        params = init_params(kp, C, Cb, stride)
        out = jax.block_until_ready(residual_block_pallas(x, params, stride))

        ref = ref_forward_nhwc(jnp.transpose(x, (0, 2, 3, 1)), params, stride)
        ref = jnp.transpose(ref, (0, 3, 1, 2))

        assert out.shape == ref.shape, (out.shape, ref.shape)
        # bf16 MXU operands and bf16 input/residual (f32 accumulation)
        # -> slightly loosened tolerance.
        np.testing.assert_allclose(np.asarray(out), np.asarray(ref),
                                   rtol=2e-2, atol=5e-3)

    print("KERNEL_OK")
</pallas_src>

<mosaic_0001>
module attributes {stable_mosaic.version = 11 : i64} {
  func.func @kernel(%arg0: i32, %arg1: memref<1x256x128xbf16, #tpu.memory_space<vmem>>, %arg2: memref<128x128xbf16, #tpu.memory_space<vmem>>, %arg3: memref<1x128xf32, #tpu.memory_space<vmem>>, %arg4: memref<9x128x128xbf16, #tpu.memory_space<vmem>>, %arg5: memref<1x128xf32, #tpu.memory_space<vmem>>, %arg6: memref<128x128xbf16, #tpu.memory_space<vmem>>, %arg7: memref<1x128xf32, #tpu.memory_space<vmem>>, %arg8: memref<1x256x128xf32, #tpu.memory_space<vmem>>, %arg9: memref<18x20x128xbf16, #tpu.memory_space<vmem>>) attributes {dimension_semantics = [#tpu.dimension_semantics<parallel>], iteration_bounds = array<i64: 2>, scalar_prefetch = 0 : i64, scratch_operands = 1 : i64, tpu.core_type = #tpu.core_type<tc>, window_params = [{transform_indices = @transform_0, window_bounds = array<i64: 1, 256, 128>}, {pipeline_mode = #tpu.pipeline_mode<synchronous>, transform_indices = @transform_1, window_bounds = array<i64: 128, 128>}, {pipeline_mode = #tpu.pipeline_mode<synchronous>, transform_indices = @transform_2, window_bounds = array<i64: 1, 128>}, {pipeline_mode = #tpu.pipeline_mode<synchronous>, transform_indices = @transform_3, window_bounds = array<i64: 9, 128, 128>}, {pipeline_mode = #tpu.pipeline_mode<synchronous>, transform_indices = @transform_4, window_bounds = array<i64: 1, 128>}, {pipeline_mode = #tpu.pipeline_mode<synchronous>, transform_indices = @transform_5, window_bounds = array<i64: 128, 128>}, {pipeline_mode = #tpu.pipeline_mode<synchronous>, transform_indices = @transform_6, window_bounds = array<i64: 1, 128>}, {transform_indices = @transform_7, window_bounds = array<i64: 1, 256, 128>}]} {
    %c0 = arith.constant 0 : index
    %c0_0 = arith.constant 0 : index
    %c0_1 = arith.constant 0 : index
    %0 = vector.load %arg1[%c0, %c0_0, %c0_1] : memref<1x256x128xbf16, #tpu.memory_space<vmem>>, vector<1x256x128xbf16>
    %1 = vector.shape_cast %0 : vector<1x256x128xbf16> to vector<256x128xbf16>
    %c0_2 = arith.constant 0 : index
    %c0_3 = arith.constant 0 : index
    %2 = vector.load %arg2[%c0_2, %c0_3] : memref<128x128xbf16, #tpu.memory_space<vmem>>, vector<128x128xbf16>
    %cst = arith.constant dense<0.000000e+00> : vector<256x128xf32>
    %3 = tpu.matmul %1, %2, %cst {dimension_numbers = #tpu.dot_dimension_numbers<[1], [0], [0], [1], [0, 0, 1, 1], [], []>} : vector<256x128xbf16>, vector<128x128xbf16>, vector<256x128xf32> -> vector<256x128xf32>
    %c0_4 = arith.constant 0 : index
    %c0_5 = arith.constant 0 : index
    %4 = vector.load %arg3[%c0_4, %c0_5] : memref<1x128xf32, #tpu.memory_space<vmem>>, vector<1x128xf32>
    %5 = vector.broadcast %4 : vector<1x128xf32> to vector<256x128xf32>
    %6 = arith.addf %3, %5 : vector<256x128xf32>
    %cst_6 = arith.constant 0.000000e+00 : f32
    %7 = vector.broadcast %cst_6 : f32 to vector<256x128xf32>
    %8 = arith.maximumf %6, %7 : vector<256x128xf32>
    %9 = vector.shape_cast %8 : vector<256x128xf32> to vector<16x16x128xf32>
    %10 = arith.truncf %9 : vector<16x16x128xf32> to vector<16x16x128xbf16>
    %c1 = arith.constant 1 : index
    %c2 = arith.constant 2 : index
    %c0_7 = arith.constant 0 : index
    %11 = vector.load %arg9[%c1, %c2, %c0_7] : memref<18x20x128xbf16, #tpu.memory_space<vmem>>, vector<16x16x128xbf16>
    tpu.vector_store %arg9[%c1, %c2, %c0_7], %10 {strides = array<i32>} : memref<18x20x128xbf16, #tpu.memory_space<vmem>>, vector<16x16x128xbf16>,
    %cst_8 = arith.constant 0.000000e+00 : bf16
    %12 = vector.broadcast %cst_8 : bf16 to vector<1x20x128xbf16>
    %c0_9 = arith.constant 0 : index
    %c0_10 = arith.constant 0 : index
    %c0_11 = arith.constant 0 : index
    %13 = vector.load %arg9[%c0_9, %c0_10, %c0_11] : memref<18x20x128xbf16, #tpu.memory_space<vmem>>, vector<1x20x128xbf16>
    tpu.vector_store %arg9[%c0_9, %c0_10, %c0_11], %12 {strides = array<i32>} : memref<18x20x128xbf16, #tpu.memory_space<vmem>>, vector<1x20x128xbf16>,
    %c17 = arith.constant 17 : index
    %c0_12 = arith.constant 0 : index
    %c0_13 = arith.constant 0 : index
    %14 = vector.load %arg9[%c17, %c0_12, %c0_13] : memref<18x20x128xbf16, #tpu.memory_space<vmem>>, vector<1x20x128xbf16>
    tpu.vector_store %arg9[%c17, %c0_12, %c0_13], %12 {strides = array<i32>} : memref<18x20x128xbf16, #tpu.memory_space<vmem>>, vector<1x20x128xbf16>,
    %cst_14 = arith.constant 0.000000e+00 : bf16
    %15 = vector.broadcast %cst_14 : bf16 to vector<18x2x128xbf16>
    %c0_15 = arith.constant 0 : index
    %c0_16 = arith.constant 0 : index
    %c0_17 = arith.constant 0 : index
    %16 = vector.load %arg9[%c0_15, %c0_16, %c0_17] : memref<18x20x128xbf16, #tpu.memory_space<vmem>>, vector<18x2x128xbf16>
    tpu.vector_store %arg9[%c0_15, %c0_16, %c0_17], %15 {strides = array<i32>} : memref<18x20x128xbf16, #tpu.memory_space<vmem>>, vector<18x2x128xbf16>,
    %c0_18 = arith.constant 0 : index
    %c18 = arith.constant 18 : index
    %c0_19 = arith.constant 0 : index
    %17 = vector.load %arg9[%c0_18, %c18, %c0_19] : memref<18x20x128xbf16, #tpu.memory_space<vmem>>, vector<18x2x128xbf16>
    tpu.vector_store %arg9[%c0_18, %c18, %c0_19], %15 {strides = array<i32>} : memref<18x20x128xbf16, #tpu.memory_space<vmem>>, vector<18x2x128xbf16>,
    %c0_20 = arith.constant 0 : index
    %c0_21 = arith.constant 0 : index
    %18 = vector.load %arg5[%c0_20, %c0_21] : memref<1x128xf32, #tpu.memory_space<vmem>>, vector<1x128xf32>
    %c0_22 = arith.constant 0 : index
    %c0_23 = arith.constant 0 : index
    %19 = vector.load %arg6[%c0_22, %c0_23] : memref<128x128xbf16, #tpu.memory_space<vmem>>, vector<128x128xbf16>
    %c0_24 = arith.constant 0 : index
    %c0_25 = arith.constant 0 : index
    %20 = vector.load %arg7[%c0_24, %c0_25] : memref<1x128xf32, #tpu.memory_space<vmem>>, vector<1x128xf32>
    %cst_26 = arith.constant 0.000000e+00 : f32
    %21 = vector.broadcast %cst_26 : f32 to vector<256x128xf32>
    %c0_27 = arith.constant 0 : index
    %c1_28 = arith.constant 1 : index
    %c0_29 = arith.constant 0 : index
    %22 = vector.load %arg9[%c0_27, %c1_28, %c0_29] : memref<18x20x128xbf16, #tpu.memory_space<vmem>>, vector<16x16x128xbf16>
    %23 = vector.shape_cast %22 : vector<16x16x128xbf16> to vector<256x128xbf16>
    %c0_30 = arith.constant 0 : index
    %c0_31 = arith.constant 0 : index
    %c0_32 = arith.constant 0 : index
    %24 = vector.load %arg4[%c0_30, %c0_31, %c0_32] : memref<9x128x128xbf16, #tpu.memory_space<vmem>>, vector<1x128x128xbf16>
    %25 = vector.shape_cast %24 : vector<1x128x128xbf16> to vector<128x128xbf16>
    %cst_33 = arith.constant dense<0.000000e+00> : vector<256x128xf32>
    %26 = tpu.matmul %23, %25, %cst_33 {dimension_numbers = #tpu.dot_dimension_numbers<[1], [0], [0], [1], [0, 0, 1, 1], [], []>} : vector<256x128xbf16>, vector<128x128xbf16>, vector<256x128xf32> -> vector<256x128xf32>
    %27 = arith.addf %21, %26 : vector<256x128xf32>
    %c0_34 = arith.constant 0 : index
    %c2_35 = arith.constant 2 : index
    %c0_36 = arith.constant 0 : index
    %28 = vector.load %arg9[%c0_34, %c2_35, %c0_36] : memref<18x20x128xbf16, #tpu.memory_space<vmem>>, vector<16x16x128xbf16>
    %29 = vector.shape_cast %28 : vector<16x16x128xbf16> to vector<256x128xbf16>
    %c1_37 = arith.constant 1 : index
    %c0_38 = arith.constant 0 : index
    %c0_39 = arith.constant 0 : index
    %30 = vector.load %arg4[%c1_37, %c0_38, %c0_39] : memref<9x128x128xbf16, #tpu.memory_space<vmem>>, vector<1x128x128xbf16>
    %31 = vector.shape_cast %30 : vector<1x128x128xbf16> to vector<128x128xbf16>
    %cst_40 = arith.constant dense<0.000000e+00> : vector<256x128xf32>
    %32 = tpu.matmul %29, %31, %cst_40 {dimension_numbers = #tpu.dot_dimension_numbers<[1], [0], [0], [1], [0, 0, 1, 1], [], []>} : vector<256x128xbf16>, vector<128x128xbf16>, vector<256x128xf32> -> vector<256x128xf32>
    %33 = arith.addf %27, %32 : vector<256x128xf32>
    %c0_41 = arith.constant 0 : index
    %c3 = arith.constant 3 : index
    %c0_42 = arith.constant 0 : index
    %34 = vector.load %arg9[%c0_41, %c3, %c0_42] : memref<18x20x128xbf16, #tpu.memory_space<vmem>>, vector<16x16x128xbf16>
    %35 = vector.shape_cast %34 : vector<16x16x128xbf16> to vector<256x128xbf16>
    %c2_43 = arith.constant 2 : index
    %c0_44 = arith.constant 0 : index
    %c0_45 = arith.constant 0 : index
    %36 = vector.load %arg4[%c2_43, %c0_44, %c0_45] : memref<9x128x128xbf16, #tpu.memory_space<vmem>>, vector<1x128x128xbf16>
    %37 = vector.shape_cast %36 : vector<1x128x128xbf16> to vector<128x128xbf16>
    %cst_46 = arith.constant dense<0.000000e+00> : vector<256x128xf32>
    %38 = tpu.matmul %35, %37, %cst_46 {dimension_numbers = #tpu.dot_dimension_numbers<[1], [0], [0], [1], [0, 0, 1, 1], [], []>} : vector<256x128xbf16>, vector<128x128xbf16>, vector<256x128xf32> -> vector<256x128xf32>
    %39 = arith.addf %33, %38 : vector<256x128xf32>
    %c1_47 = arith.constant 1 : index
    %c1_48 = arith.constant 1 : index
    %c0_49 = arith.constant 0 : index
    %40 = vector.load %arg9[%c1_47, %c1_48, %c0_49] : memref<18x20x128xbf16, #tpu.memory_space<vmem>>, vector<16x16x128xbf16>
    %41 = vector.shape_cast %40 : vector<16x16x128xbf16> to vector<256x128xbf16>
    %c3_50 = arith.constant 3 : index
    %c0_51 = arith.constant 0 : index
    %c0_52 = arith.constant 0 : index
    %42 = vector.load %arg4[%c3_50, %c0_51, %c0_52] : memref<9x128x128xbf16, #tpu.memory_space<vmem>>, vector<1x128x128xbf16>
    %43 = vector.shape_cast %42 : vector<1x128x128xbf16> to vector<128x128xbf16>
    %cst_53 = arith.constant dense<0.000000e+00> : vector<256x128xf32>
    %44 = tpu.matmul %41, %43, %cst_53 {dimension_numbers = #tpu.dot_dimension_numbers<[1], [0], [0], [1], [0, 0, 1, 1], [], []>} : vector<256x128xbf16>, vector<128x128xbf16>, vector<256x128xf32> -> vector<256x128xf32>
    %45 = arith.addf %39, %44 : vector<256x128xf32>
    %c1_54 = arith.constant 1 : index
    %c2_55 = arith.constant 2 : index
    %c0_56 = arith.constant 0 : index
    %46 = vector.load %arg9[%c1_54, %c2_55, %c0_56] : memref<18x20x128xbf16, #tpu.memory_space<vmem>>, vector<16x16x128xbf16>
    %47 = vector.shape_cast %46 : vector<16x16x128xbf16> to vector<256x128xbf16>
    %c4 = arith.constant 4 : index
    %c0_57 = arith.constant 0 : index
    %c0_58 = arith.constant 0 : index
    %48 = vector.load %arg4[%c4, %c0_57, %c0_58] : memref<9x128x128xbf16, #tpu.memory_space<vmem>>, vector<1x128x128xbf16>
    %49 = vector.shape_cast %48 : vector<1x128x128xbf16> to vector<128x128xbf16>
    %cst_59 = arith.constant dense<0.000000e+00> : vector<256x128xf32>
    %50 = tpu.matmul %47, %49, %cst_59 {dimension_numbers = #tpu.dot_dimension_numbers<[1], [0], [0], [1], [0, 0, 1, 1], [], []>} : vector<256x128xbf16>, vector<128x128xbf16>, vector<256x128xf32> -> vector<256x128xf32>
    %51 = arith.addf %45, %50 : vector<256x128xf32>
    %c1_60 = arith.constant 1 : index
    %c3_61 = arith.constant 3 : index
    %c0_62 = arith.constant 0 : index
    %52 = vector.load %arg9[%c1_60, %c3_61, %c0_62] : memref<18x20x128xbf16, #tpu.memory_space<vmem>>, vector<16x16x128xbf16>
    %53 = vector.shape_cast %52 : vector<16x16x128xbf16> to vector<256x128xbf16>
    %c5 = arith.constant 5 : index
    %c0_63 = arith.constant 0 : index
    %c0_64 = arith.constant 0 : index
    %54 = vector.load %arg4[%c5, %c0_63, %c0_64] : memref<9x128x128xbf16, #tpu.memory_space<vmem>>, vector<1x128x128xbf16>
    %55 = vector.shape_cast %54 : vector<1x128x128xbf16> to vector<128x128xbf16>
    %cst_65 = arith.constant dense<0.000000e+00> : vector<256x128xf32>
    %56 = tpu.matmul %53, %55, %cst_65 {dimension_numbers = #tpu.dot_dimension_numbers<[1], [0], [0], [1], [0, 0, 1, 1], [], []>} : vector<256x128xbf16>, vector<128x128xbf16>, vector<256x128xf32> -> vector<256x128xf32>
    %57 = arith.addf %51, %56 : vector<256x128xf32>
    %c2_66 = arith.constant 2 : index
    %c1_67 = arith.constant 1 : index
    %c0_68 = arith.constant 0 : index
    %58 = vector.load %arg9[%c2_66, %c1_67, %c0_68] : memref<18x20x128xbf16, #tpu.memory_space<vmem>>, vector<16x16x128xbf16>
    %59 = vector.shape_cast %58 : vector<16x16x128xbf16> to vector<256x128xbf16>
    %c6 = arith.constant 6 : index
    %c0_69 = arith.constant 0 : index
    %c0_70 = arith.constant 0 : index
    %60 = vector.load %arg4[%c6, %c0_69, %c0_70] : memref<9x128x128xbf16, #tpu.memory_space<vmem>>, vector<1x128x128xbf16>
    %61 = vector.shape_cast %60 : vector<1x128x128xbf16> to vector<128x128xbf16>
    %cst_71 = arith.constant dense<0.000000e+00> : vector<256x128xf32>
    %62 = tpu.matmul %59, %61, %cst_71 {dimension_numbers = #tpu.dot_dimension_numbers<[1], [0], [0], [1], [0, 0, 1, 1], [], []>} : vector<256x128xbf16>, vector<128x128xbf16>, vector<256x128xf32> -> vector<256x128xf32>
    %63 = arith.addf %57, %62 : vector<256x128xf32>
    %c2_72 = arith.constant 2 : index
    %c2_73 = arith.constant 2 : index
    %c0_74 = arith.constant 0 : index
    %64 = vector.load %arg9[%c2_72, %c2_73, %c0_74] : memref<18x20x128xbf16, #tpu.memory_space<vmem>>, vector<16x16x128xbf16>
    %65 = vector.shape_cast %64 : vector<16x16x128xbf16> to vector<256x128xbf16>
    %c7 = arith.constant 7 : index
    %c0_75 = arith.constant 0 : index
    %c0_76 = arith.constant 0 : index
    %66 = vector.load %arg4[%c7, %c0_75, %c0_76] : memref<9x128x128xbf16, #tpu.memory_space<vmem>>, vector<1x128x128xbf16>
    %67 = vector.shape_cast %66 : vector<1x128x128xbf16> to vector<128x128xbf16>
    %cst_77 = arith.constant dense<0.000000e+00> : vector<256x128xf32>
    %68 = tpu.matmul %65, %67, %cst_77 {dimension_numbers = #tpu.dot_dimension_numbers<[1], [0], [0], [1], [0, 0, 1, 1], [], []>} : vector<256x128xbf16>, vector<128x128xbf16>, vector<256x128xf32> -> vector<256x128xf32>
    %69 = arith.addf %63, %68 : vector<256x128xf32>
    %c2_78 = arith.constant 2 : index
    %c3_79 = arith.constant 3 : index
    %c0_80 = arith.constant 0 : index
    %70 = vector.load %arg9[%c2_78, %c3_79, %c0_80] : memref<18x20x128xbf16, #tpu.memory_space<vmem>>, vector<16x16x128xbf16>
    %71 = vector.shape_cast %70 : vector<16x16x128xbf16> to vector<256x128xbf16>
    %c8 = arith.constant 8 : index
    %c0_81 = arith.constant 0 : index
    %c0_82 = arith.constant 0 : index
    %72 = vector.load %arg4[%c8, %c0_81, %c0_82] : memref<9x128x128xbf16, #tpu.memory_space<vmem>>, vector<1x128x128xbf16>
    %73 = vector.shape_cast %72 : vector<1x128x128xbf16> to vector<128x128xbf16>
    %cst_83 = arith.constant dense<0.000000e+00> : vector<256x128xf32>
    %74 = tpu.matmul %71, %73, %cst_83 {dimension_numbers = #tpu.dot_dimension_numbers<[1], [0], [0], [1], [0, 0, 1, 1], [], []>} : vector<256x128xbf16>, vector<128x128xbf16>, vector<256x128xf32> -> vector<256x128xf32>
    %75 = arith.addf %69, %74 : vector<256x128xf32>
    %76 = vector.broadcast %18 : vector<1x128xf32> to vector<256x128xf32>
    %77 = arith.addf %75, %76 : vector<256x128xf32>
    %cst_84 = arith.constant 0.000000e+00 : f32
    %78 = vector.broadcast %cst_84 : f32 to vector<256x128xf32>
    %79 = arith.maximumf %77, %78 : vector<256x128xf32>
    %80 = arith.truncf %79 : vector<256x128xf32> to vector<256x128xbf16>
    %cst_85 = arith.constant dense<0.000000e+00> : vector<256x128xf32>
    %81 = tpu.matmul %80, %19, %cst_85 {dimension_numbers = #tpu.dot_dimension_numbers<[1], [0], [0], [1], [0, 0, 1, 1], [], []>} : vector<256x128xbf16>, vector<128x128xbf16>, vector<256x128xf32> -> vector<256x128xf32>
    %82 = vector.broadcast %20 : vector<1x128xf32> to vector<256x128xf32>
    %83 = arith.addf %81, %82 : vector<256x128xf32>
    %cst_86 = arith.constant 0.000000e+00 : f32
    %84 = vector.broadcast %cst_86 : f32 to vector<256x128xf32>
    %85 = arith.maximumf %83, %84 : vector<256x128xf32>
    %c0_87 = arith.constant 0 : index
    %c0_88 = arith.constant 0 : index
    %c0_89 = arith.constant 0 : index
    %86 = vector.load %arg1[%c0_87, %c0_88, %c0_89] : memref<1x256x128xbf16, #tpu.memory_space<vmem>>, vector<1x256x128xbf16>
    %87 = vector.shape_cast %86 : vector<1x256x128xbf16> to vector<256x128xbf16>
    %88 = arith.extf %87 : vector<256x128xbf16> to vector<256x128xf32>
    %89 = arith.addf %85, %88 : vector<256x128xf32>
    %c0_90 = arith.constant 0 : index
    %c0_91 = arith.constant 0 : index
    %c0_92 = arith.constant 0 : index
    %90 = vector.load %arg8[%c0_90, %c0_91, %c0_92] : memref<1x256x128xf32, #tpu.memory_space<vmem>>, vector<1x256x128xf32>
    %91 = vector.shape_cast %90 : vector<1x256x128xf32> to vector<256x128xf32>
    %92 = vector.shape_cast %89 : vector<256x128xf32> to vector<1x256x128xf32>
    tpu.vector_store %arg8[%c0_90, %c0_91, %c0_92], %92 {strides = array<i32>} : memref<1x256x128xf32, #tpu.memory_space<vmem>>, vector<1x256x128xf32>,
    return
  }
  func.func @transform_0(%arg0: i32) -> (i32, i32, i32) {
    %c0_i32 = arith.constant 0 : i32
    %c0_i32_0 = arith.constant 0 : i32
    %c0_i32_1 = arith.constant 0 : i32
    return %arg0, %c0_i32, %c0_i32_0 : i32, i32, i32
  }
  func.func @transform_1(%arg0: i32) -> (i32, i32) {
    %c0_i32 = arith.constant 0 : i32
    %c0_i32_0 = arith.constant 0 : i32
    %c0_i32_1 = arith.constant 0 : i32
    return %c0_i32, %c0_i32_0 : i32, i32
  }
  func.func @transform_2(%arg0: i32) -> (i32, i32) {
    %c0_i32 = arith.constant 0 : i32
    %c0_i32_0 = arith.constant 0 : i32
    %c0_i32_1 = arith.constant 0 : i32
    return %c0_i32, %c0_i32_0 : i32, i32
  }
  func.func @transform_3(%arg0: i32) -> (i32, i32, i32) {
    %c0_i32 = arith.constant 0 : i32
    %c0_i32_0 = arith.constant 0 : i32
    %c0_i32_1 = arith.constant 0 : i32
    %c0_i32_2 = arith.constant 0 : i32
    return %c0_i32, %c0_i32_0, %c0_i32_1 : i32, i32, i32
  }
  func.func @transform_4(%arg0: i32) -> (i32, i32) {
    %c0_i32 = arith.constant 0 : i32
    %c0_i32_0 = arith.constant 0 : i32
    %c0_i32_1 = arith.constant 0 : i32
    return %c0_i32, %c0_i32_0 : i32, i32
  }
  func.func @transform_5(%arg0: i32) -> (i32, i32) {
    %c0_i32 = arith.constant 0 : i32
    %c0_i32_0 = arith.constant 0 : i32
    %c0_i32_1 = arith.constant 0 : i32
    return %c0_i32, %c0_i32_0 : i32, i32
  }
  func.func @transform_6(%arg0: i32) -> (i32, i32) {
    %c0_i32 = arith.constant 0 : i32
    %c0_i32_0 = arith.constant 0 : i32
    %c0_i32_1 = arith.constant 0 : i32
    return %c0_i32, %c0_i32_0 : i32, i32
  }
  func.func @transform_7(%arg0: i32) -> (i32, i32, i32) {
    %c0_i32 = arith.constant 0 : i32
    %c0_i32_0 = arith.constant 0 : i32
    %c0_i32_1 = arith.constant 0 : i32
    return %arg0, %c0_i32, %c0_i32_0 : i32, i32, i32
  }
}

</mosaic_0001>

<llo_original>
// kernel: tpu_custom_call.1
$region0: #{tpu_custom_call.1}
  #allocation0 [shape = 'u32[]', space=smem, size = 0x4, offset = 0x4, fixed_abs, tag = 'smem constant byte address 0x4 - core index']
  #allocation1 [shape = 'u32[144,128]{1,0:T(1,128)}', space=vmem, size = 0x12000, scoped, tag = 'internal scratch']
  #allocation2 [shape = 'bf16[18,20,128]{2,1,0:T(8,128)(2,1)}', space=vmem, size = 0x1b000, scoped, tag = 'scratch operand']
  %s0 = inlined_call_operand.hbm [shape: bf16[2,256,128], index: 0, kind: input, shape index: {}]
  %s1 = inlined_call_operand.hbm [shape: bf16[128,128], index: 1, kind: input, shape index: {}]
  %s2 = inlined_call_operand.vmem [shape: f32[1,128], index: 2, kind: input, shape index: {}]
  %s3 = inlined_call_operand.hbm [shape: bf16[9,128,128], index: 3, kind: input, shape index: {}]
  %s4 = inlined_call_operand.vmem [shape: f32[1,128], index: 4, kind: input, shape index: {}]
  %s5 = inlined_call_operand.hbm [shape: bf16[128,128], index: 5, kind: input, shape index: {}]
  %s6 = inlined_call_operand.vmem [shape: f32[1,128], index: 6, kind: input, shape index: {}]
  %s7 = inlined_call_operand.hbm [shape: f32[2,256,128], index: 7, kind: output, shape index: {}]
  %s8 = sld [smem:[#allocation0]]
  $region77: #{tpu_custom_call.1} parent=0
    _
  %s10 = ssub.s32 1, %s8
  %s11 = scalar_select 0, %s10, %s8
  $region1: #{tpu_custom_call.1} parent=0
    #allocation3 [shape = 'u8[131072]{0}', space=vmem, size = 0x20000, scoped, tag = 'input window, operand 0']
    #allocation4 [shape = 's32[2]{0}', space=sflag, size = 0x8, scoped, tag = 'scoped memory for tpu_custom_call.1']
    #allocation5 [shape = 's32[2]{0}', space=sflag, size = 0x8, scoped, tag = 'scoped memory for tpu_custom_call.1']
    #allocation6 [shape = 'u8[32768]{0}', space=vmem, size = 0x8000, scoped, tag = 'input window, operand 1, single buffered']
    #allocation7 [shape = 's32[1]{0}', space=sflag, size = 0x4, scoped, tag = 'scoped memory for tpu_custom_call.1']
    #allocation8 [shape = 'u8[294912]{0}', space=vmem, size = 0x48000, scoped, tag = 'input window, operand 3, single buffered']
    #allocation9 [shape = 'u8[32768]{0}', space=vmem, size = 0x8000, scoped, tag = 'input window, operand 5, single buffered']
    #allocation10 [shape = 's32[1]{0}', space=sflag, size = 0x4, scoped, tag = 'scoped memory for tpu_custom_call.1']
    #allocation11 [shape = 'u8[262144]{0}', space=vmem, size = 0x40000, scoped, tag = 'output window, operand 0']
    %12 = vsyncpa [#allocation4], 0
    %s13 = scalar_lea.sflag [#allocation4], 1
    %14 = vsyncpa %s13, 0
    %15 = vsyncpa [#allocation7], 0
    %16 = vsyncpa [#allocation10], 0
    %17 = vsyncpa [#allocation5], 0
    %s18 = scalar_lea.sflag [#allocation5], 1
    %19 = vsyncpa %s18, 0
    loop: start=0, step=1, limit=4
    $region2: #{tpu_custom_call.1} parent=1 // loop_pre_header
      _
    $region3: #{tpu_custom_call.1} parent=1 // loop_header
      %s21 = sphi 0, %s25
      %p22 = scmp.ge.s32.totalorder %s21, 4
      %s31 = sphi 0, %s33
      %s34 = sphi 0, %s31
      %s35 = sphi 0, %s34
      %s51 = sphi 0, %s35
      %s55 = sphi 0, %s55
      %s57 = sphi 0, %s55
      %s58 = sphi 0, %s57
      %s72 = sphi 0, %s58
      %s76 = sphi 0, %s76
      %s78 = sphi 0, %s76
      %s79 = sphi 0, %s78
      %s93 = sphi 0, %s79
      %s97 = sphi 0, %s97
      %s99 = sphi 0, %s97
      %s100 = sphi 0, %s99
      %s114 = sphi 0, %s100
      %s118 = sphi 0, %s118
      %s120 = sphi 0, %s118
      %s121 = sphi 0, %s120
      %s135 = sphi 0, %s121
      %s139 = sphi 0, %s139
      %s141 = sphi 0, %s139
      %s142 = sphi 0, %s141
      %s156 = sphi 0, %s142
      %s160 = sphi 0, %s160
      %s162 = sphi 0, %s160
      %s163 = sphi 0, %s162
      %s177 = sphi 0, %s163
      %s183 = sphi 0, %s185
      %s186 = sphi 0, %s183
      %s187 = sphi 0, %s186
      %s203 = sphi 0, %s187
    $region4: #{tpu_custom_call.1} parent=1 // loop_header_branch
      %24 = sbr.rel (%p22) target = $region8
    $region5: #{tpu_custom_call.1} parent=1 // loop_body
      %s26 = ssub.s32 %s21, 1
      %s27 = ssub.s32 %s21, 2
      %s28 = sadd.s32 %s21, 1
      %s29 = ssub.s32 %s21, %s28
      %p30 = scmp.eq.s32.totalorder %s29, 0
      %s32 = sadd.s32 %s31, 1
      %s33 = scalar_select %p30, %s31, %s32
      %p36 = pneg %p30
      %p37 = scmp.eq.s32.totalorder %s21, 1
      %p38 = por %p36, %p37
      %p39 = scmp.ne.s32.totalorder %s31, %s34
      %p40 = scmp.eq.s32.totalorder %s21, 0
      %p41 = por %p39, %p40
      %p42 = scmp.ne.s32.totalorder %s31, %s34
      %p43 = scmp.eq.s32.totalorder %s26, 1
      %p44 = por %p42, %p43
      %p45 = scmp.ne.s32.totalorder %s34, %s35
      %p46 = scmp.eq.s32.totalorder %s26, 0
      %p47 = por %p45, %p46
      %p48 = scmp.ne.s32.totalorder %s34, %s35
      %p49 = scmp.eq.s32.totalorder %s27, 1
      %p50 = por %p48, %p49
      %p52 = scmp.ne.s32.totalorder %s35, %s51
      %p53 = scmp.eq.s32.totalorder %s27, 0
      %p54 = por %p52, %p53
      %s56 = sadd.s32 %s55, 1
      %p59 = scmp.eq.s32.totalorder %s21, 1
      %p60 = scmp.ne.s32.totalorder %s55, %s57
      %p61 = scmp.eq.s32.totalorder %s21, 0
      %p62 = por %p60, %p61
      %p63 = scmp.ne.s32.totalorder %s55, %s57
      %p64 = scmp.eq.s32.totalorder %s26, 1
      %p65 = por %p63, %p64
      %p66 = scmp.ne.s32.totalorder %s57, %s58
      %p67 = scmp.eq.s32.totalorder %s26, 0
      %p68 = por %p66, %p67
      %p69 = scmp.ne.s32.totalorder %s57, %s58
      %p70 = scmp.eq.s32.totalorder %s27, 1
      %p71 = por %p69, %p70
      %p73 = scmp.ne.s32.totalorder %s58, %s72
      %p74 = scmp.eq.s32.totalorder %s27, 0
      %p75 = por %p73, %p74
      %s77 = sadd.s32 %s76, 1
      %p80 = scmp.eq.s32.totalorder %s21, 1
      %p81 = scmp.ne.s32.totalorder %s76, %s78
      %p82 = scmp.eq.s32.totalorder %s21, 0
      %p83 = por %p81, %p82
      %p84 = scmp.ne.s32.totalorder %s76, %s78
      %p85 = scmp.eq.s32.totalorder %s26, 1
      %p86 = por %p84, %p85
      %p87 = scmp.ne.s32.totalorder %s78, %s79
      %p88 = scmp.eq.s32.totalorder %s26, 0
      %p89 = por %p87, %p88
      %p90 = scmp.ne.s32.totalorder %s78, %s79
      %p91 = scmp.eq.s32.totalorder %s27, 1
      %p92 = por %p90, %p91
      %p94 = scmp.ne.s32.totalorder %s79, %s93
      %p95 = scmp.eq.s32.totalorder %s27, 0
      %p96 = por %p94, %p95
      %s98 = sadd.s32 %s97, 1
      %p101 = scmp.eq.s32.totalorder %s21, 1
      %p102 = scmp.ne.s32.totalorder %s97, %s99
      %p103 = scmp.eq.s32.totalorder %s21, 0
      %p104 = por %p102, %p103
      %p105 = scmp.ne.s32.totalorder %s97, %s99
      %p106 = scmp.eq.s32.totalorder %s26, 1
      %p107 = por %p105, %p106
      %p108 = scmp.ne.s32.totalorder %s99, %s100
      %p109 = scmp.eq.s32.totalorder %s26, 0
      %p110 = por %p108, %p109
      %p111 = scmp.ne.s32.totalorder %s99, %s100
      %p112 = scmp.eq.s32.totalorder %s27, 1
      %p113 = por %p111, %p112
      %p115 = scmp.ne.s32.totalorder %s100, %s114
      %p116 = scmp.eq.s32.totalorder %s27, 0
      %p117 = por %p115, %p116
      %s119 = sadd.s32 %s118, 1
      %p122 = scmp.eq.s32.totalorder %s21, 1
      %p123 = scmp.ne.s32.totalorder %s118, %s120
      %p124 = scmp.eq.s32.totalorder %s21, 0
      %p125 = por %p123, %p124
      %p126 = scmp.ne.s32.totalorder %s118, %s120
      %p127 = scmp.eq.s32.totalorder %s26, 1
      %p128 = por %p126, %p127
      %p129 = scmp.ne.s32.totalorder %s120, %s121
      %p130 = scmp.eq.s32.totalorder %s26, 0
      %p131 = por %p129, %p130
      %p132 = scmp.ne.s32.totalorder %s120, %s121
      %p133 = scmp.eq.s32.totalorder %s27, 1
      %p134 = por %p132, %p133
      %p136 = scmp.ne.s32.totalorder %s121, %s135
      %p137 = scmp.eq.s32.totalorder %s27, 0
      %p138 = por %p136, %p137
      %s140 = sadd.s32 %s139, 1
      %p143 = scmp.eq.s32.totalorder %s21, 1
      %p144 = scmp.ne.s32.totalorder %s139, %s141
      %p145 = scmp.eq.s32.totalorder %s21, 0
      %p146 = por %p144, %p145
      %p147 = scmp.ne.s32.totalorder %s139, %s141
      %p148 = scmp.eq.s32.totalorder %s26, 1
      %p149 = por %p147, %p148
      %p150 = scmp.ne.s32.totalorder %s141, %s142
      %p151 = scmp.eq.s32.totalorder %s26, 0
      %p152 = por %p150, %p151
      %p153 = scmp.ne.s32.totalorder %s141, %s142
      %p154 = scmp.eq.s32.totalorder %s27, 1
      %p155 = por %p153, %p154
      %p157 = scmp.ne.s32.totalorder %s142, %s156
      %p158 = scmp.eq.s32.totalorder %s27, 0
      %p159 = por %p157, %p158
      %s161 = sadd.s32 %s160, 1
      %p164 = scmp.eq.s32.totalorder %s21, 1
      %p165 = scmp.ne.s32.totalorder %s160, %s162
      %p166 = scmp.eq.s32.totalorder %s21, 0
      %p167 = por %p165, %p166
      %p168 = scmp.ne.s32.totalorder %s160, %s162
      %p169 = scmp.eq.s32.totalorder %s26, 1
      %p170 = por %p168, %p169
      %p171 = scmp.ne.s32.totalorder %s162, %s163
      %p172 = scmp.eq.s32.totalorder %s26, 0
      %p173 = por %p171, %p172
      %p174 = scmp.ne.s32.totalorder %s162, %s163
      %p175 = scmp.eq.s32.totalorder %s27, 1
      %p176 = por %p174, %p175
      %p178 = scmp.ne.s32.totalorder %s163, %s177
      %p179 = scmp.eq.s32.totalorder %s27, 0
      %p180 = por %p178, %p179
      %s181 = ssub.s32 %s21, %s28
      %p182 = scmp.eq.s32.totalorder %s181, 0
      %s184 = sadd.s32 %s183, 1
      %s185 = scalar_select %p182, %s183, %s184
      %p188 = pneg %p182
      %p189 = scmp.eq.s32.totalorder %s21, 1
      %p190 = por %p188, %p189
      %p191 = scmp.ne.s32.totalorder %s183, %s186
      %p192 = scmp.eq.s32.totalorder %s21, 0
      %p193 = por %p191, %p192
      %p194 = scmp.ne.s32.totalorder %s183, %s186
      %p195 = scmp.eq.s32.totalorder %s26, 1
      %p196 = por %p194, %p195
      %p197 = scmp.ne.s32.totalorder %s186, %s187
      %p198 = scmp.eq.s32.totalorder %s26, 0
      %p199 = por %p197, %p198
      %p200 = scmp.ne.s32.totalorder %s186, %s187
      %p201 = scmp.eq.s32.totalorder %s27, 1
      %p202 = por %p200, %p201
      %p204 = scmp.ne.s32.totalorder %s187, %s203
      %p205 = scmp.eq.s32.totalorder %s27, 0
      %p206 = por %p204, %p205
      %p207 = scmp.le.s32.totalorder 1, %s21
      %p208 = scmp.lt.s32.totalorder %s21, 3
      %p209 = pnand %p207, %p208
      %p210 = pneg %p209
      // Predicated region
      $region9: #{tpu_custom_call.1} parent=5 // pred_check
        _
      $region10: #{tpu_custom_call.1} parent=5 // pred_check_branch
        %212 = sbr.rel (%p209) target = $region12
      $region11: #{tpu_custom_call.1} parent=5 // pred_region
        %s213 = ssub.s32 %s21, 1
        // Predicated region
        $region13: #{tpu_custom_call.1} parent=11 // pred_check
          %p214 = pneg %p68
        $region14: #{tpu_custom_call.1} parent=11 // pred_check_branch
          %216 = sbr.rel (%p214) target = $region16
        $region15: #{tpu_custom_call.1} parent=11 // pred_region
          %s218 = ssub.s32 1024, 1024
          %219 = vsyncadd [#allocation7], %s218
          %s220 = sshll.u32 [#allocation6], 4
          %s221 = int_to_ptr.vmem [resolvable:$true] %s220
          %226 = dma.hbm_to_vmem [thread:$0]  %s1, 1024, %s221, [#allocation7], 64, 64, 4
        $region16: #{tpu_custom_call.1} parent=11 // pred_fallthru
          _
        // Predicated region
        $region17: #{tpu_custom_call.1} parent=11 // pred_check
          %p227 = pneg %p89
        $region18: #{tpu_custom_call.1} parent=11 // pred_check_branch
          %229 = sbr.rel (%p227) target = $region20
        $region19: #{tpu_custom_call.1} parent=11 // pred_region
          _
        $region20: #{tpu_custom_call.1} parent=11 // pred_fallthru
          _
        // Predicated region
        $region21: #{tpu_custom_call.1} parent=11 // pred_check
          %p230 = pneg %p110
        $region22: #{tpu_custom_call.1} parent=11 // pred_check_branch
          %232 = sbr.rel (%p230) target = $region24
        $region23: #{tpu_custom_call.1} parent=11 // pred_region
          %s234 = ssub.s32 9216, 9216
          %235 = vsyncadd [#allocation7], %s234
          %s236 = sshll.u32 [#allocation8], 4
          %s237 = int_to_ptr.vmem [resolvable:$true] %s236
          %242 = dma.hbm_to_vmem [thread:$0]  %s3, 9216, %s237, [#allocation7], 64, 64, 4
        $region24: #{tpu_custom_call.1} parent=11 // pred_fallthru
          _
        // Predicated region
        $region25: #{tpu_custom_call.1} parent=11 // pred_check
          %p243 = pneg %p131
        $region26: #{tpu_custom_call.1} parent=11 // pred_check_branch
          %245 = sbr.rel (%p243) target = $region28
        $region27: #{tpu_custom_call.1} parent=11 // pred_region
          _
        $region28: #{tpu_custom_call.1} parent=11 // pred_fallthru
          _
        // Predicated region
        $region29: #{tpu_custom_call.1} parent=11 // pred_check
          %p246 = pneg %p152
        $region30: #{tpu_custom_call.1} parent=11 // pred_check_branch
          %248 = sbr.rel (%p246) target = $region32
        $region31: #{tpu_custom_call.1} parent=11 // pred_region
          %s250 = ssub.s32 1024, 1024
          %251 = vsyncadd [#allocation10], %s250
          %s252 = sshll.u32 [#allocation9], 4
          %s253 = int_to_ptr.vmem [resolvable:$true] %s252
          %258 = dma.hbm_to_vmem [thread:$0]  %s5, 1024, %s253, [#allocation10], 64, 64, 4
        $region32: #{tpu_custom_call.1} parent=11 // pred_fallthru
          _
        // Predicated region
        $region33: #{tpu_custom_call.1} parent=11 // pred_check
          %p259 = pneg %p173
        $region34: #{tpu_custom_call.1} parent=11 // pred_check_branch
          %261 = sbr.rel (%p259) target = $region36
        $region35: #{tpu_custom_call.1} parent=11 // pred_region
          _
        $region36: #{tpu_custom_call.1} parent=11 // pred_fallthru
          _
      $region12: #{tpu_custom_call.1} parent=5 // pred_fallthru
        _
      %p262 = scmp.lt.s32.totalorder %s21, 2
      // Predicated region
      $region37: #{tpu_custom_call.1} parent=5 // pred_check
        %p263 = pneg %p262
      $region38: #{tpu_custom_call.1} parent=5 // pred_check_branch
        %265 = sbr.rel (%p263) target = $region40
      $region39: #{tpu_custom_call.1} parent=5 // pred_region
        // Predicated region
        $region41: #{tpu_custom_call.1} parent=39 // pred_check
          %p266 = pneg %p41
        $region42: #{tpu_custom_call.1} parent=39 // pred_check_branch
          %268 = sbr.rel (%p266) target = $region44
        $region43: #{tpu_custom_call.1} parent=39 // pred_region
          %s269 = sand.u32 %s31, 1
          %s270 = scalar_lea.sflag [#allocation4], %s269
          %s271 = sand.u32 %s31, 1
          %s272 = smul.addr %s271, 128
          %s273 = scalar_lea.vmem [#allocation3], %s272
          %s275 = ssub.s32 2048, 2048
          %276 = vsyncadd %s270, %s275
          %s277 = smul.addr %s21, 32
          %s278 = smul.addr %s277, 64
          %s279 = scalar_lea.hbm %s0, %s278
          %s280 = sshll.u32 %s273, 4
          %s281 = int_to_ptr.vmem [resolvable:$true] %s280
          %286 = dma.hbm_to_vmem [thread:$0]  %s279, 2048, %s281, %s270, 64, 64, 4
        $region44: #{tpu_custom_call.1} parent=39 // pred_fallthru
          _
      $region40: #{tpu_custom_call.1} parent=5 // pred_fallthru
        _
      %p287 = scmp.le.s32.totalorder 1, %s21
      %p288 = scmp.lt.s32.totalorder %s21, 3
      %p289 = pnand %p287, %p288
      %p290 = pneg %p289
      // Predicated region
      $region45: #{tpu_custom_call.1} parent=5 // pred_check
        _
      $region46: #{tpu_custom_call.1} parent=5 // pred_check_branch
        %292 = sbr.rel (%p289) target = $region48
      $region47: #{tpu_custom_call.1} parent=5 // pred_region
        %s293 = ssub.s32 %s21, 1
        %s294 = sand.u32 %s34, 1
        %s295 = scalar_lea.sflag [#allocation4], %s294
        %s296 = sand.u32 %s34, 1
        %s297 = smul.addr %s296, 128
        %s298 = scalar_lea.vmem [#allocation3], %s297
        // Predicated region
        $region49: #{tpu_custom_call.1} parent=47 // pred_check
          %p299 = pneg %p47
        $region50: #{tpu_custom_call.1} parent=47 // pred_check_branch
          %301 = sbr.rel (%p299) target = $region52
        $region51: #{tpu_custom_call.1} parent=47 // pred_region
          %302 = dma.done %s295, 2048
        $region52: #{tpu_custom_call.1} parent=47 // pred_fallthru
          _
        // Predicated region
        $region53: #{tpu_custom_call.1} parent=47 // pred_check
          %p303 = pneg %p68
        $region54: #{tpu_custom_call.1} parent=47 // pred_check_branch
          %305 = sbr.rel (%p303) target = $region56
        $region55: #{tpu_custom_call.1} parent=47 // pred_region
          %306 = dma.done [#allocation7], 1024
        $region56: #{tpu_custom_call.1} parent=47 // pred_fallthru
          _
        // Predicated region
        $region57: #{tpu_custom_call.1} parent=47 // pred_check
          %p307 = pneg %p110
        $region58: #{tpu_custom_call.1} parent=47 // pred_check_branch
          %309 = sbr.rel (%p307) target = $region60
        $region59: #{tpu_custom_call.1} parent=47 // pred_region
          %310 = dma.done [#allocation7], 9216
        $region60: #{tpu_custom_call.1} parent=47 // pred_fallthru
          _
        // Predicated region
        $region61: #{tpu_custom_call.1} parent=47 // pred_check
          %p311 = pneg %p152
        $region62: #{tpu_custom_call.1} parent=47 // pred_check_branch
          %313 = sbr.rel (%p311) target = $region64
        $region63: #{tpu_custom_call.1} parent=47 // pred_region
          %314 = dma.done [#allocation10], 1024
        $region64: #{tpu_custom_call.1} parent=47 // pred_fallthru
          _
        %s315 = sand.u32 %s34, 1
        %s316 = scalar_lea.sflag [#allocation4], %s315
        %s317 = sand.u32 %s34, 1
        %s318 = smul.addr %s317, 128
        %s319 = scalar_lea.vmem [#allocation3], %s318
        %p320 = pneg %p47
        %p321 = pneg %p44
        %p322 = pneg %p68
        %p323 = pneg %p65
        %p324 = pneg %p89
        %p325 = pneg %p86
        %p326 = pneg %p110
        %p327 = pneg %p107
        %p328 = pneg %p131
        %p329 = pneg %p128
        %p330 = pneg %p152
        %p331 = pneg %p149
        %p332 = pneg %p173
        %p333 = pneg %p170
        %p334 = pneg %p199
        %p335 = pneg %p196
        %s336 = sand.u32 %s186, 1
        %s337 = scalar_lea.sflag [#allocation5], %s336
        %s338 = sand.u32 %s186, 1
        %s339 = smul.addr %s338, 256
        %s340 = scalar_lea.vmem [#allocation11], %s339
        %v342 = vld [vmem:[%s298] sm:$0xf]
        %v343 = vld [vmem:[%s298 + $0x4] sm:$0xf]
        %v344 = vld [vmem:[%s298 + $0x8] sm:$0xf]
        %v345 = vld [vmem:[%s298 + $0xc] sm:$0xf]
        %v346 = vld [vmem:[%s298 + $0x10] sm:$0xf]
        %v347 = vld [vmem:[%s298 + $0x14] sm:$0xf]
        %v348 = vld [vmem:[%s298 + $0x18] sm:$0xf]
        %v349 = vld [vmem:[%s298 + $0x1c] sm:$0xf]
        %v350 = vld [vmem:[%s298 + $0x20] sm:$0xf]
        %v351 = vld [vmem:[%s298 + $0x24] sm:$0xf]
        %v352 = vld [vmem:[%s298 + $0x28] sm:$0xf]
        %v353 = vld [vmem:[%s298 + $0x2c] sm:$0xf]
        %v354 = vld [vmem:[%s298 + $0x30] sm:$0xf]
        %v355 = vld [vmem:[%s298 + $0x34] sm:$0xf]
        %v356 = vld [vmem:[%s298 + $0x38] sm:$0xf]
        %v357 = vld [vmem:[%s298 + $0x3c] sm:$0xf]
        %v358 = vld [vmem:[%s298 + $0x40] sm:$0xf]
        %v359 = vld [vmem:[%s298 + $0x44] sm:$0xf]
        %v360 = vld [vmem:[%s298 + $0x48] sm:$0xf]
        %v361 = vld [vmem:[%s298 + $0x4c] sm:$0xf]
        %v362 = vld [vmem:[%s298 + $0x50] sm:$0xf]
        %v363 = vld [vmem:[%s298 + $0x54] sm:$0xf]
        %v364 = vld [vmem:[%s298 + $0x58] sm:$0xf]
        %v365 = vld [vmem:[%s298 + $0x5c] sm:$0xf]
        %v366 = vld [vmem:[%s298 + $0x60] sm:$0xf]
        %v367 = vld [vmem:[%s298 + $0x64] sm:$0xf]
        %v368 = vld [vmem:[%s298 + $0x68] sm:$0xf]
        %v369 = vld [vmem:[%s298 + $0x6c] sm:$0xf]
        %v370 = vld [vmem:[%s298 + $0x70] sm:$0xf]
        %v371 = vld [vmem:[%s298 + $0x74] sm:$0xf]
        %v372 = vld [vmem:[%s298 + $0x78] sm:$0xf]
        %v373 = vld [vmem:[%s298 + $0x7c] sm:$0xf]
        %v374 = vld [vmem:[#allocation6] sm:$0xf]
        %v375 = vld [vmem:[#allocation6 + $0x4] sm:$0xf]
        %v376 = vld [vmem:[#allocation6 + $0x8] sm:$0xf]
        %v377 = vld [vmem:[#allocation6 + $0xc] sm:$0xf]
        %v378 = vld [vmem:[#allocation6 + $0x10] sm:$0xf]
        %v379 = vld [vmem:[#allocation6 + $0x14] sm:$0xf]
        %v380 = vld [vmem:[#allocation6 + $0x18] sm:$0xf]
        %v381 = vld [vmem:[#allocation6 + $0x1c] sm:$0xf]
        %v382 = vld [vmem:[#allocation6 + $0x20] sm:$0xf]
        %v383 = vld [vmem:[#allocation6 + $0x24] sm:$0xf]
        %v384 = vld [vmem:[#allocation6 + $0x28] sm:$0xf]
        %v385 = vld [vmem:[#allocation6 + $0x2c] sm:$0xf]
        %v386 = vld [vmem:[#allocation6 + $0x30] sm:$0xf]
        %v387 = vld [vmem:[#allocation6 + $0x34] sm:$0xf]
        %v388 = vld [vmem:[#allocation6 + $0x38] sm:$0xf]
        %v389 = vld [vmem:[#allocation6 + $0x3c] sm:$0xf]
        %v390 = vld [vmem:[%s2] sm:$0x1]
        %v392 = vlaneseq
        %v393 = vshrl.u32 %v392, 7
        %v394 = vsub.s32 0, %v393
        %v395 = vrot.slane %v390, %v394
        %v429 = vunpack.c.l.b16 %v342
        %v430 = vunpack.c.l.b16 %v343
        %v431 = vunpack.c.l.b16 %v344
        %v432 = vunpack.c.l.b16 %v345
        %v433 = vunpack.c.l.b16 %v346
        %v434 = vunpack.c.l.b16 %v347
        %v435 = vunpack.c.l.b16 %v348
        %v436 = vunpack.c.l.b16 %v349
        %v437 = vunpack.c.l.b16 %v350
        %v438 = vunpack.c.l.b16 %v351
        %v439 = vunpack.c.l.b16 %v352
        %v440 = vunpack.c.l.b16 %v353
        %v441 = vunpack.c.l.b16 %v354
        %v442 = vunpack.c.l.b16 %v355
        %v443 = vunpack.c.l.b16 %v356
        %v444 = vunpack.c.l.b16 %v357
        %v445 = vunpack.c.l.b16 %v358
        %v446 = vunpack.c.l.b16 %v359
        %v447 = vunpack.c.l.b16 %v360
        %v448 = vunpack.c.l.b16 %v361
        %v449 = vunpack.c.l.b16 %v362
        %v450 = vunpack.c.l.b16 %v363
        %v451 = vunpack.c.l.b16 %v364
        %v452 = vunpack.c.l.b16 %v365
        %v453 = vunpack.c.l.b16 %v366
        %v454 = vunpack.c.l.b16 %v367
        %v455 = vunpack.c.l.b16 %v368
        %v456 = vunpack.c.l.b16 %v369
        %v457 = vunpack.c.l.b16 %v370
        %v458 = vunpack.c.l.b16 %v371
        %v459 = vunpack.c.l.b16 %v372
        %v460 = vunpack.c.l.b16 %v373
        %v461 = vpack.c.b16 %v430, %v429
        %v462 = vpack.c.b16 %v432, %v431
        %v463 = vpack.c.b16 %v434, %v433
        %v464 = vpack.c.b16 %v436, %v435
        %v465 = vpack.c.b16 %v438, %v437
        %v466 = vpack.c.b16 %v440, %v439
        %v467 = vpack.c.b16 %v442, %v441
        %v468 = vpack.c.b16 %v444, %v443
        %v469 = vpack.c.b16 %v446, %v445
        %v470 = vpack.c.b16 %v448, %v447
        %v471 = vpack.c.b16 %v450, %v449
        %v472 = vpack.c.b16 %v452, %v451
        %v473 = vpack.c.b16 %v454, %v453
        %v474 = vpack.c.b16 %v456, %v455
        %v475 = vpack.c.b16 %v458, %v457
        %v476 = vpack.c.b16 %v460, %v459
        %v509 = vunpack.c.l.b16 %v374
        %v510 = vunpack.c.l.b16 %v375
        %v511 = vunpack.c.l.b16 %v376
        %v512 = vunpack.c.l.b16 %v377
        %v513 = vunpack.c.l.b16 %v378
        %v514 = vunpack.c.l.b16 %v379
        %v515 = vunpack.c.l.b16 %v380
        %v516 = vunpack.c.l.b16 %v381
        %v517 = vunpack.c.l.b16 %v382
        %v518 = vunpack.c.l.b16 %v383
        %v519 = vunpack.c.l.b16 %v384
        %v520 = vunpack.c.l.b16 %v385
        %v521 = vunpack.c.l.b16 %v386
        %v522 = vunpack.c.l.b16 %v387
        %v523 = vunpack.c.l.b16 %v388
        %v524 = vunpack.c.l.b16 %v389
        %v525 = vpack.c.b16 %v510, %v509
        %v526 = vpack.c.b16 %v512, %v511
        %v527 = vpack.c.b16 %v514, %v513
        %v528 = vpack.c.b16 %v516, %v515
        %v529 = vpack.c.b16 %v518, %v517
        %v530 = vpack.c.b16 %v520, %v519
        %v531 = vpack.c.b16 %v522, %v521
        %v532 = vpack.c.b16 %v524, %v523
        %541 = vmatprep.subr.bf16.mxu0 0
        %542 = vmatpush1.bf16.msra.mxu0 %v525
        %543 = vmatprep.subr.bf16.mxu0 0
        %544 = vmatpush1.bf16.msra.mxu0 %v526
        %545 = vmatprep.subr.bf16.mxu0 0
        %546 = vmatpush1.bf16.msra.mxu0 %v527
        %547 = vmatprep.subr.bf16.mxu0 0
        %548 = vmatpush1.bf16.msra.mxu0 %v528
        %549 = vmatprep.subr.bf16.mxu0 0
        %550 = vmatpush1.bf16.msra.mxu0 %v529
        %551 = vmatprep.subr.bf16.mxu0 0
        %552 = vmatpush1.bf16.msra.mxu0 %v530
        %553 = vmatprep.subr.bf16.mxu0 0
        %554 = vmatpush1.bf16.msra.mxu0 %v531
        %555 = vmatprep.subr.bf16.mxu0 0
        %556 = vmatpush1.bf16.msra.mxu0 %v532
        %557 = vmatprep.subr.bf16.mxu0 0
        %558 = vmatpush1.bf16.msra.mxu0 0
        %559 = vmatprep.subr.bf16.mxu0 0
        %560 = vmatpush1.bf16.msra.mxu0 0
        %561 = vmatprep.subr.bf16.mxu0 0
        %562 = vmatpush1.bf16.msra.mxu0 0
        %563 = vmatprep.subr.bf16.mxu0 0
        %564 = vmatpush1.bf16.msra.mxu0 0
        %565 = vmatprep.subr.bf16.mxu0 0
        %566 = vmatpush1.bf16.msra.mxu0 0
        %567 = vmatprep.subr.bf16.mxu0 0
        %568 = vmatpush1.bf16.msra.mxu0 0
        %569 = vmatprep.subr.bf16.mxu0 0
        %570 = vmatpush1.bf16.msra.mxu0 0
        %571 = vmatprep.subr.bf16.mxu0 0
        %572 = vmatpush1.bf16.msra.mxu0 0
        %573 = vmatprep.mubr.bf16.mxu0 0
        %574 = vmatmul.mubr.bf16.gmra.mrb[0].mxu0 %v461
        %v575 = vpop.f32.mrb[0].mxu0
        %v576 = vadd.f32 %v395, %v575
        %v577 = vpop.f32.mrb[0].mxu0
        %v578 = vpop.f32.mrb[0].mxu0
        %v579 = vadd.f32 %v395, %v578
        %v580 = vpop.f32.mrb[0].mxu0
        %581 = vmatprep.mubr.bf16.mxu0 0
        %582 = vmatmul.mubr.bf16.gmra.mrb[0].mxu0 %v462
        %v583 = vpop.f32.mrb[0].mxu0
        %v584 = vadd.f32 %v395, %v583
        %v585 = vpop.f32.mrb[0].mxu0
        %v586 = vpop.f32.mrb[0].mxu0
        %v587 = vadd.f32 %v395, %v586
        %v588 = vpop.f32.mrb[0].mxu0
        %589 = vmatprep.mubr.bf16.mxu0 0
        %590 = vmatmul.mubr.bf16.gmra.mrb[0].mxu0 %v463
        %v591 = vpop.f32.mrb[0].mxu0
        %v592 = vadd.f32 %v395, %v591
        %v593 = vpop.f32.mrb[0].mxu0
        %v594 = vpop.f32.mrb[0].mxu0
        %v595 = vadd.f32 %v395, %v594
        %v596 = vpop.f32.mrb[0].mxu0
        %597 = vmatprep.mubr.bf16.mxu0 0
        %598 = vmatmul.mubr.bf16.gmra.mrb[0].mxu0 %v464
        %v599 = vpop.f32.mrb[0].mxu0
        %v600 = vadd.f32 %v395, %v599
        %v601 = vpop.f32.mrb[0].mxu0
        %v602 = vpop.f32.mrb[0].mxu0
        %v603 = vadd.f32 %v395, %v602
        %v604 = vpop.f32.mrb[0].mxu0
        %605 = vmatprep.mubr.bf16.mxu0 0
        %606 = vmatmul.mubr.bf16.gmra.mrb[0].mxu0 %v465
        %v607 = vpop.f32.mrb[0].mxu0
        %v608 = vadd.f32 %v395, %v607
        %v609 = vpop.f32.mrb[0].mxu0
        %v610 = vpop.f32.mrb[0].mxu0
        %v611 = vadd.f32 %v395, %v610
        %v612 = vpop.f32.mrb[0].mxu0
        %613 = vmatprep.mubr.bf16.mxu0 0
        %614 = vmatmul.mubr.bf16.gmra.mrb[0].mxu0 %v466
        %v615 = vpop.f32.mrb[0].mxu0
        %v616 = vadd.f32 %v395, %v615
        %v617 = vpop.f32.mrb[0].mxu0
        %v618 = vpop.f32.mrb[0].mxu0
        %v619 = vadd.f32 %v395, %v618
        %v620 = vpop.f32.mrb[0].mxu0
        %621 = vmatprep.mubr.bf16.mxu0 0
        %622 = vmatmul.mubr.bf16.gmra.mrb[0].mxu0 %v467
        %v623 = vpop.f32.mrb[0].mxu0
        %v624 = vadd.f32 %v395, %v623
        %v625 = vpop.f32.mrb[0].mxu0
        %v626 = vpop.f32.mrb[0].mxu0
        %v627 = vadd.f32 %v395, %v626
        %v628 = vpop.f32.mrb[0].mxu0
        %629 = vmatprep.mubr.bf16.mxu0 0
        %630 = vmatmul.mubr.bf16.gmra.mrb[0].mxu0 %v468
        %v631 = vpop.f32.mrb[0].mxu0
        %v632 = vadd.f32 %v395, %v631
        %v633 = vpop.f32.mrb[0].mxu0
        %v634 = vpop.f32.mrb[0].mxu0
        %v635 = vadd.f32 %v395, %v634
        %v636 = vpop.f32.mrb[0].mxu0
        %637 = vmatprep.mubr.bf16.mxu0 0
        %638 = vmatmul.mubr.bf16.gmra.mrb[0].mxu0 %v469
        %v639 = vpop.f32.mrb[0].mxu0
        %v640 = vadd.f32 %v395, %v639
        %v641 = vpop.f32.mrb[0].mxu0
        %v642 = vpop.f32.mrb[0].mxu0
        %v643 = vadd.f32 %v395, %v642
        %v644 = vpop.f32.mrb[0].mxu0
        %645 = vmatprep.mubr.bf16.mxu0 0
        %646 = vmatmul.mubr.bf16.gmra.mrb[0].mxu0 %v470
        %v647 = vpop.f32.mrb[0].mxu0
        %v648 = vadd.f32 %v395, %v647
        %v649 = vpop.f32.mrb[0].mxu0
        %v650 = vpop.f32.mrb[0].mxu0
        %v651 = vadd.f32 %v395, %v650
        %v652 = vpop.f32.mrb[0].mxu0
        %653 = vmatprep.mubr.bf16.mxu0 0
        %654 = vmatmul.mubr.bf16.gmra.mrb[0].mxu0 %v471
        %v655 = vpop.f32.mrb[0].mxu0
        %v656 = vadd.f32 %v395, %v655
        %v657 = vpop.f32.mrb[0].mxu0
        %v658 = vpop.f32.mrb[0].mxu0
        %v659 = vadd.f32 %v395, %v658
        %v660 = vpop.f32.mrb[0].mxu0
        %661 = vmatprep.mubr.bf16.mxu0 0
        %662 = vmatmul.mubr.bf16.gmra.mrb[0].mxu0 %v472
        %v663 = vpop.f32.mrb[0].mxu0
        %v664 = vadd.f32 %v395, %v663
        %v665 = vpop.f32.mrb[0].mxu0
        %v666 = vpop.f32.mrb[0].mxu0
        %v667 = vadd.f32 %v395, %v666
        %v668 = vpop.f32.mrb[0].mxu0
        %669 = vmatprep.mubr.bf16.mxu0 0
        %670 = vmatmul.mubr.bf16.gmra.mrb[0].mxu0 %v473
        %v671 = vpop.f32.mrb[0].mxu0
        %v672 = vadd.f32 %v395, %v671
        %v673 = vpop.f32.mrb[0].mxu0
        %v674 = vpop.f32.mrb[0].mxu0
        %v675 = vadd.f32 %v395, %v674
        %v676 = vpop.f32.mrb[0].mxu0
        %677 = vmatprep.mubr.bf16.mxu0 0
        %678 = vmatmul.mubr.bf16.gmra.mrb[0].mxu0 %v474
        %v679 = vpop.f32.mrb[0].mxu0
        %v680 = vadd.f32 %v395, %v679
        %v681 = vpop.f32.mrb[0].mxu0
        %v682 = vpop.f32.mrb[0].mxu0
        %v683 = vadd.f32 %v395, %v682
        %v684 = vpop.f32.mrb[0].mxu0
        %685 = vmatprep.mubr.bf16.mxu0 0
        %686 = vmatmul.mubr.bf16.gmra.mrb[0].mxu0 %v475
        %v687 = vpop.f32.mrb[0].mxu0
        %v688 = vadd.f32 %v395, %v687
        %v689 = vpop.f32.mrb[0].mxu0
        %v690 = vpop.f32.mrb[0].mxu0
        %v691 = vadd.f32 %v395, %v690
        %v692 = vpop.f32.mrb[0].mxu0
        %693 = vmatprep.mubr.bf16.mxu0 0
        %694 = vmatmul.mubr.bf16.gmra.mrb[0].mxu0 %v476
        %v695 = vpop.f32.mrb[0].mxu0
        %v696 = vadd.f32 %v395, %v695
        %v697 = vpop.f32.mrb[0].mxu0
        %v698 = vpop.f32.mrb[0].mxu0
        %v699 = vadd.f32 %v395, %v698
        %v700 = vpop.f32.mrb[0].mxu0
        %701 = vdwg.mxu0
        %v702 = vmax.f32 %v576, 0.0
        %v703 = vmax.f32 %v579, 0.0
        %v704 = vmax.f32 %v584, 0.0
        %v705 = vmax.f32 %v587, 0.0
        %v706 = vmax.f32 %v592, 0.0
        %v707 = vmax.f32 %v595, 0.0
        %v708 = vmax.f32 %v600, 0.0
        %v709 = vmax.f32 %v603, 0.0
        %v710 = vmax.f32 %v608, 0.0
        %v711 = vmax.f32 %v611, 0.0
        %v712 = vmax.f32 %v616, 0.0
        %v713 = vmax.f32 %v619, 0.0
        %v714 = vmax.f32 %v624, 0.0
        %v715 = vmax.f32 %v627, 0.0
        %v716 = vmax.f32 %v632, 0.0
        %v717 = vmax.f32 %v635, 0.0
        %v718 = vmax.f32 %v640, 0.0
        %v719 = vmax.f32 %v643, 0.0
        %v720 = vmax.f32 %v648, 0.0
        %v721 = vmax.f32 %v651, 0.0
        %v722 = vmax.f32 %v656, 0.0
        %v723 = vmax.f32 %v659, 0.0
        %v724 = vmax.f32 %v664, 0.0
        %v725 = vmax.f32 %v667, 0.0
        %v726 = vmax.f32 %v672, 0.0
        %v727 = vmax.f32 %v675, 0.0
        %v728 = vmax.f32 %v680, 0.0
        %v729 = vmax.f32 %v683, 0.0
        %v730 = vmax.f32 %v688, 0.0
        %v731 = vmax.f32 %v691, 0.0
        %v732 = vmax.f32 %v696, 0.0
        %v733 = vmax.f32 %v699, 0.0
        %v734 = vpack.c.bf16 %v703, %v702
        %v735 = vpack.c.bf16 %v705, %v704
        %v736 = vpack.c.bf16 %v707, %v706
        %v737 = vpack.c.bf16 %v709, %v708
        %v738 = vpack.c.bf16 %v711, %v710
        %v739 = vpack.c.bf16 %v713, %v712
        %v740 = vpack.c.bf16 %v715, %v714
        %v741 = vpack.c.bf16 %v717, %v716
        %v742 = vpack.c.bf16 %v719, %v718
        %v743 = vpack.c.bf16 %v721, %v720
        %v744 = vpack.c.bf16 %v723, %v722
        %v745 = vpack.c.bf16 %v725, %v724
        %v746 = vpack.c.bf16 %v727, %v726
        %v747 = vpack.c.bf16 %v729, %v728
        %v748 = vpack.c.bf16 %v731, %v730
        %v749 = vpack.c.bf16 %v733, %v732
        %v766 = vunpack.c.l.b16 %v734
        %v767 = vunpack.c.h.b16 %v734
        %v768 = vunpack.c.l.b16 %v735
        %v769 = vunpack.c.h.b16 %v735
        %v770 = vunpack.c.l.b16 %v736
        %v771 = vunpack.c.h.b16 %v736
        %v772 = vunpack.c.l.b16 %v737
        %v773 = vunpack.c.h.b16 %v737
        %v774 = vunpack.c.l.b16 %v738
        %v775 = vunpack.c.h.b16 %v738
        %v776 = vunpack.c.l.b16 %v739
        %v777 = vunpack.c.h.b16 %v739
        %v778 = vunpack.c.l.b16 %v740
        %v779 = vunpack.c.h.b16 %v740
        %v780 = vunpack.c.l.b16 %v741
        %v781 = vunpack.c.h.b16 %v741
        %v782 = vunpack.c.l.b16 %v742
        %v783 = vunpack.c.h.b16 %v742
        %v784 = vunpack.c.l.b16 %v743
        %v785 = vunpack.c.h.b16 %v743
        %v786 = vunpack.c.l.b16 %v744
        %v787 = vunpack.c.h.b16 %v744
        %v788 = vunpack.c.l.b16 %v745
        %v789 = vunpack.c.h.b16 %v745
        %v790 = vunpack.c.l.b16 %v746
        %v791 = vunpack.c.h.b16 %v746
        %v792 = vunpack.c.l.b16 %v747
        %v793 = vunpack.c.h.b16 %v747
        %v794 = vunpack.c.l.b16 %v748
        %v795 = vunpack.c.h.b16 %v748
        %v796 = vunpack.c.l.b16 %v749
        %v797 = vunpack.c.h.b16 %v749
        %v798 = vpack.c.b16 %v766, %v766
        %v799 = vpack.c.b16 %v767, %v767
        %v800 = vpack.c.b16 %v768, %v768
        %v801 = vpack.c.b16 %v769, %v769
        %v802 = vpack.c.b16 %v770, %v770
        %v803 = vpack.c.b16 %v771, %v771
        %v804 = vpack.c.b16 %v772, %v772
        %v805 = vpack.c.b16 %v773, %v773
        %v806 = vpack.c.b16 %v774, %v774
        %v807 = vpack.c.b16 %v775, %v775
        %v808 = vpack.c.b16 %v776, %v776
        %v809 = vpack.c.b16 %v777, %v777
        %v810 = vpack.c.b16 %v778, %v778
        %v811 = vpack.c.b16 %v779, %v779
        %v812 = vpack.c.b16 %v780, %v780
        %v813 = vpack.c.b16 %v781, %v781
        %v814 = vpack.c.b16 %v782, %v782
        %v815 = vpack.c.b16 %v783, %v783
        %v816 = vpack.c.b16 %v784, %v784
        %v817 = vpack.c.b16 %v785, %v785
        %v818 = vpack.c.b16 %v786, %v786
        %v819 = vpack.c.b16 %v787, %v787
        %v820 = vpack.c.b16 %v788, %v788
        %v821 = vpack.c.b16 %v789, %v789
        %v822 = vpack.c.b16 %v790, %v790
        %v823 = vpack.c.b16 %v791, %v791
        %v824 = vpack.c.b16 %v792, %v792
        %v825 = vpack.c.b16 %v793, %v793
        %v826 = vpack.c.b16 %v794, %v794
        %v827 = vpack.c.b16 %v795, %v795
        %v828 = vpack.c.b16 %v796, %v796
        %v829 = vpack.c.b16 %v797, %v797
        %vm830 = vcmask 1040384
        %vm831 = vcmask 1044484
        %vm832 = vmor %vm830, %vm831
        %v833 = vrot.slane %v798, 7
        %v834 = vrot.slane %v833, 4
        %v835 = vrot.slane %v799, 7
        %v836 = vsel %vm832, %v834, %v835
        %v837 = vrot.slane %v835, 4
        %v838 = vrot.slane %v800, 7
        %v839 = vrot.slane %v838, 4
        %v840 = vrot.slane %v801, 7
        %v841 = vsel %vm832, %v839, %v840
        %v842 = vrot.slane %v840, 4
        %v843 = vrot.slane %v802, 7
        %v844 = vrot.slane %v843, 4
        %v845 = vrot.slane %v803, 7
        %v846 = vsel %vm832, %v844, %v845
        %v847 = vrot.slane %v845, 4
        %v848 = vrot.slane %v804, 7
        %v849 = vrot.slane %v848, 4
        %v850 = vrot.slane %v805, 7
        %v851 = vsel %vm832, %v849, %v850
        %v852 = vrot.slane %v850, 4
        %v853 = vrot.slane %v806, 7
        %v854 = vrot.slane %v853, 4
        %v855 = vrot.slane %v807, 7
        %v856 = vsel %vm832, %v854, %v855
        %v857 = vrot.slane %v855, 4
        %v858 = vrot.slane %v808, 7
        %v859 = vrot.slane %v858, 4
        %v860 = vrot.slane %v809, 7
        %v861 = vsel %vm832, %v859, %v860
        %v862 = vrot.slane %v860, 4
        %v863 = vrot.slane %v810, 7
        %v864 = vrot.slane %v863, 4
        %v865 = vrot.slane %v811, 7
        %v866 = vsel %vm832, %v864, %v865
        %v867 = vrot.slane %v865, 4
        %v868 = vrot.slane %v812, 7
        %v869 = vrot.slane %v868, 4
        %v870 = vrot.slane %v813, 7
        %v871 = vsel %vm832, %v869, %v870
        %v872 = vrot.slane %v870, 4
        %v873 = vrot.slane %v814, 7
        %v874 = vrot.slane %v873, 4
        %v875 = vrot.slane %v815, 7
        %v876 = vsel %vm832, %v874, %v875
        %v877 = vrot.slane %v875, 4
        %v878 = vrot.slane %v816, 7
        %v879 = vrot.slane %v878, 4
        %v880 = vrot.slane %v817, 7
        %v881 = vsel %vm832, %v879, %v880
        %v882 = vrot.slane %v880, 4
        %v883 = vrot.slane %v818, 7
        %v884 = vrot.slane %v883, 4
        %v885 = vrot.slane %v819, 7
        %v886 = vsel %vm832, %v884, %v885
        %v887 = vrot.slane %v885, 4
        %v888 = vrot.slane %v820, 7
        %v889 = vrot.slane %v888, 4
        %v890 = vrot.slane %v821, 7
        %v891 = vsel %vm832, %v889, %v890
        %v892 = vrot.slane %v890, 4
        %v893 = vrot.slane %v822, 7
        %v894 = vrot.slane %v893, 4
        %v895 = vrot.slane %v823, 7
        %v896 = vsel %vm832, %v894, %v895
        %v897 = vrot.slane %v895, 4
        %v898 = vrot.slane %v824, 7
        %v899 = vrot.slane %v898, 4
        %v900 = vrot.slane %v825, 7
        %v901 = vsel %vm832, %v899, %v900
        %v902 = vrot.slane %v900, 4
        %v903 = vrot.slane %v826, 7
        %v904 = vrot.slane %v903, 4
        %v905 = vrot.slane %v827, 7
        %v906 = vsel %vm832, %v904, %v905
        %v907 = vrot.slane %v905, 4
        %v908 = vrot.slane %v828, 7
        %v909 = vrot.slane %v908, 4
        %v910 = vrot.slane %v829, 7
        %v911 = vsel %vm832, %v909, %v910
        %v912 = vrot.slane %v910, 4
        %s961 = scalar_lea.vmem [#allocation2], 12
        %962 = vst [vmem:[%s961] sm:$0xe] %v833
        %963 = vst [vmem:[%s961 + $0x4] sm:$0xf] %v836
        %964 = vst [vmem:[%s961 + $0x8] sm:$0x1] %v837
        %965 = vst [vmem:[%s961 + $0xc] sm:$0xe] %v838
        %966 = vst [vmem:[%s961 + $0x10] sm:$0xf] %v841
        %967 = vst [vmem:[%s961 + $0x14] sm:$0x1] %v842
        %968 = vst [vmem:[%s961 + $0x18] sm:$0xe] %v843
        %969 = vst [vmem:[%s961 + $0x1c] sm:$0xf] %v846
        %970 = vst [vmem:[%s961 + $0x20] sm:$0x1] %v847
        %971 = vst [vmem:[%s961 + $0x24] sm:$0xe] %v848
        %972 = vst [vmem:[%s961 + $0x28] sm:$0xf] %v851
        %973 = vst [vmem:[%s961 + $0x2c] sm:$0x1] %v852
        %974 = vst [vmem:[%s961 + $0x30] sm:$0xe] %v853
        %975 = vst [vmem:[%s961 + $0x34] sm:$0xf] %v856
        %976 = vst [vmem:[%s961 + $0x38] sm:$0x1] %v857
        %977 = vst [vmem:[%s961 + $0x3c] sm:$0xe] %v858
        %978 = vst [vmem:[%s961 + $0x40] sm:$0xf] %v861
        %979 = vst [vmem:[%s961 + $0x44] sm:$0x1] %v862
        %980 = vst [vmem:[%s961 + $0x48] sm:$0xe] %v863
        %981 = vst [vmem:[%s961 + $0x4c] sm:$0xf] %v866
        %982 = vst [vmem:[%s961 + $0x50] sm:$0x1] %v867
        %983 = vst [vmem:[%s961 + $0x54] sm:$0xe] %v868
        %984 = vst [vmem:[%s961 + $0x58] sm:$0xf] %v871
        %985 = vst [vmem:[%s961 + $0x5c] sm:$0x1] %v872
        %986 = vst [vmem:[%s961 + $0x60] sm:$0xe] %v873
        %987 = vst [vmem:[%s961 + $0x64] sm:$0xf] %v876
        %988 = vst [vmem:[%s961 + $0x68] sm:$0x1] %v877
        %989 = vst [vmem:[%s961 + $0x6c] sm:$0xe] %v878
        %990 = vst [vmem:[%s961 + $0x70] sm:$0xf] %v881
        %991 = vst [vmem:[%s961 + $0x74] sm:$0x1] %v882
        %992 = vst [vmem:[%s961 + $0x78] sm:$0xe] %v883
        %993 = vst [vmem:[%s961 + $0x7c] sm:$0xf] %v886
        %994 = vst [vmem:[%s961 + $0x80] sm:$0x1] %v887
        %995 = vst [vmem:[%s961 + $0x84] sm:$0xe] %v888
        %996 = vst [vmem:[%s961 + $0x88] sm:$0xf] %v891
        %997 = vst [vmem:[%s961 + $0x8c] sm:$0x1] %v892
        %998 = vst [vmem:[%s961 + $0x90] sm:$0xe] %v893
        %999 = vst [vmem:[%s961 + $0x94] sm:$0xf] %v896
        %1000 = vst [vmem:[%s961 + $0x98] sm:$0x1] %v897
        %1001 = vst [vmem:[%s961 + $0x9c] sm:$0xe] %v898
        %1002 = vst [vmem:[%s961 + $0xa0] sm:$0xf] %v901
        %1003 = vst [vmem:[%s961 + $0xa4] sm:$0x1] %v902
        %1004 = vst [vmem:[%s961 + $0xa8] sm:$0xe] %v903
        %1005 = vst [vmem:[%s961 + $0xac] sm:$0xf] %v906
        %1006 = vst [vmem:[%s961 + $0xb0] sm:$0x1] %v907
        %1007 = vst [vmem:[%s961 + $0xb4] sm:$0xe] %v908
        %1008 = vst [vmem:[%s961 + $0xb8] sm:$0xf] %v911
        %1009 = vst [vmem:[%s961 + $0xbc] sm:$0x1] %v912
        %1010 = vst [vmem:[#allocation2] sm:$0xf] 0
        %1011 = vst [vmem:[#allocation2 + $0x4] sm:$0xf] 0
        %1012 = vst [vmem:[#allocation2 + $0x8] sm:$0x3] 0
        %s1013 = scalar_lea.vmem [#allocation2], 204
        %1014 = vst [vmem:[%s1013] sm:$0xf] 0
        %1015 = vst [vmem:[%s1013 + $0x4] sm:$0xf] 0
        %1016 = vst [vmem:[%s1013 + $0x8] sm:$0x3] 0
        %1017 = vst [vmem:[#allocation2] sm:$0x1] 0
        %1018 = vst [vmem:[#allocation2 + $0xc] sm:$0x1] 0
        %1019 = vst [vmem:[#allocation2 + $0x18] sm:$0x1] 0
        %1020 = vst [vmem:[#allocation2 + $0x24] sm:$0x1] 0
        %1021 = vst [vmem:[#allocation2 + $0x30] sm:$0x1] 0
        %1022 = vst [vmem:[#allocation2 + $0x3c] sm:$0x1] 0
        %1023 = vst [vmem:[#allocation2 + $0x48] sm:$0x1] 0
        %1024 = vst [vmem:[#allocation2 + $0x54] sm:$0x1] 0
        %1025 = vst [vmem:[#allocation2 + $0x60] sm:$0x1] 0
        %1026 = vst [vmem:[#allocation2 + $0x6c] sm:$0x1] 0
        %1027 = vst [vmem:[#allocation2 + $0x78] sm:$0x1] 0
        %1028 = vst [vmem:[#allocation2 + $0x84] sm:$0x1] 0
        %1029 = vst [vmem:[#allocation2 + $0x90] sm:$0x1] 0
        %1030 = vst [vmem:[#allocation2 + $0x9c] sm:$0x1] 0
        %1031 = vst [vmem:[#allocation2 + $0xa8] sm:$0x1] 0
        %1032 = vst [vmem:[#allocation2 + $0xb4] sm:$0x1] 0
        %1033 = vst [vmem:[#allocation2 + $0xc0] sm:$0x1] 0
        %1034 = vst [vmem:[#allocation2 + $0xcc] sm:$0x1] 0
        %1035 = vst [vmem:[#allocation2 + $0x8] sm:$0x2] 0
        %1036 = vst [vmem:[#allocation2 + $0x14] sm:$0x2] 0
        %1037 = vst [vmem:[#allocation2 + $0x20] sm:$0x2] 0
        %1038 = vst [vmem:[#allocation2 + $0x2c] sm:$0x2] 0
        %1039 = vst [vmem:[#allocation2 + $0x38] sm:$0x2] 0
        %1040 = vst [vmem:[#allocation2 + $0x44] sm:$0x2] 0
        %1041 = vst [vmem:[#allocation2 + $0x50] sm:$0x2] 0
        %1042 = vst [vmem:[#allocation2 + $0x5c] sm:$0x2] 0
        %1043 = vst [vmem:[#allocation2 + $0x68] sm:$0x2] 0
        %1044 = vst [vmem:[#allocation2 + $0x74] sm:$0x2] 0
        %1045 = vst [vmem:[#allocation2 + $0x80] sm:$0x2] 0
        %1046 = vst [vmem:[#allocation2 + $0x8c] sm:$0x2] 0
        %1047 = vst [vmem:[#allocation2 + $0x98] sm:$0x2] 0
        %1048 = vst [vmem:[#allocation2 + $0xa4] sm:$0x2] 0
        %1049 = vst [vmem:[#allocation2 + $0xb0] sm:$0x2] 0
        %1050 = vst [vmem:[#allocation2 + $0xbc] sm:$0x2] 0
        %1051 = vst [vmem:[#allocation2 + $0xc8] sm:$0x2] 0
        %1052 = vst [vmem:[#allocation2 + $0xd4] sm:$0x2] 0
        %v1053 = vld [vmem:[%s4] sm:$0x1]
        %v1054 = vld [vmem:[#allocation9] sm:$0xf]
        %v1055 = vld [vmem:[#allocation9 + $0x4] sm:$0xf]
        %v1056 = vld [vmem:[#allocation9 + $0x8] sm:$0xf]
        %v1057 = vld [vmem:[#allocation9 + $0xc] sm:$0xf]
        %v1058 = vld [vmem:[#allocation9 + $0x10] sm:$0xf]
        %v1059 = vld [vmem:[#allocation9 + $0x14] sm:$0xf]
        %v1060 = vld [vmem:[#allocation9 + $0x18] sm:$0xf]
        %v1061 = vld [vmem:[#allocation9 + $0x1c] sm:$0xf]
        %v1062 = vld [vmem:[#allocation9 + $0x20] sm:$0xf]
        %v1063 = vld [vmem:[#allocation9 + $0x24] sm:$0xf]
        %v1064 = vld [vmem:[#allocation9 + $0x28] sm:$0xf]
        %v1065 = vld [vmem:[#allocation9 + $0x2c] sm:$0xf]
        %v1066 = vld [vmem:[#allocation9 + $0x30] sm:$0xf]
        %v1067 = vld [vmem:[#allocation9 + $0x34] sm:$0xf]
        %v1068 = vld [vmem:[#allocation9 + $0x38] sm:$0xf]
        %v1069 = vld [vmem:[#allocation9 + $0x3c] sm:$0xf]
        %v1070 = vld [vmem:[%s6] sm:$0x1]
        %v1071 = vld [vmem:[#allocation2] sm:$0xf]
        %v1072 = vld [vmem:[#allocation2 + $0x4] sm:$0xf]
        %v1073 = vld [vmem:[#allocation2 + $0x8] sm:$0x1]
        %v1074 = vld [vmem:[#allocation2 + $0xc] sm:$0xf]
        %v1075 = vld [vmem:[#allocation2 + $0x10] sm:$0xf]
        %v1076 = vld [vmem:[#allocation2 + $0x14] sm:$0x1]
        %v1077 = vld [vmem:[#allocation2 + $0x18] sm:$0xf]
        %v1078 = vld [vmem:[#allocation2 + $0x1c] sm:$0xf]
        %v1079 = vld [vmem:[#allocation2 + $0x20] sm:$0x1]
        %v1080 = vld [vmem:[#allocation2 + $0x24] sm:$0xf]
        %v1081 = vld [vmem:[#allocation2 + $0x28] sm:$0xf]
        %v1082 = vld [vmem:[#allocation2 + $0x2c] sm:$0x1]
        %v1083 = vld [vmem:[#allocation2 + $0x30] sm:$0xf]
        %v1084 = vld [vmem:[#allocation2 + $0x34] sm:$0xf]
        %v1085 = vld [vmem:[#allocation2 + $0x38] sm:$0x1]
        %v1086 = vld [vmem:[#allocation2 + $0x3c] sm:$0xf]
        %v1087 = vld [vmem:[#allocation2 + $0x40] sm:$0xf]
        %v1088 = vld [vmem:[#allocation2 + $0x44] sm:$0x1]
        %v1089 = vld [vmem:[#allocation2 + $0x48] sm:$0xf]
        %v1090 = vld [vmem:[#allocation2 + $0x4c] sm:$0xf]
        %v1091 = vld [vmem:[#allocation2 + $0x50] sm:$0x1]
        %v1092 = vld [vmem:[#allocation2 + $0x54] sm:$0xf]
        %v1093 = vld [vmem:[#allocation2 + $0x58] sm:$0xf]
        %v1094 = vld [vmem:[#allocation2 + $0x5c] sm:$0x1]
        %v1095 = vld [vmem:[#allocation2 + $0x60] sm:$0xf]
        %v1096 = vld [vmem:[#allocation2 + $0x64] sm:$0xf]
        %v1097 = vld [vmem:[#allocation2 + $0x68] sm:$0x1]
        %v1098 = vld [vmem:[#allocation2 + $0x6c] sm:$0xf]
        %v1099 = vld [vmem:[#allocation2 + $0x70] sm:$0xf]
        %v1100 = vld [vmem:[#allocation2 + $0x74] sm:$0x1]
        %v1101 = vld [vmem:[#allocation2 + $0x78] sm:$0xf]
        %v1102 = vld [vmem:[#allocation2 + $0x7c] sm:$0xf]
        %v1103 = vld [vmem:[#allocation2 + $0x80] sm:$0x1]
        %v1104 = vld [vmem:[#allocation2 + $0x84] sm:$0xf]
        %v1105 = vld [vmem:[#allocation2 + $0x88] sm:$0xf]
        %v1106 = vld [vmem:[#allocation2 + $0x8c] sm:$0x1]
        %v1107 = vld [vmem:[#allocation2 + $0x90] sm:$0xf]
        %v1108 = vld [vmem:[#allocation2 + $0x94] sm:$0xf]
        %v1109 = vld [vmem:[#allocation2 + $0x98] sm:$0x1]
        %v1110 = vld [vmem:[#allocation2 + $0x9c] sm:$0xf]
        %v1111 = vld [vmem:[#allocation2 + $0xa0] sm:$0xf]
        %v1112 = vld [vmem:[#allocation2 + $0xa4] sm:$0x1]
        %v1113 = vld [vmem:[#allocation2 + $0xa8] sm:$0xf]
        %v1114 = vld [vmem:[#allocation2 + $0xac] sm:$0xf]
        %v1115 = vld [vmem:[#allocation2 + $0xb0] sm:$0x1]
        %v1116 = vld [vmem:[#allocation2 + $0xb4] sm:$0xf]
        %v1117 = vld [vmem:[#allocation2 + $0xb8] sm:$0xf]
        %v1118 = vld [vmem:[#allocation2 + $0xbc] sm:$0x1]
        %vm1119 = vsmask.f32 3328
        %vm1120 = vsmask.f32 7440
        %vm1121 = vmor %vm1119, %vm1120
        %v1123 = vshrl.u32 %v1071, 16
        %v1125 = vrot.slane %v1123, 4
        %v1126 = vshll.u32 %v1071, 16
        %v1128 = vrot.slane %v1126, 5
        %v1129 = vor.u32 %v1125, %v1128
        %v1130 = vrot.slane %v1129, 4
        %v1132 = vshll.u32 %v1072, 16
        %v1134 = vrot.slane %v1132, 5
        %v1135 = vsel %vm1121, %v1130, %v1134
        %v1136 = vshrl.u32 %v1072, 16
        %v1138 = vrot.slane %v1136, 4
        %v1139 = vor.u32 %v1138, %v1134
        %v1140 = vrot.slane %v1139, 4
        %v1142 = vshll.u32 %v1073, 16
        %v1144 = vrot.slane %v1142, 5
        %v1145 = vsel %vm1121, %v1140, %v1144
        %v1147 = vshrl.u32 %v1074, 16
        %v1149 = vrot.slane %v1147, 4
        %v1150 = vshll.u32 %v1074, 16
        %v1152 = vrot.slane %v1150, 5
        %v1153 = vor.u32 %v1149, %v1152
        %v1154 = vrot.slane %v1153, 4
        %v1156 = vshll.u32 %v1075, 16
        %v1158 = vrot.slane %v1156, 5
        %v1159 = vsel %vm1121, %v1154, %v1158
        %v1160 = vshrl.u32 %v1075, 16
        %v1162 = vrot.slane %v1160, 4
        %v1163 = vor.u32 %v1162, %v1158
        %v1164 = vrot.slane %v1163, 4
        %v1166 = vshll.u32 %v1076, 16
        %v1168 = vrot.slane %v1166, 5
        %v1169 = vsel %vm1121, %v1164, %v1168
        %v1171 = vshrl.u32 %v1077, 16
        %v1173 = vrot.slane %v1171, 4
        %v1174 = vshll.u32 %v1077, 16
        %v1176 = vrot.slane %v1174, 5
        %v1177 = vor.u32 %v1173, %v1176
        %v1178 = vrot.slane %v1177, 4
        %v1180 = vshll.u32 %v1078, 16
        %v1182 = vrot.slane %v1180, 5
        %v1183 = vsel %vm1121, %v1178, %v1182
        %v1184 = vshrl.u32 %v1078, 16
        %v1186 = vrot.slane %v1184, 4
        %v1187 = vor.u32 %v1186, %v1182
        %v1188 = vrot.slane %v1187, 4
        %v1190 = vshll.u32 %v1079, 16
        %v1192 = vrot.slane %v1190, 5
        %v1193 = vsel %vm1121, %v1188, %v1192
        %v1195 = vshrl.u32 %v1080, 16
        %v1197 = vrot.slane %v1195, 4
        %v1198 = vshll.u32 %v1080, 16
        %v1200 = vrot.slane %v1198, 5
        %v1201 = vor.u32 %v1197, %v1200
        %v1202 = vrot.slane %v1201, 4
        %v1204 = vshll.u32 %v1081, 16
        %v1206 = vrot.slane %v1204, 5
        %v1207 = vsel %vm1121, %v1202, %v1206
        %v1208 = vshrl.u32 %v1081, 16
        %v1210 = vrot.slane %v1208, 4
        %v1211 = vor.u32 %v1210, %v1206
        %v1212 = vrot.slane %v1211, 4
        %v1214 = vshll.u32 %v1082, 16
        %v1216 = vrot.slane %v1214, 5
        %v1217 = vsel %vm1121, %v1212, %v1216
        %v1219 = vshrl.u32 %v1083, 16
        %v1221 = vrot.slane %v1219, 4
        %v1222 = vshll.u32 %v1083, 16
        %v1224 = vrot.slane %v1222, 5
        %v1225 = vor.u32 %v1221, %v1224
        %v1226 = vrot.slane %v1225, 4
        %v1228 = vshll.u32 %v1084, 16
        %v1230 = vrot.slane %v1228, 5
        %v1231 = vsel %vm1121, %v1226, %v1230
        %v1232 = vshrl.u32 %v1084, 16
        %v1234 = vrot.slane %v1232, 4
        %v1235 = vor.u32 %v1234, %v1230
        %v1236 = vrot.slane %v1235, 4
        %v1238 = vshll.u32 %v1085, 16
        %v1240 = vrot.slane %v1238, 5
        %v1241 = vsel %vm1121, %v1236, %v1240
        %v1243 = vshrl.u32 %v1086, 16
        %v1245 = vrot.slane %v1243, 4
        %v1246 = vshll.u32 %v1086, 16
        %v1248 = vrot.slane %v1246, 5
        %v1249 = vor.u32 %v1245, %v1248
        %v1250 = vrot.slane %v1249, 4
        %v1252 = vshll.u32 %v1087, 16
        %v1254 = vrot.slane %v1252, 5
        %v1255 = vsel %vm1121, %v1250, %v1254
        %v1256 = vshrl.u32 %v1087, 16
        %v1258 = vrot.slane %v1256, 4
        %v1259 = vor.u32 %v1258, %v1254
        %v1260 = vrot.slane %v1259, 4
        %v1262 = vshll.u32 %v1088, 16
        %v1264 = vrot.slane %v1262, 5
        %v1265 = vsel %vm1121, %v1260, %v1264
        %v1267 = vshrl.u32 %v1089, 16
        %v1269 = vrot.slane %v1267, 4
        %v1270 = vshll.u32 %v1089, 16
        %v1272 = vrot.slane %v1270, 5
        %v1273 = vor.u32 %v1269, %v1272
        %v1274 = vrot.slane %v1273, 4
        %v1276 = vshll.u32 %v1090, 16
        %v1278 = vrot.slane %v1276, 5
        %v1279 = vsel %vm1121, %v1274, %v1278
        %v1280 = vshrl.u32 %v1090, 16
        %v1282 = vrot.slane %v1280, 4
        %v1283 = vor.u32 %v1282, %v1278
        %v1284 = vrot.slane %v1283, 4
        %v1286 = vshll.u32 %v1091, 16
        %v1288 = vrot.slane %v1286, 5
        %v1289 = vsel %vm1121, %v1284, %v1288
        %v1291 = vshrl.u32 %v1092, 16
        %v1293 = vrot.slane %v1291, 4
        %v1294 = vshll.u32 %v1092, 16
        %v1296 = vrot.slane %v1294, 5
        %v1297 = vor.u32 %v1293, %v1296
        %v1298 = vrot.slane %v1297, 4
        %v1300 = vshll.u32 %v1093, 16
        %v1302 = vrot.slane %v1300, 5
        %v1303 = vsel %vm1121, %v1298, %v1302
        %v1304 = vshrl.u32 %v1093, 16
        %v1306 = vrot.slane %v1304, 4
        %v1307 = vor.u32 %v1306, %v1302
        %v1308 = vrot.slane %v1307, 4
        %v1310 = vshll.u32 %v1094, 16
        %v1312 = vrot.slane %v1310, 5
        %v1313 = vsel %vm1121, %v1308, %v1312
        %v1315 = vshrl.u32 %v1095, 16
        %v1317 = vrot.slane %v1315, 4
        %v1318 = vshll.u32 %v1095, 16
        %v1320 = vrot.slane %v1318, 5
        %v1321 = vor.u32 %v1317, %v1320
        %v1322 = vrot.slane %v1321, 4
        %v1324 = vshll.u32 %v1096, 16
        %v1326 = vrot.slane %v1324, 5
        %v1327 = vsel %vm1121, %v1322, %v1326
        %v1328 = vshrl.u32 %v1096, 16
        %v1330 = vrot.slane %v1328, 4
        %v1331 = vor.u32 %v1330, %v1326
        %v1332 = vrot.slane %v1331, 4
        %v1334 = vshll.u32 %v1097, 16
        %v1336 = vrot.slane %v1334, 5
        %v1337 = vsel %vm1121, %v1332, %v1336
        %v1339 = vshrl.u32 %v1098, 16
        %v1341 = vrot.slane %v1339, 4
        %v1342 = vshll.u32 %v1098, 16
        %v1344 = vrot.slane %v1342, 5
        %v1345 = vor.u32 %v1341, %v1344
        %v1346 = vrot.slane %v1345, 4
        %v1348 = vshll.u32 %v1099, 16
        %v1350 = vrot.slane %v1348, 5
        %v1351 = vsel %vm1121, %v1346, %v1350
        %v1352 = vshrl.u32 %v1099, 16
        %v1354 = vrot.slane %v1352, 4
        %v1355 = vor.u32 %v1354, %v1350
        %v1356 = vrot.slane %v1355, 4
        %v1358 = vshll.u32 %v1100, 16
        %v1360 = vrot.slane %v1358, 5
        %v1361 = vsel %vm1121, %v1356, %v1360
        %v1363 = vshrl.u32 %v1101, 16
        %v1365 = vrot.slane %v1363, 4
        %v1366 = vshll.u32 %v1101, 16
        %v1368 = vrot.slane %v1366, 5
        %v1369 = vor.u32 %v1365, %v1368
        %v1370 = vrot.slane %v1369, 4
        %v1372 = vshll.u32 %v1102, 16
        %v1374 = vrot.slane %v1372, 5
        %v1375 = vsel %vm1121, %v1370, %v1374
        %v1376 = vshrl.u32 %v1102, 16
        %v1378 = vrot.slane %v1376, 4
        %v1379 = vor.u32 %v1378, %v1374
        %v1380 = vrot.slane %v1379, 4
        %v1382 = vshll.u32 %v1103, 16
        %v1384 = vrot.slane %v1382, 5
        %v1385 = vsel %vm1121, %v1380, %v1384
        %v1387 = vshrl.u32 %v1104, 16
        %v1389 = vrot.slane %v1387, 4
        %v1390 = vshll.u32 %v1104, 16
        %v1392 = vrot.slane %v1390, 5
        %v1393 = vor.u32 %v1389, %v1392
        %v1394 = vrot.slane %v1393, 4
        %v1396 = vshll.u32 %v1105, 16
        %v1398 = vrot.slane %v1396, 5
        %v1399 = vsel %vm1121, %v1394, %v1398
        %v1400 = vshrl.u32 %v1105, 16
        %v1402 = vrot.slane %v1400, 4
        %v1403 = vor.u32 %v1402, %v1398
        %v1404 = vrot.slane %v1403, 4
        %v1406 = vshll.u32 %v1106, 16
        %v1408 = vrot.slane %v1406, 5
        %v1409 = vsel %vm1121, %v1404, %v1408
        %v1411 = vshrl.u32 %v1107, 16
        %v1413 = vrot.slane %v1411, 4
        %v1414 = vshll.u32 %v1107, 16
        %v1416 = vrot.slane %v1414, 5
        %v1417 = vor.u32 %v1413, %v1416
        %v1418 = vrot.slane %v1417, 4
        %v1420 = vshll.u32 %v1108, 16
        %v1422 = vrot.slane %v1420, 5
        %v1423 = vsel %vm1121, %v1418, %v1422
        %v1424 = vshrl.u32 %v1108, 16
        %v1426 = vrot.slane %v1424, 4
        %v1427 = vor.u32 %v1426, %v1422
        %v1428 = vrot.slane %v1427, 4
        %v1430 = vshll.u32 %v1109, 16
        %v1432 = vrot.slane %v1430, 5
        %v1433 = vsel %vm1121, %v1428, %v1432
        %v1435 = vshrl.u32 %v1110, 16
        %v1437 = vrot.slane %v1435, 4
        %v1438 = vshll.u32 %v1110, 16
        %v1440 = vrot.slane %v1438, 5
        %v1441 = vor.u32 %v1437, %v1440
        %v1442 = vrot.slane %v1441, 4
        %v1444 = vshll.u32 %v1111, 16
        %v1446 = vrot.slane %v1444, 5
        %v1447 = vsel %vm1121, %v1442, %v1446
        %v1448 = vshrl.u32 %v1111, 16
        %v1450 = vrot.slane %v1448, 4
        %v1451 = vor.u32 %v1450, %v1446
        %v1452 = vrot.slane %v1451, 4
        %v1454 = vshll.u32 %v1112, 16
        %v1456 = vrot.slane %v1454, 5
        %v1457 = vsel %vm1121, %v1452, %v1456
        %v1459 = vshrl.u32 %v1113, 16
        %v1461 = vrot.slane %v1459, 4
        %v1462 = vshll.u32 %v1113, 16
        %v1464 = vrot.slane %v1462, 5
        %v1465 = vor.u32 %v1461, %v1464
        %v1466 = vrot.slane %v1465, 4
        %v1468 = vshll.u32 %v1114, 16
        %v1470 = vrot.slane %v1468, 5
        %v1471 = vsel %vm1121, %v1466, %v1470
        %v1472 = vshrl.u32 %v1114, 16
        %v1474 = vrot.slane %v1472, 4
        %v1475 = vor.u32 %v1474, %v1470
        %v1476 = vrot.slane %v1475, 4
        %v1478 = vshll.u32 %v1115, 16
        %v1480 = vrot.slane %v1478, 5
        %v1481 = vsel %vm1121, %v1476, %v1480
        %v1483 = vshrl.u32 %v1116, 16
        %v1485 = vrot.slane %v1483, 4
        %v1486 = vshll.u32 %v1116, 16
        %v1488 = vrot.slane %v1486, 5
        %v1489 = vor.u32 %v1485, %v1488
        %v1490 = vrot.slane %v1489, 4
        %v1492 = vshll.u32 %v1117, 16
        %v1494 = vrot.slane %v1492, 5
        %v1495 = vsel %vm1121, %v1490, %v1494
        %v1496 = vshrl.u32 %v1117, 16
        %v1498 = vrot.slane %v1496, 4
        %v1499 = vor.u32 %v1498, %v1494
        %v1500 = vrot.slane %v1499, 4
        %v1502 = vshll.u32 %v1118, 16
        %v1504 = vrot.slane %v1502, 5
        %v1505 = vsel %vm1121, %v1500, %v1504
        %v1506 = vld [vmem:[#allocation8] sm:$0xf]
        %v1507 = vld [vmem:[#allocation8 + $0x4] sm:$0xf]
        %v1508 = vld [vmem:[#allocation8 + $0x8] sm:$0xf]
        %v1509 = vld [vmem:[#allocation8 + $0xc] sm:$0xf]
        %v1510 = vld [vmem:[#allocation8 + $0x10] sm:$0xf]
        %v1511 = vld [vmem:[#allocation8 + $0x14] sm:$0xf]
        %v1512 = vld [vmem:[#allocation8 + $0x18] sm:$0xf]
        %v1513 = vld [vmem:[#allocation8 + $0x1c] sm:$0xf]
        %v1514 = vld [vmem:[#allocation8 + $0x20] sm:$0xf]
        %v1515 = vld [vmem:[#allocation8 + $0x24] sm:$0xf]
        %v1516 = vld [vmem:[#allocation8 + $0x28] sm:$0xf]
        %v1517 = vld [vmem:[#allocation8 + $0x2c] sm:$0xf]
        %v1518 = vld [vmem:[#allocation8 + $0x30] sm:$0xf]
        %v1519 = vld [vmem:[#allocation8 + $0x34] sm:$0xf]
        %v1520 = vld [vmem:[#allocation8 + $0x38] sm:$0xf]
        %v1521 = vld [vmem:[#allocation8 + $0x3c] sm:$0xf]
        %v1522 = vld [vmem:[#allocation2] sm:$0xe]
        %v1523 = vld [vmem:[#allocation2 + $0xc] sm:$0xe]
        %v1524 = vld [vmem:[#allocation2 + $0x18] sm:$0xe]
        %v1525 = vld [vmem:[#allocation2 + $0x24] sm:$0xe]
        %v1526 = vld [vmem:[#allocation2 + $0x30] sm:$0xe]
        %v1527 = vld [vmem:[#allocation2 + $0x3c] sm:$0xe]
        %v1528 = vld [vmem:[#allocation2 + $0x48] sm:$0xe]
        %v1529 = vld [vmem:[#allocation2 + $0x54] sm:$0xe]
        %v1530 = vld [vmem:[#allocation2 + $0x60] sm:$0xe]
        %v1531 = vld [vmem:[#allocation2 + $0x6c] sm:$0xe]
        %v1532 = vld [vmem:[#allocation2 + $0x78] sm:$0xe]
        %v1533 = vld [vmem:[#allocation2 + $0x84] sm:$0xe]
        %v1534 = vld [vmem:[#allocation2 + $0x90] sm:$0xe]
        %v1535 = vld [vmem:[#allocation2 + $0x9c] sm:$0xe]
        %v1536 = vld [vmem:[#allocation2 + $0xa8] sm:$0xe]
        %v1537 = vld [vmem:[#allocation2 + $0xb4] sm:$0xe]
        %vm1586 = vcmask 1042432
        %vm1587 = vcmask 1046532
        %vm1588 = vmor %vm1586, %vm1587
        %v1589 = vrot.slane %v1522, 5
        %v1590 = vrot.slane %v1589, 4
        %v1591 = vrot.slane %v1072, 5
        %v1592 = vsel %vm1588, %v1590, %v1591
        %v1593 = vrot.slane %v1591, 4
        %v1594 = vrot.slane %v1073, 5
        %v1595 = vsel %vm1588, %v1593, %v1594
        %v1596 = vrot.slane %v1523, 5
        %v1597 = vrot.slane %v1596, 4
        %v1598 = vrot.slane %v1075, 5
        %v1599 = vsel %vm1588, %v1597, %v1598
        %v1600 = vrot.slane %v1598, 4
        %v1601 = vrot.slane %v1076, 5
        %v1602 = vsel %vm1588, %v1600, %v1601
        %v1603 = vrot.slane %v1524, 5
        %v1604 = vrot.slane %v1603, 4
        %v1605 = vrot.slane %v1078, 5
        %v1606 = vsel %vm1588, %v1604, %v1605
        %v1607 = vrot.slane %v1605, 4
        %v1608 = vrot.slane %v1079, 5
        %v1609 = vsel %vm1588, %v1607, %v1608
        %v1610 = vrot.slane %v1525, 5
        %v1611 = vrot.slane %v1610, 4
        %v1612 = vrot.slane %v1081, 5
        %v1613 = vsel %vm1588, %v1611, %v1612
        %v1614 = vrot.slane %v1612, 4
        %v1615 = vrot.slane %v1082, 5
        %v1616 = vsel %vm1588, %v1614, %v1615
        %v1617 = vrot.slane %v1526, 5
        %v1618 = vrot.slane %v1617, 4
        %v1619 = vrot.slane %v1084, 5
        %v1620 = vsel %vm1588, %v1618, %v1619
        %v1621 = vrot.slane %v1619, 4
        %v1622 = vrot.slane %v1085, 5
        %v1623 = vsel %vm1588, %v1621, %v1622
        %v1624 = vrot.slane %v1527, 5
        %v1625 = vrot.slane %v1624, 4
        %v1626 = vrot.slane %v1087, 5
        %v1627 = vsel %vm1588, %v1625, %v1626
        %v1628 = vrot.slane %v1626, 4
        %v1629 = vrot.slane %v1088, 5
        %v1630 = vsel %vm1588, %v1628, %v1629
        %v1631 = vrot.slane %v1528, 5
        %v1632 = vrot.slane %v1631, 4
        %v1633 = vrot.slane %v1090, 5
        %v1634 = vsel %vm1588, %v1632, %v1633
        %v1635 = vrot.slane %v1633, 4
        %v1636 = vrot.slane %v1091, 5
        %v1637 = vsel %vm1588, %v1635, %v1636
        %v1638 = vrot.slane %v1529, 5
        %v1639 = vrot.slane %v1638, 4
        %v1640 = vrot.slane %v1093, 5
        %v1641 = vsel %vm1588, %v1639, %v1640
        %v1642 = vrot.slane %v1640, 4
        %v1643 = vrot.slane %v1094, 5
        %v1644 = vsel %vm1588, %v1642, %v1643
        %v1645 = vrot.slane %v1530, 5
        %v1646 = vrot.slane %v1645, 4
        %v1647 = vrot.slane %v1096, 5
        %v1648 = vsel %vm1588, %v1646, %v1647
        %v1649 = vrot.slane %v1647, 4
        %v1650 = vrot.slane %v1097, 5
        %v1651 = vsel %vm1588, %v1649, %v1650
        %v1652 = vrot.slane %v1531, 5
        %v1653 = vrot.slane %v1652, 4
        %v1654 = vrot.slane %v1099, 5
        %v1655 = vsel %vm1588, %v1653, %v1654
        %v1656 = vrot.slane %v1654, 4
        %v1657 = vrot.slane %v1100, 5
        %v1658 = vsel %vm1588, %v1656, %v1657
        %v1659 = vrot.slane %v1532, 5
        %v1660 = vrot.slane %v1659, 4
        %v1661 = vrot.slane %v1102, 5
        %v1662 = vsel %vm1588, %v1660, %v1661
        %v1663 = vrot.slane %v1661, 4
        %v1664 = vrot.slane %v1103, 5
        %v1665 = vsel %vm1588, %v1663, %v1664
        %v1666 = vrot.slane %v1533, 5
        %v1667 = vrot.slane %v1666, 4
        %v1668 = vrot.slane %v1105, 5
        %v1669 = vsel %vm1588, %v1667, %v1668
        %v1670 = vrot.slane %v1668, 4
        %v1671 = vrot.slane %v1106, 5
        %v1672 = vsel %vm1588, %v1670, %v1671
        %v1673 = vrot.slane %v1534, 5
        %v1674 = vrot.slane %v1673, 4
        %v1675 = vrot.slane %v1108, 5
        %v1676 = vsel %vm1588, %v1674, %v1675
        %v1677 = vrot.slane %v1675, 4
        %v1678 = vrot.slane %v1109, 5
        %v1679 = vsel %vm1588, %v1677, %v1678
        %v1680 = vrot.slane %v1535, 5
        %v1681 = vrot.slane %v1680, 4
        %v1682 = vrot.slane %v1111, 5
        %v1683 = vsel %vm1588, %v1681, %v1682
        %v1684 = vrot.slane %v1682, 4
        %v1685 = vrot.slane %v1112, 5
        %v1686 = vsel %vm1588, %v1684, %v1685
        %v1687 = vrot.slane %v1536, 5
        %v1688 = vrot.slane %v1687, 4
        %v1689 = vrot.slane %v1114, 5
        %v1690 = vsel %vm1588, %v1688, %v1689
        %v1691 = vrot.slane %v1689, 4
        %v1692 = vrot.slane %v1115, 5
        %v1693 = vsel %vm1588, %v1691, %v1692
        %v1694 = vrot.slane %v1537, 5
        %v1695 = vrot.slane %v1694, 4
        %v1696 = vrot.slane %v1117, 5
        %v1697 = vsel %vm1588, %v1695, %v1696
        %v1698 = vrot.slane %v1696, 4
        %v1699 = vrot.slane %v1118, 5
        %v1700 = vsel %vm1588, %v1698, %v1699
        %s1701 = scalar_lea.vmem [#allocation8], 64
        %v1702 = vld [vmem:[%s1701] sm:$0xf]
        %v1703 = vld [vmem:[%s1701 + $0x4] sm:$0xf]
        %v1704 = vld [vmem:[%s1701 + $0x8] sm:$0xf]
        %v1705 = vld [vmem:[%s1701 + $0xc] sm:$0xf]
        %v1706 = vld [vmem:[%s1701 + $0x10] sm:$0xf]
        %v1707 = vld [vmem:[%s1701 + $0x14] sm:$0xf]
        %v1708 = vld [vmem:[%s1701 + $0x18] sm:$0xf]
        %v1709 = vld [vmem:[%s1701 + $0x1c] sm:$0xf]
        %v1710 = vld [vmem:[%s1701 + $0x20] sm:$0xf]
        %v1711 = vld [vmem:[%s1701 + $0x24] sm:$0xf]
        %v1712 = vld [vmem:[%s1701 + $0x28] sm:$0xf]
        %v1713 = vld [vmem:[%s1701 + $0x2c] sm:$0xf]
        %v1714 = vld [vmem:[%s1701 + $0x30] sm:$0xf]
        %v1715 = vld [vmem:[%s1701 + $0x34] sm:$0xf]
        %v1716 = vld [vmem:[%s1701 + $0x38] sm:$0xf]
        %v1717 = vld [vmem:[%s1701 + $0x3c] sm:$0xf]
        %v1718 = vunpack.c.l.b16 %v1592
        %v1719 = vunpack.c.l.b16 %v1595
        %v1720 = vunpack.c.l.b16 %v1599
        %v1721 = vunpack.c.l.b16 %v1602
        %v1722 = vunpack.c.l.b16 %v1606
        %v1723 = vunpack.c.l.b16 %v1609
        %v1724 = vunpack.c.l.b16 %v1613
        %v1725 = vunpack.c.l.b16 %v1616
        %v1726 = vunpack.c.l.b16 %v1620
        %v1727 = vunpack.c.l.b16 %v1623
        %v1728 = vunpack.c.l.b16 %v1627
        %v1729 = vunpack.c.l.b16 %v1630
        %v1730 = vunpack.c.l.b16 %v1634
        %v1731 = vunpack.c.l.b16 %v1637
        %v1732 = vunpack.c.l.b16 %v1641
        %v1733 = vunpack.c.l.b16 %v1644
        %v1734 = vunpack.c.l.b16 %v1648
        %v1735 = vunpack.c.l.b16 %v1651
        %v1736 = vunpack.c.l.b16 %v1655
        %v1737 = vunpack.c.l.b16 %v1658
        %v1738 = vunpack.c.l.b16 %v1662
        %v1739 = vunpack.c.l.b16 %v1665
        %v1740 = vunpack.c.l.b16 %v1669
        %v1741 = vunpack.c.l.b16 %v1672
        %v1742 = vunpack.c.l.b16 %v1676
        %v1743 = vunpack.c.l.b16 %v1679
        %v1744 = vunpack.c.l.b16 %v1683
        %v1745 = vunpack.c.l.b16 %v1686
        %v1746 = vunpack.c.l.b16 %v1690
        %v1747 = vunpack.c.l.b16 %v1693
        %v1748 = vunpack.c.l.b16 %v1697
        %v1749 = vunpack.c.l.b16 %v1700
        %v1750 = vpack.c.b16 %v1719, %v1718
        %v1751 = vpack.c.b16 %v1721, %v1720
        %v1752 = vpack.c.b16 %v1723, %v1722
        %v1753 = vpack.c.b16 %v1725, %v1724
        %v1754 = vpack.c.b16 %v1727, %v1726
        %v1755 = vpack.c.b16 %v1729, %v1728
        %v1756 = vpack.c.b16 %v1731, %v1730
        %v1757 = vpack.c.b16 %v1733, %v1732
        %v1758 = vpack.c.b16 %v1735, %v1734
        %v1759 = vpack.c.b16 %v1737, %v1736
        %v1760 = vpack.c.b16 %v1739, %v1738
        %v1761 = vpack.c.b16 %v1741, %v1740
        %v1762 = vpack.c.b16 %v1743, %v1742
        %v1763 = vpack.c.b16 %v1745, %v1744
        %v1764 = vpack.c.b16 %v1747, %v1746
        %v1765 = vpack.c.b16 %v1749, %v1748
        %v1798 = vunpack.c.l.b16 %v1702
        %v1799 = vunpack.c.l.b16 %v1703
        %v1800 = vunpack.c.l.b16 %v1704
        %v1801 = vunpack.c.l.b16 %v1705
        %v1802 = vunpack.c.l.b16 %v1706
        %v1803 = vunpack.c.l.b16 %v1707
        %v1804 = vunpack.c.l.b16 %v1708
        %v1805 = vunpack.c.l.b16 %v1709
        %v1806 = vunpack.c.l.b16 %v1710
        %v1807 = vunpack.c.l.b16 %v1711
        %v1808 = vunpack.c.l.b16 %v1712
        %v1809 = vunpack.c.l.b16 %v1713
        %v1810 = vunpack.c.l.b16 %v1714
        %v1811 = vunpack.c.l.b16 %v1715
        %v1812 = vunpack.c.l.b16 %v1716
        %v1813 = vunpack.c.l.b16 %v1717
        %v1814 = vpack.c.b16 %v1799, %v1798
        %v1815 = vpack.c.b16 %v1801, %v1800
        %v1816 = vpack.c.b16 %v1803, %v1802
        %v1817 = vpack.c.b16 %v1805, %v1804
        %v1818 = vpack.c.b16 %v1807, %v1806
        %v1819 = vpack.c.b16 %v1809, %v1808
        %v1820 = vpack.c.b16 %v1811, %v1810
        %v1821 = vpack.c.b16 %v1813, %v1812
        %1830 = vmatprep.subr.bf16.mxu0 0
        %1831 = vmatpush1.bf16.msra.mxu0 %v1814
        %1832 = vmatprep.subr.bf16.mxu0 0
        %1833 = vmatpush1.bf16.msra.mxu0 %v1815
        %1834 = vmatprep.subr.bf16.mxu0 0
        %1835 = vmatpush1.bf16.msra.mxu0 %v1816
        %1836 = vmatprep.subr.bf16.mxu0 0
        %1837 = vmatpush1.bf16.msra.mxu0 %v1817
        %1838 = vmatprep.subr.bf16.mxu0 0
        %1839 = vmatpush1.bf16.msra.mxu0 %v1818
        %1840 = vmatprep.subr.bf16.mxu0 0
        %1841 = vmatpush1.bf16.msra.mxu0 %v1819
        %1842 = vmatprep.subr.bf16.mxu0 0
        %1843 = vmatpush1.bf16.msra.mxu0 %v1820
        %1844 = vmatprep.subr.bf16.mxu0 0
        %1845 = vmatpush1.bf16.msra.mxu0 %v1821
        %1846 = vmatprep.subr.bf16.mxu0 0
        %1847 = vmatpush1.bf16.msra.mxu0 0
        %1848 = vmatprep.subr.bf16.mxu0 0
        %1849 = vmatpush1.bf16.msra.mxu0 0
        %1850 = vmatprep.subr.bf16.mxu0 0
        %1851 = vmatpush1.bf16.msra.mxu0 0
        %1852 = vmatprep.subr.bf16.mxu0 0
        %1853 = vmatpush1.bf16.msra.mxu0 0
        %1854 = vmatprep.subr.bf16.mxu0 0
        %1855 = vmatpush1.bf16.msra.mxu0 0
        %1856 = vmatprep.subr.bf16.mxu0 0
        %1857 = vmatpush1.bf16.msra.mxu0 0
        %1858 = vmatprep.subr.bf16.mxu0 0
        %1859 = vmatpush1.bf16.msra.mxu0 0
        %1860 = vmatprep.subr.bf16.mxu0 0
        %1861 = vmatpush1.bf16.msra.mxu0 0
        %1862 = vmatprep.mubr.bf16.mxu0 0
        %1863 = vmatmul.mubr.bf16.gmra.mrb[0].mxu0 %v1750
        %v1864 = vpop.f32.mrb[0].mxu0
        %v1865 = vadd.f32 0.0, %v1864
        %v1866 = vpop.f32.mrb[0].mxu0
        %v1867 = vpop.f32.mrb[0].mxu0
        %v1868 = vadd.f32 0.0, %v1867
        %v1869 = vpop.f32.mrb[0].mxu0
        %1870 = vmatprep.mubr.bf16.mxu0 0
        %1871 = vmatmul.mubr.bf16.gmra.mrb[0].mxu0 %v1751
        %v1872 = vpop.f32.mrb[0].mxu0
        %v1873 = vadd.f32 0.0, %v1872
        %v1874 = vpop.f32.mrb[0].mxu0
        %v1875 = vpop.f32.mrb[0].mxu0
        %v1876 = vadd.f32 0.0, %v1875
        %v1877 = vpop.f32.mrb[0].mxu0
        %1878 = vmatprep.mubr.bf16.mxu0 0
        %1879 = vmatmul.mubr.bf16.gmra.mrb[0].mxu0 %v1752
        %v1880 = vpop.f32.mrb[0].mxu0
        %v1881 = vadd.f32 0.0, %v1880
        %v1882 = vpop.f32.mrb[0].mxu0
        %v1883 = vpop.f32.mrb[0].mxu0
        %v1884 = vadd.f32 0.0, %v1883
        %v1885 = vpop.f32.mrb[0].mxu0
        %1886 = vmatprep.mubr.bf16.mxu0 0
        %1887 = vmatmul.mubr.bf16.gmra.mrb[0].mxu0 %v1753
        %v1888 = vpop.f32.mrb[0].mxu0
        %v1889 = vadd.f32 0.0, %v1888
        %v1890 = vpop.f32.mrb[0].mxu0
        %v1891 = vpop.f32.mrb[0].mxu0
        %v1892 = vadd.f32 0.0, %v1891
        %v1893 = vpop.f32.mrb[0].mxu0
        %1894 = vmatprep.mubr.bf16.mxu0 0
        %1895 = vmatmul.mubr.bf16.gmra.mrb[0].mxu0 %v1754
        %v1896 = vpop.f32.mrb[0].mxu0
        %v1897 = vadd.f32 0.0, %v1896
        %v1898 = vpop.f32.mrb[0].mxu0
        %v1899 = vpop.f32.mrb[0].mxu0
        %v1900 = vadd.f32 0.0, %v1899
        %v1901 = vpop.f32.mrb[0].mxu0
        %1902 = vmatprep.mubr.bf16.mxu0 0
        %1903 = vmatmul.mubr.bf16.gmra.mrb[0].mxu0 %v1755
        %v1904 = vpop.f32.mrb[0].mxu0
        %v1905 = vadd.f32 0.0, %v1904
        %v1906 = vpop.f32.mrb[0].mxu0
        %v1907 = vpop.f32.mrb[0].mxu0
        %v1908 = vadd.f32 0.0, %v1907
        %v1909 = vpop.f32.mrb[0].mxu0
        %1910 = vmatprep.mubr.bf16.mxu0 0
        %1911 = vmatmul.mubr.bf16.gmra.mrb[0].mxu0 %v1756
        %v1912 = vpop.f32.mrb[0].mxu0
        %v1913 = vadd.f32 0.0, %v1912
        %v1914 = vpop.f32.mrb[0].mxu0
        %v1915 = vpop.f32.mrb[0].mxu0
        %v1916 = vadd.f32 0.0, %v1915
        %v1917 = vpop.f32.mrb[0].mxu0
        %1918 = vmatprep.mubr.bf16.mxu0 0
        %1919 = vmatmul.mubr.bf16.gmra.mrb[0].mxu0 %v1757
        %v1920 = vpop.f32.mrb[0].mxu0
        %v1921 = vadd.f32 0.0, %v1920
        %v1922 = vpop.f32.mrb[0].mxu0
        %v1923 = vpop.f32.mrb[0].mxu0
        %v1924 = vadd.f32 0.0, %v1923
        %v1925 = vpop.f32.mrb[0].mxu0
        %1926 = vmatprep.mubr.bf16.mxu0 0
        %1927 = vmatmul.mubr.bf16.gmra.mrb[0].mxu0 %v1758
        %v1928 = vpop.f32.mrb[0].mxu0
        %v1929 = vadd.f32 0.0, %v1928
        %v1930 = vpop.f32.mrb[0].mxu0
        %v1931 = vpop.f32.mrb[0].mxu0
        %v1932 = vadd.f32 0.0, %v1931
        %v1933 = vpop.f32.mrb[0].mxu0
        %1934 = vmatprep.mubr.bf16.mxu0 0
        %1935 = vmatmul.mubr.bf16.gmra.mrb[0].mxu0 %v1759
        %v1936 = vpop.f32.mrb[0].mxu0
        %v1937 = vadd.f32 0.0, %v1936
        %v1938 = vpop.f32.mrb[0].mxu0
        %v1939 = vpop.f32.mrb[0].mxu0
        %v1940 = vadd.f32 0.0, %v1939
        %v1941 = vpop.f32.mrb[0].mxu0
        %1942 = vmatprep.mubr.bf16.mxu0 0
        %1943 = vmatmul.mubr.bf16.gmra.mrb[0].mxu0 %v1760
        %v1944 = vpop.f32.mrb[0].mxu0
        %v1945 = vadd.f32 0.0, %v1944
        %v1946 = vpop.f32.mrb[0].mxu0
        %v1947 = vpop.f32.mrb[0].mxu0
        %v1948 = vadd.f32 0.0, %v1947
        %v1949 = vpop.f32.mrb[0].mxu0
        %1950 = vmatprep.mubr.bf16.mxu0 0
        %1951 = vmatmul.mubr.bf16.gmra.mrb[0].mxu0 %v1761
        %v1952 = vpop.f32.mrb[0].mxu0
        %v1953 = vadd.f32 0.0, %v1952
        %v1954 = vpop.f32.mrb[0].mxu0
        %v1955 = vpop.f32.mrb[0].mxu0
        %v1956 = vadd.f32 0.0, %v1955
        %v1957 = vpop.f32.mrb[0].mxu0
        %1958 = vmatprep.mubr.bf16.mxu0 0
        %1959 = vmatmul.mubr.bf16.gmra.mrb[0].mxu0 %v1762
        %v1960 = vpop.f32.mrb[0].mxu0
        %v1961 = vadd.f32 0.0, %v1960
        %v1962 = vpop.f32.mrb[0].mxu0
        %v1963 = vpop.f32.mrb[0].mxu0
        %v1964 = vadd.f32 0.0, %v1963
        %v1965 = vpop.f32.mrb[0].mxu0
        %1966 = vmatprep.mubr.bf16.mxu0 0
        %1967 = vmatmul.mubr.bf16.gmra.mrb[0].mxu0 %v1763
        %v1968 = vpop.f32.mrb[0].mxu0
        %v1969 = vadd.f32 0.0, %v1968
        %v1970 = vpop.f32.mrb[0].mxu0
        %v1971 = vpop.f32.mrb[0].mxu0
        %v1972 = vadd.f32 0.0, %v1971
        %v1973 = vpop.f32.mrb[0].mxu0
        %1974 = vmatprep.mubr.bf16.mxu0 0
        %1975 = vmatmul.mubr.bf16.gmra.mrb[0].mxu0 %v1764
        %v1976 = vpop.f32.mrb[0].mxu0
        %v1977 = vadd.f32 0.0, %v1976
        %v1978 = vpop.f32.mrb[0].mxu0
        %v1979 = vpop.f32.mrb[0].mxu0
        %v1980 = vadd.f32 0.0, %v1979
        %v1981 = vpop.f32.mrb[0].mxu0
        %1982 = vmatprep.mubr.bf16.mxu0 0
        %1983 = vmatmul.mubr.bf16.gmra.mrb[0].mxu0 %v1765
        %v1984 = vpop.f32.mrb[0].mxu0
        %v1985 = vadd.f32 0.0, %v1984
        %v1986 = vpop.f32.mrb[0].mxu0
        %v1987 = vpop.f32.mrb[0].mxu0
        %v1988 = vadd.f32 0.0, %v1987
        %v1989 = vpop.f32.mrb[0].mxu0
        %1990 = vdwg.mxu0
        %v1991 = vunpack.c.l.b16 %v1135
        %v1992 = vunpack.c.l.b16 %v1145
        %v1993 = vunpack.c.l.b16 %v1159
        %v1994 = vunpack.c.l.b16 %v1169
        %v1995 = vunpack.c.l.b16 %v1183
        %v1996 = vunpack.c.l.b16 %v1193
        %v1997 = vunpack.c.l.b16 %v1207
        %v1998 = vunpack.c.l.b16 %v1217
        %v1999 = vunpack.c.l.b16 %v1231
        %v2000 = vunpack.c.l.b16 %v1241
        %v2001 = vunpack.c.l.b16 %v1255
        %v2002 = vunpack.c.l.b16 %v1265
        %v2003 = vunpack.c.l.b16 %v1279
        %v2004 = vunpack.c.l.b16 %v1289
        %v2005 = vunpack.c.l.b16 %v1303
        %v2006 = vunpack.c.l.b16 %v1313
        %v2007 = vunpack.c.l.b16 %v1327
        %v2008 = vunpack.c.l.b16 %v1337
        %v2009 = vunpack.c.l.b16 %v1351
        %v2010 = vunpack.c.l.b16 %v1361
        %v2011 = vunpack.c.l.b16 %v1375
        %v2012 = vunpack.c.l.b16 %v1385
        %v2013 = vunpack.c.l.b16 %v1399
        %v2014 = vunpack.c.l.b16 %v1409
        %v2015 = vunpack.c.l.b16 %v1423
        %v2016 = vunpack.c.l.b16 %v1433
        %v2017 = vunpack.c.l.b16 %v1447
        %v2018 = vunpack.c.l.b16 %v1457
        %v2019 = vunpack.c.l.b16 %v1471
        %v2020 = vunpack.c.l.b16 %v1481
        %v2021 = vunpack.c.l.b16 %v1495
        %v2022 = vunpack.c.l.b16 %v1505
        %v2023 = vpack.c.b16 %v1992, %v1991
        %v2024 = vpack.c.b16 %v1994, %v1993
        %v2025 = vpack.c.b16 %v1996, %v1995
        %v2026 = vpack.c.b16 %v1998, %v1997
        %v2027 = vpack.c.b16 %v2000, %v1999
        %v2028 = vpack.c.b16 %v2002, %v2001
        %v2029 = vpack.c.b16 %v2004, %v2003
        %v2030 = vpack.c.b16 %v2006, %v2005
        %v2031 = vpack.c.b16 %v2008, %v2007
        %v2032 = vpack.c.b16 %v2010, %v2009
        %v2033 = vpack.c.b16 %v2012, %v2011
        %v2034 = vpack.c.b16 %v2014, %v2013
        %v2035 = vpack.c.b16 %v2016, %v2015
        %v2036 = vpack.c.b16 %v2018, %v2017
        %v2037 = vpack.c.b16 %v2020, %v2019
        %v2038 = vpack.c.b16 %v2022, %v2021
        %v2071 = vunpack.c.l.b16 %v1506
        %v2072 = vunpack.c.l.b16 %v1507
        %v2073 = vunpack.c.l.b16 %v1508
        %v2074 = vunpack.c.l.b16 %v1509
        %v2075 = vunpack.c.l.b16 %v1510
        %v2076 = vunpack.c.l.b16 %v1511
        %v2077 = vunpack.c.l.b16 %v1512
        %v2078 = vunpack.c.l.b16 %v1513
        %v2079 = vunpack.c.l.b16 %v1514
        %v2080 = vunpack.c.l.b16 %v1515
        %v2081 = vunpack.c.l.b16 %v1516
        %v2082 = vunpack.c.l.b16 %v1517
        %v2083 = vunpack.c.l.b16 %v1518
        %v2084 = vunpack.c.l.b16 %v1519
        %v2085 = vunpack.c.l.b16 %v1520
        %v2086 = vunpack.c.l.b16 %v1521
        %v2087 = vpack.c.b16 %v2072, %v2071
        %v2088 = vpack.c.b16 %v2074, %v2073
        %v2089 = vpack.c.b16 %v2076, %v2075
        %v2090 = vpack.c.b16 %v2078, %v2077
        %v2091 = vpack.c.b16 %v2080, %v2079
        %v2092 = vpack.c.b16 %v2082, %v2081
        %v2093 = vpack.c.b16 %v2084, %v2083
        %v2094 = vpack.c.b16 %v2086, %v2085
        %2103 = vmatprep.subr.bf16.mxu0 0
        %2104 = vmatpush1.bf16.msra.mxu0 %v2087
        %2105 = vmatprep.subr.bf16.mxu0 0
        %2106 = vmatpush1.bf16.msra.mxu0 %v2088
        %2107 = vmatprep.subr.bf16.mxu0 0
        %2108 = vmatpush1.bf16.msra.mxu0 %v2089
        %2109 = vmatprep.subr.bf16.mxu0 0
        %2110 = vmatpush1.bf16.msra.mxu0 %v2090
        %2111 = vmatprep.subr.bf16.mxu0 0
        %2112 = vmatpush1.bf16.msra.mxu0 %v2091
        %2113 = vmatprep.subr.bf16.mxu0 0
        %2114 = vmatpush1.bf16.msra.mxu0 %v2092
        %2115 = vmatprep.subr.bf16.mxu0 0
        %2116 = vmatpush1.bf16.msra.mxu0 %v2093
        %2117 = vmatprep.subr.bf16.mxu0 0
        %2118 = vmatpush1.bf16.msra.mxu0 %v2094
        %2119 = vmatprep.subr.bf16.mxu0 0
        %2120 = vmatpush1.bf16.msra.mxu0 0
        %2121 = vmatprep.subr.bf16.mxu0 0
        %2122 = vmatpush1.bf16.msra.mxu0 0
        %2123 = vmatprep.subr.bf16.mxu0 0
        %2124 = vmatpush1.bf16.msra.mxu0 0
        %2125 = vmatprep.subr.bf16.mxu0 0
        %2126 = vmatpush1.bf16.msra.mxu0 0
        %2127 = vmatprep.subr.bf16.mxu0 0
        %2128 = vmatpush1.bf16.msra.mxu0 0
        %2129 = vmatprep.subr.bf16.mxu0 0
        %2130 = vmatpush1.bf16.msra.mxu0 0
        %2131 = vmatprep.subr.bf16.mxu0 0
        %2132 = vmatpush1.bf16.msra.mxu0 0
        %2133 = vmatprep.subr.bf16.mxu0 0
        %2134 = vmatpush1.bf16.msra.mxu0 0
        %2135 = vmatprep.mubr.bf16.mxu0 0
        %2136 = vmatmul.mubr.bf16.gmra.mrb[0].mxu0 %v2023
        %v2137 = vpop.f32.mrb[0].mxu0
        %v2138 = vadd.f32 %v1865, %v2137
        %v2139 = vpop.f32.mrb[0].mxu0
        %v2140 = vpop.f32.mrb[0].mxu0
        %v2141 = vadd.f32 %v1868, %v2140
        %v2142 = vpop.f32.mrb[0].mxu0
        %2143 = vmatprep.mubr.bf16.mxu0 0
        %2144 = vmatmul.mubr.bf16.gmra.mrb[0].mxu0 %v2024
        %v2145 = vpop.f32.mrb[0].mxu0
        %v2146 = vadd.f32 %v1873, %v2145
        %v2147 = vpop.f32.mrb[0].mxu0
        %v2148 = vpop.f32.mrb[0].mxu0
        %v2149 = vadd.f32 %v1876, %v2148
        %v2150 = vpop.f32.mrb[0].mxu0
        %2151 = vmatprep.mubr.bf16.mxu0 0
        %2152 = vmatmul.mubr.bf16.gmra.mrb[0].mxu0 %v2025
        %v2153 = vpop.f32.mrb[0].mxu0
        %v2154 = vadd.f32 %v1881, %v2153
        %v2155 = vpop.f32.mrb[0].mxu0
        %v2156 = vpop.f32.mrb[0].mxu0
        %v2157 = vadd.f32 %v1884, %v2156
        %v2158 = vpop.f32.mrb[0].mxu0
        %2159 = vmatprep.mubr.bf16.mxu0 0
        %2160 = vmatmul.mubr.bf16.gmra.mrb[0].mxu0 %v2026
        %v2161 = vpop.f32.mrb[0].mxu0
        %v2162 = vadd.f32 %v1889, %v2161
        %v2163 = vpop.f32.mrb[0].mxu0
        %v2164 = vpop.f32.mrb[0].mxu0
        %v2165 = vadd.f32 %v1892, %v2164
        %v2166 = vpop.f32.mrb[0].mxu0
        %2167 = vmatprep.mubr.bf16.mxu0 0
        %2168 = vmatmul.mubr.bf16.gmra.mrb[0].mxu0 %v2027
        %v2169 = vpop.f32.mrb[0].mxu0
        %v2170 = vadd.f32 %v1897, %v2169
        %v2171 = vpop.f32.mrb[0].mxu0
        %v2172 = vpop.f32.mrb[0].mxu0
        %v2173 = vadd.f32 %v1900, %v2172
        %v2174 = vpop.f32.mrb[0].mxu0
        %2175 = vmatprep.mubr.bf16.mxu0 0
        %2176 = vmatmul.mubr.bf16.gmra.mrb[0].mxu0 %v2028
        %v2177 = vpop.f32.mrb[0].mxu0
        %v2178 = vadd.f32 %v1905, %v2177
        %v2179 = vpop.f32.mrb[0].mxu0
        %v2180 = vpop.f32.mrb[0].mxu0
        %v2181 = vadd.f32 %v1908, %v2180
        %v2182 = vpop.f32.mrb[0].mxu0
        %2183 = vmatprep.mubr.bf16.mxu0 0
        %2184 = vmatmul.mubr.bf16.gmra.mrb[0].mxu0 %v2029
        %v2185 = vpop.f32.mrb[0].mxu0
        %v2186 = vadd.f32 %v1913, %v2185
        %v2187 = vpop.f32.mrb[0].mxu0
        %v2188 = vpop.f32.mrb[0].mxu0
        %v2189 = vadd.f32 %v1916, %v2188
        %v2190 = vpop.f32.mrb[0].mxu0
        %2191 = vmatprep.mubr.bf16.mxu0 0
        %2192 = vmatmul.mubr.bf16.gmra.mrb[0].mxu0 %v2030
        %v2193 = vpop.f32.mrb[0].mxu0
        %v2194 = vadd.f32 %v1921, %v2193
        %v2195 = vpop.f32.mrb[0].mxu0
        %v2196 = vpop.f32.mrb[0].mxu0
        %v2197 = vadd.f32 %v1924, %v2196
        %v2198 = vpop.f32.mrb[0].mxu0
        %2199 = vmatprep.mubr.bf16.mxu0 0
        %2200 = vmatmul.mubr.bf16.gmra.mrb[0].mxu0 %v2031
        %v2201 = vpop.f32.mrb[0].mxu0
        %v2202 = vadd.f32 %v1929, %v2201
        %v2203 = vpop.f32.mrb[0].mxu0
        %v2204 = vpop.f32.mrb[0].mxu0
        %v2205 = vadd.f32 %v1932, %v2204
        %v2206 = vpop.f32.mrb[0].mxu0
        %2207 = vmatprep.mubr.bf16.mxu0 0
        %2208 = vmatmul.mubr.bf16.gmra.mrb[0].mxu0 %v2032
        %v2209 = vpop.f32.mrb[0].mxu0
        %v2210 = vadd.f32 %v1937, %v2209
        %v2211 = vpop.f32.mrb[0].mxu0
        %v2212 = vpop.f32.mrb[0].mxu0
        %v2213 = vadd.f32 %v1940, %v2212
        %v2214 = vpop.f32.mrb[0].mxu0
        %2215 = vmatprep.mubr.bf16.mxu0 0
        %2216 = vmatmul.mubr.bf16.gmra.mrb[0].mxu0 %v2033
        %v2217 = vpop.f32.mrb[0].mxu0
        %v2218 = vadd.f32 %v1945, %v2217
        %v2219 = vpop.f32.mrb[0].mxu0
        %v2220 = vpop.f32.mrb[0].mxu0
        %v2221 = vadd.f32 %v1948, %v2220
        %v2222 = vpop.f32.mrb[0].mxu0
        %2223 = vmatprep.mubr.bf16.mxu0 0
        %2224 = vmatmul.mubr.bf16.gmra.mrb[0].mxu0 %v2034
        %v2225 = vpop.f32.mrb[0].mxu0
        %v2226 = vadd.f32 %v1953, %v2225
        %v2227 = vpop.f32.mrb[0].mxu0
        %v2228 = vpop.f32.mrb[0].mxu0
        %v2229 = vadd.f32 %v1956, %v2228
        %v2230 = vpop.f32.mrb[0].mxu0
        %2231 = vmatprep.mubr.bf16.mxu0 0
        %2232 = vmatmul.mubr.bf16.gmra.mrb[0].mxu0 %v2035
        %v2233 = vpop.f32.mrb[0].mxu0
        %v2234 = vadd.f32 %v1961, %v2233
        %v2235 = vpop.f32.mrb[0].mxu0
        %v2236 = vpop.f32.mrb[0].mxu0
        %v2237 = vadd.f32 %v1964, %v2236
        %v2238 = vpop.f32.mrb[0].mxu0
        %2239 = vmatprep.mubr.bf16.mxu0 0
        %2240 = vmatmul.mubr.bf16.gmra.mrb[0].mxu0 %v2036
        %v2241 = vpop.f32.mrb[0].mxu0
        %v2242 = vadd.f32 %v1969, %v2241
        %v2243 = vpop.f32.mrb[0].mxu0
        %v2244 = vpop.f32.mrb[0].mxu0
        %v2245 = vadd.f32 %v1972, %v2244
        %v2246 = vpop.f32.mrb[0].mxu0
        %2247 = vmatprep.mubr.bf16.mxu0 0
        %2248 = vmatmul.mubr.bf16.gmra.mrb[0].mxu0 %v2037
        %v2249 = vpop.f32.mrb[0].mxu0
        %v2250 = vadd.f32 %v1977, %v2249
        %v2251 = vpop.f32.mrb[0].mxu0
        %v2252 = vpop.f32.mrb[0].mxu0
        %v2253 = vadd.f32 %v1980, %v2252
        %v2254 = vpop.f32.mrb[0].mxu0
        %2255 = vmatprep.mubr.bf16.mxu0 0
        %2256 = vmatmul.mubr.bf16.gmra.mrb[0].mxu0 %v2038
        %v2257 = vpop.f32.mrb[0].mxu0
        %v2258 = vadd.f32 %v1985, %v2257
        %v2259 = vpop.f32.mrb[0].mxu0
        %v2260 = vpop.f32.mrb[0].mxu0
        %v2261 = vadd.f32 %v1988, %v2260
        %v2262 = vpop.f32.mrb[0].mxu0
        %2263 = vdwg.mxu0
        %v2264 = vld [vmem:[#allocation2 + $0x8] sm:$0x3]
        %v2265 = vld [vmem:[#allocation2 + $0x14] sm:$0x3]
        %v2266 = vld [vmem:[#allocation2 + $0x20] sm:$0x3]
        %v2267 = vld [vmem:[#allocation2 + $0x2c] sm:$0x3]
        %v2268 = vld [vmem:[#allocation2 + $0x38] sm:$0x3]
        %v2269 = vld [vmem:[#allocation2 + $0x44] sm:$0x3]
        %v2270 = vld [vmem:[#allocation2 + $0x50] sm:$0x3]
        %v2271 = vld [vmem:[#allocation2 + $0x5c] sm:$0x3]
        %v2272 = vld [vmem:[#allocation2 + $0x68] sm:$0x3]
        %v2273 = vld [vmem:[#allocation2 + $0x74] sm:$0x3]
        %v2274 = vld [vmem:[#allocation2 + $0x80] sm:$0x3]
        %v2275 = vld [vmem:[#allocation2 + $0x8c] sm:$0x3]
        %v2276 = vld [vmem:[#allocation2 + $0x98] sm:$0x3]
        %v2277 = vld [vmem:[#allocation2 + $0xa4] sm:$0x3]
        %v2278 = vld [vmem:[#allocation2 + $0xb0] sm:$0x3]
        %v2279 = vld [vmem:[#allocation2 + $0xbc] sm:$0x3]
        %vm2280 = vsmask.f32 2304
        %vm2281 = vsmask.f32 6416
        %vm2282 = vmor %vm2280, %vm2281
        %v2284 = vshrl.u32 %v1522, 16
        %v2286 = vrot.slane %v2284, 5
        %v2287 = vshll.u32 %v1522, 16
        %v2289 = vrot.slane %v2287, 6
        %v2290 = vor.u32 %v2286, %v2289
        %v2291 = vrot.slane %v2290, 4
        %v2292 = vrot.slane %v1136, 5
        %v2293 = vrot.slane %v1132, 6
        %v2294 = vor.u32 %v2292, %v2293
        %v2295 = vsel %vm2282, %v2291, %v2294
        %v2296 = vrot.slane %v2294, 4
        %v2298 = vshrl.u32 %v2264, 16
        %v2300 = vrot.slane %v2298, 5
        %v2301 = vshll.u32 %v2264, 16
        %v2303 = vrot.slane %v2301, 6
        %v2304 = vor.u32 %v2300, %v2303
        %v2305 = vsel %vm2282, %v2296, %v2304
        %v2307 = vshrl.u32 %v1523, 16
        %v2309 = vrot.slane %v2307, 5
        %v2310 = vshll.u32 %v1523, 16
        %v2312 = vrot.slane %v2310, 6
        %v2313 = vor.u32 %v2309, %v2312
        %v2314 = vrot.slane %v2313, 4
        %v2315 = vrot.slane %v1160, 5
        %v2316 = vrot.slane %v1156, 6
        %v2317 = vor.u32 %v2315, %v2316
        %v2318 = vsel %vm2282, %v2314, %v2317
        %v2319 = vrot.slane %v2317, 4
        %v2321 = vshrl.u32 %v2265, 16
        %v2323 = vrot.slane %v2321, 5
        %v2324 = vshll.u32 %v2265, 16
        %v2326 = vrot.slane %v2324, 6
        %v2327 = vor.u32 %v2323, %v2326
        %v2328 = vsel %vm2282, %v2319, %v2327
        %v2330 = vshrl.u32 %v1524, 16
        %v2332 = vrot.slane %v2330, 5
        %v2333 = vshll.u32 %v1524, 16
        %v2335 = vrot.slane %v2333, 6
        %v2336 = vor.u32 %v2332, %v2335
        %v2337 = vrot.slane %v2336, 4
        %v2338 = vrot.slane %v1184, 5
        %v2339 = vrot.slane %v1180, 6
        %v2340 = vor.u32 %v2338, %v2339
        %v2341 = vsel %vm2282, %v2337, %v2340
        %v2342 = vrot.slane %v2340, 4
        %v2344 = vshrl.u32 %v2266, 16
        %v2346 = vrot.slane %v2344, 5
        %v2347 = vshll.u32 %v2266, 16
        %v2349 = vrot.slane %v2347, 6
        %v2350 = vor.u32 %v2346, %v2349
        %v2351 = vsel %vm2282, %v2342, %v2350
        %v2353 = vshrl.u32 %v1525, 16
        %v2355 = vrot.slane %v2353, 5
        %v2356 = vshll.u32 %v1525, 16
        %v2358 = vrot.slane %v2356, 6
        %v2359 = vor.u32 %v2355, %v2358
        %v2360 = vrot.slane %v2359, 4
        %v2361 = vrot.slane %v1208, 5
        %v2362 = vrot.slane %v1204, 6
        %v2363 = vor.u32 %v2361, %v2362
        %v2364 = vsel %vm2282, %v2360, %v2363
        %v2365 = vrot.slane %v2363, 4
        %v2367 = vshrl.u32 %v2267, 16
        %v2369 = vrot.slane %v2367, 5
        %v2370 = vshll.u32 %v2267, 16
        %v2372 = vrot.slane %v2370, 6
        %v2373 = vor.u32 %v2369, %v2372
        %v2374 = vsel %vm2282, %v2365, %v2373
        %v2376 = vshrl.u32 %v1526, 16
        %v2378 = vrot.slane %v2376, 5
        %v2379 = vshll.u32 %v1526, 16
        %v2381 = vrot.slane %v2379, 6
        %v2382 = vor.u32 %v2378, %v2381
        %v2383 = vrot.slane %v2382, 4
        %v2384 = vrot.slane %v1232, 5
        %v2385 = vrot.slane %v1228, 6
        %v2386 = vor.u32 %v2384, %v2385
        %v2387 = vsel %vm2282, %v2383, %v2386
        %v2388 = vrot.slane %v2386, 4
        %v2390 = vshrl.u32 %v2268, 16
        %v2392 = vrot.slane %v2390, 5
        %v2393 = vshll.u32 %v2268, 16
        %v2395 = vrot.slane %v2393, 6
        %v2396 = vor.u32 %v2392, %v2395
        %v2397 = vsel %vm2282, %v2388, %v2396
        %v2399 = vshrl.u32 %v1527, 16
        %v2401 = vrot.slane %v2399, 5
        %v2402 = vshll.u32 %v1527, 16
        %v2404 = vrot.slane %v2402, 6
        %v2405 = vor.u32 %v2401, %v2404
        %v2406 = vrot.slane %v2405, 4
        %v2407 = vrot.slane %v1256, 5
        %v2408 = vrot.slane %v1252, 6
        %v2409 = vor.u32 %v2407, %v2408
        %v2410 = vsel %vm2282, %v2406, %v2409
        %v2411 = vrot.slane %v2409, 4
        %v2413 = vshrl.u32 %v2269, 16
        %v2415 = vrot.slane %v2413, 5
        %v2416 = vshll.u32 %v2269, 16
        %v2418 = vrot.slane %v2416, 6
        %v2419 = vor.u32 %v2415, %v2418
        %v2420 = vsel %vm2282, %v2411, %v2419
        %v2422 = vshrl.u32 %v1528, 16
        %v2424 = vrot.slane %v2422, 5
        %v2425 = vshll.u32 %v1528, 16
        %v2427 = vrot.slane %v2425, 6
        %v2428 = vor.u32 %v2424, %v2427
        %v2429 = vrot.slane %v2428, 4
        %v2430 = vrot.slane %v1280, 5
        %v2431 = vrot.slane %v1276, 6
        %v2432 = vor.u32 %v2430, %v2431
        %v2433 = vsel %vm2282, %v2429, %v2432
        %v2434 = vrot.slane %v2432, 4
        %v2436 = vshrl.u32 %v2270, 16
        %v2438 = vrot.slane %v2436, 5
        %v2439 = vshll.u32 %v2270, 16
        %v2441 = vrot.slane %v2439, 6
        %v2442 = vor.u32 %v2438, %v2441
        %v2443 = vsel %vm2282, %v2434, %v2442
        %v2445 = vshrl.u32 %v1529, 16
        %v2447 = vrot.slane %v2445, 5
        %v2448 = vshll.u32 %v1529, 16
        %v2450 = vrot.slane %v2448, 6
        %v2451 = vor.u32 %v2447, %v2450
        %v2452 = vrot.slane %v2451, 4
        %v2453 = vrot.slane %v1304, 5
        %v2454 = vrot.slane %v1300, 6
        %v2455 = vor.u32 %v2453, %v2454
        %v2456 = vsel %vm2282, %v2452, %v2455
        %v2457 = vrot.slane %v2455, 4
        %v2459 = vshrl.u32 %v2271, 16
        %v2461 = vrot.slane %v2459, 5
        %v2462 = vshll.u32 %v2271, 16
        %v2464 = vrot.slane %v2462, 6
        %v2465 = vor.u32 %v2461, %v2464
        %v2466 = vsel %vm2282, %v2457, %v2465
        %v2468 = vshrl.u32 %v1530, 16
        %v2470 = vrot.slane %v2468, 5
        %v2471 = vshll.u32 %v1530, 16
        %v2473 = vrot.slane %v2471, 6
        %v2474 = vor.u32 %v2470, %v2473
        %v2475 = vrot.slane %v2474, 4
        %v2476 = vrot.slane %v1328, 5
        %v2477 = vrot.slane %v1324, 6
        %v2478 = vor.u32 %v2476, %v2477
        %v2479 = vsel %vm2282, %v2475, %v2478
        %v2480 = vrot.slane %v2478, 4
        %v2482 = vshrl.u32 %v2272, 16
        %v2484 = vrot.slane %v2482, 5
        %v2485 = vshll.u32 %v2272, 16
        %v2487 = vrot.slane %v2485, 6
        %v2488 = vor.u32 %v2484, %v2487
        %v2489 = vsel %vm2282, %v2480, %v2488
        %v2491 = vshrl.u32 %v1531, 16
        %v2493 = vrot.slane %v2491, 5
        %v2494 = vshll.u32 %v1531, 16
        %v2496 = vrot.slane %v2494, 6
        %v2497 = vor.u32 %v2493, %v2496
        %v2498 = vrot.slane %v2497, 4
        %v2499 = vrot.slane %v1352, 5
        %v2500 = vrot.slane %v1348, 6
        %v2501 = vor.u32 %v2499, %v2500
        %v2502 = vsel %vm2282, %v2498, %v2501
        %v2503 = vrot.slane %v2501, 4
        %v2505 = vshrl.u32 %v2273, 16
        %v2507 = vrot.slane %v2505, 5
        %v2508 = vshll.u32 %v2273, 16
        %v2510 = vrot.slane %v2508, 6
        %v2511 = vor.u32 %v2507, %v2510
        %v2512 = vsel %vm2282, %v2503, %v2511
        %v2514 = vshrl.u32 %v1532, 16
        %v2516 = vrot.slane %v2514, 5
        %v2517 = vshll.u32 %v1532, 16
        %v2519 = vrot.slane %v2517, 6
        %v2520 = vor.u32 %v2516, %v2519
        %v2521 = vrot.slane %v2520, 4
        %v2522 = vrot.slane %v1376, 5
        %v2523 = vrot.slane %v1372, 6
        %v2524 = vor.u32 %v2522, %v2523
        %v2525 = vsel %vm2282, %v2521, %v2524
        %v2526 = vrot.slane %v2524, 4
        %v2528 = vshrl.u32 %v2274, 16
        %v2530 = vrot.slane %v2528, 5
        %v2531 = vshll.u32 %v2274, 16
        %v2533 = vrot.slane %v2531, 6
        %v2534 = vor.u32 %v2530, %v2533
        %v2535 = vsel %vm2282, %v2526, %v2534
        %v2537 = vshrl.u32 %v1533, 16
        %v2539 = vrot.slane %v2537, 5
        %v2540 = vshll.u32 %v1533, 16
        %v2542 = vrot.slane %v2540, 6
        %v2543 = vor.u32 %v2539, %v2542
        %v2544 = vrot.slane %v2543, 4
        %v2545 = vrot.slane %v1400, 5
        %v2546 = vrot.slane %v1396, 6
        %v2547 = vor.u32 %v2545, %v2546
        %v2548 = vsel %vm2282, %v2544, %v2547
        %v2549 = vrot.slane %v2547, 4
        %v2551 = vshrl.u32 %v2275, 16
        %v2553 = vrot.slane %v2551, 5
        %v2554 = vshll.u32 %v2275, 16
        %v2556 = vrot.slane %v2554, 6
        %v2557 = vor.u32 %v2553, %v2556
        %v2558 = vsel %vm2282, %v2549, %v2557
        %v2560 = vshrl.u32 %v1534, 16
        %v2562 = vrot.slane %v2560, 5
        %v2563 = vshll.u32 %v1534, 16
        %v2565 = vrot.slane %v2563, 6
        %v2566 = vor.u32 %v2562, %v2565
        %v2567 = vrot.slane %v2566, 4
        %v2568 = vrot.slane %v1424, 5
        %v2569 = vrot.slane %v1420, 6
        %v2570 = vor.u32 %v2568, %v2569
        %v2571 = vsel %vm2282, %v2567, %v2570
        %v2572 = vrot.slane %v2570, 4
        %v2574 = vshrl.u32 %v2276, 16
        %v2576 = vrot.slane %v2574, 5
        %v2577 = vshll.u32 %v2276, 16
        %v2579 = vrot.slane %v2577, 6
        %v2580 = vor.u32 %v2576, %v2579
        %v2581 = vsel %vm2282, %v2572, %v2580
        %v2583 = vshrl.u32 %v1535, 16
        %v2585 = vrot.slane %v2583, 5
        %v2586 = vshll.u32 %v1535, 16
        %v2588 = vrot.slane %v2586, 6
        %v2589 = vor.u32 %v2585, %v2588
        %v2590 = vrot.slane %v2589, 4
        %v2591 = vrot.slane %v1448, 5
        %v2592 = vrot.slane %v1444, 6
        %v2593 = vor.u32 %v2591, %v2592
        %v2594 = vsel %vm2282, %v2590, %v2593
        %v2595 = vrot.slane %v2593, 4
        %v2597 = vshrl.u32 %v2277, 16
        %v2599 = vrot.slane %v2597, 5
        %v2600 = vshll.u32 %v2277, 16
        %v2602 = vrot.slane %v2600, 6
        %v2603 = vor.u32 %v2599, %v2602
        %v2604 = vsel %vm2282, %v2595, %v2603
        %v2606 = vshrl.u32 %v1536, 16
        %v2608 = vrot.slane %v2606, 5
        %v2609 = vshll.u32 %v1536, 16
        %v2611 = vrot.slane %v2609, 6
        %v2612 = vor.u32 %v2608, %v2611
        %v2613 = vrot.slane %v2612, 4
        %v2614 = vrot.slane %v1472, 5
        %v2615 = vrot.slane %v1468, 6
        %v2616 = vor.u32 %v2614, %v2615
        %v2617 = vsel %vm2282, %v2613, %v2616
        %v2618 = vrot.slane %v2616, 4
        %v2620 = vshrl.u32 %v2278, 16
        %v2622 = vrot.slane %v2620, 5
        %v2623 = vshll.u32 %v2278, 16
        %v2625 = vrot.slane %v2623, 6
        %v2626 = vor.u32 %v2622, %v2625
        %v2627 = vsel %vm2282, %v2618, %v2626
        %v2629 = vshrl.u32 %v1537, 16
        %v2631 = vrot.slane %v2629, 5
        %v2632 = vshll.u32 %v1537, 16
        %v2634 = vrot.slane %v2632, 6
        %v2635 = vor.u32 %v2631, %v2634
        %v2636 = vrot.slane %v2635, 4
        %v2637 = vrot.slane %v1496, 5
        %v2638 = vrot.slane %v1492, 6
        %v2639 = vor.u32 %v2637, %v2638
        %v2640 = vsel %vm2282, %v2636, %v2639
        %v2641 = vrot.slane %v2639, 4
        %v2643 = vshrl.u32 %v2279, 16
        %v2645 = vrot.slane %v2643, 5
        %v2646 = vshll.u32 %v2279, 16
        %v2648 = vrot.slane %v2646, 6
        %v2649 = vor.u32 %v2645, %v2648
        %v2650 = vsel %vm2282, %v2641, %v2649
        %s2651 = scalar_lea.vmem [#allocation8], 128
        %v2652 = vld [vmem:[%s2651] sm:$0xf]
        %v2653 = vld [vmem:[%s2651 + $0x4] sm:$0xf]
        %v2654 = vld [vmem:[%s2651 + $0x8] sm:$0xf]
        %v2655 = vld [vmem:[%s2651 + $0xc] sm:$0xf]
        %v2656 = vld [vmem:[%s2651 + $0x10] sm:$0xf]
        %v2657 = vld [vmem:[%s2651 + $0x14] sm:$0xf]
        %v2658 = vld [vmem:[%s2651 + $0x18] sm:$0xf]
        %v2659 = vld [vmem:[%s2651 + $0x1c] sm:$0xf]
        %v2660 = vld [vmem:[%s2651 + $0x20] sm:$0xf]
        %v2661 = vld [vmem:[%s2651 + $0x24] sm:$0xf]
        %v2662 = vld [vmem:[%s2651 + $0x28] sm:$0xf]
        %v2663 = vld [vmem:[%s2651 + $0x2c] sm:$0xf]
        %v2664 = vld [vmem:[%s2651 + $0x30] sm:$0xf]
        %v2665 = vld [vmem:[%s2651 + $0x34] sm:$0xf]
        %v2666 = vld [vmem:[%s2651 + $0x38] sm:$0xf]
        %v2667 = vld [vmem:[%s2651 + $0x3c] sm:$0xf]
        %v2668 = vunpack.c.l.b16 %v2295
        %v2669 = vunpack.c.l.b16 %v2305
        %v2670 = vunpack.c.l.b16 %v2318
        %v2671 = vunpack.c.l.b16 %v2328
        %v2672 = vunpack.c.l.b16 %v2341
        %v2673 = vunpack.c.l.b16 %v2351
        %v2674 = vunpack.c.l.b16 %v2364
        %v2675 = vunpack.c.l.b16 %v2374
        %v2676 = vunpack.c.l.b16 %v2387
        %v2677 = vunpack.c.l.b16 %v2397
        %v2678 = vunpack.c.l.b16 %v2410
        %v2679 = vunpack.c.l.b16 %v2420
        %v2680 = vunpack.c.l.b16 %v2433
        %v2681 = vunpack.c.l.b16 %v2443
        %v2682 = vunpack.c.l.b16 %v2456
        %v2683 = vunpack.c.l.b16 %v2466
        %v2684 = vunpack.c.l.b16 %v2479
        %v2685 = vunpack.c.l.b16 %v2489
        %v2686 = vunpack.c.l.b16 %v2502
        %v2687 = vunpack.c.l.b16 %v2512
        %v2688 = vunpack.c.l.b16 %v2525
        %v2689 = vunpack.c.l.b16 %v2535
        %v2690 = vunpack.c.l.b16 %v2548
        %v2691 = vunpack.c.l.b16 %v2558
        %v2692 = vunpack.c.l.b16 %v2571
        %v2693 = vunpack.c.l.b16 %v2581
        %v2694 = vunpack.c.l.b16 %v2594
        %v2695 = vunpack.c.l.b16 %v2604
        %v2696 = vunpack.c.l.b16 %v2617
        %v2697 = vunpack.c.l.b16 %v2627
        %v2698 = vunpack.c.l.b16 %v2640
        %v2699 = vunpack.c.l.b16 %v2650
        %v2700 = vpack.c.b16 %v2669, %v2668
        %v2701 = vpack.c.b16 %v2671, %v2670
        %v2702 = vpack.c.b16 %v2673, %v2672
        %v2703 = vpack.c.b16 %v2675, %v2674
        %v2704 = vpack.c.b16 %v2677, %v2676
        %v2705 = vpack.c.b16 %v2679, %v2678
        %v2706 = vpack.c.b16 %v2681, %v2680
        %v2707 = vpack.c.b16 %v2683, %v2682
        %v2708 = vpack.c.b16 %v2685, %v2684
        %v2709 = vpack.c.b16 %v2687, %v2686
        %v2710 = vpack.c.b16 %v2689, %v2688
        %v2711 = vpack.c.b16 %v2691, %v2690
        %v2712 = vpack.c.b16 %v2693, %v2692
        %v2713 = vpack.c.b16 %v2695, %v2694
        %v2714 = vpack.c.b16 %v2697, %v2696
        %v2715 = vpack.c.b16 %v2699, %v2698
        %v2748 = vunpack.c.l.b16 %v2652
        %v2749 = vunpack.c.l.b16 %v2653
        %v2750 = vunpack.c.l.b16 %v2654
        %v2751 = vunpack.c.l.b16 %v2655
        %v2752 = vunpack.c.l.b16 %v2656
        %v2753 = vunpack.c.l.b16 %v2657
        %v2754 = vunpack.c.l.b16 %v2658
        %v2755 = vunpack.c.l.b16 %v2659
        %v2756 = vunpack.c.l.b16 %v2660
        %v2757 = vunpack.c.l.b16 %v2661
        %v2758 = vunpack.c.l.b16 %v2662
        %v2759 = vunpack.c.l.b16 %v2663
        %v2760 = vunpack.c.l.b16 %v2664
        %v2761 = vunpack.c.l.b16 %v2665
        %v2762 = vunpack.c.l.b16 %v2666
        %v2763 = vunpack.c.l.b16 %v2667
        %v2764 = vpack.c.b16 %v2749, %v2748
        %v2765 = vpack.c.b16 %v2751, %v2750
        %v2766 = vpack.c.b16 %v2753, %v2752
        %v2767 = vpack.c.b16 %v2755, %v2754
        %v2768 = vpack.c.b16 %v2757, %v2756
        %v2769 = vpack.c.b16 %v2759, %v2758
        %v2770 = vpack.c.b16 %v2761, %v2760
        %v2771 = vpack.c.b16 %v2763, %v2762
        %2780 = vmatprep.subr.bf16.mxu0 0
        %2781 = vmatpush1.bf16.msra.mxu0 %v2764
        %2782 = vmatprep.subr.bf16.mxu0 0
        %2783 = vmatpush1.bf16.msra.mxu0 %v2765
        %2784 = vmatprep.subr.bf16.mxu0 0
        %2785 = vmatpush1.bf16.msra.mxu0 %v2766
        %2786 = vmatprep.subr.bf16.mxu0 0
        %2787 = vmatpush1.bf16.msra.mxu0 %v2767
        %2788 = vmatprep.subr.bf16.mxu0 0
        %2789 = vmatpush1.bf16.msra.mxu0 %v2768
        %2790 = vmatprep.subr.bf16.mxu0 0
        %2791 = vmatpush1.bf16.msra.mxu0 %v2769
        %2792 = vmatprep.subr.bf16.mxu0 0
        %2793 = vmatpush1.bf16.msra.mxu0 %v2770
        %2794 = vmatprep.subr.bf16.mxu0 0
        %2795 = vmatpush1.bf16.msra.mxu0 %v2771
        %2796 = vmatprep.subr.bf16.mxu0 0
        %2797 = vmatpush1.bf16.msra.mxu0 0
        %2798 = vmatprep.subr.bf16.mxu0 0
        %2799 = vmatpush1.bf16.msra.mxu0 0
        %2800 = vmatprep.subr.bf16.mxu0 0
        %2801 = vmatpush1.bf16.msra.mxu0 0
        %2802 = vmatprep.subr.bf16.mxu0 0
        %2803 = vmatpush1.bf16.msra.mxu0 0
        %2804 = vmatprep.subr.bf16.mxu0 0
        %2805 = vmatpush1.bf16.msra.mxu0 0
        %2806 = vmatprep.subr.bf16.mxu0 0
        %2807 = vmatpush1.bf16.msra.mxu0 0
        %2808 = vmatprep.subr.bf16.mxu0 0
        %2809 = vmatpush1.bf16.msra.mxu0 0
        %2810 = vmatprep.subr.bf16.mxu0 0
        %2811 = vmatpush1.bf16.msra.mxu0 0
        %2812 = vmatprep.mubr.bf16.mxu0 0
        %2813 = vmatmul.mubr.bf16.gmra.mrb[0].mxu0 %v2700
        %v2814 = vpop.f32.mrb[0].mxu0
        %v2815 = vadd.f32 0.0, %v2814
        %v2816 = vpop.f32.mrb[0].mxu0
        %v2817 = vpop.f32.mrb[0].mxu0
        %v2818 = vadd.f32 0.0, %v2817
        %v2819 = vpop.f32.mrb[0].mxu0
        %2820 = vmatprep.mubr.bf16.mxu0 0
        %2821 = vmatmul.mubr.bf16.gmra.mrb[0].mxu0 %v2701
        %v2822 = vpop.f32.mrb[0].mxu0
        %v2823 = vadd.f32 0.0, %v2822
        %v2824 = vpop.f32.mrb[0].mxu0
        %v2825 = vpop.f32.mrb[0].mxu0
        %v2826 = vadd.f32 0.0, %v2825
        %v2827 = vpop.f32.mrb[0].mxu0
        %2828 = vmatprep.mubr.bf16.mxu0 0
        %2829 = vmatmul.mubr.bf16.gmra.mrb[0].mxu0 %v2702
        %v2830 = vpop.f32.mrb[0].mxu0
        %v2831 = vadd.f32 0.0, %v2830
        %v2832 = vpop.f32.mrb[0].mxu0
        %v2833 = vpop.f32.mrb[0].mxu0
        %v2834 = vadd.f32 0.0, %v2833
        %v2835 = vpop.f32.mrb[0].mxu0
        %2836 = vmatprep.mubr.bf16.mxu0 0
        %2837 = vmatmul.mubr.bf16.gmra.mrb[0].mxu0 %v2703
        %v2838 = vpop.f32.mrb[0].mxu0
        %v2839 = vadd.f32 0.0, %v2838
        %v2840 = vpop.f32.mrb[0].mxu0
        %v2841 = vpop.f32.mrb[0].mxu0
        %v2842 = vadd.f32 0.0, %v2841
        %v2843 = vpop.f32.mrb[0].mxu0
        %2844 = vmatprep.mubr.bf16.mxu0 0
        %2845 = vmatmul.mubr.bf16.gmra.mrb[0].mxu0 %v2704
        %v2846 = vpop.f32.mrb[0].mxu0
        %v2847 = vadd.f32 0.0, %v2846
        %v2848 = vpop.f32.mrb[0].mxu0
        %v2849 = vpop.f32.mrb[0].mxu0
        %v2850 = vadd.f32 0.0, %v2849
        %v2851 = vpop.f32.mrb[0].mxu0
        %2852 = vmatprep.mubr.bf16.mxu0 0
        %2853 = vmatmul.mubr.bf16.gmra.mrb[0].mxu0 %v2705
        %v2854 = vpop.f32.mrb[0].mxu0
        %v2855 = vadd.f32 0.0, %v2854
        %v2856 = vpop.f32.mrb[0].mxu0
        %v2857 = vpop.f32.mrb[0].mxu0
        %v2858 = vadd.f32 0.0, %v2857
        %v2859 = vpop.f32.mrb[0].mxu0
        %2860 = vmatprep.mubr.bf16.mxu0 0
        %2861 = vmatmul.mubr.bf16.gmra.mrb[0].mxu0 %v2706
        %v2862 = vpop.f32.mrb[0].mxu0
        %v2863 = vadd.f32 0.0, %v2862
        %v2864 = vpop.f32.mrb[0].mxu0
        %v2865 = vpop.f32.mrb[0].mxu0
        %v2866 = vadd.f32 0.0, %v2865
        %v2867 = vpop.f32.mrb[0].mxu0
        %2868 = vmatprep.mubr.bf16.mxu0 0
        %2869 = vmatmul.mubr.bf16.gmra.mrb[0].mxu0 %v2707
        %v2870 = vpop.f32.mrb[0].mxu0
        %v2871 = vadd.f32 0.0, %v2870
        %v2872 = vpop.f32.mrb[0].mxu0
        %v2873 = vpop.f32.mrb[0].mxu0
        %v2874 = vadd.f32 0.0, %v2873
        %v2875 = vpop.f32.mrb[0].mxu0
        %2876 = vmatprep.mubr.bf16.mxu0 0
        %2877 = vmatmul.mubr.bf16.gmra.mrb[0].mxu0 %v2708
        %v2878 = vpop.f32.mrb[0].mxu0
        %v2879 = vadd.f32 0.0, %v2878
        %v2880 = vpop.f32.mrb[0].mxu0
        %v2881 = vpop.f32.mrb[0].mxu0
        %v2882 = vadd.f32 0.0, %v2881
        %v2883 = vpop.f32.mrb[0].mxu0
        %2884 = vmatprep.mubr.bf16.mxu0 0
        %2885 = vmatmul.mubr.bf16.gmra.mrb[0].mxu0 %v2709
        %v2886 = vpop.f32.mrb[0].mxu0
        %v2887 = vadd.f32 0.0, %v2886
        %v2888 = vpop.f32.mrb[0].mxu0
        %v2889 = vpop.f32.mrb[0].mxu0
        %v2890 = vadd.f32 0.0, %v2889
        %v2891 = vpop.f32.mrb[0].mxu0
        %2892 = vmatprep.mubr.bf16.mxu0 0
        %2893 = vmatmul.mubr.bf16.gmra.mrb[0].mxu0 %v2710
        %v2894 = vpop.f32.mrb[0].mxu0
        %v2895 = vadd.f32 0.0, %v2894
        %v2896 = vpop.f32.mrb[0].mxu0
        %v2897 = vpop.f32.mrb[0].mxu0
        %v2898 = vadd.f32 0.0, %v2897
        %v2899 = vpop.f32.mrb[0].mxu0
        %2900 = vmatprep.mubr.bf16.mxu0 0
        %2901 = vmatmul.mubr.bf16.gmra.mrb[0].mxu0 %v2711
        %v2902 = vpop.f32.mrb[0].mxu0
        %v2903 = vadd.f32 0.0, %v2902
        %v2904 = vpop.f32.mrb[0].mxu0
        %v2905 = vpop.f32.mrb[0].mxu0
        %v2906 = vadd.f32 0.0, %v2905
        %v2907 = vpop.f32.mrb[0].mxu0
        %2908 = vmatprep.mubr.bf16.mxu0 0
        %2909 = vmatmul.mubr.bf16.gmra.mrb[0].mxu0 %v2712
        %v2910 = vpop.f32.mrb[0].mxu0
        %v2911 = vadd.f32 0.0, %v2910
        %v2912 = vpop.f32.mrb[0].mxu0
        %v2913 = vpop.f32.mrb[0].mxu0
        %v2914 = vadd.f32 0.0, %v2913
        %v2915 = vpop.f32.mrb[0].mxu0
        %2916 = vmatprep.mubr.bf16.mxu0 0
        %2917 = vmatmul.mubr.bf16.gmra.mrb[0].mxu0 %v2713
        %v2918 = vpop.f32.mrb[0].mxu0
        %v2919 = vadd.f32 0.0, %v2918
        %v2920 = vpop.f32.mrb[0].mxu0
        %v2921 = vpop.f32.mrb[0].mxu0
        %v2922 = vadd.f32 0.0, %v2921
        %v2923 = vpop.f32.mrb[0].mxu0
        %2924 = vmatprep.mubr.bf16.mxu0 0
        %2925 = vmatmul.mubr.bf16.gmra.mrb[0].mxu0 %v2714
        %v2926 = vpop.f32.mrb[0].mxu0
        %v2927 = vadd.f32 0.0, %v2926
        %v2928 = vpop.f32.mrb[0].mxu0
        %v2929 = vpop.f32.mrb[0].mxu0
        %v2930 = vadd.f32 0.0, %v2929
        %v2931 = vpop.f32.mrb[0].mxu0
        %2932 = vmatprep.mubr.bf16.mxu0 0
        %2933 = vmatmul.mubr.bf16.gmra.mrb[0].mxu0 %v2715
        %v2934 = vpop.f32.mrb[0].mxu0
        %v2935 = vadd.f32 0.0, %v2934
        %v2936 = vpop.f32.mrb[0].mxu0
        %v2937 = vpop.f32.mrb[0].mxu0
        %v2938 = vadd.f32 0.0, %v2937
        %v2939 = vpop.f32.mrb[0].mxu0
        %2940 = vdwg.mxu0
        %v2941 = vadd.f32 %v2138, %v2815
        %v2942 = vadd.f32 %v2141, %v2818
        %v2943 = vadd.f32 %v2146, %v2823
        %v2944 = vadd.f32 %v2149, %v2826
        %v2945 = vadd.f32 %v2154, %v2831
        %v2946 = vadd.f32 %v2157, %v2834
        %v2947 = vadd.f32 %v2162, %v2839
        %v2948 = vadd.f32 %v2165, %v2842
        %v2949 = vadd.f32 %v2170, %v2847
        %v2950 = vadd.f32 %v2173, %v2850
        %v2951 = vadd.f32 %v2178, %v2855
        %v2952 = vadd.f32 %v2181, %v2858
        %v2953 = vadd.f32 %v2186, %v2863
        %v2954 = vadd.f32 %v2189, %v2866
        %v2955 = vadd.f32 %v2194, %v2871
        %v2956 = vadd.f32 %v2197, %v2874
        %v2957 = vadd.f32 %v2202, %v2879
        %v2958 = vadd.f32 %v2205, %v2882
        %v2959 = vadd.f32 %v2210, %v2887
        %v2960 = vadd.f32 %v2213, %v2890
        %v2961 = vadd.f32 %v2218, %v2895
        %v2962 = vadd.f32 %v2221, %v2898
        %v2963 = vadd.f32 %v2226, %v2903
        %v2964 = vadd.f32 %v2229, %v2906
        %v2965 = vadd.f32 %v2234, %v2911
        %v2966 = vadd.f32 %v2237, %v2914
        %v2967 = vadd.f32 %v2242, %v2919
        %v2968 = vadd.f32 %v2245, %v2922
        %v2969 = vadd.f32 %v2250, %v2927
        %v2970 = vadd.f32 %v2253, %v2930
        %v2971 = vadd.f32 %v2258, %v2935
        %v2972 = vadd.f32 %v2261, %v2938
        %v2973 = vld [vmem:[%s961] sm:$0xf]
        %v2974 = vld [vmem:[%s961 + $0x4] sm:$0xf]
        %v2975 = vld [vmem:[%s961 + $0x8] sm:$0x1]
        %v2976 = vld [vmem:[%s961 + $0xc] sm:$0xf]
        %v2977 = vld [vmem:[%s961 + $0x10] sm:$0xf]
        %v2978 = vld [vmem:[%s961 + $0x14] sm:$0x1]
        %v2979 = vld [vmem:[%s961 + $0x18] sm:$0xf]
        %v2980 = vld [vmem:[%s961 + $0x1c] sm:$0xf]
        %v2981 = vld [vmem:[%s961 + $0x20] sm:$0x1]
        %v2982 = vld [vmem:[%s961 + $0x24] sm:$0xf]
        %v2983 = vld [vmem:[%s961 + $0x28] sm:$0xf]
        %v2984 = vld [vmem:[%s961 + $0x2c] sm:$0x1]
        %v2985 = vld [vmem:[%s961 + $0x30] sm:$0xf]
        %v2986 = vld [vmem:[%s961 + $0x34] sm:$0xf]
        %v2987 = vld [vmem:[%s961 + $0x38] sm:$0x1]
        %v2988 = vld [vmem:[%s961 + $0x3c] sm:$0xf]
        %v2989 = vld [vmem:[%s961 + $0x40] sm:$0xf]
        %v2990 = vld [vmem:[%s961 + $0x44] sm:$0x1]
        %v2991 = vld [vmem:[%s961 + $0x48] sm:$0xf]
        %v2992 = vld [vmem:[%s961 + $0x4c] sm:$0xf]
        %v2993 = vld [vmem:[%s961 + $0x50] sm:$0x1]
        %v2994 = vld [vmem:[%s961 + $0x54] sm:$0xf]
        %v2995 = vld [vmem:[%s961 + $0x58] sm:$0xf]
        %v2996 = vld [vmem:[%s961 + $0x5c] sm:$0x1]
        %v2997 = vld [vmem:[%s961 + $0x60] sm:$0xf]
        %v2998 = vld [vmem:[%s961 + $0x64] sm:$0xf]
        %v2999 = vld [vmem:[%s961 + $0x68] sm:$0x1]
        %v3000 = vld [vmem:[%s961 + $0x6c] sm:$0xf]
        %v3001 = vld [vmem:[%s961 + $0x70] sm:$0xf]
        %v3002 = vld [vmem:[%s961 + $0x74] sm:$0x1]
        %v3003 = vld [vmem:[%s961 + $0x78] sm:$0xf]
        %v3004 = vld [vmem:[%s961 + $0x7c] sm:$0xf]
        %v3005 = vld [vmem:[%s961 + $0x80] sm:$0x1]
        %v3006 = vld [vmem:[%s961 + $0x84] sm:$0xf]
        %v3007 = vld [vmem:[%s961 + $0x88] sm:$0xf]
        %v3008 = vld [vmem:[%s961 + $0x8c] sm:$0x1]
        %v3009 = vld [vmem:[%s961 + $0x90] sm:$0xf]
        %v3010 = vld [vmem:[%s961 + $0x94] sm:$0xf]
        %v3011 = vld [vmem:[%s961 + $0x98] sm:$0x1]
        %v3012 = vld [vmem:[%s961 + $0x9c] sm:$0xf]
        %v3013 = vld [vmem:[%s961 + $0xa0] sm:$0xf]
        %v3014 = vld [vmem:[%s961 + $0xa4] sm:$0x1]
        %v3015 = vld [vmem:[%s961 + $0xa8] sm:$0xf]
        %v3016 = vld [vmem:[%s961 + $0xac] sm:$0xf]
        %v3017 = vld [vmem:[%s961 + $0xb0] sm:$0x1]
        %v3018 = vld [vmem:[%s961 + $0xb4] sm:$0xf]
        %v3019 = vld [vmem:[%s961 + $0xb8] sm:$0xf]
        %v3020 = vld [vmem:[%s961 + $0xbc] sm:$0x1]
        %v3022 = vshrl.u32 %v2973, 16
        %v3024 = vrot.slane %v3022, 4
        %v3025 = vshll.u32 %v2973, 16
        %v3027 = vrot.slane %v3025, 5
        %v3028 = vor.u32 %v3024, %v3027
        %v3029 = vrot.slane %v3028, 4
        %v3031 = vshll.u32 %v2974, 16
        %v3033 = vrot.slane %v3031, 5
        %v3034 = vsel %vm1121, %v3029, %v3033
        %v3035 = vshrl.u32 %v2974, 16
        %v3037 = vrot.slane %v3035, 4
        %v3038 = vor.u32 %v3037, %v3033
        %v3039 = vrot.slane %v3038, 4
        %v3041 = vshll.u32 %v2975, 16
        %v3043 = vrot.slane %v3041, 5
        %v3044 = vsel %vm1121, %v3039, %v3043
        %v3046 = vshrl.u32 %v2976, 16
        %v3048 = vrot.slane %v3046, 4
        %v3049 = vshll.u32 %v2976, 16
        %v3051 = vrot.slane %v3049, 5
        %v3052 = vor.u32 %v3048, %v3051
        %v3053 = vrot.slane %v3052, 4
        %v3055 = vshll.u32 %v2977, 16
        %v3057 = vrot.slane %v3055, 5
        %v3058 = vsel %vm1121, %v3053, %v3057
        %v3059 = vshrl.u32 %v2977, 16
        %v3061 = vrot.slane %v3059, 4
        %v3062 = vor.u32 %v3061, %v3057
        %v3063 = vrot.slane %v3062, 4
        %v3065 = vshll.u32 %v2978, 16
        %v3067 = vrot.slane %v3065, 5
        %v3068 = vsel %vm1121, %v3063, %v3067
        %v3070 = vshrl.u32 %v2979, 16
        %v3072 = vrot.slane %v3070, 4
        %v3073 = vshll.u32 %v2979, 16
        %v3075 = vrot.slane %v3073, 5
        %v3076 = vor.u32 %v3072, %v3075
        %v3077 = vrot.slane %v3076, 4
        %v3079 = vshll.u32 %v2980, 16
        %v3081 = vrot.slane %v3079, 5
        %v3082 = vsel %vm1121, %v3077, %v3081
        %v3083 = vshrl.u32 %v2980, 16
        %v3085 = vrot.slane %v3083, 4
        %v3086 = vor.u32 %v3085, %v3081
        %v3087 = vrot.slane %v3086, 4
        %v3089 = vshll.u32 %v2981, 16
        %v3091 = vrot.slane %v3089, 5
        %v3092 = vsel %vm1121, %v3087, %v3091
        %v3094 = vshrl.u32 %v2982, 16
        %v3096 = vrot.slane %v3094, 4
        %v3097 = vshll.u32 %v2982, 16
        %v3099 = vrot.slane %v3097, 5
        %v3100 = vor.u32 %v3096, %v3099
        %v3101 = vrot.slane %v3100, 4
        %v3103 = vshll.u32 %v2983, 16
        %v3105 = vrot.slane %v3103, 5
        %v3106 = vsel %vm1121, %v3101, %v3105
        %v3107 = vshrl.u32 %v2983, 16
        %v3109 = vrot.slane %v3107, 4
        %v3110 = vor.u32 %v3109, %v3105
        %v3111 = vrot.slane %v3110, 4
        %v3113 = vshll.u32 %v2984, 16
        %v3115 = vrot.slane %v3113, 5
        %v3116 = vsel %vm1121, %v3111, %v3115
        %v3118 = vshrl.u32 %v2985, 16
        %v3120 = vrot.slane %v3118, 4
        %v3121 = vshll.u32 %v2985, 16
        %v3123 = vrot.slane %v3121, 5
        %v3124 = vor.u32 %v3120, %v3123
        %v3125 = vrot.slane %v3124, 4
        %v3127 = vshll.u32 %v2986, 16
        %v3129 = vrot.slane %v3127, 5
        %v3130 = vsel %vm1121, %v3125, %v3129
        %v3131 = vshrl.u32 %v2986, 16
        %v3133 = vrot.slane %v3131, 4
        %v3134 = vor.u32 %v3133, %v3129
        %v3135 = vrot.slane %v3134, 4
        %v3137 = vshll.u32 %v2987, 16
        %v3139 = vrot.slane %v3137, 5
        %v3140 = vsel %vm1121, %v3135, %v3139
        %v3142 = vshrl.u32 %v2988, 16
        %v3144 = vrot.slane %v3142, 4
        %v3145 = vshll.u32 %v2988, 16
        %v3147 = vrot.slane %v3145, 5
        %v3148 = vor.u32 %v3144, %v3147
        %v3149 = vrot.slane %v3148, 4
        %v3151 = vshll.u32 %v2989, 16
        %v3153 = vrot.slane %v3151, 5
        %v3154 = vsel %vm1121, %v3149, %v3153
        %v3155 = vshrl.u32 %v2989, 16
        %v3157 = vrot.slane %v3155, 4
        %v3158 = vor.u32 %v3157, %v3153
        %v3159 = vrot.slane %v3158, 4
        %v3161 = vshll.u32 %v2990, 16
        %v3163 = vrot.slane %v3161, 5
        %v3164 = vsel %vm1121, %v3159, %v3163
        %v3166 = vshrl.u32 %v2991, 16
        %v3168 = vrot.slane %v3166, 4
        %v3169 = vshll.u32 %v2991, 16
        %v3171 = vrot.slane %v3169, 5
        %v3172 = vor.u32 %v3168, %v3171
        %v3173 = vrot.slane %v3172, 4
        %v3175 = vshll.u32 %v2992, 16
        %v3177 = vrot.slane %v3175, 5
        %v3178 = vsel %vm1121, %v3173, %v3177
        %v3179 = vshrl.u32 %v2992, 16
        %v3181 = vrot.slane %v3179, 4
        %v3182 = vor.u32 %v3181, %v3177
        %v3183 = vrot.slane %v3182, 4
        %v3185 = vshll.u32 %v2993, 16
        %v3187 = vrot.slane %v3185, 5
        %v3188 = vsel %vm1121, %v3183, %v3187
        %v3190 = vshrl.u32 %v2994, 16
        %v3192 = vrot.slane %v3190, 4
        %v3193 = vshll.u32 %v2994, 16
        %v3195 = vrot.slane %v3193, 5
        %v3196 = vor.u32 %v3192, %v3195
        %v3197 = vrot.slane %v3196, 4
        %v3199 = vshll.u32 %v2995, 16
        %v3201 = vrot.slane %v3199, 5
        %v3202 = vsel %vm1121, %v3197, %v3201
        %v3203 = vshrl.u32 %v2995, 16
        %v3205 = vrot.slane %v3203, 4
        %v3206 = vor.u32 %v3205, %v3201
        %v3207 = vrot.slane %v3206, 4
        %v3209 = vshll.u32 %v2996, 16
        %v3211 = vrot.slane %v3209, 5
        %v3212 = vsel %vm1121, %v3207, %v3211
        %v3214 = vshrl.u32 %v2997, 16
        %v3216 = vrot.slane %v3214, 4
        %v3217 = vshll.u32 %v2997, 16
        %v3219 = vrot.slane %v3217, 5
        %v3220 = vor.u32 %v3216, %v3219
        %v3221 = vrot.slane %v3220, 4
        %v3223 = vshll.u32 %v2998, 16
        %v3225 = vrot.slane %v3223, 5
        %v3226 = vsel %vm1121, %v3221, %v3225
        %v3227 = vshrl.u32 %v2998, 16
        %v3229 = vrot.slane %v3227, 4
        %v3230 = vor.u32 %v3229, %v3225
        %v3231 = vrot.slane %v3230, 4
        %v3233 = vshll.u32 %v2999, 16
        %v3235 = vrot.slane %v3233, 5
        %v3236 = vsel %vm1121, %v3231, %v3235
        %v3238 = vshrl.u32 %v3000, 16
        %v3240 = vrot.slane %v3238, 4
        %v3241 = vshll.u32 %v3000, 16
        %v3243 = vrot.slane %v3241, 5
        %v3244 = vor.u32 %v3240, %v3243
        %v3245 = vrot.slane %v3244, 4
        %v3247 = vshll.u32 %v3001, 16
        %v3249 = vrot.slane %v3247, 5
        %v3250 = vsel %vm1121, %v3245, %v3249
        %v3251 = vshrl.u32 %v3001, 16
        %v3253 = vrot.slane %v3251, 4
        %v3254 = vor.u32 %v3253, %v3249
        %v3255 = vrot.slane %v3254, 4
        %v3257 = vshll.u32 %v3002, 16
        %v3259 = vrot.slane %v3257, 5
        %v3260 = vsel %vm1121, %v3255, %v3259
        %v3262 = vshrl.u32 %v3003, 16
        %v3264 = vrot.slane %v3262, 4
        %v3265 = vshll.u32 %v3003, 16
        %v3267 = vrot.slane %v3265, 5
        %v3268 = vor.u32 %v3264, %v3267
        %v3269 = vrot.slane %v3268, 4
        %v3271 = vshll.u32 %v3004, 16
        %v3273 = vrot.slane %v3271, 5
        %v3274 = vsel %vm1121, %v3269, %v3273
        %v3275 = vshrl.u32 %v3004, 16
        %v3277 = vrot.slane %v3275, 4
        %v3278 = vor.u32 %v3277, %v3273
        %v3279 = vrot.slane %v3278, 4
        %v3281 = vshll.u32 %v3005, 16
        %v3283 = vrot.slane %v3281, 5
        %v3284 = vsel %vm1121, %v3279, %v3283
        %v3286 = vshrl.u32 %v3006, 16
        %v3288 = vrot.slane %v3286, 4
        %v3289 = vshll.u32 %v3006, 16
        %v3291 = vrot.slane %v3289, 5
        %v3292 = vor.u32 %v3288, %v3291
        %v3293 = vrot.slane %v3292, 4
        %v3295 = vshll.u32 %v3007, 16
        %v3297 = vrot.slane %v3295, 5
        %v3298 = vsel %vm1121, %v3293, %v3297
        %v3299 = vshrl.u32 %v3007, 16
        %v3301 = vrot.slane %v3299, 4
        %v3302 = vor.u32 %v3301, %v3297
        %v3303 = vrot.slane %v3302, 4
        %v3305 = vshll.u32 %v3008, 16
        %v3307 = vrot.slane %v3305, 5
        %v3308 = vsel %vm1121, %v3303, %v3307
        %v3310 = vshrl.u32 %v3009, 16
        %v3312 = vrot.slane %v3310, 4
        %v3313 = vshll.u32 %v3009, 16
        %v3315 = vrot.slane %v3313, 5
        %v3316 = vor.u32 %v3312, %v3315
        %v3317 = vrot.slane %v3316, 4
        %v3319 = vshll.u32 %v3010, 16
        %v3321 = vrot.slane %v3319, 5
        %v3322 = vsel %vm1121, %v3317, %v3321
        %v3323 = vshrl.u32 %v3010, 16
        %v3325 = vrot.slane %v3323, 4
        %v3326 = vor.u32 %v3325, %v3321
        %v3327 = vrot.slane %v3326, 4
        %v3329 = vshll.u32 %v3011, 16
        %v3331 = vrot.slane %v3329, 5
        %v3332 = vsel %vm1121, %v3327, %v3331
        %v3334 = vshrl.u32 %v3012, 16
        %v3336 = vrot.slane %v3334, 4
        %v3337 = vshll.u32 %v3012, 16
        %v3339 = vrot.slane %v3337, 5
        %v3340 = vor.u32 %v3336, %v3339
        %v3341 = vrot.slane %v3340, 4
        %v3343 = vshll.u32 %v3013, 16
        %v3345 = vrot.slane %v3343, 5
        %v3346 = vsel %vm1121, %v3341, %v3345
        %v3347 = vshrl.u32 %v3013, 16
        %v3349 = vrot.slane %v3347, 4
        %v3350 = vor.u32 %v3349, %v3345
        %v3351 = vrot.slane %v3350, 4
        %v3353 = vshll.u32 %v3014, 16
        %v3355 = vrot.slane %v3353, 5
        %v3356 = vsel %vm1121, %v3351, %v3355
        %v3358 = vshrl.u32 %v3015, 16
        %v3360 = vrot.slane %v3358, 4
        %v3361 = vshll.u32 %v3015, 16
        %v3363 = vrot.slane %v3361, 5
        %v3364 = vor.u32 %v3360, %v3363
        %v3365 = vrot.slane %v3364, 4
        %v3367 = vshll.u32 %v3016, 16
        %v3369 = vrot.slane %v3367, 5
        %v3370 = vsel %vm1121, %v3365, %v3369
        %v3371 = vshrl.u32 %v3016, 16
        %v3373 = vrot.slane %v3371, 4
        %v3374 = vor.u32 %v3373, %v3369
        %v3375 = vrot.slane %v3374, 4
        %v3377 = vshll.u32 %v3017, 16
        %v3379 = vrot.slane %v3377, 5
        %v3380 = vsel %vm1121, %v3375, %v3379
        %v3382 = vshrl.u32 %v3018, 16
        %v3384 = vrot.slane %v3382, 4
        %v3385 = vshll.u32 %v3018, 16
        %v3387 = vrot.slane %v3385, 5
        %v3388 = vor.u32 %v3384, %v3387
        %v3389 = vrot.slane %v3388, 4
        %v3391 = vshll.u32 %v3019, 16
        %v3393 = vrot.slane %v3391, 5
        %v3394 = vsel %vm1121, %v3389, %v3393
        %v3395 = vshrl.u32 %v3019, 16
        %v3397 = vrot.slane %v3395, 4
        %v3398 = vor.u32 %v3397, %v3393
        %v3399 = vrot.slane %v3398, 4
        %v3401 = vshll.u32 %v3020, 16
        %v3403 = vrot.slane %v3401, 5
        %v3404 = vsel %vm1121, %v3399, %v3403
        %s3405 = scalar_lea.vmem [#allocation8], 192
        %v3406 = vld [vmem:[%s3405] sm:$0xf]
        %v3407 = vld [vmem:[%s3405 + $0x4] sm:$0xf]
        %v3408 = vld [vmem:[%s3405 + $0x8] sm:$0xf]
        %v3409 = vld [vmem:[%s3405 + $0xc] sm:$0xf]
        %v3410 = vld [vmem:[%s3405 + $0x10] sm:$0xf]
        %v3411 = vld [vmem:[%s3405 + $0x14] sm:$0xf]
        %v3412 = vld [vmem:[%s3405 + $0x18] sm:$0xf]
        %v3413 = vld [vmem:[%s3405 + $0x1c] sm:$0xf]
        %v3414 = vld [vmem:[%s3405 + $0x20] sm:$0xf]
        %v3415 = vld [vmem:[%s3405 + $0x24] sm:$0xf]
        %v3416 = vld [vmem:[%s3405 + $0x28] sm:$0xf]
        %v3417 = vld [vmem:[%s3405 + $0x2c] sm:$0xf]
        %v3418 = vld [vmem:[%s3405 + $0x30] sm:$0xf]
        %v3419 = vld [vmem:[%s3405 + $0x34] sm:$0xf]
        %v3420 = vld [vmem:[%s3405 + $0x38] sm:$0xf]
        %v3421 = vld [vmem:[%s3405 + $0x3c] sm:$0xf]
        %v3422 = vunpack.c.l.b16 %v3034
        %v3423 = vunpack.c.l.b16 %v3044
        %v3424 = vunpack.c.l.b16 %v3058
        %v3425 = vunpack.c.l.b16 %v3068
        %v3426 = vunpack.c.l.b16 %v3082
        %v3427 = vunpack.c.l.b16 %v3092
        %v3428 = vunpack.c.l.b16 %v3106
        %v3429 = vunpack.c.l.b16 %v3116
        %v3430 = vunpack.c.l.b16 %v3130
        %v3431 = vunpack.c.l.b16 %v3140
        %v3432 = vunpack.c.l.b16 %v3154
        %v3433 = vunpack.c.l.b16 %v3164
        %v3434 = vunpack.c.l.b16 %v3178
        %v3435 = vunpack.c.l.b16 %v3188
        %v3436 = vunpack.c.l.b16 %v3202
        %v3437 = vunpack.c.l.b16 %v3212
        %v3438 = vunpack.c.l.b16 %v3226
        %v3439 = vunpack.c.l.b16 %v3236
        %v3440 = vunpack.c.l.b16 %v3250
        %v3441 = vunpack.c.l.b16 %v3260
        %v3442 = vunpack.c.l.b16 %v3274
        %v3443 = vunpack.c.l.b16 %v3284
        %v3444 = vunpack.c.l.b16 %v3298
        %v3445 = vunpack.c.l.b16 %v3308
        %v3446 = vunpack.c.l.b16 %v3322
        %v3447 = vunpack.c.l.b16 %v3332
        %v3448 = vunpack.c.l.b16 %v3346
        %v3449 = vunpack.c.l.b16 %v3356
        %v3450 = vunpack.c.l.b16 %v3370
        %v3451 = vunpack.c.l.b16 %v3380
        %v3452 = vunpack.c.l.b16 %v3394
        %v3453 = vunpack.c.l.b16 %v3404
        %v3454 = vpack.c.b16 %v3423, %v3422
        %v3455 = vpack.c.b16 %v3425, %v3424
        %v3456 = vpack.c.b16 %v3427, %v3426
        %v3457 = vpack.c.b16 %v3429, %v3428
        %v3458 = vpack.c.b16 %v3431, %v3430
        %v3459 = vpack.c.b16 %v3433, %v3432
        %v3460 = vpack.c.b16 %v3435, %v3434
        %v3461 = vpack.c.b16 %v3437, %v3436
        %v3462 = vpack.c.b16 %v3439, %v3438
        %v3463 = vpack.c.b16 %v3441, %v3440
        %v3464 = vpack.c.b16 %v3443, %v3442
        %v3465 = vpack.c.b16 %v3445, %v3444
        %v3466 = vpack.c.b16 %v3447, %v3446
        %v3467 = vpack.c.b16 %v3449, %v3448
        %v3468 = vpack.c.b16 %v3451, %v3450
        %v3469 = vpack.c.b16 %v3453, %v3452
        %v3502 = vunpack.c.l.b16 %v3406
        %v3503 = vunpack.c.l.b16 %v3407
        %v3504 = vunpack.c.l.b16 %v3408
        %v3505 = vunpack.c.l.b16 %v3409
        %v3506 = vunpack.c.l.b16 %v3410
        %v3507 = vunpack.c.l.b16 %v3411
        %v3508 = vunpack.c.l.b16 %v3412
        %v3509 = vunpack.c.l.b16 %v3413
        %v3510 = vunpack.c.l.b16 %v3414
        %v3511 = vunpack.c.l.b16 %v3415
        %v3512 = vunpack.c.l.b16 %v3416
        %v3513 = vunpack.c.l.b16 %v3417
        %v3514 = vunpack.c.l.b16 %v3418
        %v3515 = vunpack.c.l.b16 %v3419
        %v3516 = vunpack.c.l.b16 %v3420
        %v3517 = vunpack.c.l.b16 %v3421
        %v3518 = vpack.c.b16 %v3503, %v3502
        %v3519 = vpack.c.b16 %v3505, %v3504
        %v3520 = vpack.c.b16 %v3507, %v3506
        %v3521 = vpack.c.b16 %v3509, %v3508
        %v3522 = vpack.c.b16 %v3511, %v3510
        %v3523 = vpack.c.b16 %v3513, %v3512
        %v3524 = vpack.c.b16 %v3515, %v3514
        %v3525 = vpack.c.b16 %v3517, %v3516
        %3534 = vmatprep.subr.bf16.mxu0 0
        %3535 = vmatpush1.bf16.msra.mxu0 %v3518
        %3536 = vmatprep.subr.bf16.mxu0 0
        %3537 = vmatpush1.bf16.msra.mxu0 %v3519
        %3538 = vmatprep.subr.bf16.mxu0 0
        %3539 = vmatpush1.bf16.msra.mxu0 %v3520
        %3540 = vmatprep.subr.bf16.mxu0 0
        %3541 = vmatpush1.bf16.msra.mxu0 %v3521
        %3542 = vmatprep.subr.bf16.mxu0 0
        %3543 = vmatpush1.bf16.msra.mxu0 %v3522
        %3544 = vmatprep.subr.bf16.mxu0 0
        %3545 = vmatpush1.bf16.msra.mxu0 %v3523
        %3546 = vmatprep.subr.bf16.mxu0 0
        %3547 = vmatpush1.bf16.msra.mxu0 %v3524
        %3548 = vmatprep.subr.bf16.mxu0 0
        %3549 = vmatpush1.bf16.msra.mxu0 %v3525
        %3550 = vmatprep.subr.bf16.mxu0 0
        %3551 = vmatpush1.bf16.msra.mxu0 0
        %3552 = vmatprep.subr.bf16.mxu0 0
        %3553 = vmatpush1.bf16.msra.mxu0 0
        %3554 = vmatprep.subr.bf16.mxu0 0
        %3555 = vmatpush1.bf16.msra.mxu0 0
        %3556 = vmatprep.subr.bf16.mxu0 0
        %3557 = vmatpush1.bf16.msra.mxu0 0
        %3558 = vmatprep.subr.bf16.mxu0 0
        %3559 = vmatpush1.bf16.msra.mxu0 0
        %3560 = vmatprep.subr.bf16.mxu0 0
        %3561 = vmatpush1.bf16.msra.mxu0 0
        %3562 = vmatprep.subr.bf16.mxu0 0
        %3563 = vmatpush1.bf16.msra.mxu0 0
        %3564 = vmatprep.subr.bf16.mxu0 0
        %3565 = vmatpush1.bf16.msra.mxu0 0
        %3566 = vmatprep.mubr.bf16.mxu0 0
        %3567 = vmatmul.mubr.bf16.gmra.mrb[0].mxu0 %v3454
        %v3568 = vpop.f32.mrb[0].mxu0
        %v3569 = vadd.f32 0.0, %v3568
        %v3570 = vpop.f32.mrb[0].mxu0
        %v3571 = vpop.f32.mrb[0].mxu0
        %v3572 = vadd.f32 0.0, %v3571
        %v3573 = vpop.f32.mrb[0].mxu0
        %3574 = vmatprep.mubr.bf16.mxu0 0
        %3575 = vmatmul.mubr.bf16.gmra.mrb[0].mxu0 %v3455
        %v3576 = vpop.f32.mrb[0].mxu0
        %v3577 = vadd.f32 0.0, %v3576
        %v3578 = vpop.f32.mrb[0].mxu0
        %v3579 = vpop.f32.mrb[0].mxu0
        %v3580 = vadd.f32 0.0, %v3579
        %v3581 = vpop.f32.mrb[0].mxu0
        %3582 = vmatprep.mubr.bf16.mxu0 0
        %3583 = vmatmul.mubr.bf16.gmra.mrb[0].mxu0 %v3456
        %v3584 = vpop.f32.mrb[0].mxu0
        %v3585 = vadd.f32 0.0, %v3584
        %v3586 = vpop.f32.mrb[0].mxu0
        %v3587 = vpop.f32.mrb[0].mxu0
        %v3588 = vadd.f32 0.0, %v3587
        %v3589 = vpop.f32.mrb[0].mxu0
        %3590 = vmatprep.mubr.bf16.mxu0 0
        %3591 = vmatmul.mubr.bf16.gmra.mrb[0].mxu0 %v3457
        %v3592 = vpop.f32.mrb[0].mxu0
        %v3593 = vadd.f32 0.0, %v3592
        %v3594 = vpop.f32.mrb[0].mxu0
        %v3595 = vpop.f32.mrb[0].mxu0
        %v3596 = vadd.f32 0.0, %v3595
        %v3597 = vpop.f32.mrb[0].mxu0
        %3598 = vmatprep.mubr.bf16.mxu0 0
        %3599 = vmatmul.mubr.bf16.gmra.mrb[0].mxu0 %v3458
        %v3600 = vpop.f32.mrb[0].mxu0
        %v3601 = vadd.f32 0.0, %v3600
        %v3602 = vpop.f32.mrb[0].mxu0
        %v3603 = vpop.f32.mrb[0].mxu0
        %v3604 = vadd.f32 0.0, %v3603
        %v3605 = vpop.f32.mrb[0].mxu0
        %3606 = vmatprep.mubr.bf16.mxu0 0
        %3607 = vmatmul.mubr.bf16.gmra.mrb[0].mxu0 %v3459
        %v3608 = vpop.f32.mrb[0].mxu0
        %v3609 = vadd.f32 0.0, %v3608
        %v3610 = vpop.f32.mrb[0].mxu0
        %v3611 = vpop.f32.mrb[0].mxu0
        %v3612 = vadd.f32 0.0, %v3611
        %v3613 = vpop.f32.mrb[0].mxu0
        %3614 = vmatprep.mubr.bf16.mxu0 0
        %3615 = vmatmul.mubr.bf16.gmra.mrb[0].mxu0 %v3460
        %v3616 = vpop.f32.mrb[0].mxu0
        %v3617 = vadd.f32 0.0, %v3616
        %v3618 = vpop.f32.mrb[0].mxu0
        %v3619 = vpop.f32.mrb[0].mxu0
        %v3620 = vadd.f32 0.0, %v3619
        %v3621 = vpop.f32.mrb[0].mxu0
        %3622 = vmatprep.mubr.bf16.mxu0 0
        %3623 = vmatmul.mubr.bf16.gmra.mrb[0].mxu0 %v3461
        %v3624 = vpop.f32.mrb[0].mxu0
        %v3625 = vadd.f32 0.0, %v3624
        %v3626 = vpop.f32.mrb[0].mxu0
        %v3627 = vpop.f32.mrb[0].mxu0
        %v3628 = vadd.f32 0.0, %v3627
        %v3629 = vpop.f32.mrb[0].mxu0
        %3630 = vmatprep.mubr.bf16.mxu0 0
        %3631 = vmatmul.mubr.bf16.gmra.mrb[0].mxu0 %v3462
        %v3632 = vpop.f32.mrb[0].mxu0
        %v3633 = vadd.f32 0.0, %v3632
        %v3634 = vpop.f32.mrb[0].mxu0
        %v3635 = vpop.f32.mrb[0].mxu0
        %v3636 = vadd.f32 0.0, %v3635
        %v3637 = vpop.f32.mrb[0].mxu0
        %3638 = vmatprep.mubr.bf16.mxu0 0
        %3639 = vmatmul.mubr.bf16.gmra.mrb[0].mxu0 %v3463
        %v3640 = vpop.f32.mrb[0].mxu0
        %v3641 = vadd.f32 0.0, %v3640
        %v3642 = vpop.f32.mrb[0].mxu0
        %v3643 = vpop.f32.mrb[0].mxu0
        %v3644 = vadd.f32 0.0, %v3643
        %v3645 = vpop.f32.mrb[0].mxu0
        %3646 = vmatprep.mubr.bf16.mxu0 0
        %3647 = vmatmul.mubr.bf16.gmra.mrb[0].mxu0 %v3464
        %v3648 = vpop.f32.mrb[0].mxu0
        %v3649 = vadd.f32 0.0, %v3648
        %v3650 = vpop.f32.mrb[0].mxu0
        %v3651 = vpop.f32.mrb[0].mxu0
        %v3652 = vadd.f32 0.0, %v3651
        %v3653 = vpop.f32.mrb[0].mxu0
        %3654 = vmatprep.mubr.bf16.mxu0 0
        %3655 = vmatmul.mubr.bf16.gmra.mrb[0].mxu0 %v3465
        %v3656 = vpop.f32.mrb[0].mxu0
        %v3657 = vadd.f32 0.0, %v3656
        %v3658 = vpop.f32.mrb[0].mxu0
        %v3659 = vpop.f32.mrb[0].mxu0
        %v3660 = vadd.f32 0.0, %v3659
        %v3661 = vpop.f32.mrb[0].mxu0
        %3662 = vmatprep.mubr.bf16.mxu0 0
        %3663 = vmatmul.mubr.bf16.gmra.mrb[0].mxu0 %v3466
        %v3664 = vpop.f32.mrb[0].mxu0
        %v3665 = vadd.f32 0.0, %v3664
        %v3666 = vpop.f32.mrb[0].mxu0
        %v3667 = vpop.f32.mrb[0].mxu0
        %v3668 = vadd.f32 0.0, %v3667
        %v3669 = vpop.f32.mrb[0].mxu0
        %3670 = vmatprep.mubr.bf16.mxu0 0
        %3671 = vmatmul.mubr.bf16.gmra.mrb[0].mxu0 %v3467
        %v3672 = vpop.f32.mrb[0].mxu0
        %v3673 = vadd.f32 0.0, %v3672
        %v3674 = vpop.f32.mrb[0].mxu0
        %v3675 = vpop.f32.mrb[0].mxu0
        %v3676 = vadd.f32 0.0, %v3675
        %v3677 = vpop.f32.mrb[0].mxu0
        %3678 = vmatprep.mubr.bf16.mxu0 0
        %3679 = vmatmul.mubr.bf16.gmra.mrb[0].mxu0 %v3468
        %v3680 = vpop.f32.mrb[0].mxu0
        %v3681 = vadd.f32 0.0, %v3680
        %v3682 = vpop.f32.mrb[0].mxu0
        %v3683 = vpop.f32.mrb[0].mxu0
        %v3684 = vadd.f32 0.0, %v3683
        %v3685 = vpop.f32.mrb[0].mxu0
        %3686 = vmatprep.mubr.bf16.mxu0 0
        %3687 = vmatmul.mubr.bf16.gmra.mrb[0].mxu0 %v3469
        %v3688 = vpop.f32.mrb[0].mxu0
        %v3689 = vadd.f32 0.0, %v3688
        %v3690 = vpop.f32.mrb[0].mxu0
        %v3691 = vpop.f32.mrb[0].mxu0
        %v3692 = vadd.f32 0.0, %v3691
        %v3693 = vpop.f32.mrb[0].mxu0
        %3694 = vdwg.mxu0
        %v3695 = vadd.f32 %v2941, %v3569
        %v3696 = vadd.f32 %v2942, %v3572
        %v3697 = vadd.f32 %v2943, %v3577
        %v3698 = vadd.f32 %v2944, %v3580
        %v3699 = vadd.f32 %v2945, %v3585
        %v3700 = vadd.f32 %v2946, %v3588
        %v3701 = vadd.f32 %v2947, %v3593
        %v3702 = vadd.f32 %v2948, %v3596
        %v3703 = vadd.f32 %v2949, %v3601
        %v3704 = vadd.f32 %v2950, %v3604
        %v3705 = vadd.f32 %v2951, %v3609
        %v3706 = vadd.f32 %v2952, %v3612
        %v3707 = vadd.f32 %v2953, %v3617
        %v3708 = vadd.f32 %v2954, %v3620
        %v3709 = vadd.f32 %v2955, %v3625
        %v3710 = vadd.f32 %v2956, %v3628
        %v3711 = vadd.f32 %v2957, %v3633
        %v3712 = vadd.f32 %v2958, %v3636
        %v3713 = vadd.f32 %v2959, %v3641
        %v3714 = vadd.f32 %v2960, %v3644
        %v3715 = vadd.f32 %v2961, %v3649
        %v3716 = vadd.f32 %v2962, %v3652
        %v3717 = vadd.f32 %v2963, %v3657
        %v3718 = vadd.f32 %v2964, %v3660
        %v3719 = vadd.f32 %v2965, %v3665
        %v3720 = vadd.f32 %v2966, %v3668
        %v3721 = vadd.f32 %v2967, %v3673
        %v3722 = vadd.f32 %v2968, %v3676
        %v3723 = vadd.f32 %v2969, %v3681
        %v3724 = vadd.f32 %v2970, %v3684
        %v3725 = vadd.f32 %v2971, %v3689
        %v3726 = vadd.f32 %v2972, %v3692
        %v3727 = vld [vmem:[%s961] sm:$0xe]
        %v3728 = vld [vmem:[%s961 + $0xc] sm:$0xe]
        %v3729 = vld [vmem:[%s961 + $0x18] sm:$0xe]
        %v3730 = vld [vmem:[%s961 + $0x24] sm:$0xe]
        %v3731 = vld [vmem:[%s961 + $0x30] sm:$0xe]
        %v3732 = vld [vmem:[%s961 + $0x3c] sm:$0xe]
        %v3733 = vld [vmem:[%s961 + $0x48] sm:$0xe]
        %v3734 = vld [vmem:[%s961 + $0x54] sm:$0xe]
        %v3735 = vld [vmem:[%s961 + $0x60] sm:$0xe]
        %v3736 = vld [vmem:[%s961 + $0x6c] sm:$0xe]
        %v3737 = vld [vmem:[%s961 + $0x78] sm:$0xe]
        %v3738 = vld [vmem:[%s961 + $0x84] sm:$0xe]
        %v3739 = vld [vmem:[%s961 + $0x90] sm:$0xe]
        %v3740 = vld [vmem:[%s961 + $0x9c] sm:$0xe]
        %v3741 = vld [vmem:[%s961 + $0xa8] sm:$0xe]
        %v3742 = vld [vmem:[%s961 + $0xb4] sm:$0xe]
        %v3791 = vrot.slane %v3727, 5
        %v3792 = vrot.slane %v3791, 4
        %v3793 = vrot.slane %v2974, 5
        %v3794 = vsel %vm1588, %v3792, %v3793
        %v3795 = vrot.slane %v3793, 4
        %v3796 = vrot.slane %v2975, 5
        %v3797 = vsel %vm1588, %v3795, %v3796
        %v3798 = vrot.slane %v3728, 5
        %v3799 = vrot.slane %v3798, 4
        %v3800 = vrot.slane %v2977, 5
        %v3801 = vsel %vm1588, %v3799, %v3800
        %v3802 = vrot.slane %v3800, 4
        %v3803 = vrot.slane %v2978, 5
        %v3804 = vsel %vm1588, %v3802, %v3803
        %v3805 = vrot.slane %v3729, 5
        %v3806 = vrot.slane %v3805, 4
        %v3807 = vrot.slane %v2980, 5
        %v3808 = vsel %vm1588, %v3806, %v3807
        %v3809 = vrot.slane %v3807, 4
        %v3810 = vrot.slane %v2981, 5
        %v3811 = vsel %vm1588, %v3809, %v3810
        %v3812 = vrot.slane %v3730, 5
        %v3813 = vrot.slane %v3812, 4
        %v3814 = vrot.slane %v2983, 5
        %v3815 = vsel %vm1588, %v3813, %v3814
        %v3816 = vrot.slane %v3814, 4
        %v3817 = vrot.slane %v2984, 5
        %v3818 = vsel %vm1588, %v3816, %v3817
        %v3819 = vrot.slane %v3731, 5
        %v3820 = vrot.slane %v3819, 4
        %v3821 = vrot.slane %v2986, 5
        %v3822 = vsel %vm1588, %v3820, %v3821
        %v3823 = vrot.slane %v3821, 4
        %v3824 = vrot.slane %v2987, 5
        %v3825 = vsel %vm1588, %v3823, %v3824
        %v3826 = vrot.slane %v3732, 5
        %v3827 = vrot.slane %v3826, 4
        %v3828 = vrot.slane %v2989, 5
        %v3829 = vsel %vm1588, %v3827, %v3828
        %v3830 = vrot.slane %v3828, 4
        %v3831 = vrot.slane %v2990, 5
        %v3832 = vsel %vm1588, %v3830, %v3831
        %v3833 = vrot.slane %v3733, 5
        %v3834 = vrot.slane %v3833, 4
        %v3835 = vrot.slane %v2992, 5
        %v3836 = vsel %vm1588, %v3834, %v3835
        %v3837 = vrot.slane %v3835, 4
        %v3838 = vrot.slane %v2993, 5
        %v3839 = vsel %vm1588, %v3837, %v3838
        %v3840 = vrot.slane %v3734, 5
        %v3841 = vrot.slane %v3840, 4
        %v3842 = vrot.slane %v2995, 5
        %v3843 = vsel %vm1588, %v3841, %v3842
        %v3844 = vrot.slane %v3842, 4
        %v3845 = vrot.slane %v2996, 5
        %v3846 = vsel %vm1588, %v3844, %v3845
        %v3847 = vrot.slane %v3735, 5
        %v3848 = vrot.slane %v3847, 4
        %v3849 = vrot.slane %v2998, 5
        %v3850 = vsel %vm1588, %v3848, %v3849
        %v3851 = vrot.slane %v3849, 4
        %v3852 = vrot.slane %v2999, 5
        %v3853 = vsel %vm1588, %v3851, %v3852
        %v3854 = vrot.slane %v3736, 5
        %v3855 = vrot.slane %v3854, 4
        %v3856 = vrot.slane %v3001, 5
        %v3857 = vsel %vm1588, %v3855, %v3856
        %v3858 = vrot.slane %v3856, 4
        %v3859 = vrot.slane %v3002, 5
        %v3860 = vsel %vm1588, %v3858, %v3859
        %v3861 = vrot.slane %v3737, 5
        %v3862 = vrot.slane %v3861, 4
        %v3863 = vrot.slane %v3004, 5
        %v3864 = vsel %vm1588, %v3862, %v3863
        %v3865 = vrot.slane %v3863, 4
        %v3866 = vrot.slane %v3005, 5
        %v3867 = vsel %vm1588, %v3865, %v3866
        %v3868 = vrot.slane %v3738, 5
        %v3869 = vrot.slane %v3868, 4
        %v3870 = vrot.slane %v3007, 5
        %v3871 = vsel %vm1588, %v3869, %v3870
        %v3872 = vrot.slane %v3870, 4
        %v3873 = vrot.slane %v3008, 5
        %v3874 = vsel %vm1588, %v3872, %v3873
        %v3875 = vrot.slane %v3739, 5
        %v3876 = vrot.slane %v3875, 4
        %v3877 = vrot.slane %v3010, 5
        %v3878 = vsel %vm1588, %v3876, %v3877
        %v3879 = vrot.slane %v3877, 4
        %v3880 = vrot.slane %v3011, 5
        %v3881 = vsel %vm1588, %v3879, %v3880
        %v3882 = vrot.slane %v3740, 5
        %v3883 = vrot.slane %v3882, 4
        %v3884 = vrot.slane %v3013, 5
        %v3885 = vsel %vm1588, %v3883, %v3884
        %v3886 = vrot.slane %v3884, 4
        %v3887 = vrot.slane %v3014, 5
        %v3888 = vsel %vm1588, %v3886, %v3887
        %v3889 = vrot.slane %v3741, 5
        %v3890 = vrot.slane %v3889, 4
        %v3891 = vrot.slane %v3016, 5
        %v3892 = vsel %vm1588, %v3890, %v3891
        %v3893 = vrot.slane %v3891, 4
        %v3894 = vrot.slane %v3017, 5
        %v3895 = vsel %vm1588, %v3893, %v3894
        %v3896 = vrot.slane %v3742, 5
        %v3897 = vrot.slane %v3896, 4
        %v3898 = vrot.slane %v3019, 5
        %v3899 = vsel %vm1588, %v3897, %v3898
        %v3900 = vrot.slane %v3898, 4
        %v3901 = vrot.slane %v3020, 5
        %v3902 = vsel %vm1588, %v3900, %v3901
        %s3903 = scalar_lea.vmem [#allocation8], 256
        %v3904 = vld [vmem:[%s3903] sm:$0xf]
        %v3905 = vld [vmem:[%s3903 + $0x4] sm:$0xf]
        %v3906 = vld [vmem:[%s3903 + $0x8] sm:$0xf]
        %v3907 = vld [vmem:[%s3903 + $0xc] sm:$0xf]
        %v3908 = vld [vmem:[%s3903 + $0x10] sm:$0xf]
        %v3909 = vld [vmem:[%s3903 + $0x14] sm:$0xf]
        %v3910 = vld [vmem:[%s3903 + $0x18] sm:$0xf]
        %v3911 = vld [vmem:[%s3903 + $0x1c] sm:$0xf]
        %v3912 = vld [vmem:[%s3903 + $0x20] sm:$0xf]
        %v3913 = vld [vmem:[%s3903 + $0x24] sm:$0xf]
        %v3914 = vld [vmem:[%s3903 + $0x28] sm:$0xf]
        %v3915 = vld [vmem:[%s3903 + $0x2c] sm:$0xf]
        %v3916 = vld [vmem:[%s3903 + $0x30] sm:$0xf]
        %v3917 = vld [vmem:[%s3903 + $0x34] sm:$0xf]
        %v3918 = vld [vmem:[%s3903 + $0x38] sm:$0xf]
        %v3919 = vld [vmem:[%s3903 + $0x3c] sm:$0xf]
        %v3920 = vunpack.c.l.b16 %v3794
        %v3921 = vunpack.c.l.b16 %v3797
        %v3922 = vunpack.c.l.b16 %v3801
        %v3923 = vunpack.c.l.b16 %v3804
        %v3924 = vunpack.c.l.b16 %v3808
        %v3925 = vunpack.c.l.b16 %v3811
        %v3926 = vunpack.c.l.b16 %v3815
        %v3927 = vunpack.c.l.b16 %v3818
        %v3928 = vunpack.c.l.b16 %v3822
        %v3929 = vunpack.c.l.b16 %v3825
        %v3930 = vunpack.c.l.b16 %v3829
        %v3931 = vunpack.c.l.b16 %v3832
        %v3932 = vunpack.c.l.b16 %v3836
        %v3933 = vunpack.c.l.b16 %v3839
        %v3934 = vunpack.c.l.b16 %v3843
        %v3935 = vunpack.c.l.b16 %v3846
        %v3936 = vunpack.c.l.b16 %v3850
        %v3937 = vunpack.c.l.b16 %v3853
        %v3938 = vunpack.c.l.b16 %v3857
        %v3939 = vunpack.c.l.b16 %v3860
        %v3940 = vunpack.c.l.b16 %v3864
        %v3941 = vunpack.c.l.b16 %v3867
        %v3942 = vunpack.c.l.b16 %v3871
        %v3943 = vunpack.c.l.b16 %v3874
        %v3944 = vunpack.c.l.b16 %v3878
        %v3945 = vunpack.c.l.b16 %v3881
        %v3946 = vunpack.c.l.b16 %v3885
        %v3947 = vunpack.c.l.b16 %v3888
        %v3948 = vunpack.c.l.b16 %v3892
        %v3949 = vunpack.c.l.b16 %v3895
        %v3950 = vunpack.c.l.b16 %v3899
        %v3951 = vunpack.c.l.b16 %v3902
        %v3952 = vpack.c.b16 %v3921, %v3920
        %v3953 = vpack.c.b16 %v3923, %v3922
        %v3954 = vpack.c.b16 %v3925, %v3924
        %v3955 = vpack.c.b16 %v3927, %v3926
        %v3956 = vpack.c.b16 %v3929, %v3928
        %v3957 = vpack.c.b16 %v3931, %v3930
        %v3958 = vpack.c.b16 %v3933, %v3932
        %v3959 = vpack.c.b16 %v3935, %v3934
        %v3960 = vpack.c.b16 %v3937, %v3936
        %v3961 = vpack.c.b16 %v3939, %v3938
        %v3962 = vpack.c.b16 %v3941, %v3940
        %v3963 = vpack.c.b16 %v3943, %v3942
        %v3964 = vpack.c.b16 %v3945, %v3944
        %v3965 = vpack.c.b16 %v3947, %v3946
        %v3966 = vpack.c.b16 %v3949, %v3948
        %v3967 = vpack.c.b16 %v3951, %v3950
        %v4000 = vunpack.c.l.b16 %v3904
        %v4001 = vunpack.c.l.b16 %v3905
        %v4002 = vunpack.c.l.b16 %v3906
        %v4003 = vunpack.c.l.b16 %v3907
        %v4004 = vunpack.c.l.b16 %v3908
        %v4005 = vunpack.c.l.b16 %v3909
        %v4006 = vunpack.c.l.b16 %v3910
        %v4007 = vunpack.c.l.b16 %v3911
        %v4008 = vunpack.c.l.b16 %v3912
        %v4009 = vunpack.c.l.b16 %v3913
        %v4010 = vunpack.c.l.b16 %v3914
        %v4011 = vunpack.c.l.b16 %v3915
        %v4012 = vunpack.c.l.b16 %v3916
        %v4013 = vunpack.c.l.b16 %v3917
        %v4014 = vunpack.c.l.b16 %v3918
        %v4015 = vunpack.c.l.b16 %v3919
        %v4016 = vpack.c.b16 %v4001, %v4000
        %v4017 = vpack.c.b16 %v4003, %v4002
        %v4018 = vpack.c.b16 %v4005, %v4004
        %v4019 = vpack.c.b16 %v4007, %v4006
        %v4020 = vpack.c.b16 %v4009, %v4008
        %v4021 = vpack.c.b16 %v4011, %v4010
        %v4022 = vpack.c.b16 %v4013, %v4012
        %v4023 = vpack.c.b16 %v4015, %v4014
        %4032 = vmatprep.subr.bf16.mxu0 0
        %4033 = vmatpush1.bf16.msra.mxu0 %v4016
        %4034 = vmatprep.subr.bf16.mxu0 0
        %4035 = vmatpush1.bf16.msra.mxu0 %v4017
        %4036 = vmatprep.subr.bf16.mxu0 0
        %4037 = vmatpush1.bf16.msra.mxu0 %v4018
        %4038 = vmatprep.subr.bf16.mxu0 0
        %4039 = vmatpush1.bf16.msra.mxu0 %v4019
        %4040 = vmatprep.subr.bf16.mxu0 0
        %4041 = vmatpush1.bf16.msra.mxu0 %v4020
        %4042 = vmatprep.subr.bf16.mxu0 0
        %4043 = vmatpush1.bf16.msra.mxu0 %v4021
        %4044 = vmatprep.subr.bf16.mxu0 0
        %4045 = vmatpush1.bf16.msra.mxu0 %v4022
        %4046 = vmatprep.subr.bf16.mxu0 0
        %4047 = vmatpush1.bf16.msra.mxu0 %v4023
        %4048 = vmatprep.subr.bf16.mxu0 0
        %4049 = vmatpush1.bf16.msra.mxu0 0
        %4050 = vmatprep.subr.bf16.mxu0 0
        %4051 = vmatpush1.bf16.msra.mxu0 0
        %4052 = vmatprep.subr.bf16.mxu0 0
        %4053 = vmatpush1.bf16.msra.mxu0 0
        %4054 = vmatprep.subr.bf16.mxu0 0
        %4055 = vmatpush1.bf16.msra.mxu0 0
        %4056 = vmatprep.subr.bf16.mxu0 0
        %4057 = vmatpush1.bf16.msra.mxu0 0
        %4058 = vmatprep.subr.bf16.mxu0 0
        %4059 = vmatpush1.bf16.msra.mxu0 0
        %4060 = vmatprep.subr.bf16.mxu0 0
        %4061 = vmatpush1.bf16.msra.mxu0 0
        %4062 = vmatprep.subr.bf16.mxu0 0
        %4063 = vmatpush1.bf16.msra.mxu0 0
        %4064 = vmatprep.mubr.bf16.mxu0 0
        %4065 = vmatmul.mubr.bf16.gmra.mrb[0].mxu0 %v3952
        %v4066 = vpop.f32.mrb[0].mxu0
        %v4067 = vadd.f32 0.0, %v4066
        %v4068 = vpop.f32.mrb[0].mxu0
        %v4069 = vpop.f32.mrb[0].mxu0
        %v4070 = vadd.f32 0.0, %v4069
        %v4071 = vpop.f32.mrb[0].mxu0
        %4072 = vmatprep.mubr.bf16.mxu0 0
        %4073 = vmatmul.mubr.bf16.gmra.mrb[0].mxu0 %v3953
        %v4074 = vpop.f32.mrb[0].mxu0
        %v4075 = vadd.f32 0.0, %v4074
        %v4076 = vpop.f32.mrb[0].mxu0
        %v4077 = vpop.f32.mrb[0].mxu0
        %v4078 = vadd.f32 0.0, %v4077
        %v4079 = vpop.f32.mrb[0].mxu0
        %4080 = vmatprep.mubr.bf16.mxu0 0
        %4081 = vmatmul.mubr.bf16.gmra.mrb[0].mxu0 %v3954
        %v4082 = vpop.f32.mrb[0].mxu0
        %v4083 = vadd.f32 0.0, %v4082
        %v4084 = vpop.f32.mrb[0].mxu0
        %v4085 = vpop.f32.mrb[0].mxu0
        %v4086 = vadd.f32 0.0, %v4085
        %v4087 = vpop.f32.mrb[0].mxu0
        %4088 = vmatprep.mubr.bf16.mxu0 0
        %4089 = vmatmul.mubr.bf16.gmra.mrb[0].mxu0 %v3955
        %v4090 = vpop.f32.mrb[0].mxu0
        %v4091 = vadd.f32 0.0, %v4090
        %v4092 = vpop.f32.mrb[0].mxu0
        %v4093 = vpop.f32.mrb[0].mxu0
        %v4094 = vadd.f32 0.0, %v4093
        %v4095 = vpop.f32.mrb[0].mxu0
        %4096 = vmatprep.mubr.bf16.mxu0 0
        %4097 = vmatmul.mubr.bf16.gmra.mrb[0].mxu0 %v3956
        %v4098 = vpop.f32.mrb[0].mxu0
        %v4099 = vadd.f32 0.0, %v4098
        %v4100 = vpop.f32.mrb[0].mxu0
        %v4101 = vpop.f32.mrb[0].mxu0
        %v4102 = vadd.f32 0.0, %v4101
        %v4103 = vpop.f32.mrb[0].mxu0
        %4104 = vmatprep.mubr.bf16.mxu0 0
        %4105 = vmatmul.mubr.bf16.gmra.mrb[0].mxu0 %v3957
        %v4106 = vpop.f32.mrb[0].mxu0
        %v4107 = vadd.f32 0.0, %v4106
        %v4108 = vpop.f32.mrb[0].mxu0
        %v4109 = vpop.f32.mrb[0].mxu0
        %v4110 = vadd.f32 0.0, %v4109
        %v4111 = vpop.f32.mrb[0].mxu0
        %4112 = vmatprep.mubr.bf16.mxu0 0
        %4113 = vmatmul.mubr.bf16.gmra.mrb[0].mxu0 %v3958
        %v4114 = vpop.f32.mrb[0].mxu0
        %v4115 = vadd.f32 0.0, %v4114
        %v4116 = vpop.f32.mrb[0].mxu0
        %v4117 = vpop.f32.mrb[0].mxu0
        %v4118 = vadd.f32 0.0, %v4117
        %v4119 = vpop.f32.mrb[0].mxu0
        %4120 = vmatprep.mubr.bf16.mxu0 0
        %4121 = vmatmul.mubr.bf16.gmra.mrb[0].mxu0 %v3959
        %v4122 = vpop.f32.mrb[0].mxu0
        %v4123 = vadd.f32 0.0, %v4122
        %v4124 = vpop.f32.mrb[0].mxu0
        %v4125 = vpop.f32.mrb[0].mxu0
        %v4126 = vadd.f32 0.0, %v4125
        %v4127 = vpop.f32.mrb[0].mxu0
        %4128 = vmatprep.mubr.bf16.mxu0 0
        %4129 = vmatmul.mubr.bf16.gmra.mrb[0].mxu0 %v3960
        %v4130 = vpop.f32.mrb[0].mxu0
        %v4131 = vadd.f32 0.0, %v4130
        %v4132 = vpop.f32.mrb[0].mxu0
        %v4133 = vpop.f32.mrb[0].mxu0
        %v4134 = vadd.f32 0.0, %v4133
        %v4135 = vpop.f32.mrb[0].mxu0
        %4136 = vmatprep.mubr.bf16.mxu0 0
        %4137 = vmatmul.mubr.bf16.gmra.mrb[0].mxu0 %v3961
        %v4138 = vpop.f32.mrb[0].mxu0
        %v4139 = vadd.f32 0.0, %v4138
        %v4140 = vpop.f32.mrb[0].mxu0
        %v4141 = vpop.f32.mrb[0].mxu0
        %v4142 = vadd.f32 0.0, %v4141
        %v4143 = vpop.f32.mrb[0].mxu0
        %4144 = vmatprep.mubr.bf16.mxu0 0
        %4145 = vmatmul.mubr.bf16.gmra.mrb[0].mxu0 %v3962
        %v4146 = vpop.f32.mrb[0].mxu0
        %v4147 = vadd.f32 0.0, %v4146
        %v4148 = vpop.f32.mrb[0].mxu0
        %v4149 = vpop.f32.mrb[0].mxu0
        %v4150 = vadd.f32 0.0, %v4149
        %v4151 = vpop.f32.mrb[0].mxu0
        %4152 = vmatprep.mubr.bf16.mxu0 0
        %4153 = vmatmul.mubr.bf16.gmra.mrb[0].mxu0 %v3963
        %v4154 = vpop.f32.mrb[0].mxu0
        %v4155 = vadd.f32 0.0, %v4154
        %v4156 = vpop.f32.mrb[0].mxu0
        %v4157 = vpop.f32.mrb[0].mxu0
        %v4158 = vadd.f32 0.0, %v4157
        %v4159 = vpop.f32.mrb[0].mxu0
        %4160 = vmatprep.mubr.bf16.mxu0 0
        %4161 = vmatmul.mubr.bf16.gmra.mrb[0].mxu0 %v3964
        %v4162 = vpop.f32.mrb[0].mxu0
        %v4163 = vadd.f32 0.0, %v4162
        %v4164 = vpop.f32.mrb[0].mxu0
        %v4165 = vpop.f32.mrb[0].mxu0
        %v4166 = vadd.f32 0.0, %v4165
        %v4167 = vpop.f32.mrb[0].mxu0
        %4168 = vmatprep.mubr.bf16.mxu0 0
        %4169 = vmatmul.mubr.bf16.gmra.mrb[0].mxu0 %v3965
        %v4170 = vpop.f32.mrb[0].mxu0
        %v4171 = vadd.f32 0.0, %v4170
        %v4172 = vpop.f32.mrb[0].mxu0
        %v4173 = vpop.f32.mrb[0].mxu0
        %v4174 = vadd.f32 0.0, %v4173
        %v4175 = vpop.f32.mrb[0].mxu0
        %4176 = vmatprep.mubr.bf16.mxu0 0
        %4177 = vmatmul.mubr.bf16.gmra.mrb[0].mxu0 %v3966
        %v4178 = vpop.f32.mrb[0].mxu0
        %v4179 = vadd.f32 0.0, %v4178
        %v4180 = vpop.f32.mrb[0].mxu0
        %v4181 = vpop.f32.mrb[0].mxu0
        %v4182 = vadd.f32 0.0, %v4181
        %v4183 = vpop.f32.mrb[0].mxu0
        %4184 = vmatprep.mubr.bf16.mxu0 0
        %4185 = vmatmul.mubr.bf16.gmra.mrb[0].mxu0 %v3967
        %v4186 = vpop.f32.mrb[0].mxu0
        %v4187 = vadd.f32 0.0, %v4186
        %v4188 = vpop.f32.mrb[0].mxu0
        %v4189 = vpop.f32.mrb[0].mxu0
        %v4190 = vadd.f32 0.0, %v4189
        %v4191 = vpop.f32.mrb[0].mxu0
        %4192 = vdwg.mxu0
        %v4193 = vadd.f32 %v3695, %v4067
        %v4194 = vadd.f32 %v3696, %v4070
        %v4195 = vadd.f32 %v3697, %v4075
        %v4196 = vadd.f32 %v3698, %v4078
        %v4197 = vadd.f32 %v3699, %v4083
        %v4198 = vadd.f32 %v3700, %v4086
        %v4199 = vadd.f32 %v3701, %v4091
        %v4200 = vadd.f32 %v3702, %v4094
        %v4201 = vadd.f32 %v3703, %v4099
        %v4202 = vadd.f32 %v3704, %v4102
        %v4203 = vadd.f32 %v3705, %v4107
        %v4204 = vadd.f32 %v3706, %v4110
        %v4205 = vadd.f32 %v3707, %v4115
        %v4206 = vadd.f32 %v3708, %v4118
        %v4207 = vadd.f32 %v3709, %v4123
        %v4208 = vadd.f32 %v3710, %v4126
        %v4209 = vadd.f32 %v3711, %v4131
        %v4210 = vadd.f32 %v3712, %v4134
        %v4211 = vadd.f32 %v3713, %v4139
        %v4212 = vadd.f32 %v3714, %v4142
        %v4213 = vadd.f32 %v3715, %v4147
        %v4214 = vadd.f32 %v3716, %v4150
        %v4215 = vadd.f32 %v3717, %v4155
        %v4216 = vadd.f32 %v3718, %v4158
        %v4217 = vadd.f32 %v3719, %v4163
        %v4218 = vadd.f32 %v3720, %v4166
        %v4219 = vadd.f32 %v3721, %v4171
        %v4220 = vadd.f32 %v3722, %v4174
        %v4221 = vadd.f32 %v3723, %v4179
        %v4222 = vadd.f32 %v3724, %v4182
        %v4223 = vadd.f32 %v3725, %v4187
        %v4224 = vadd.f32 %v3726, %v4190
        %v4225 = vld [vmem:[%s961 + $0x8] sm:$0x3]
        %v4226 = vld [vmem:[%s961 + $0x14] sm:$0x3]
        %v4227 = vld [vmem:[%s961 + $0x20] sm:$0x3]
        %v4228 = vld [vmem:[%s961 + $0x2c] sm:$0x3]
        %v4229 = vld [vmem:[%s961 + $0x38] sm:$0x3]
        %v4230 = vld [vmem:[%s961 + $0x44] sm:$0x3]
        %v4231 = vld [vmem:[%s961 + $0x50] sm:$0x3]
        %v4232 = vld [vmem:[%s961 + $0x5c] sm:$0x3]
        %v4233 = vld [vmem:[%s961 + $0x68] sm:$0x3]
        %v4234 = vld [vmem:[%s961 + $0x74] sm:$0x3]
        %v4235 = vld [vmem:[%s961 + $0x80] sm:$0x3]
        %v4236 = vld [vmem:[%s961 + $0x8c] sm:$0x3]
        %v4237 = vld [vmem:[%s961 + $0x98] sm:$0x3]
        %v4238 = vld [vmem:[%s961 + $0xa4] sm:$0x3]
        %v4239 = vld [vmem:[%s961 + $0xb0] sm:$0x3]
        %v4240 = vld [vmem:[%s961 + $0xbc] sm:$0x3]
        %v4242 = vshrl.u32 %v3727, 16
        %v4244 = vrot.slane %v4242, 5
        %v4245 = vshll.u32 %v3727, 16
        %v4247 = vrot.slane %v4245, 6
        %v4248 = vor.u32 %v4244, %v4247
        %v4249 = vrot.slane %v4248, 4
        %v4250 = vrot.slane %v3035, 5
        %v4251 = vrot.slane %v3031, 6
        %v4252 = vor.u32 %v4250, %v4251
        %v4253 = vsel %vm2282, %v4249, %v4252
        %v4254 = vrot.slane %v4252, 4
        %v4256 = vshrl.u32 %v4225, 16
        %v4258 = vrot.slane %v4256, 5
        %v4259 = vshll.u32 %v4225, 16
        %v4261 = vrot.slane %v4259, 6
        %v4262 = vor.u32 %v4258, %v4261
        %v4263 = vsel %vm2282, %v4254, %v4262
        %v4265 = vshrl.u32 %v3728, 16
        %v4267 = vrot.slane %v4265, 5
        %v4268 = vshll.u32 %v3728, 16
        %v4270 = vrot.slane %v4268, 6
        %v4271 = vor.u32 %v4267, %v4270
        %v4272 = vrot.slane %v4271, 4
        %v4273 = vrot.slane %v3059, 5
        %v4274 = vrot.slane %v3055, 6
        %v4275 = vor.u32 %v4273, %v4274
        %v4276 = vsel %vm2282, %v4272, %v4275
        %v4277 = vrot.slane %v4275, 4
        %v4279 = vshrl.u32 %v4226, 16
        %v4281 = vrot.slane %v4279, 5
        %v4282 = vshll.u32 %v4226, 16
        %v4284 = vrot.slane %v4282, 6
        %v4285 = vor.u32 %v4281, %v4284
        %v4286 = vsel %vm2282, %v4277, %v4285
        %v4288 = vshrl.u32 %v3729, 16
        %v4290 = vrot.slane %v4288, 5
        %v4291 = vshll.u32 %v3729, 16
        %v4293 = vrot.slane %v4291, 6
        %v4294 = vor.u32 %v4290, %v4293
        %v4295 = vrot.slane %v4294, 4
        %v4296 = vrot.slane %v3083, 5
        %v4297 = vrot.slane %v3079, 6
        %v4298 = vor.u32 %v4296, %v4297
        %v4299 = vsel %vm2282, %v4295, %v4298
        %v4300 = vrot.slane %v4298, 4
        %v4302 = vshrl.u32 %v4227, 16
        %v4304 = vrot.slane %v4302, 5
        %v4305 = vshll.u32 %v4227, 16
        %v4307 = vrot.slane %v4305, 6
        %v4308 = vor.u32 %v4304, %v4307
        %v4309 = vsel %vm2282, %v4300, %v4308
        %v4311 = vshrl.u32 %v3730, 16
        %v4313 = vrot.slane %v4311, 5
        %v4314 = vshll.u32 %v3730, 16
        %v4316 = vrot.slane %v4314, 6
        %v4317 = vor.u32 %v4313, %v4316
        %v4318 = vrot.slane %v4317, 4
        %v4319 = vrot.slane %v3107, 5
        %v4320 = vrot.slane %v3103, 6
        %v4321 = vor.u32 %v4319, %v4320
        %v4322 = vsel %vm2282, %v4318, %v4321
        %v4323 = vrot.slane %v4321, 4
        %v4325 = vshrl.u32 %v4228, 16
        %v4327 = vrot.slane %v4325, 5
        %v4328 = vshll.u32 %v4228, 16
        %v4330 = vrot.slane %v4328, 6
        %v4331 = vor.u32 %v4327, %v4330
        %v4332 = vsel %vm2282, %v4323, %v4331
        %v4334 = vshrl.u32 %v3731, 16
        %v4336 = vrot.slane %v4334, 5
        %v4337 = vshll.u32 %v3731, 16
        %v4339 = vrot.slane %v4337, 6
        %v4340 = vor.u32 %v4336, %v4339
        %v4341 = vrot.slane %v4340, 4
        %v4342 = vrot.slane %v3131, 5
        %v4343 = vrot.slane %v3127, 6
        %v4344 = vor.u32 %v4342, %v4343
        %v4345 = vsel %vm2282, %v4341, %v4344
        %v4346 = vrot.slane %v4344, 4
        %v4348 = vshrl.u32 %v4229, 16
        %v4350 = vrot.slane %v4348, 5
        %v4351 = vshll.u32 %v4229, 16
        %v4353 = vrot.slane %v4351, 6
        %v4354 = vor.u32 %v4350, %v4353
        %v4355 = vsel %vm2282, %v4346, %v4354
        %v4357 = vshrl.u32 %v3732, 16
        %v4359 = vrot.slane %v4357, 5
        %v4360 = vshll.u32 %v3732, 16
        %v4362 = vrot.slane %v4360, 6
        %v4363 = vor.u32 %v4359, %v4362
        %v4364 = vrot.slane %v4363, 4
        %v4365 = vrot.slane %v3155, 5
        %v4366 = vrot.slane %v3151, 6
        %v4367 = vor.u32 %v4365, %v4366
        %v4368 = vsel %vm2282, %v4364, %v4367
        %v4369 = vrot.slane %v4367, 4
        %v4371 = vshrl.u32 %v4230, 16
        %v4373 = vrot.slane %v4371, 5
        %v4374 = vshll.u32 %v4230, 16
        %v4376 = vrot.slane %v4374, 6
        %v4377 = vor.u32 %v4373, %v4376
        %v4378 = vsel %vm2282, %v4369, %v4377
        %v4380 = vshrl.u32 %v3733, 16
        %v4382 = vrot.slane %v4380, 5
        %v4383 = vshll.u32 %v3733, 16
        %v4385 = vrot.slane %v4383, 6
        %v4386 = vor.u32 %v4382, %v4385
        %v4387 = vrot.slane %v4386, 4
        %v4388 = vrot.slane %v3179, 5
        %v4389 = vrot.slane %v3175, 6
        %v4390 = vor.u32 %v4388, %v4389
        %v4391 = vsel %vm2282, %v4387, %v4390
        %v4392 = vrot.slane %v4390, 4
        %v4394 = vshrl.u32 %v4231, 16
        %v4396 = vrot.slane %v4394, 5
        %v4397 = vshll.u32 %v4231, 16
        %v4399 = vrot.slane %v4397, 6
        %v4400 = vor.u32 %v4396, %v4399
        %v4401 = vsel %vm2282, %v4392, %v4400
        %v4403 = vshrl.u32 %v3734, 16
        %v4405 = vrot.slane %v4403, 5
        %v4406 = vshll.u32 %v3734, 16
        %v4408 = vrot.slane %v4406, 6
        %v4409 = vor.u32 %v4405, %v4408
        %v4410 = vrot.slane %v4409, 4
        %v4411 = vrot.slane %v3203, 5
        %v4412 = vrot.slane %v3199, 6
        %v4413 = vor.u32 %v4411, %v4412
        %v4414 = vsel %vm2282, %v4410, %v4413
        %v4415 = vrot.slane %v4413, 4
        %v4417 = vshrl.u32 %v4232, 16
        %v4419 = vrot.slane %v4417, 5
        %v4420 = vshll.u32 %v4232, 16
        %v4422 = vrot.slane %v4420, 6
        %v4423 = vor.u32 %v4419, %v4422
        %v4424 = vsel %vm2282, %v4415, %v4423
        %v4426 = vshrl.u32 %v3735, 16
        %v4428 = vrot.slane %v4426, 5
        %v4429 = vshll.u32 %v3735, 16
        %v4431 = vrot.slane %v4429, 6
        %v4432 = vor.u32 %v4428, %v4431
        %v4433 = vrot.slane %v4432, 4
        %v4434 = vrot.slane %v3227, 5
        %v4435 = vrot.slane %v3223, 6
        %v4436 = vor.u32 %v4434, %v4435
        %v4437 = vsel %vm2282, %v4433, %v4436
        %v4438 = vrot.slane %v4436, 4
        %v4440 = vshrl.u32 %v4233, 16
        %v4442 = vrot.slane %v4440, 5
        %v4443 = vshll.u32 %v4233, 16
        %v4445 = vrot.slane %v4443, 6
        %v4446 = vor.u32 %v4442, %v4445
        %v4447 = vsel %vm2282, %v4438, %v4446
        %v4449 = vshrl.u32 %v3736, 16
        %v4451 = vrot.slane %v4449, 5
        %v4452 = vshll.u32 %v3736, 16
        %v4454 = vrot.slane %v4452, 6
        %v4455 = vor.u32 %v4451, %v4454
        %v4456 = vrot.slane %v4455, 4
        %v4457 = vrot.slane %v3251, 5
        %v4458 = vrot.slane %v3247, 6
        %v4459 = vor.u32 %v4457, %v4458
        %v4460 = vsel %vm2282, %v4456, %v4459
        %v4461 = vrot.slane %v4459, 4
        %v4463 = vshrl.u32 %v4234, 16
        %v4465 = vrot.slane %v4463, 5
        %v4466 = vshll.u32 %v4234, 16
        %v4468 = vrot.slane %v4466, 6
        %v4469 = vor.u32 %v4465, %v4468
        %v4470 = vsel %vm2282, %v4461, %v4469
        %v4472 = vshrl.u32 %v3737, 16
        %v4474 = vrot.slane %v4472, 5
        %v4475 = vshll.u32 %v3737, 16
        %v4477 = vrot.slane %v4475, 6
        %v4478 = vor.u32 %v4474, %v4477
        %v4479 = vrot.slane %v4478, 4
        %v4480 = vrot.slane %v3275, 5
        %v4481 = vrot.slane %v3271, 6
        %v4482 = vor.u32 %v4480, %v4481
        %v4483 = vsel %vm2282, %v4479, %v4482
        %v4484 = vrot.slane %v4482, 4
        %v4486 = vshrl.u32 %v4235, 16
        %v4488 = vrot.slane %v4486, 5
        %v4489 = vshll.u32 %v4235, 16
        %v4491 = vrot.slane %v4489, 6
        %v4492 = vor.u32 %v4488, %v4491
        %v4493 = vsel %vm2282, %v4484, %v4492
        %v4495 = vshrl.u32 %v3738, 16
        %v4497 = vrot.slane %v4495, 5
        %v4498 = vshll.u32 %v3738, 16
        %v4500 = vrot.slane %v4498, 6
        %v4501 = vor.u32 %v4497, %v4500
        %v4502 = vrot.slane %v4501, 4
        %v4503 = vrot.slane %v3299, 5
        %v4504 = vrot.slane %v3295, 6
        %v4505 = vor.u32 %v4503, %v4504
        %v4506 = vsel %vm2282, %v4502, %v4505
        %v4507 = vrot.slane %v4505, 4
        %v4509 = vshrl.u32 %v4236, 16
        %v4511 = vrot.slane %v4509, 5
        %v4512 = vshll.u32 %v4236, 16
        %v4514 = vrot.slane %v4512, 6
        %v4515 = vor.u32 %v4511, %v4514
        %v4516 = vsel %vm2282, %v4507, %v4515
        %v4518 = vshrl.u32 %v3739, 16
        %v4520 = vrot.slane %v4518, 5
        %v4521 = vshll.u32 %v3739, 16
        %v4523 = vrot.slane %v4521, 6
        %v4524 = vor.u32 %v4520, %v4523
        %v4525 = vrot.slane %v4524, 4
        %v4526 = vrot.slane %v3323, 5
        %v4527 = vrot.slane %v3319, 6
        %v4528 = vor.u32 %v4526, %v4527
        %v4529 = vsel %vm2282, %v4525, %v4528
        %v4530 = vrot.slane %v4528, 4
        %v4532 = vshrl.u32 %v4237, 16
        %v4534 = vrot.slane %v4532, 5
        %v4535 = vshll.u32 %v4237, 16
        %v4537 = vrot.slane %v4535, 6
        %v4538 = vor.u32 %v4534, %v4537
        %v4539 = vsel %vm2282, %v4530, %v4538
        %v4541 = vshrl.u32 %v3740, 16
        %v4543 = vrot.slane %v4541, 5
        %v4544 = vshll.u32 %v3740, 16
        %v4546 = vrot.slane %v4544, 6
        %v4547 = vor.u32 %v4543, %v4546
        %v4548 = vrot.slane %v4547, 4
        %v4549 = vrot.slane %v3347, 5
        %v4550 = vrot.slane %v3343, 6
        %v4551 = vor.u32 %v4549, %v4550
        %v4552 = vsel %vm2282, %v4548, %v4551
        %v4553 = vrot.slane %v4551, 4
        %v4555 = vshrl.u32 %v4238, 16
        %v4557 = vrot.slane %v4555, 5
        %v4558 = vshll.u32 %v4238, 16
        %v4560 = vrot.slane %v4558, 6
        %v4561 = vor.u32 %v4557, %v4560
        %v4562 = vsel %vm2282, %v4553, %v4561
        %v4564 = vshrl.u32 %v3741, 16
        %v4566 = vrot.slane %v4564, 5
        %v4567 = vshll.u32 %v3741, 16
        %v4569 = vrot.slane %v4567, 6
        %v4570 = vor.u32 %v4566, %v4569
        %v4571 = vrot.slane %v4570, 4
        %v4572 = vrot.slane %v3371, 5
        %v4573 = vrot.slane %v3367, 6
        %v4574 = vor.u32 %v4572, %v4573
        %v4575 = vsel %vm2282, %v4571, %v4574
        %v4576 = vrot.slane %v4574, 4
        %v4578 = vshrl.u32 %v4239, 16
        %v4580 = vrot.slane %v4578, 5
        %v4581 = vshll.u32 %v4239, 16
        %v4583 = vrot.slane %v4581, 6
        %v4584 = vor.u32 %v4580, %v4583
        %v4585 = vsel %vm2282, %v4576, %v4584
        %v4587 = vshrl.u32 %v3742, 16
        %v4589 = vrot.slane %v4587, 5
        %v4590 = vshll.u32 %v3742, 16
        %v4592 = vrot.slane %v4590, 6
        %v4593 = vor.u32 %v4589, %v4592
        %v4594 = vrot.slane %v4593, 4
        %v4595 = vrot.slane %v3395, 5
        %v4596 = vrot.slane %v3391, 6
        %v4597 = vor.u32 %v4595, %v4596
        %v4598 = vsel %vm2282, %v4594, %v4597
        %v4599 = vrot.slane %v4597, 4
        %v4601 = vshrl.u32 %v4240, 16
        %v4603 = vrot.slane %v4601, 5
        %v4604 = vshll.u32 %v4240, 16
        %v4606 = vrot.slane %v4604, 6
        %v4607 = vor.u32 %v4603, %v4606
        %v4608 = vsel %vm2282, %v4599, %v4607
        %s4609 = scalar_lea.vmem [#allocation8], 320
        %v4610 = vld [vmem:[%s4609] sm:$0xf]
        %v4611 = vld [vmem:[%s4609 + $0x4] sm:$0xf]
        %v4612 = vld [vmem:[%s4609 + $0x8] sm:$0xf]
        %v4613 = vld [vmem:[%s4609 + $0xc] sm:$0xf]
        %v4614 = vld [vmem:[%s4609 + $0x10] sm:$0xf]
        %v4615 = vld [vmem:[%s4609 + $0x14] sm:$0xf]
        %v4616 = vld [vmem:[%s4609 + $0x18] sm:$0xf]
        %v4617 = vld [vmem:[%s4609 + $0x1c] sm:$0xf]
        %v4618 = vld [vmem:[%s4609 + $0x20] sm:$0xf]
        %v4619 = vld [vmem:[%s4609 + $0x24] sm:$0xf]
        %v4620 = vld [vmem:[%s4609 + $0x28] sm:$0xf]
        %v4621 = vld [vmem:[%s4609 + $0x2c] sm:$0xf]
        %v4622 = vld [vmem:[%s4609 + $0x30] sm:$0xf]
        %v4623 = vld [vmem:[%s4609 + $0x34] sm:$0xf]
        %v4624 = vld [vmem:[%s4609 + $0x38] sm:$0xf]
        %v4625 = vld [vmem:[%s4609 + $0x3c] sm:$0xf]
        %v4626 = vunpack.c.l.b16 %v4253
        %v4627 = vunpack.c.l.b16 %v4263
        %v4628 = vunpack.c.l.b16 %v4276
        %v4629 = vunpack.c.l.b16 %v4286
        %v4630 = vunpack.c.l.b16 %v4299
        %v4631 = vunpack.c.l.b16 %v4309
        %v4632 = vunpack.c.l.b16 %v4322
        %v4633 = vunpack.c.l.b16 %v4332
        %v4634 = vunpack.c.l.b16 %v4345
        %v4635 = vunpack.c.l.b16 %v4355
        %v4636 = vunpack.c.l.b16 %v4368
        %v4637 = vunpack.c.l.b16 %v4378
        %v4638 = vunpack.c.l.b16 %v4391
        %v4639 = vunpack.c.l.b16 %v4401
        %v4640 = vunpack.c.l.b16 %v4414
        %v4641 = vunpack.c.l.b16 %v4424
        %v4642 = vunpack.c.l.b16 %v4437
        %v4643 = vunpack.c.l.b16 %v4447
        %v4644 = vunpack.c.l.b16 %v4460
        %v4645 = vunpack.c.l.b16 %v4470
        %v4646 = vunpack.c.l.b16 %v4483
        %v4647 = vunpack.c.l.b16 %v4493
        %v4648 = vunpack.c.l.b16 %v4506
        %v4649 = vunpack.c.l.b16 %v4516
        %v4650 = vunpack.c.l.b16 %v4529
        %v4651 = vunpack.c.l.b16 %v4539
        %v4652 = vunpack.c.l.b16 %v4552
        %v4653 = vunpack.c.l.b16 %v4562
        %v4654 = vunpack.c.l.b16 %v4575
        %v4655 = vunpack.c.l.b16 %v4585
        %v4656 = vunpack.c.l.b16 %v4598
        %v4657 = vunpack.c.l.b16 %v4608
        %v4658 = vpack.c.b16 %v4627, %v4626
        %v4659 = vpack.c.b16 %v4629, %v4628
        %v4660 = vpack.c.b16 %v4631, %v4630
        %v4661 = vpack.c.b16 %v4633, %v4632
        %v4662 = vpack.c.b16 %v4635, %v4634
        %v4663 = vpack.c.b16 %v4637, %v4636
        %v4664 = vpack.c.b16 %v4639, %v4638
        %v4665 = vpack.c.b16 %v4641, %v4640
        %v4666 = vpack.c.b16 %v4643, %v4642
        %v4667 = vpack.c.b16 %v4645, %v4644
        %v4668 = vpack.c.b16 %v4647, %v4646
        %v4669 = vpack.c.b16 %v4649, %v4648
        %v4670 = vpack.c.b16 %v4651, %v4650
        %v4671 = vpack.c.b16 %v4653, %v4652
        %v4672 = vpack.c.b16 %v4655, %v4654
        %v4673 = vpack.c.b16 %v4657, %v4656
        %v4706 = vunpack.c.l.b16 %v4610
        %v4707 = vunpack.c.l.b16 %v4611
        %v4708 = vunpack.c.l.b16 %v4612
        %v4709 = vunpack.c.l.b16 %v4613
        %v4710 = vunpack.c.l.b16 %v4614
        %v4711 = vunpack.c.l.b16 %v4615
        %v4712 = vunpack.c.l.b16 %v4616
        %v4713 = vunpack.c.l.b16 %v4617
        %v4714 = vunpack.c.l.b16 %v4618
        %v4715 = vunpack.c.l.b16 %v4619
        %v4716 = vunpack.c.l.b16 %v4620
        %v4717 = vunpack.c.l.b16 %v4621
        %v4718 = vunpack.c.l.b16 %v4622
        %v4719 = vunpack.c.l.b16 %v4623
        %v4720 = vunpack.c.l.b16 %v4624
        %v4721 = vunpack.c.l.b16 %v4625
        %v4722 = vpack.c.b16 %v4707, %v4706
        %v4723 = vpack.c.b16 %v4709, %v4708
        %v4724 = vpack.c.b16 %v4711, %v4710
        %v4725 = vpack.c.b16 %v4713, %v4712
        %v4726 = vpack.c.b16 %v4715, %v4714
        %v4727 = vpack.c.b16 %v4717, %v4716
        %v4728 = vpack.c.b16 %v4719, %v4718
        %v4729 = vpack.c.b16 %v4721, %v4720
        %4738 = vmatprep.subr.bf16.mxu0 0
        %4739 = vmatpush1.bf16.msra.mxu0 %v4722
        %4740 = vmatprep.subr.bf16.mxu0 0
        %4741 = vmatpush1.bf16.msra.mxu0 %v4723
        %4742 = vmatprep.subr.bf16.mxu0 0
        %4743 = vmatpush1.bf16.msra.mxu0 %v4724
        %4744 = vmatprep.subr.bf16.mxu0 0
        %4745 = vmatpush1.bf16.msra.mxu0 %v4725
        %4746 = vmatprep.subr.bf16.mxu0 0
        %4747 = vmatpush1.bf16.msra.mxu0 %v4726
        %4748 = vmatprep.subr.bf16.mxu0 0
        %4749 = vmatpush1.bf16.msra.mxu0 %v4727
        %4750 = vmatprep.subr.bf16.mxu0 0
        %4751 = vmatpush1.bf16.msra.mxu0 %v4728
        %4752 = vmatprep.subr.bf16.mxu0 0
        %4753 = vmatpush1.bf16.msra.mxu0 %v4729
        %4754 = vmatprep.subr.bf16.mxu0 0
        %4755 = vmatpush1.bf16.msra.mxu0 0
        %4756 = vmatprep.subr.bf16.mxu0 0
        %4757 = vmatpush1.bf16.msra.mxu0 0
        %4758 = vmatprep.subr.bf16.mxu0 0
        %4759 = vmatpush1.bf16.msra.mxu0 0
        %4760 = vmatprep.subr.bf16.mxu0 0
        %4761 = vmatpush1.bf16.msra.mxu0 0
        %4762 = vmatprep.subr.bf16.mxu0 0
        %4763 = vmatpush1.bf16.msra.mxu0 0
        %4764 = vmatprep.subr.bf16.mxu0 0
        %4765 = vmatpush1.bf16.msra.mxu0 0
        %4766 = vmatprep.subr.bf16.mxu0 0
        %4767 = vmatpush1.bf16.msra.mxu0 0
        %4768 = vmatprep.subr.bf16.mxu0 0
        %4769 = vmatpush1.bf16.msra.mxu0 0
        %4770 = vmatprep.mubr.bf16.mxu0 0
        %4771 = vmatmul.mubr.bf16.gmra.mrb[0].mxu0 %v4658
        %v4772 = vpop.f32.mrb[0].mxu0
        %v4773 = vadd.f32 0.0, %v4772
        %v4774 = vpop.f32.mrb[0].mxu0
        %v4775 = vpop.f32.mrb[0].mxu0
        %v4776 = vadd.f32 0.0, %v4775
        %v4777 = vpop.f32.mrb[0].mxu0
        %4778 = vmatprep.mubr.bf16.mxu0 0
        %4779 = vmatmul.mubr.bf16.gmra.mrb[0].mxu0 %v4659
        %v4780 = vpop.f32.mrb[0].mxu0
        %v4781 = vadd.f32 0.0, %v4780
        %v4782 = vpop.f32.mrb[0].mxu0
        %v4783 = vpop.f32.mrb[0].mxu0
        %v4784 = vadd.f32 0.0, %v4783
        %v4785 = vpop.f32.mrb[0].mxu0
        %4786 = vmatprep.mubr.bf16.mxu0 0
        %4787 = vmatmul.mubr.bf16.gmra.mrb[0].mxu0 %v4660
        %v4788 = vpop.f32.mrb[0].mxu0
        %v4789 = vadd.f32 0.0, %v4788
        %v4790 = vpop.f32.mrb[0].mxu0
        %v4791 = vpop.f32.mrb[0].mxu0
        %v4792 = vadd.f32 0.0, %v4791
        %v4793 = vpop.f32.mrb[0].mxu0
        %4794 = vmatprep.mubr.bf16.mxu0 0
        %4795 = vmatmul.mubr.bf16.gmra.mrb[0].mxu0 %v4661
        %v4796 = vpop.f32.mrb[0].mxu0
        %v4797 = vadd.f32 0.0, %v4796
        %v4798 = vpop.f32.mrb[0].mxu0
        %v4799 = vpop.f32.mrb[0].mxu0
        %v4800 = vadd.f32 0.0, %v4799
        %v4801 = vpop.f32.mrb[0].mxu0
        %4802 = vmatprep.mubr.bf16.mxu0 0
        %4803 = vmatmul.mubr.bf16.gmra.mrb[0].mxu0 %v4662
        %v4804 = vpop.f32.mrb[0].mxu0
        %v4805 = vadd.f32 0.0, %v4804
        %v4806 = vpop.f32.mrb[0].mxu0
        %v4807 = vpop.f32.mrb[0].mxu0
        %v4808 = vadd.f32 0.0, %v4807
        %v4809 = vpop.f32.mrb[0].mxu0
        %4810 = vmatprep.mubr.bf16.mxu0 0
        %4811 = vmatmul.mubr.bf16.gmra.mrb[0].mxu0 %v4663
        %v4812 = vpop.f32.mrb[0].mxu0
        %v4813 = vadd.f32 0.0, %v4812
        %v4814 = vpop.f32.mrb[0].mxu0
        %v4815 = vpop.f32.mrb[0].mxu0
        %v4816 = vadd.f32 0.0, %v4815
        %v4817 = vpop.f32.mrb[0].mxu0
        %4818 = vmatprep.mubr.bf16.mxu0 0
        %4819 = vmatmul.mubr.bf16.gmra.mrb[0].mxu0 %v4664
        %v4820 = vpop.f32.mrb[0].mxu0
        %v4821 = vadd.f32 0.0, %v4820
        %v4822 = vpop.f32.mrb[0].mxu0
        %v4823 = vpop.f32.mrb[0].mxu0
        %v4824 = vadd.f32 0.0, %v4823
        %v4825 = vpop.f32.mrb[0].mxu0
        %4826 = vmatprep.mubr.bf16.mxu0 0
        %4827 = vmatmul.mubr.bf16.gmra.mrb[0].mxu0 %v4665
        %v4828 = vpop.f32.mrb[0].mxu0
        %v4829 = vadd.f32 0.0, %v4828
        %v4830 = vpop.f32.mrb[0].mxu0
        %v4831 = vpop.f32.mrb[0].mxu0
        %v4832 = vadd.f32 0.0, %v4831
        %v4833 = vpop.f32.mrb[0].mxu0
        %4834 = vmatprep.mubr.bf16.mxu0 0
        %4835 = vmatmul.mubr.bf16.gmra.mrb[0].mxu0 %v4666
        %v4836 = vpop.f32.mrb[0].mxu0
        %v4837 = vadd.f32 0.0, %v4836
        %v4838 = vpop.f32.mrb[0].mxu0
        %v4839 = vpop.f32.mrb[0].mxu0
        %v4840 = vadd.f32 0.0, %v4839
        %v4841 = vpop.f32.mrb[0].mxu0
        %4842 = vmatprep.mubr.bf16.mxu0 0
        %4843 = vmatmul.mubr.bf16.gmra.mrb[0].mxu0 %v4667
        %v4844 = vpop.f32.mrb[0].mxu0
        %v4845 = vadd.f32 0.0, %v4844
        %v4846 = vpop.f32.mrb[0].mxu0
        %v4847 = vpop.f32.mrb[0].mxu0
        %v4848 = vadd.f32 0.0, %v4847
        %v4849 = vpop.f32.mrb[0].mxu0
        %4850 = vmatprep.mubr.bf16.mxu0 0
        %4851 = vmatmul.mubr.bf16.gmra.mrb[0].mxu0 %v4668
        %v4852 = vpop.f32.mrb[0].mxu0
        %v4853 = vadd.f32 0.0, %v4852
        %v4854 = vpop.f32.mrb[0].mxu0
        %v4855 = vpop.f32.mrb[0].mxu0
        %v4856 = vadd.f32 0.0, %v4855
        %v4857 = vpop.f32.mrb[0].mxu0
        %4858 = vmatprep.mubr.bf16.mxu0 0
        %4859 = vmatmul.mubr.bf16.gmra.mrb[0].mxu0 %v4669
        %v4860 = vpop.f32.mrb[0].mxu0
        %v4861 = vadd.f32 0.0, %v4860
        %v4862 = vpop.f32.mrb[0].mxu0
        %v4863 = vpop.f32.mrb[0].mxu0
        %v4864 = vadd.f32 0.0, %v4863
        %v4865 = vpop.f32.mrb[0].mxu0
        %4866 = vmatprep.mubr.bf16.mxu0 0
        %4867 = vmatmul.mubr.bf16.gmra.mrb[0].mxu0 %v4670
        %v4868 = vpop.f32.mrb[0].mxu0
        %v4869 = vadd.f32 0.0, %v4868
        %v4870 = vpop.f32.mrb[0].mxu0
        %v4871 = vpop.f32.mrb[0].mxu0
        %v4872 = vadd.f32 0.0, %v4871
        %v4873 = vpop.f32.mrb[0].mxu0
        %4874 = vmatprep.mubr.bf16.mxu0 0
        %4875 = vmatmul.mubr.bf16.gmra.mrb[0].mxu0 %v4671
        %v4876 = vpop.f32.mrb[0].mxu0
        %v4877 = vadd.f32 0.0, %v4876
        %v4878 = vpop.f32.mrb[0].mxu0
        %v4879 = vpop.f32.mrb[0].mxu0
        %v4880 = vadd.f32 0.0, %v4879
        %v4881 = vpop.f32.mrb[0].mxu0
        %4882 = vmatprep.mubr.bf16.mxu0 0
        %4883 = vmatmul.mubr.bf16.gmra.mrb[0].mxu0 %v4672
        %v4884 = vpop.f32.mrb[0].mxu0
        %v4885 = vadd.f32 0.0, %v4884
        %v4886 = vpop.f32.mrb[0].mxu0
        %v4887 = vpop.f32.mrb[0].mxu0
        %v4888 = vadd.f32 0.0, %v4887
        %v4889 = vpop.f32.mrb[0].mxu0
        %4890 = vmatprep.mubr.bf16.mxu0 0
        %4891 = vmatmul.mubr.bf16.gmra.mrb[0].mxu0 %v4673
        %v4892 = vpop.f32.mrb[0].mxu0
        %v4893 = vadd.f32 0.0, %v4892
        %v4894 = vpop.f32.mrb[0].mxu0
        %v4895 = vpop.f32.mrb[0].mxu0
        %v4896 = vadd.f32 0.0, %v4895
        %v4897 = vpop.f32.mrb[0].mxu0
        %4898 = vdwg.mxu0
        %v4899 = vadd.f32 %v4193, %v4773
        %v4900 = vadd.f32 %v4194, %v4776
        %v4901 = vadd.f32 %v4195, %v4781
        %v4902 = vadd.f32 %v4196, %v4784
        %v4903 = vadd.f32 %v4197, %v4789
        %v4904 = vadd.f32 %v4198, %v4792
        %v4905 = vadd.f32 %v4199, %v4797
        %v4906 = vadd.f32 %v4200, %v4800
        %v4907 = vadd.f32 %v4201, %v4805
        %v4908 = vadd.f32 %v4202, %v4808
        %v4909 = vadd.f32 %v4203, %v4813
        %v4910 = vadd.f32 %v4204, %v4816
        %v4911 = vadd.f32 %v4205, %v4821
        %v4912 = vadd.f32 %v4206, %v4824
        %v4913 = vadd.f32 %v4207, %v4829
        %v4914 = vadd.f32 %v4208, %v4832
        %v4915 = vadd.f32 %v4209, %v4837
        %v4916 = vadd.f32 %v4210, %v4840
        %v4917 = vadd.f32 %v4211, %v4845
        %v4918 = vadd.f32 %v4212, %v4848
        %v4919 = vadd.f32 %v4213, %v4853
        %v4920 = vadd.f32 %v4214, %v4856
        %v4921 = vadd.f32 %v4215, %v4861
        %v4922 = vadd.f32 %v4216, %v4864
        %v4923 = vadd.f32 %v4217, %v4869
        %v4924 = vadd.f32 %v4218, %v4872
        %v4925 = vadd.f32 %v4219, %v4877
        %v4926 = vadd.f32 %v4220, %v4880
        %v4927 = vadd.f32 %v4221, %v4885
        %v4928 = vadd.f32 %v4222, %v4888
        %v4929 = vadd.f32 %v4223, %v4893
        %v4930 = vadd.f32 %v4224, %v4896
        %s4931 = scalar_lea.vmem [#allocation2], 24
        %v4932 = vld [vmem:[%s4931] sm:$0xf]
        %v4933 = vld [vmem:[%s4931 + $0x4] sm:$0xf]
        %v4934 = vld [vmem:[%s4931 + $0x8] sm:$0x1]
        %v4935 = vld [vmem:[%s4931 + $0xc] sm:$0xf]
        %v4936 = vld [vmem:[%s4931 + $0x10] sm:$0xf]
        %v4937 = vld [vmem:[%s4931 + $0x14] sm:$0x1]
        %v4938 = vld [vmem:[%s4931 + $0x18] sm:$0xf]
        %v4939 = vld [vmem:[%s4931 + $0x1c] sm:$0xf]
        %v4940 = vld [vmem:[%s4931 + $0x20] sm:$0x1]
        %v4941 = vld [vmem:[%s4931 + $0x24] sm:$0xf]
        %v4942 = vld [vmem:[%s4931 + $0x28] sm:$0xf]
        %v4943 = vld [vmem:[%s4931 + $0x2c] sm:$0x1]
        %v4944 = vld [vmem:[%s4931 + $0x30] sm:$0xf]
        %v4945 = vld [vmem:[%s4931 + $0x34] sm:$0xf]
        %v4946 = vld [vmem:[%s4931 + $0x38] sm:$0x1]
        %v4947 = vld [vmem:[%s4931 + $0x3c] sm:$0xf]
        %v4948 = vld [vmem:[%s4931 + $0x40] sm:$0xf]
        %v4949 = vld [vmem:[%s4931 + $0x44] sm:$0x1]
        %v4950 = vld [vmem:[%s4931 + $0x48] sm:$0xf]
        %v4951 = vld [vmem:[%s4931 + $0x4c] sm:$0xf]
        %v4952 = vld [vmem:[%s4931 + $0x50] sm:$0x1]
        %v4953 = vld [vmem:[%s4931 + $0x54] sm:$0xf]
        %v4954 = vld [vmem:[%s4931 + $0x58] sm:$0xf]
        %v4955 = vld [vmem:[%s4931 + $0x5c] sm:$0x1]
        %v4956 = vld [vmem:[%s4931 + $0x60] sm:$0xf]
        %v4957 = vld [vmem:[%s4931 + $0x64] sm:$0xf]
        %v4958 = vld [vmem:[%s4931 + $0x68] sm:$0x1]
        %v4959 = vld [vmem:[%s4931 + $0x6c] sm:$0xf]
        %v4960 = vld [vmem:[%s4931 + $0x70] sm:$0xf]
        %v4961 = vld [vmem:[%s4931 + $0x74] sm:$0x1]
        %v4962 = vld [vmem:[%s4931 + $0x78] sm:$0xf]
        %v4963 = vld [vmem:[%s4931 + $0x7c] sm:$0xf]
        %v4964 = vld [vmem:[%s4931 + $0x80] sm:$0x1]
        %v4965 = vld [vmem:[%s4931 + $0x84] sm:$0xf]
        %v4966 = vld [vmem:[%s4931 + $0x88] sm:$0xf]
        %v4967 = vld [vmem:[%s4931 + $0x8c] sm:$0x1]
        %v4968 = vld [vmem:[%s4931 + $0x90] sm:$0xf]
        %v4969 = vld [vmem:[%s4931 + $0x94] sm:$0xf]
        %v4970 = vld [vmem:[%s4931 + $0x98] sm:$0x1]
        %v4971 = vld [vmem:[%s4931 + $0x9c] sm:$0xf]
        %v4972 = vld [vmem:[%s4931 + $0xa0] sm:$0xf]
        %v4973 = vld [vmem:[%s4931 + $0xa4] sm:$0x1]
        %v4974 = vld [vmem:[%s4931 + $0xa8] sm:$0xf]
        %v4975 = vld [vmem:[%s4931 + $0xac] sm:$0xf]
        %v4976 = vld [vmem:[%s4931 + $0xb0] sm:$0x1]
        %v4977 = vld [vmem:[%s4931 + $0xb4] sm:$0xf]
        %v4978 = vld [vmem:[%s4931 + $0xb8] sm:$0xf]
        %v4979 = vld [vmem:[%s4931 + $0xbc] sm:$0x1]
        %v4981 = vshrl.u32 %v4932, 16
        %v4983 = vrot.slane %v4981, 4
        %v4984 = vshll.u32 %v4932, 16
        %v4986 = vrot.slane %v4984, 5
        %v4987 = vor.u32 %v4983, %v4986
        %v4988 = vrot.slane %v4987, 4
        %v4990 = vshll.u32 %v4933, 16
        %v4992 = vrot.slane %v4990, 5
        %v4993 = vsel %vm1121, %v4988, %v4992
        %v4994 = vshrl.u32 %v4933, 16
        %v4996 = vrot.slane %v4994, 4
        %v4997 = vor.u32 %v4996, %v4992
        %v4998 = vrot.slane %v4997, 4
        %v5000 = vshll.u32 %v4934, 16
        %v5002 = vrot.slane %v5000, 5
        %v5003 = vsel %vm1121, %v4998, %v5002
        %v5005 = vshrl.u32 %v4935, 16
        %v5007 = vrot.slane %v5005, 4
        %v5008 = vshll.u32 %v4935, 16
        %v5010 = vrot.slane %v5008, 5
        %v5011 = vor.u32 %v5007, %v5010
        %v5012 = vrot.slane %v5011, 4
        %v5014 = vshll.u32 %v4936, 16
        %v5016 = vrot.slane %v5014, 5
        %v5017 = vsel %vm1121, %v5012, %v5016
        %v5018 = vshrl.u32 %v4936, 16
        %v5020 = vrot.slane %v5018, 4
        %v5021 = vor.u32 %v5020, %v5016
        %v5022 = vrot.slane %v5021, 4
        %v5024 = vshll.u32 %v4937, 16
        %v5026 = vrot.slane %v5024, 5
        %v5027 = vsel %vm1121, %v5022, %v5026
        %v5029 = vshrl.u32 %v4938, 16
        %v5031 = vrot.slane %v5029, 4
        %v5032 = vshll.u32 %v4938, 16
        %v5034 = vrot.slane %v5032, 5
        %v5035 = vor.u32 %v5031, %v5034
        %v5036 = vrot.slane %v5035, 4
        %v5038 = vshll.u32 %v4939, 16
        %v5040 = vrot.slane %v5038, 5
        %v5041 = vsel %vm1121, %v5036, %v5040
        %v5042 = vshrl.u32 %v4939, 16
        %v5044 = vrot.slane %v5042, 4
        %v5045 = vor.u32 %v5044, %v5040
        %v5046 = vrot.slane %v5045, 4
        %v5048 = vshll.u32 %v4940, 16
        %v5050 = vrot.slane %v5048, 5
        %v5051 = vsel %vm1121, %v5046, %v5050
        %v5053 = vshrl.u32 %v4941, 16
        %v5055 = vrot.slane %v5053, 4
        %v5056 = vshll.u32 %v4941, 16
        %v5058 = vrot.slane %v5056, 5
        %v5059 = vor.u32 %v5055, %v5058
        %v5060 = vrot.slane %v5059, 4
        %v5062 = vshll.u32 %v4942, 16
        %v5064 = vrot.slane %v5062, 5
        %v5065 = vsel %vm1121, %v5060, %v5064
        %v5066 = vshrl.u32 %v4942, 16
        %v5068 = vrot.slane %v5066, 4
        %v5069 = vor.u32 %v5068, %v5064
        %v5070 = vrot.slane %v5069, 4
        %v5072 = vshll.u32 %v4943, 16
        %v5074 = vrot.slane %v5072, 5
        %v5075 = vsel %vm1121, %v5070, %v5074
        %v5077 = vshrl.u32 %v4944, 16
        %v5079 = vrot.slane %v5077, 4
        %v5080 = vshll.u32 %v4944, 16
        %v5082 = vrot.slane %v5080, 5
        %v5083 = vor.u32 %v5079, %v5082
        %v5084 = vrot.slane %v5083, 4
        %v5086 = vshll.u32 %v4945, 16
        %v5088 = vrot.slane %v5086, 5
        %v5089 = vsel %vm1121, %v5084, %v5088
        %v5090 = vshrl.u32 %v4945, 16
        %v5092 = vrot.slane %v5090, 4
        %v5093 = vor.u32 %v5092, %v5088
        %v5094 = vrot.slane %v5093, 4
        %v5096 = vshll.u32 %v4946, 16
        %v5098 = vrot.slane %v5096, 5
        %v5099 = vsel %vm1121, %v5094, %v5098
        %v5101 = vshrl.u32 %v4947, 16
        %v5103 = vrot.slane %v5101, 4
        %v5104 = vshll.u32 %v4947, 16
        %v5106 = vrot.slane %v5104, 5
        %v5107 = vor.u32 %v5103, %v5106
        %v5108 = vrot.slane %v5107, 4
        %v5110 = vshll.u32 %v4948, 16
        %v5112 = vrot.slane %v5110, 5
        %v5113 = vsel %vm1121, %v5108, %v5112
        %v5114 = vshrl.u32 %v4948, 16
        %v5116 = vrot.slane %v5114, 4
        %v5117 = vor.u32 %v5116, %v5112
        %v5118 = vrot.slane %v5117, 4
        %v5120 = vshll.u32 %v4949, 16
        %v5122 = vrot.slane %v5120, 5
        %v5123 = vsel %vm1121, %v5118, %v5122
        %v5125 = vshrl.u32 %v4950, 16
        %v5127 = vrot.slane %v5125, 4
        %v5128 = vshll.u32 %v4950, 16
        %v5130 = vrot.slane %v5128, 5
        %v5131 = vor.u32 %v5127, %v5130
        %v5132 = vrot.slane %v5131, 4
        %v5134 = vshll.u32 %v4951, 16
        %v5136 = vrot.slane %v5134, 5
        %v5137 = vsel %vm1121, %v5132, %v5136
        %v5138 = vshrl.u32 %v4951, 16
        %v5140 = vrot.slane %v5138, 4
        %v5141 = vor.u32 %v5140, %v5136
        %v5142 = vrot.slane %v5141, 4
        %v5144 = vshll.u32 %v4952, 16
        %v5146 = vrot.slane %v5144, 5
        %v5147 = vsel %vm1121, %v5142, %v5146
        %v5149 = vshrl.u32 %v4953, 16
        %v5151 = vrot.slane %v5149, 4
        %v5152 = vshll.u32 %v4953, 16
        %v5154 = vrot.slane %v5152, 5
        %v5155 = vor.u32 %v5151, %v5154
        %v5156 = vrot.slane %v5155, 4
        %v5158 = vshll.u32 %v4954, 16
        %v5160 = vrot.slane %v5158, 5
        %v5161 = vsel %vm1121, %v5156, %v5160
        %v5162 = vshrl.u32 %v4954, 16
        %v5164 = vrot.slane %v5162, 4
        %v5165 = vor.u32 %v5164, %v5160
        %v5166 = vrot.slane %v5165, 4
        %v5168 = vshll.u32 %v4955, 16
        %v5170 = vrot.slane %v5168, 5
        %v5171 = vsel %vm1121, %v5166, %v5170
        %v5173 = vshrl.u32 %v4956, 16
        %v5175 = vrot.slane %v5173, 4
        %v5176 = vshll.u32 %v4956, 16
        %v5178 = vrot.slane %v5176, 5
        %v5179 = vor.u32 %v5175, %v5178
        %v5180 = vrot.slane %v5179, 4
        %v5182 = vshll.u32 %v4957, 16
        %v5184 = vrot.slane %v5182, 5
        %v5185 = vsel %vm1121, %v5180, %v5184
        %v5186 = vshrl.u32 %v4957, 16
        %v5188 = vrot.slane %v5186, 4
        %v5189 = vor.u32 %v5188, %v5184
        %v5190 = vrot.slane %v5189, 4
        %v5192 = vshll.u32 %v4958, 16
        %v5194 = vrot.slane %v5192, 5
        %v5195 = vsel %vm1121, %v5190, %v5194
        %v5197 = vshrl.u32 %v4959, 16
        %v5199 = vrot.slane %v5197, 4
        %v5200 = vshll.u32 %v4959, 16
        %v5202 = vrot.slane %v5200, 5
        %v5203 = vor.u32 %v5199, %v5202
        %v5204 = vrot.slane %v5203, 4
        %v5206 = vshll.u32 %v4960, 16
        %v5208 = vrot.slane %v5206, 5
        %v5209 = vsel %vm1121, %v5204, %v5208
        %v5210 = vshrl.u32 %v4960, 16
        %v5212 = vrot.slane %v5210, 4
        %v5213 = vor.u32 %v5212, %v5208
        %v5214 = vrot.slane %v5213, 4
        %v5216 = vshll.u32 %v4961, 16
        %v5218 = vrot.slane %v5216, 5
        %v5219 = vsel %vm1121, %v5214, %v5218
        %v5221 = vshrl.u32 %v4962, 16
        %v5223 = vrot.slane %v5221, 4
        %v5224 = vshll.u32 %v4962, 16
        %v5226 = vrot.slane %v5224, 5
        %v5227 = vor.u32 %v5223, %v5226
        %v5228 = vrot.slane %v5227, 4
        %v5230 = vshll.u32 %v4963, 16
        %v5232 = vrot.slane %v5230, 5
        %v5233 = vsel %vm1121, %v5228, %v5232
        %v5234 = vshrl.u32 %v4963, 16
        %v5236 = vrot.slane %v5234, 4
        %v5237 = vor.u32 %v5236, %v5232
        %v5238 = vrot.slane %v5237, 4
        %v5240 = vshll.u32 %v4964, 16
        %v5242 = vrot.slane %v5240, 5
        %v5243 = vsel %vm1121, %v5238, %v5242
        %v5245 = vshrl.u32 %v4965, 16
        %v5247 = vrot.slane %v5245, 4
        %v5248 = vshll.u32 %v4965, 16
        %v5250 = vrot.slane %v5248, 5
        %v5251 = vor.u32 %v5247, %v5250
        %v5252 = vrot.slane %v5251, 4
        %v5254 = vshll.u32 %v4966, 16
        %v5256 = vrot.slane %v5254, 5
        %v5257 = vsel %vm1121, %v5252, %v5256
        %v5258 = vshrl.u32 %v4966, 16
        %v5260 = vrot.slane %v5258, 4
        %v5261 = vor.u32 %v5260, %v5256
        %v5262 = vrot.slane %v5261, 4
        %v5264 = vshll.u32 %v4967, 16
        %v5266 = vrot.slane %v5264, 5
        %v5267 = vsel %vm1121, %v5262, %v5266
        %v5269 = vshrl.u32 %v4968, 16
        %v5271 = vrot.slane %v5269, 4
        %v5272 = vshll.u32 %v4968, 16
        %v5274 = vrot.slane %v5272, 5
        %v5275 = vor.u32 %v5271, %v5274
        %v5276 = vrot.slane %v5275, 4
        %v5278 = vshll.u32 %v4969, 16
        %v5280 = vrot.slane %v5278, 5
        %v5281 = vsel %vm1121, %v5276, %v5280
        %v5282 = vshrl.u32 %v4969, 16
        %v5284 = vrot.slane %v5282, 4
        %v5285 = vor.u32 %v5284, %v5280
        %v5286 = vrot.slane %v5285, 4
        %v5288 = vshll.u32 %v4970, 16
        %v5290 = vrot.slane %v5288, 5
        %v5291 = vsel %vm1121, %v5286, %v5290
        %v5293 = vshrl.u32 %v4971, 16
        %v5295 = vrot.slane %v5293, 4
        %v5296 = vshll.u32 %v4971, 16
        %v5298 = vrot.slane %v5296, 5
        %v5299 = vor.u32 %v5295, %v5298
        %v5300 = vrot.slane %v5299, 4
        %v5302 = vshll.u32 %v4972, 16
        %v5304 = vrot.slane %v5302, 5
        %v5305 = vsel %vm1121, %v5300, %v5304
        %v5306 = vshrl.u32 %v4972, 16
        %v5308 = vrot.slane %v5306, 4
        %v5309 = vor.u32 %v5308, %v5304
        %v5310 = vrot.slane %v5309, 4
        %v5312 = vshll.u32 %v4973, 16
        %v5314 = vrot.slane %v5312, 5
        %v5315 = vsel %vm1121, %v5310, %v5314
        %v5317 = vshrl.u32 %v4974, 16
        %v5319 = vrot.slane %v5317, 4
        %v5320 = vshll.u32 %v4974, 16
        %v5322 = vrot.slane %v5320, 5
        %v5323 = vor.u32 %v5319, %v5322
        %v5324 = vrot.slane %v5323, 4
        %v5326 = vshll.u32 %v4975, 16
        %v5328 = vrot.slane %v5326, 5
        %v5329 = vsel %vm1121, %v5324, %v5328
        %v5330 = vshrl.u32 %v4975, 16
        %v5332 = vrot.slane %v5330, 4
        %v5333 = vor.u32 %v5332, %v5328
        %v5334 = vrot.slane %v5333, 4
        %v5336 = vshll.u32 %v4976, 16
        %v5338 = vrot.slane %v5336, 5
        %v5339 = vsel %vm1121, %v5334, %v5338
        %v5341 = vshrl.u32 %v4977, 16
        %v5343 = vrot.slane %v5341, 4
        %v5344 = vshll.u32 %v4977, 16
        %v5346 = vrot.slane %v5344, 5
        %v5347 = vor.u32 %v5343, %v5346
        %v5348 = vrot.slane %v5347, 4
        %v5350 = vshll.u32 %v4978, 16
        %v5352 = vrot.slane %v5350, 5
        %v5353 = vsel %vm1121, %v5348, %v5352
        %v5354 = vshrl.u32 %v4978, 16
        %v5356 = vrot.slane %v5354, 4
        %v5357 = vor.u32 %v5356, %v5352
        %v5358 = vrot.slane %v5357, 4
        %v5360 = vshll.u32 %v4979, 16
        %v5362 = vrot.slane %v5360, 5
        %v5363 = vsel %vm1121, %v5358, %v5362
        %s5364 = scalar_lea.vmem [#allocation8], 384
        %v5365 = vld [vmem:[%s5364] sm:$0xf]
        %v5366 = vld [vmem:[%s5364 + $0x4] sm:$0xf]
        %v5367 = vld [vmem:[%s5364 + $0x8] sm:$0xf]
        %v5368 = vld [vmem:[%s5364 + $0xc] sm:$0xf]
        %v5369 = vld [vmem:[%s5364 + $0x10] sm:$0xf]
        %v5370 = vld [vmem:[%s5364 + $0x14] sm:$0xf]
        %v5371 = vld [vmem:[%s5364 + $0x18] sm:$0xf]
        %v5372 = vld [vmem:[%s5364 + $0x1c] sm:$0xf]
        %v5373 = vld [vmem:[%s5364 + $0x20] sm:$0xf]
        %v5374 = vld [vmem:[%s5364 + $0x24] sm:$0xf]
        %v5375 = vld [vmem:[%s5364 + $0x28] sm:$0xf]
        %v5376 = vld [vmem:[%s5364 + $0x2c] sm:$0xf]
        %v5377 = vld [vmem:[%s5364 + $0x30] sm:$0xf]
        %v5378 = vld [vmem:[%s5364 + $0x34] sm:$0xf]
        %v5379 = vld [vmem:[%s5364 + $0x38] sm:$0xf]
        %v5380 = vld [vmem:[%s5364 + $0x3c] sm:$0xf]
        %v5381 = vunpack.c.l.b16 %v4993
        %v5382 = vunpack.c.l.b16 %v5003
        %v5383 = vunpack.c.l.b16 %v5017
        %v5384 = vunpack.c.l.b16 %v5027
        %v5385 = vunpack.c.l.b16 %v5041
        %v5386 = vunpack.c.l.b16 %v5051
        %v5387 = vunpack.c.l.b16 %v5065
        %v5388 = vunpack.c.l.b16 %v5075
        %v5389 = vunpack.c.l.b16 %v5089
        %v5390 = vunpack.c.l.b16 %v5099
        %v5391 = vunpack.c.l.b16 %v5113
        %v5392 = vunpack.c.l.b16 %v5123
        %v5393 = vunpack.c.l.b16 %v5137
        %v5394 = vunpack.c.l.b16 %v5147
        %v5395 = vunpack.c.l.b16 %v5161
        %v5396 = vunpack.c.l.b16 %v5171
        %v5397 = vunpack.c.l.b16 %v5185
        %v5398 = vunpack.c.l.b16 %v5195
        %v5399 = vunpack.c.l.b16 %v5209
        %v5400 = vunpack.c.l.b16 %v5219
        %v5401 = vunpack.c.l.b16 %v5233
        %v5402 = vunpack.c.l.b16 %v5243
        %v5403 = vunpack.c.l.b16 %v5257
        %v5404 = vunpack.c.l.b16 %v5267
        %v5405 = vunpack.c.l.b16 %v5281
        %v5406 = vunpack.c.l.b16 %v5291
        %v5407 = vunpack.c.l.b16 %v5305
        %v5408 = vunpack.c.l.b16 %v5315
        %v5409 = vunpack.c.l.b16 %v5329
        %v5410 = vunpack.c.l.b16 %v5339
        %v5411 = vunpack.c.l.b16 %v5353
        %v5412 = vunpack.c.l.b16 %v5363
        %v5413 = vpack.c.b16 %v5382, %v5381
        %v5414 = vpack.c.b16 %v5384, %v5383
        %v5415 = vpack.c.b16 %v5386, %v5385
        %v5416 = vpack.c.b16 %v5388, %v5387
        %v5417 = vpack.c.b16 %v5390, %v5389
        %v5418 = vpack.c.b16 %v5392, %v5391
        %v5419 = vpack.c.b16 %v5394, %v5393
        %v5420 = vpack.c.b16 %v5396, %v5395
        %v5421 = vpack.c.b16 %v5398, %v5397
        %v5422 = vpack.c.b16 %v5400, %v5399
        %v5423 = vpack.c.b16 %v5402, %v5401
        %v5424 = vpack.c.b16 %v5404, %v5403
        %v5425 = vpack.c.b16 %v5406, %v5405
        %v5426 = vpack.c.b16 %v5408, %v5407
        %v5427 = vpack.c.b16 %v5410, %v5409
        %v5428 = vpack.c.b16 %v5412, %v5411
        %v5461 = vunpack.c.l.b16 %v5365
        %v5462 = vunpack.c.l.b16 %v5366
        %v5463 = vunpack.c.l.b16 %v5367
        %v5464 = vunpack.c.l.b16 %v5368
        %v5465 = vunpack.c.l.b16 %v5369
        %v5466 = vunpack.c.l.b16 %v5370
        %v5467 = vunpack.c.l.b16 %v5371
        %v5468 = vunpack.c.l.b16 %v5372
        %v5469 = vunpack.c.l.b16 %v5373
        %v5470 = vunpack.c.l.b16 %v5374
        %v5471 = vunpack.c.l.b16 %v5375
        %v5472 = vunpack.c.l.b16 %v5376
        %v5473 = vunpack.c.l.b16 %v5377
        %v5474 = vunpack.c.l.b16 %v5378
        %v5475 = vunpack.c.l.b16 %v5379
        %v5476 = vunpack.c.l.b16 %v5380
        %v5477 = vpack.c.b16 %v5462, %v5461
        %v5478 = vpack.c.b16 %v5464, %v5463
        %v5479 = vpack.c.b16 %v5466, %v5465
        %v5480 = vpack.c.b16 %v5468, %v5467
        %v5481 = vpack.c.b16 %v5470, %v5469
        %v5482 = vpack.c.b16 %v5472, %v5471
        %v5483 = vpack.c.b16 %v5474, %v5473
        %v5484 = vpack.c.b16 %v5476, %v5475
        %5493 = vmatprep.subr.bf16.mxu0 0
        %5494 = vmatpush1.bf16.msra.mxu0 %v5477
        %5495 = vmatprep.subr.bf16.mxu0 0
        %5496 = vmatpush1.bf16.msra.mxu0 %v5478
        %5497 = vmatprep.subr.bf16.mxu0 0
        %5498 = vmatpush1.bf16.msra.mxu0 %v5479
        %5499 = vmatprep.subr.bf16.mxu0 0
        %5500 = vmatpush1.bf16.msra.mxu0 %v5480
        %5501 = vmatprep.subr.bf16.mxu0 0
        %5502 = vmatpush1.bf16.msra.mxu0 %v5481
        %5503 = vmatprep.subr.bf16.mxu0 0
        %5504 = vmatpush1.bf16.msra.mxu0 %v5482
        %5505 = vmatprep.subr.bf16.mxu0 0
        %5506 = vmatpush1.bf16.msra.mxu0 %v5483
        %5507 = vmatprep.subr.bf16.mxu0 0
        %5508 = vmatpush1.bf16.msra.mxu0 %v5484
        %5509 = vmatprep.subr.bf16.mxu0 0
        %5510 = vmatpush1.bf16.msra.mxu0 0
        %5511 = vmatprep.subr.bf16.mxu0 0
        %5512 = vmatpush1.bf16.msra.mxu0 0
        %5513 = vmatprep.subr.bf16.mxu0 0
        %5514 = vmatpush1.bf16.msra.mxu0 0
        %5515 = vmatprep.subr.bf16.mxu0 0
        %5516 = vmatpush1.bf16.msra.mxu0 0
        %5517 = vmatprep.subr.bf16.mxu0 0
        %5518 = vmatpush1.bf16.msra.mxu0 0
        %5519 = vmatprep.subr.bf16.mxu0 0
        %5520 = vmatpush1.bf16.msra.mxu0 0
        %5521 = vmatprep.subr.bf16.mxu0 0
        %5522 = vmatpush1.bf16.msra.mxu0 0
        %5523 = vmatprep.subr.bf16.mxu0 0
        %5524 = vmatpush1.bf16.msra.mxu0 0
        %5525 = vmatprep.mubr.bf16.mxu0 0
        %5526 = vmatmul.mubr.bf16.gmra.mrb[0].mxu0 %v5413
        %v5527 = vpop.f32.mrb[0].mxu0
        %v5528 = vadd.f32 0.0, %v5527
        %v5529 = vpop.f32.mrb[0].mxu0
        %v5530 = vpop.f32.mrb[0].mxu0
        %v5531 = vadd.f32 0.0, %v5530
        %v5532 = vpop.f32.mrb[0].mxu0
        %5533 = vmatprep.mubr.bf16.mxu0 0
        %5534 = vmatmul.mubr.bf16.gmra.mrb[0].mxu0 %v5414
        %v5535 = vpop.f32.mrb[0].mxu0
        %v5536 = vadd.f32 0.0, %v5535
        %v5537 = vpop.f32.mrb[0].mxu0
        %v5538 = vpop.f32.mrb[0].mxu0
        %v5539 = vadd.f32 0.0, %v5538
        %v5540 = vpop.f32.mrb[0].mxu0
        %5541 = vmatprep.mubr.bf16.mxu0 0
        %5542 = vmatmul.mubr.bf16.gmra.mrb[0].mxu0 %v5415
        %v5543 = vpop.f32.mrb[0].mxu0
        %v5544 = vadd.f32 0.0, %v5543
        %v5545 = vpop.f32.mrb[0].mxu0
        %v5546 = vpop.f32.mrb[0].mxu0
        %v5547 = vadd.f32 0.0, %v5546
        %v5548 = vpop.f32.mrb[0].mxu0
        %5549 = vmatprep.mubr.bf16.mxu0 0
        %5550 = vmatmul.mubr.bf16.gmra.mrb[0].mxu0 %v5416
        %v5551 = vpop.f32.mrb[0].mxu0
        %v5552 = vadd.f32 0.0, %v5551
        %v5553 = vpop.f32.mrb[0].mxu0
        %v5554 = vpop.f32.mrb[0].mxu0
        %v5555 = vadd.f32 0.0, %v5554
        %v5556 = vpop.f32.mrb[0].mxu0
        %5557 = vmatprep.mubr.bf16.mxu0 0
        %5558 = vmatmul.mubr.bf16.gmra.mrb[0].mxu0 %v5417
        %v5559 = vpop.f32.mrb[0].mxu0
        %v5560 = vadd.f32 0.0, %v5559
        %v5561 = vpop.f32.mrb[0].mxu0
        %v5562 = vpop.f32.mrb[0].mxu0
        %v5563 = vadd.f32 0.0, %v5562
        %v5564 = vpop.f32.mrb[0].mxu0
        %5565 = vmatprep.mubr.bf16.mxu0 0
        %5566 = vmatmul.mubr.bf16.gmra.mrb[0].mxu0 %v5418
        %v5567 = vpop.f32.mrb[0].mxu0
        %v5568 = vadd.f32 0.0, %v5567
        %v5569 = vpop.f32.mrb[0].mxu0
        %v5570 = vpop.f32.mrb[0].mxu0
        %v5571 = vadd.f32 0.0, %v5570
        %v5572 = vpop.f32.mrb[0].mxu0
        %5573 = vmatprep.mubr.bf16.mxu0 0
        %5574 = vmatmul.mubr.bf16.gmra.mrb[0].mxu0 %v5419
        %v5575 = vpop.f32.mrb[0].mxu0
        %v5576 = vadd.f32 0.0, %v5575
        %v5577 = vpop.f32.mrb[0].mxu0
        %v5578 = vpop.f32.mrb[0].mxu0
        %v5579 = vadd.f32 0.0, %v5578
        %v5580 = vpop.f32.mrb[0].mxu0
        %5581 = vmatprep.mubr.bf16.mxu0 0
        %5582 = vmatmul.mubr.bf16.gmra.mrb[0].mxu0 %v5420
        %v5583 = vpop.f32.mrb[0].mxu0
        %v5584 = vadd.f32 0.0, %v5583
        %v5585 = vpop.f32.mrb[0].mxu0
        %v5586 = vpop.f32.mrb[0].mxu0
        %v5587 = vadd.f32 0.0, %v5586
        %v5588 = vpop.f32.mrb[0].mxu0
        %5589 = vmatprep.mubr.bf16.mxu0 0
        %5590 = vmatmul.mubr.bf16.gmra.mrb[0].mxu0 %v5421
        %v5591 = vpop.f32.mrb[0].mxu0
        %v5592 = vadd.f32 0.0, %v5591
        %v5593 = vpop.f32.mrb[0].mxu0
        %v5594 = vpop.f32.mrb[0].mxu0
        %v5595 = vadd.f32 0.0, %v5594
        %v5596 = vpop.f32.mrb[0].mxu0
        %5597 = vmatprep.mubr.bf16.mxu0 0
        %5598 = vmatmul.mubr.bf16.gmra.mrb[0].mxu0 %v5422
        %v5599 = vpop.f32.mrb[0].mxu0
        %v5600 = vadd.f32 0.0, %v5599
        %v5601 = vpop.f32.mrb[0].mxu0
        %v5602 = vpop.f32.mrb[0].mxu0
        %v5603 = vadd.f32 0.0, %v5602
        %v5604 = vpop.f32.mrb[0].mxu0
        %5605 = vmatprep.mubr.bf16.mxu0 0
        %5606 = vmatmul.mubr.bf16.gmra.mrb[0].mxu0 %v5423
        %v5607 = vpop.f32.mrb[0].mxu0
        %v5608 = vadd.f32 0.0, %v5607
        %v5609 = vpop.f32.mrb[0].mxu0
        %v5610 = vpop.f32.mrb[0].mxu0
        %v5611 = vadd.f32 0.0, %v5610
        %v5612 = vpop.f32.mrb[0].mxu0
        %5613 = vmatprep.mubr.bf16.mxu0 0
        %5614 = vmatmul.mubr.bf16.gmra.mrb[0].mxu0 %v5424
        %v5615 = vpop.f32.mrb[0].mxu0
        %v5616 = vadd.f32 0.0, %v5615
        %v5617 = vpop.f32.mrb[0].mxu0
        %v5618 = vpop.f32.mrb[0].mxu0
        %v5619 = vadd.f32 0.0, %v5618
        %v5620 = vpop.f32.mrb[0].mxu0
        %5621 = vmatprep.mubr.bf16.mxu0 0
        %5622 = vmatmul.mubr.bf16.gmra.mrb[0].mxu0 %v5425
        %v5623 = vpop.f32.mrb[0].mxu0
        %v5624 = vadd.f32 0.0, %v5623
        %v5625 = vpop.f32.mrb[0].mxu0
        %v5626 = vpop.f32.mrb[0].mxu0
        %v5627 = vadd.f32 0.0, %v5626
        %v5628 = vpop.f32.mrb[0].mxu0
        %5629 = vmatprep.mubr.bf16.mxu0 0
        %5630 = vmatmul.mubr.bf16.gmra.mrb[0].mxu0 %v5426
        %v5631 = vpop.f32.mrb[0].mxu0
        %v5632 = vadd.f32 0.0, %v5631
        %v5633 = vpop.f32.mrb[0].mxu0
        %v5634 = vpop.f32.mrb[0].mxu0
        %v5635 = vadd.f32 0.0, %v5634
        %v5636 = vpop.f32.mrb[0].mxu0
        %5637 = vmatprep.mubr.bf16.mxu0 0
        %5638 = vmatmul.mubr.bf16.gmra.mrb[0].mxu0 %v5427
        %v5639 = vpop.f32.mrb[0].mxu0
        %v5640 = vadd.f32 0.0, %v5639
        %v5641 = vpop.f32.mrb[0].mxu0
        %v5642 = vpop.f32.mrb[0].mxu0
        %v5643 = vadd.f32 0.0, %v5642
        %v5644 = vpop.f32.mrb[0].mxu0
        %5645 = vmatprep.mubr.bf16.mxu0 0
        %5646 = vmatmul.mubr.bf16.gmra.mrb[0].mxu0 %v5428
        %v5647 = vpop.f32.mrb[0].mxu0
        %v5648 = vadd.f32 0.0, %v5647
        %v5649 = vpop.f32.mrb[0].mxu0
        %v5650 = vpop.f32.mrb[0].mxu0
        %v5651 = vadd.f32 0.0, %v5650
        %v5652 = vpop.f32.mrb[0].mxu0
        %5653 = vdwg.mxu0
        %v5654 = vadd.f32 %v4899, %v5528
        %v5655 = vadd.f32 %v4900, %v5531
        %v5656 = vadd.f32 %v4901, %v5536
        %v5657 = vadd.f32 %v4902, %v5539
        %v5658 = vadd.f32 %v4903, %v5544
        %v5659 = vadd.f32 %v4904, %v5547
        %v5660 = vadd.f32 %v4905, %v5552
        %v5661 = vadd.f32 %v4906, %v5555
        %v5662 = vadd.f32 %v4907, %v5560
        %v5663 = vadd.f32 %v4908, %v5563
        %v5664 = vadd.f32 %v4909, %v5568
        %v5665 = vadd.f32 %v4910, %v5571
        %v5666 = vadd.f32 %v4911, %v5576
        %v5667 = vadd.f32 %v4912, %v5579
        %v5668 = vadd.f32 %v4913, %v5584
        %v5669 = vadd.f32 %v4914, %v5587
        %v5670 = vadd.f32 %v4915, %v5592
        %v5671 = vadd.f32 %v4916, %v5595
        %v5672 = vadd.f32 %v4917, %v5600
        %v5673 = vadd.f32 %v4918, %v5603
        %v5674 = vadd.f32 %v4919, %v5608
        %v5675 = vadd.f32 %v4920, %v5611
        %v5676 = vadd.f32 %v4921, %v5616
        %v5677 = vadd.f32 %v4922, %v5619
        %v5678 = vadd.f32 %v4923, %v5624
        %v5679 = vadd.f32 %v4924, %v5627
        %v5680 = vadd.f32 %v4925, %v5632
        %v5681 = vadd.f32 %v4926, %v5635
        %v5682 = vadd.f32 %v4927, %v5640
        %v5683 = vadd.f32 %v4928, %v5643
        %v5684 = vadd.f32 %v4929, %v5648
        %v5685 = vadd.f32 %v4930, %v5651
        %v5686 = vld [vmem:[%s4931] sm:$0xe]
        %v5687 = vld [vmem:[%s4931 + $0xc] sm:$0xe]
        %v5688 = vld [vmem:[%s4931 + $0x18] sm:$0xe]
        %v5689 = vld [vmem:[%s4931 + $0x24] sm:$0xe]
        %v5690 = vld [vmem:[%s4931 + $0x30] sm:$0xe]
        %v5691 = vld [vmem:[%s4931 + $0x3c] sm:$0xe]
        %v5692 = vld [vmem:[%s4931 + $0x48] sm:$0xe]
        %v5693 = vld [vmem:[%s4931 + $0x54] sm:$0xe]
        %v5694 = vld [vmem:[%s4931 + $0x60] sm:$0xe]
        %v5695 = vld [vmem:[%s4931 + $0x6c] sm:$0xe]
        %v5696 = vld [vmem:[%s4931 + $0x78] sm:$0xe]
        %v5697 = vld [vmem:[%s4931 + $0x84] sm:$0xe]
        %v5698 = vld [vmem:[%s4931 + $0x90] sm:$0xe]
        %v5699 = vld [vmem:[%s4931 + $0x9c] sm:$0xe]
        %v5700 = vld [vmem:[%s4931 + $0xa8] sm:$0xe]
        %v5701 = vld [vmem:[%s4931 + $0xb4] sm:$0xe]
        %v5750 = vrot.slane %v5686, 5
        %v5751 = vrot.slane %v5750, 4
        %v5752 = vrot.slane %v4933, 5
        %v5753 = vsel %vm1588, %v5751, %v5752
        %v5754 = vrot.slane %v5752, 4
        %v5755 = vrot.slane %v4934, 5
        %v5756 = vsel %vm1588, %v5754, %v5755
        %v5757 = vrot.slane %v5687, 5
        %v5758 = vrot.slane %v5757, 4
        %v5759 = vrot.slane %v4936, 5
        %v5760 = vsel %vm1588, %v5758, %v5759
        %v5761 = vrot.slane %v5759, 4
        %v5762 = vrot.slane %v4937, 5
        %v5763 = vsel %vm1588, %v5761, %v5762
        %v5764 = vrot.slane %v5688, 5
        %v5765 = vrot.slane %v5764, 4
        %v5766 = vrot.slane %v4939, 5
        %v5767 = vsel %vm1588, %v5765, %v5766
        %v5768 = vrot.slane %v5766, 4
        %v5769 = vrot.slane %v4940, 5
        %v5770 = vsel %vm1588, %v5768, %v5769
        %v5771 = vrot.slane %v5689, 5
        %v5772 = vrot.slane %v5771, 4
        %v5773 = vrot.slane %v4942, 5
        %v5774 = vsel %vm1588, %v5772, %v5773
        %v5775 = vrot.slane %v5773, 4
        %v5776 = vrot.slane %v4943, 5
        %v5777 = vsel %vm1588, %v5775, %v5776
        %v5778 = vrot.slane %v5690, 5
        %v5779 = vrot.slane %v5778, 4
        %v5780 = vrot.slane %v4945, 5
        %v5781 = vsel %vm1588, %v5779, %v5780
        %v5782 = vrot.slane %v5780, 4
        %v5783 = vrot.slane %v4946, 5
        %v5784 = vsel %vm1588, %v5782, %v5783
        %v5785 = vrot.slane %v5691, 5
        %v5786 = vrot.slane %v5785, 4
        %v5787 = vrot.slane %v4948, 5
        %v5788 = vsel %vm1588, %v5786, %v5787
        %v5789 = vrot.slane %v5787, 4
        %v5790 = vrot.slane %v4949, 5
        %v5791 = vsel %vm1588, %v5789, %v5790
        %v5792 = vrot.slane %v5692, 5
        %v5793 = vrot.slane %v5792, 4
        %v5794 = vrot.slane %v4951, 5
        %v5795 = vsel %vm1588, %v5793, %v5794
        %v5796 = vrot.slane %v5794, 4
        %v5797 = vrot.slane %v4952, 5
        %v5798 = vsel %vm1588, %v5796, %v5797
        %v5799 = vrot.slane %v5693, 5
        %v5800 = vrot.slane %v5799, 4
        %v5801 = vrot.slane %v4954, 5
        %v5802 = vsel %vm1588, %v5800, %v5801
        %v5803 = vrot.slane %v5801, 4
        %v5804 = vrot.slane %v4955, 5
        %v5805 = vsel %vm1588, %v5803, %v5804
        %v5806 = vrot.slane %v5694, 5
        %v5807 = vrot.slane %v5806, 4
        %v5808 = vrot.slane %v4957, 5
        %v5809 = vsel %vm1588, %v5807, %v5808
        %v5810 = vrot.slane %v5808, 4
        %v5811 = vrot.slane %v4958, 5
        %v5812 = vsel %vm1588, %v5810, %v5811
        %v5813 = vrot.slane %v5695, 5
        %v5814 = vrot.slane %v5813, 4
        %v5815 = vrot.slane %v4960, 5
        %v5816 = vsel %vm1588, %v5814, %v5815
        %v5817 = vrot.slane %v5815, 4
        %v5818 = vrot.slane %v4961, 5
        %v5819 = vsel %vm1588, %v5817, %v5818
        %v5820 = vrot.slane %v5696, 5
        %v5821 = vrot.slane %v5820, 4
        %v5822 = vrot.slane %v4963, 5
        %v5823 = vsel %vm1588, %v5821, %v5822
        %v5824 = vrot.slane %v5822, 4
        %v5825 = vrot.slane %v4964, 5
        %v5826 = vsel %vm1588, %v5824, %v5825
        %v5827 = vrot.slane %v5697, 5
        %v5828 = vrot.slane %v5827, 4
        %v5829 = vrot.slane %v4966, 5
        %v5830 = vsel %vm1588, %v5828, %v5829
        %v5831 = vrot.slane %v5829, 4
        %v5832 = vrot.slane %v4967, 5
        %v5833 = vsel %vm1588, %v5831, %v5832
        %v5834 = vrot.slane %v5698, 5
        %v5835 = vrot.slane %v5834, 4
        %v5836 = vrot.slane %v4969, 5
        %v5837 = vsel %vm1588, %v5835, %v5836
        %v5838 = vrot.slane %v5836, 4
        %v5839 = vrot.slane %v4970, 5
        %v5840 = vsel %vm1588, %v5838, %v5839
        %v5841 = vrot.slane %v5699, 5
        %v5842 = vrot.slane %v5841, 4
        %v5843 = vrot.slane %v4972, 5
        %v5844 = vsel %vm1588, %v5842, %v5843
        %v5845 = vrot.slane %v5843, 4
        %v5846 = vrot.slane %v4973, 5
        %v5847 = vsel %vm1588, %v5845, %v5846
        %v5848 = vrot.slane %v5700, 5
        %v5849 = vrot.slane %v5848, 4
        %v5850 = vrot.slane %v4975, 5
        %v5851 = vsel %vm1588, %v5849, %v5850
        %v5852 = vrot.slane %v5850, 4
        %v5853 = vrot.slane %v4976, 5
        %v5854 = vsel %vm1588, %v5852, %v5853
        %v5855 = vrot.slane %v5701, 5
        %v5856 = vrot.slane %v5855, 4
        %v5857 = vrot.slane %v4978, 5
        %v5858 = vsel %vm1588, %v5856, %v5857
        %v5859 = vrot.slane %v5857, 4
        %v5860 = vrot.slane %v4979, 5
        %v5861 = vsel %vm1588, %v5859, %v5860
        %s5862 = scalar_lea.vmem [#allocation8], 448
        %v5863 = vld [vmem:[%s5862] sm:$0xf]
        %v5864 = vld [vmem:[%s5862 + $0x4] sm:$0xf]
        %v5865 = vld [vmem:[%s5862 + $0x8] sm:$0xf]
        %v5866 = vld [vmem:[%s5862 + $0xc] sm:$0xf]
        %v5867 = vld [vmem:[%s5862 + $0x10] sm:$0xf]
        %v5868 = vld [vmem:[%s5862 + $0x14] sm:$0xf]
        %v5869 = vld [vmem:[%s5862 + $0x18] sm:$0xf]
        %v5870 = vld [vmem:[%s5862 + $0x1c] sm:$0xf]
        %v5871 = vld [vmem:[%s5862 + $0x20] sm:$0xf]
        %v5872 = vld [vmem:[%s5862 + $0x24] sm:$0xf]
        %v5873 = vld [vmem:[%s5862 + $0x28] sm:$0xf]
        %v5874 = vld [vmem:[%s5862 + $0x2c] sm:$0xf]
        %v5875 = vld [vmem:[%s5862 + $0x30] sm:$0xf]
        %v5876 = vld [vmem:[%s5862 + $0x34] sm:$0xf]
        %v5877 = vld [vmem:[%s5862 + $0x38] sm:$0xf]
        %v5878 = vld [vmem:[%s5862 + $0x3c] sm:$0xf]
        %v5879 = vunpack.c.l.b16 %v5753
        %v5880 = vunpack.c.l.b16 %v5756
        %v5881 = vunpack.c.l.b16 %v5760
        %v5882 = vunpack.c.l.b16 %v5763
        %v5883 = vunpack.c.l.b16 %v5767
        %v5884 = vunpack.c.l.b16 %v5770
        %v5885 = vunpack.c.l.b16 %v5774
        %v5886 = vunpack.c.l.b16 %v5777
        %v5887 = vunpack.c.l.b16 %v5781
        %v5888 = vunpack.c.l.b16 %v5784
        %v5889 = vunpack.c.l.b16 %v5788
        %v5890 = vunpack.c.l.b16 %v5791
        %v5891 = vunpack.c.l.b16 %v5795
        %v5892 = vunpack.c.l.b16 %v5798
        %v5893 = vunpack.c.l.b16 %v5802
        %v5894 = vunpack.c.l.b16 %v5805
        %v5895 = vunpack.c.l.b16 %v5809
        %v5896 = vunpack.c.l.b16 %v5812
        %v5897 = vunpack.c.l.b16 %v5816
        %v5898 = vunpack.c.l.b16 %v5819
        %v5899 = vunpack.c.l.b16 %v5823
        %v5900 = vunpack.c.l.b16 %v5826
        %v5901 = vunpack.c.l.b16 %v5830
        %v5902 = vunpack.c.l.b16 %v5833
        %v5903 = vunpack.c.l.b16 %v5837
        %v5904 = vunpack.c.l.b16 %v5840
        %v5905 = vunpack.c.l.b16 %v5844
        %v5906 = vunpack.c.l.b16 %v5847
        %v5907 = vunpack.c.l.b16 %v5851
        %v5908 = vunpack.c.l.b16 %v5854
        %v5909 = vunpack.c.l.b16 %v5858
        %v5910 = vunpack.c.l.b16 %v5861
        %v5911 = vpack.c.b16 %v5880, %v5879
        %v5912 = vpack.c.b16 %v5882, %v5881
        %v5913 = vpack.c.b16 %v5884, %v5883
        %v5914 = vpack.c.b16 %v5886, %v5885
        %v5915 = vpack.c.b16 %v5888, %v5887
        %v5916 = vpack.c.b16 %v5890, %v5889
        %v5917 = vpack.c.b16 %v5892, %v5891
        %v5918 = vpack.c.b16 %v5894, %v5893
        %v5919 = vpack.c.b16 %v5896, %v5895
        %v5920 = vpack.c.b16 %v5898, %v5897
        %v5921 = vpack.c.b16 %v5900, %v5899
        %v5922 = vpack.c.b16 %v5902, %v5901
        %v5923 = vpack.c.b16 %v5904, %v5903
        %v5924 = vpack.c.b16 %v5906, %v5905
        %v5925 = vpack.c.b16 %v5908, %v5907
        %v5926 = vpack.c.b16 %v5910, %v5909
        %v5959 = vunpack.c.l.b16 %v5863
        %v5960 = vunpack.c.l.b16 %v5864
        %v5961 = vunpack.c.l.b16 %v5865
        %v5962 = vunpack.c.l.b16 %v5866
        %v5963 = vunpack.c.l.b16 %v5867
        %v5964 = vunpack.c.l.b16 %v5868
        %v5965 = vunpack.c.l.b16 %v5869
        %v5966 = vunpack.c.l.b16 %v5870
        %v5967 = vunpack.c.l.b16 %v5871
        %v5968 = vunpack.c.l.b16 %v5872
        %v5969 = vunpack.c.l.b16 %v5873
        %v5970 = vunpack.c.l.b16 %v5874
        %v5971 = vunpack.c.l.b16 %v5875
        %v5972 = vunpack.c.l.b16 %v5876
        %v5973 = vunpack.c.l.b16 %v5877
        %v5974 = vunpack.c.l.b16 %v5878
        %v5975 = vpack.c.b16 %v5960, %v5959
        %v5976 = vpack.c.b16 %v5962, %v5961
        %v5977 = vpack.c.b16 %v5964, %v5963
        %v5978 = vpack.c.b16 %v5966, %v5965
        %v5979 = vpack.c.b16 %v5968, %v5967
        %v5980 = vpack.c.b16 %v5970, %v5969
        %v5981 = vpack.c.b16 %v5972, %v5971
        %v5982 = vpack.c.b16 %v5974, %v5973
        %5991 = vmatprep.subr.bf16.mxu0 0
        %5992 = vmatpush1.bf16.msra.mxu0 %v5975
        %5993 = vmatprep.subr.bf16.mxu0 0
        %5994 = vmatpush1.bf16.msra.mxu0 %v5976
        %5995 = vmatprep.subr.bf16.mxu0 0
        %5996 = vmatpush1.bf16.msra.mxu0 %v5977
        %5997 = vmatprep.subr.bf16.mxu0 0
        %5998 = vmatpush1.bf16.msra.mxu0 %v5978
        %5999 = vmatprep.subr.bf16.mxu0 0
        %6000 = vmatpush1.bf16.msra.mxu0 %v5979
        %6001 = vmatprep.subr.bf16.mxu0 0
        %6002 = vmatpush1.bf16.msra.mxu0 %v5980
        %6003 = vmatprep.subr.bf16.mxu0 0
        %6004 = vmatpush1.bf16.msra.mxu0 %v5981
        %6005 = vmatprep.subr.bf16.mxu0 0
        %6006 = vmatpush1.bf16.msra.mxu0 %v5982
        %6007 = vmatprep.subr.bf16.mxu0 0
        %6008 = vmatpush1.bf16.msra.mxu0 0
        %6009 = vmatprep.subr.bf16.mxu0 0
        %6010 = vmatpush1.bf16.msra.mxu0 0
        %6011 = vmatprep.subr.bf16.mxu0 0
        %6012 = vmatpush1.bf16.msra.mxu0 0
        %6013 = vmatprep.subr.bf16.mxu0 0
        %6014 = vmatpush1.bf16.msra.mxu0 0
        %6015 = vmatprep.subr.bf16.mxu0 0
        %6016 = vmatpush1.bf16.msra.mxu0 0
        %6017 = vmatprep.subr.bf16.mxu0 0
        %6018 = vmatpush1.bf16.msra.mxu0 0
        %6019 = vmatprep.subr.bf16.mxu0 0
        %6020 = vmatpush1.bf16.msra.mxu0 0
        %6021 = vmatprep.subr.bf16.mxu0 0
        %6022 = vmatpush1.bf16.msra.mxu0 0
        %6023 = vmatprep.mubr.bf16.mxu0 0
        %6024 = vmatmul.mubr.bf16.gmra.mrb[0].mxu0 %v5911
        %v6025 = vpop.f32.mrb[0].mxu0
        %v6026 = vadd.f32 0.0, %v6025
        %v6027 = vpop.f32.mrb[0].mxu0
        %v6028 = vpop.f32.mrb[0].mxu0
        %v6029 = vadd.f32 0.0, %v6028
        %v6030 = vpop.f32.mrb[0].mxu0
        %6031 = vmatprep.mubr.bf16.mxu0 0
        %6032 = vmatmul.mubr.bf16.gmra.mrb[0].mxu0 %v5912
        %v6033 = vpop.f32.mrb[0].mxu0
        %v6034 = vadd.f32 0.0, %v6033
        %v6035 = vpop.f32.mrb[0].mxu0
        %v6036 = vpop.f32.mrb[0].mxu0
        %v6037 = vadd.f32 0.0, %v6036
        %v6038 = vpop.f32.mrb[0].mxu0
        %6039 = vmatprep.mubr.bf16.mxu0 0
        %6040 = vmatmul.mubr.bf16.gmra.mrb[0].mxu0 %v5913
        %v6041 = vpop.f32.mrb[0].mxu0
        %v6042 = vadd.f32 0.0, %v6041
        %v6043 = vpop.f32.mrb[0].mxu0
        %v6044 = vpop.f32.mrb[0].mxu0
        %v6045 = vadd.f32 0.0, %v6044
        %v6046 = vpop.f32.mrb[0].mxu0
        %6047 = vmatprep.mubr.bf16.mxu0 0
        %6048 = vmatmul.mubr.bf16.gmra.mrb[0].mxu0 %v5914
        %v6049 = vpop.f32.mrb[0].mxu0
        %v6050 = vadd.f32 0.0, %v6049
        %v6051 = vpop.f32.mrb[0].mxu0
        %v6052 = vpop.f32.mrb[0].mxu0
        %v6053 = vadd.f32 0.0, %v6052
        %v6054 = vpop.f32.mrb[0].mxu0
        %6055 = vmatprep.mubr.bf16.mxu0 0
        %6056 = vmatmul.mubr.bf16.gmra.mrb[0].mxu0 %v5915
        %v6057 = vpop.f32.mrb[0].mxu0
        %v6058 = vadd.f32 0.0, %v6057
        %v6059 = vpop.f32.mrb[0].mxu0
        %v6060 = vpop.f32.mrb[0].mxu0
        %v6061 = vadd.f32 0.0, %v6060
        %v6062 = vpop.f32.mrb[0].mxu0
        %6063 = vmatprep.mubr.bf16.mxu0 0
        %6064 = vmatmul.mubr.bf16.gmra.mrb[0].mxu0 %v5916
        %v6065 = vpop.f32.mrb[0].mxu0
        %v6066 = vadd.f32 0.0, %v6065
        %v6067 = vpop.f32.mrb[0].mxu0
        %v6068 = vpop.f32.mrb[0].mxu0
        %v6069 = vadd.f32 0.0, %v6068
        %v6070 = vpop.f32.mrb[0].mxu0
        %6071 = vmatprep.mubr.bf16.mxu0 0
        %6072 = vmatmul.mubr.bf16.gmra.mrb[0].mxu0 %v5917
        %v6073 = vpop.f32.mrb[0].mxu0
        %v6074 = vadd.f32 0.0, %v6073
        %v6075 = vpop.f32.mrb[0].mxu0
        %v6076 = vpop.f32.mrb[0].mxu0
        %v6077 = vadd.f32 0.0, %v6076
        %v6078 = vpop.f32.mrb[0].mxu0
        %6079 = vmatprep.mubr.bf16.mxu0 0
        %6080 = vmatmul.mubr.bf16.gmra.mrb[0].mxu0 %v5918
        %v6081 = vpop.f32.mrb[0].mxu0
        %v6082 = vadd.f32 0.0, %v6081
        %v6083 = vpop.f32.mrb[0].mxu0
        %v6084 = vpop.f32.mrb[0].mxu0
        %v6085 = vadd.f32 0.0, %v6084
        %v6086 = vpop.f32.mrb[0].mxu0
        %6087 = vmatprep.mubr.bf16.mxu0 0
        %6088 = vmatmul.mubr.bf16.gmra.mrb[0].mxu0 %v5919
        %v6089 = vpop.f32.mrb[0].mxu0
        %v6090 = vadd.f32 0.0, %v6089
        %v6091 = vpop.f32.mrb[0].mxu0
        %v6092 = vpop.f32.mrb[0].mxu0
        %v6093 = vadd.f32 0.0, %v6092
        %v6094 = vpop.f32.mrb[0].mxu0
        %6095 = vmatprep.mubr.bf16.mxu0 0
        %6096 = vmatmul.mubr.bf16.gmra.mrb[0].mxu0 %v5920
        %v6097 = vpop.f32.mrb[0].mxu0
        %v6098 = vadd.f32 0.0, %v6097
        %v6099 = vpop.f32.mrb[0].mxu0
        %v6100 = vpop.f32.mrb[0].mxu0
        %v6101 = vadd.f32 0.0, %v6100
        %v6102 = vpop.f32.mrb[0].mxu0
        %6103 = vmatprep.mubr.bf16.mxu0 0
        %6104 = vmatmul.mubr.bf16.gmra.mrb[0].mxu0 %v5921
        %v6105 = vpop.f32.mrb[0].mxu0
        %v6106 = vadd.f32 0.0, %v6105
        %v6107 = vpop.f32.mrb[0].mxu0
        %v6108 = vpop.f32.mrb[0].mxu0
        %v6109 = vadd.f32 0.0, %v6108
        %v6110 = vpop.f32.mrb[0].mxu0
        %6111 = vmatprep.mubr.bf16.mxu0 0
        %6112 = vmatmul.mubr.bf16.gmra.mrb[0].mxu0 %v5922
        %v6113 = vpop.f32.mrb[0].mxu0
        %v6114 = vadd.f32 0.0, %v6113
        %v6115 = vpop.f32.mrb[0].mxu0
        %v6116 = vpop.f32.mrb[0].mxu0
        %v6117 = vadd.f32 0.0, %v6116
        %v6118 = vpop.f32.mrb[0].mxu0
        %6119 = vmatprep.mubr.bf16.mxu0 0
        %6120 = vmatmul.mubr.bf16.gmra.mrb[0].mxu0 %v5923
        %v6121 = vpop.f32.mrb[0].mxu0
        %v6122 = vadd.f32 0.0, %v6121
        %v6123 = vpop.f32.mrb[0].mxu0
        %v6124 = vpop.f32.mrb[0].mxu0
        %v6125 = vadd.f32 0.0, %v6124
        %v6126 = vpop.f32.mrb[0].mxu0
        %6127 = vmatprep.mubr.bf16.mxu0 0
        %6128 = vmatmul.mubr.bf16.gmra.mrb[0].mxu0 %v5924
        %v6129 = vpop.f32.mrb[0].mxu0
        %v6130 = vadd.f32 0.0, %v6129
        %v6131 = vpop.f32.mrb[0].mxu0
        %v6132 = vpop.f32.mrb[0].mxu0
        %v6133 = vadd.f32 0.0, %v6132
        %v6134 = vpop.f32.mrb[0].mxu0
        %6135 = vmatprep.mubr.bf16.mxu0 0
        %6136 = vmatmul.mubr.bf16.gmra.mrb[0].mxu0 %v5925
        %v6137 = vpop.f32.mrb[0].mxu0
        %v6138 = vadd.f32 0.0, %v6137
        %v6139 = vpop.f32.mrb[0].mxu0
        %v6140 = vpop.f32.mrb[0].mxu0
        %v6141 = vadd.f32 0.0, %v6140
        %v6142 = vpop.f32.mrb[0].mxu0
        %6143 = vmatprep.mubr.bf16.mxu0 0
        %6144 = vmatmul.mubr.bf16.gmra.mrb[0].mxu0 %v5926
        %v6145 = vpop.f32.mrb[0].mxu0
        %v6146 = vadd.f32 0.0, %v6145
        %v6147 = vpop.f32.mrb[0].mxu0
        %v6148 = vpop.f32.mrb[0].mxu0
        %v6149 = vadd.f32 0.0, %v6148
        %v6150 = vpop.f32.mrb[0].mxu0
        %6151 = vdwg.mxu0
        %v6152 = vadd.f32 %v5654, %v6026
        %v6153 = vadd.f32 %v5655, %v6029
        %v6154 = vadd.f32 %v5656, %v6034
        %v6155 = vadd.f32 %v5657, %v6037
        %v6156 = vadd.f32 %v5658, %v6042
        %v6157 = vadd.f32 %v5659, %v6045
        %v6158 = vadd.f32 %v5660, %v6050
        %v6159 = vadd.f32 %v5661, %v6053
        %v6160 = vadd.f32 %v5662, %v6058
        %v6161 = vadd.f32 %v5663, %v6061
        %v6162 = vadd.f32 %v5664, %v6066
        %v6163 = vadd.f32 %v5665, %v6069
        %v6164 = vadd.f32 %v5666, %v6074
        %v6165 = vadd.f32 %v5667, %v6077
        %v6166 = vadd.f32 %v5668, %v6082
        %v6167 = vadd.f32 %v5669, %v6085
        %v6168 = vadd.f32 %v5670, %v6090
        %v6169 = vadd.f32 %v5671, %v6093
        %v6170 = vadd.f32 %v5672, %v6098
        %v6171 = vadd.f32 %v5673, %v6101
        %v6172 = vadd.f32 %v5674, %v6106
        %v6173 = vadd.f32 %v5675, %v6109
        %v6174 = vadd.f32 %v5676, %v6114
        %v6175 = vadd.f32 %v5677, %v6117
        %v6176 = vadd.f32 %v5678, %v6122
        %v6177 = vadd.f32 %v5679, %v6125
        %v6178 = vadd.f32 %v5680, %v6130
        %v6179 = vadd.f32 %v5681, %v6133
        %v6180 = vadd.f32 %v5682, %v6138
        %v6181 = vadd.f32 %v5683, %v6141
        %v6182 = vadd.f32 %v5684, %v6146
        %v6183 = vadd.f32 %v5685, %v6149
        %v6184 = vld [vmem:[%s4931 + $0x8] sm:$0x3]
        %v6185 = vld [vmem:[%s4931 + $0x14] sm:$0x3]
        %v6186 = vld [vmem:[%s4931 + $0x20] sm:$0x3]
        %v6187 = vld [vmem:[%s4931 + $0x2c] sm:$0x3]
        %v6188 = vld [vmem:[%s4931 + $0x38] sm:$0x3]
        %v6189 = vld [vmem:[%s4931 + $0x44] sm:$0x3]
        %v6190 = vld [vmem:[%s4931 + $0x50] sm:$0x3]
        %v6191 = vld [vmem:[%s4931 + $0x5c] sm:$0x3]
        %v6192 = vld [vmem:[%s4931 + $0x68] sm:$0x3]
        %v6193 = vld [vmem:[%s4931 + $0x74] sm:$0x3]
        %v6194 = vld [vmem:[%s4931 + $0x80] sm:$0x3]
        %v6195 = vld [vmem:[%s4931 + $0x8c] sm:$0x3]
        %v6196 = vld [vmem:[%s4931 + $0x98] sm:$0x3]
        %v6197 = vld [vmem:[%s4931 + $0xa4] sm:$0x3]
        %v6198 = vld [vmem:[%s4931 + $0xb0] sm:$0x3]
        %v6199 = vld [vmem:[%s4931 + $0xbc] sm:$0x3]
        %v6201 = vshrl.u32 %v5686, 16
        %v6203 = vrot.slane %v6201, 5
        %v6204 = vshll.u32 %v5686, 16
        %v6206 = vrot.slane %v6204, 6
        %v6207 = vor.u32 %v6203, %v6206
        %v6208 = vrot.slane %v6207, 4
        %v6209 = vrot.slane %v4994, 5
        %v6210 = vrot.slane %v4990, 6
        %v6211 = vor.u32 %v6209, %v6210
        %v6212 = vsel %vm2282, %v6208, %v6211
        %v6213 = vrot.slane %v6211, 4
        %v6215 = vshrl.u32 %v6184, 16
        %v6217 = vrot.slane %v6215, 5
        %v6218 = vshll.u32 %v6184, 16
        %v6220 = vrot.slane %v6218, 6
        %v6221 = vor.u32 %v6217, %v6220
        %v6222 = vsel %vm2282, %v6213, %v6221
        %v6224 = vshrl.u32 %v5687, 16
        %v6226 = vrot.slane %v6224, 5
        %v6227 = vshll.u32 %v5687, 16
        %v6229 = vrot.slane %v6227, 6
        %v6230 = vor.u32 %v6226, %v6229
        %v6231 = vrot.slane %v6230, 4
        %v6232 = vrot.slane %v5018, 5
        %v6233 = vrot.slane %v5014, 6
        %v6234 = vor.u32 %v6232, %v6233
        %v6235 = vsel %vm2282, %v6231, %v6234
        %v6236 = vrot.slane %v6234, 4
        %v6238 = vshrl.u32 %v6185, 16
        %v6240 = vrot.slane %v6238, 5
        %v6241 = vshll.u32 %v6185, 16
        %v6243 = vrot.slane %v6241, 6
        %v6244 = vor.u32 %v6240, %v6243
        %v6245 = vsel %vm2282, %v6236, %v6244
        %v6247 = vshrl.u32 %v5688, 16
        %v6249 = vrot.slane %v6247, 5
        %v6250 = vshll.u32 %v5688, 16
        %v6252 = vrot.slane %v6250, 6
        %v6253 = vor.u32 %v6249, %v6252
        %v6254 = vrot.slane %v6253, 4
        %v6255 = vrot.slane %v5042, 5
        %v6256 = vrot.slane %v5038, 6
        %v6257 = vor.u32 %v6255, %v6256
        %v6258 = vsel %vm2282, %v6254, %v6257
        %v6259 = vrot.slane %v6257, 4
        %v6261 = vshrl.u32 %v6186, 16
        %v6263 = vrot.slane %v6261, 5
        %v6264 = vshll.u32 %v6186, 16
        %v6266 = vrot.slane %v6264, 6
        %v6267 = vor.u32 %v6263, %v6266
        %v6268 = vsel %vm2282, %v6259, %v6267
        %v6270 = vshrl.u32 %v5689, 16
        %v6272 = vrot.slane %v6270, 5
        %v6273 = vshll.u32 %v5689, 16
        %v6275 = vrot.slane %v6273, 6
        %v6276 = vor.u32 %v6272, %v6275
        %v6277 = vrot.slane %v6276, 4
        %v6278 = vrot.slane %v5066, 5
        %v6279 = vrot.slane %v5062, 6
        %v6280 = vor.u32 %v6278, %v6279
        %v6281 = vsel %vm2282, %v6277, %v6280
        %v6282 = vrot.slane %v6280, 4
        %v6284 = vshrl.u32 %v6187, 16
        %v6286 = vrot.slane %v6284, 5
        %v6287 = vshll.u32 %v6187, 16
        %v6289 = vrot.slane %v6287, 6
        %v6290 = vor.u32 %v6286, %v6289
        %v6291 = vsel %vm2282, %v6282, %v6290
        %v6293 = vshrl.u32 %v5690, 16
        %v6295 = vrot.slane %v6293, 5
        %v6296 = vshll.u32 %v5690, 16
        %v6298 = vrot.slane %v6296, 6
        %v6299 = vor.u32 %v6295, %v6298
        %v6300 = vrot.slane %v6299, 4
        %v6301 = vrot.slane %v5090, 5
        %v6302 = vrot.slane %v5086, 6
        %v6303 = vor.u32 %v6301, %v6302
        %v6304 = vsel %vm2282, %v6300, %v6303
        %v6305 = vrot.slane %v6303, 4
        %v6307 = vshrl.u32 %v6188, 16
        %v6309 = vrot.slane %v6307, 5
        %v6310 = vshll.u32 %v6188, 16
        %v6312 = vrot.slane %v6310, 6
        %v6313 = vor.u32 %v6309, %v6312
        %v6314 = vsel %vm2282, %v6305, %v6313
        %v6316 = vshrl.u32 %v5691, 16
        %v6318 = vrot.slane %v6316, 5
        %v6319 = vshll.u32 %v5691, 16
        %v6321 = vrot.slane %v6319, 6
        %v6322 = vor.u32 %v6318, %v6321
        %v6323 = vrot.slane %v6322, 4
        %v6324 = vrot.slane %v5114, 5
        %v6325 = vrot.slane %v5110, 6
        %v6326 = vor.u32 %v6324, %v6325
        %v6327 = vsel %vm2282, %v6323, %v6326
        %v6328 = vrot.slane %v6326, 4
        %v6330 = vshrl.u32 %v6189, 16
        %v6332 = vrot.slane %v6330, 5
        %v6333 = vshll.u32 %v6189, 16
        %v6335 = vrot.slane %v6333, 6
        %v6336 = vor.u32 %v6332, %v6335
        %v6337 = vsel %vm2282, %v6328, %v6336
        %v6339 = vshrl.u32 %v5692, 16
        %v6341 = vrot.slane %v6339, 5
        %v6342 = vshll.u32 %v5692, 16
        %v6344 = vrot.slane %v6342, 6
        %v6345 = vor.u32 %v6341, %v6344
        %v6346 = vrot.slane %v6345, 4
        %v6347 = vrot.slane %v5138, 5
        %v6348 = vrot.slane %v5134, 6
        %v6349 = vor.u32 %v6347, %v6348
        %v6350 = vsel %vm2282, %v6346, %v6349
        %v6351 = vrot.slane %v6349, 4
        %v6353 = vshrl.u32 %v6190, 16
        %v6355 = vrot.slane %v6353, 5
        %v6356 = vshll.u32 %v6190, 16
        %v6358 = vrot.slane %v6356, 6
        %v6359 = vor.u32 %v6355, %v6358
        %v6360 = vsel %vm2282, %v6351, %v6359
        %v6362 = vshrl.u32 %v5693, 16
        %v6364 = vrot.slane %v6362, 5
        %v6365 = vshll.u32 %v5693, 16
        %v6367 = vrot.slane %v6365, 6
        %v6368 = vor.u32 %v6364, %v6367
        %v6369 = vrot.slane %v6368, 4
        %v6370 = vrot.slane %v5162, 5
        %v6371 = vrot.slane %v5158, 6
        %v6372 = vor.u32 %v6370, %v6371
        %v6373 = vsel %vm2282, %v6369, %v6372
        %v6374 = vrot.slane %v6372, 4
        %v6376 = vshrl.u32 %v6191, 16
        %v6378 = vrot.slane %v6376, 5
        %v6379 = vshll.u32 %v6191, 16
        %v6381 = vrot.slane %v6379, 6
        %v6382 = vor.u32 %v6378, %v6381
        %v6383 = vsel %vm2282, %v6374, %v6382
        %v6385 = vshrl.u32 %v5694, 16
        %v6387 = vrot.slane %v6385, 5
        %v6388 = vshll.u32 %v5694, 16
        %v6390 = vrot.slane %v6388, 6
        %v6391 = vor.u32 %v6387, %v6390
        %v6392 = vrot.slane %v6391, 4
        %v6393 = vrot.slane %v5186, 5
        %v6394 = vrot.slane %v5182, 6
        %v6395 = vor.u32 %v6393, %v6394
        %v6396 = vsel %vm2282, %v6392, %v6395
        %v6397 = vrot.slane %v6395, 4
        %v6399 = vshrl.u32 %v6192, 16
        %v6401 = vrot.slane %v6399, 5
        %v6402 = vshll.u32 %v6192, 16
        %v6404 = vrot.slane %v6402, 6
        %v6405 = vor.u32 %v6401, %v6404
        %v6406 = vsel %vm2282, %v6397, %v6405
        %v6408 = vshrl.u32 %v5695, 16
        %v6410 = vrot.slane %v6408, 5
        %v6411 = vshll.u32 %v5695, 16
        %v6413 = vrot.slane %v6411, 6
        %v6414 = vor.u32 %v6410, %v6413
        %v6415 = vrot.slane %v6414, 4
        %v6416 = vrot.slane %v5210, 5
        %v6417 = vrot.slane %v5206, 6
        %v6418 = vor.u32 %v6416, %v6417
        %v6419 = vsel %vm2282, %v6415, %v6418
        %v6420 = vrot.slane %v6418, 4
        %v6422 = vshrl.u32 %v6193, 16
        %v6424 = vrot.slane %v6422, 5
        %v6425 = vshll.u32 %v6193, 16
        %v6427 = vrot.slane %v6425, 6
        %v6428 = vor.u32 %v6424, %v6427
        %v6429 = vsel %vm2282, %v6420, %v6428
        %v6431 = vshrl.u32 %v5696, 16
        %v6433 = vrot.slane %v6431, 5
        %v6434 = vshll.u32 %v5696, 16
        %v6436 = vrot.slane %v6434, 6
        %v6437 = vor.u32 %v6433, %v6436
        %v6438 = vrot.slane %v6437, 4
        %v6439 = vrot.slane %v5234, 5
        %v6440 = vrot.slane %v5230, 6
        %v6441 = vor.u32 %v6439, %v6440
        %v6442 = vsel %vm2282, %v6438, %v6441
        %v6443 = vrot.slane %v6441, 4
        %v6445 = vshrl.u32 %v6194, 16
        %v6447 = vrot.slane %v6445, 5
        %v6448 = vshll.u32 %v6194, 16
        %v6450 = vrot.slane %v6448, 6
        %v6451 = vor.u32 %v6447, %v6450
        %v6452 = vsel %vm2282, %v6443, %v6451
        %v6454 = vshrl.u32 %v5697, 16
        %v6456 = vrot.slane %v6454, 5
        %v6457 = vshll.u32 %v5697, 16
        %v6459 = vrot.slane %v6457, 6
        %v6460 = vor.u32 %v6456, %v6459
        %v6461 = vrot.slane %v6460, 4
        %v6462 = vrot.slane %v5258, 5
        %v6463 = vrot.slane %v5254, 6
        %v6464 = vor.u32 %v6462, %v6463
        %v6465 = vsel %vm2282, %v6461, %v6464
        %v6466 = vrot.slane %v6464, 4
        %v6468 = vshrl.u32 %v6195, 16
        %v6470 = vrot.slane %v6468, 5
        %v6471 = vshll.u32 %v6195, 16
        %v6473 = vrot.slane %v6471, 6
        %v6474 = vor.u32 %v6470, %v6473
        %v6475 = vsel %vm2282, %v6466, %v6474
        %v6477 = vshrl.u32 %v5698, 16
        %v6479 = vrot.slane %v6477, 5
        %v6480 = vshll.u32 %v5698, 16
        %v6482 = vrot.slane %v6480, 6
        %v6483 = vor.u32 %v6479, %v6482
        %v6484 = vrot.slane %v6483, 4
        %v6485 = vrot.slane %v5282, 5
        %v6486 = vrot.slane %v5278, 6
        %v6487 = vor.u32 %v6485, %v6486
        %v6488 = vsel %vm2282, %v6484, %v6487
        %v6489 = vrot.slane %v6487, 4
        %v6491 = vshrl.u32 %v6196, 16
        %v6493 = vrot.slane %v6491, 5
        %v6494 = vshll.u32 %v6196, 16
        %v6496 = vrot.slane %v6494, 6
        %v6497 = vor.u32 %v6493, %v6496
        %v6498 = vsel %vm2282, %v6489, %v6497
        %v6500 = vshrl.u32 %v5699, 16
        %v6502 = vrot.slane %v6500, 5
        %v6503 = vshll.u32 %v5699, 16
        %v6505 = vrot.slane %v6503, 6
        %v6506 = vor.u32 %v6502, %v6505
        %v6507 = vrot.slane %v6506, 4
        %v6508 = vrot.slane %v5306, 5
        %v6509 = vrot.slane %v5302, 6
        %v6510 = vor.u32 %v6508, %v6509
        %v6511 = vsel %vm2282, %v6507, %v6510
        %v6512 = vrot.slane %v6510, 4
        %v6514 = vshrl.u32 %v6197, 16
        %v6516 = vrot.slane %v6514, 5
        %v6517 = vshll.u32 %v6197, 16
        %v6519 = vrot.slane %v6517, 6
        %v6520 = vor.u32 %v6516, %v6519
        %v6521 = vsel %vm2282, %v6512, %v6520
        %v6523 = vshrl.u32 %v5700, 16
        %v6525 = vrot.slane %v6523, 5
        %v6526 = vshll.u32 %v5700, 16
        %v6528 = vrot.slane %v6526, 6
        %v6529 = vor.u32 %v6525, %v6528
        %v6530 = vrot.slane %v6529, 4
        %v6531 = vrot.slane %v5330, 5
        %v6532 = vrot.slane %v5326, 6
        %v6533 = vor.u32 %v6531, %v6532
        %v6534 = vsel %vm2282, %v6530, %v6533
        %v6535 = vrot.slane %v6533, 4
        %v6537 = vshrl.u32 %v6198, 16
        %v6539 = vrot.slane %v6537, 5
        %v6540 = vshll.u32 %v6198, 16
        %v6542 = vrot.slane %v6540, 6
        %v6543 = vor.u32 %v6539, %v6542
        %v6544 = vsel %vm2282, %v6535, %v6543
        %v6546 = vshrl.u32 %v5701, 16
        %v6548 = vrot.slane %v6546, 5
        %v6549 = vshll.u32 %v5701, 16
        %v6551 = vrot.slane %v6549, 6
        %v6552 = vor.u32 %v6548, %v6551
        %v6553 = vrot.slane %v6552, 4
        %v6554 = vrot.slane %v5354, 5
        %v6555 = vrot.slane %v5350, 6
        %v6556 = vor.u32 %v6554, %v6555
        %v6557 = vsel %vm2282, %v6553, %v6556
        %v6558 = vrot.slane %v6556, 4
        %v6560 = vshrl.u32 %v6199, 16
        %v6562 = vrot.slane %v6560, 5
        %v6563 = vshll.u32 %v6199, 16
        %v6565 = vrot.slane %v6563, 6
        %v6566 = vor.u32 %v6562, %v6565
        %v6567 = vsel %vm2282, %v6558, %v6566
        %s6568 = scalar_lea.vmem [#allocation8], 512
        %v6569 = vld [vmem:[%s6568] sm:$0xf]
        %v6570 = vld [vmem:[%s6568 + $0x4] sm:$0xf]
        %v6571 = vld [vmem:[%s6568 + $0x8] sm:$0xf]
        %v6572 = vld [vmem:[%s6568 + $0xc] sm:$0xf]
        %v6573 = vld [vmem:[%s6568 + $0x10] sm:$0xf]
        %v6574 = vld [vmem:[%s6568 + $0x14] sm:$0xf]
        %v6575 = vld [vmem:[%s6568 + $0x18] sm:$0xf]
        %v6576 = vld [vmem:[%s6568 + $0x1c] sm:$0xf]
        %v6577 = vld [vmem:[%s6568 + $0x20] sm:$0xf]
        %v6578 = vld [vmem:[%s6568 + $0x24] sm:$0xf]
        %v6579 = vld [vmem:[%s6568 + $0x28] sm:$0xf]
        %v6580 = vld [vmem:[%s6568 + $0x2c] sm:$0xf]
        %v6581 = vld [vmem:[%s6568 + $0x30] sm:$0xf]
        %v6582 = vld [vmem:[%s6568 + $0x34] sm:$0xf]
        %v6583 = vld [vmem:[%s6568 + $0x38] sm:$0xf]
        %v6584 = vld [vmem:[%s6568 + $0x3c] sm:$0xf]
        %v6585 = vunpack.c.l.b16 %v6212
        %v6586 = vunpack.c.l.b16 %v6222
        %v6587 = vunpack.c.l.b16 %v6235
        %v6588 = vunpack.c.l.b16 %v6245
        %v6589 = vunpack.c.l.b16 %v6258
        %v6590 = vunpack.c.l.b16 %v6268
        %v6591 = vunpack.c.l.b16 %v6281
        %v6592 = vunpack.c.l.b16 %v6291
        %v6593 = vunpack.c.l.b16 %v6304
        %v6594 = vunpack.c.l.b16 %v6314
        %v6595 = vunpack.c.l.b16 %v6327
        %v6596 = vunpack.c.l.b16 %v6337
        %v6597 = vunpack.c.l.b16 %v6350
        %v6598 = vunpack.c.l.b16 %v6360
        %v6599 = vunpack.c.l.b16 %v6373
        %v6600 = vunpack.c.l.b16 %v6383
        %v6601 = vunpack.c.l.b16 %v6396
        %v6602 = vunpack.c.l.b16 %v6406
        %v6603 = vunpack.c.l.b16 %v6419
        %v6604 = vunpack.c.l.b16 %v6429
        %v6605 = vunpack.c.l.b16 %v6442
        %v6606 = vunpack.c.l.b16 %v6452
        %v6607 = vunpack.c.l.b16 %v6465
        %v6608 = vunpack.c.l.b16 %v6475
        %v6609 = vunpack.c.l.b16 %v6488
        %v6610 = vunpack.c.l.b16 %v6498
        %v6611 = vunpack.c.l.b16 %v6511
        %v6612 = vunpack.c.l.b16 %v6521
        %v6613 = vunpack.c.l.b16 %v6534
        %v6614 = vunpack.c.l.b16 %v6544
        %v6615 = vunpack.c.l.b16 %v6557
        %v6616 = vunpack.c.l.b16 %v6567
        %v6617 = vpack.c.b16 %v6586, %v6585
        %v6618 = vpack.c.b16 %v6588, %v6587
        %v6619 = vpack.c.b16 %v6590, %v6589
        %v6620 = vpack.c.b16 %v6592, %v6591
        %v6621 = vpack.c.b16 %v6594, %v6593
        %v6622 = vpack.c.b16 %v6596, %v6595
        %v6623 = vpack.c.b16 %v6598, %v6597
        %v6624 = vpack.c.b16 %v6600, %v6599
        %v6625 = vpack.c.b16 %v6602, %v6601
        %v6626 = vpack.c.b16 %v6604, %v6603
        %v6627 = vpack.c.b16 %v6606, %v6605
        %v6628 = vpack.c.b16 %v6608, %v6607
        %v6629 = vpack.c.b16 %v6610, %v6609
        %v6630 = vpack.c.b16 %v6612, %v6611
        %v6631 = vpack.c.b16 %v6614, %v6613
        %v6632 = vpack.c.b16 %v6616, %v6615
        %v6665 = vunpack.c.l.b16 %v6569
        %v6666 = vunpack.c.l.b16 %v6570
        %v6667 = vunpack.c.l.b16 %v6571
        %v6668 = vunpack.c.l.b16 %v6572
        %v6669 = vunpack.c.l.b16 %v6573
        %v6670 = vunpack.c.l.b16 %v6574
        %v6671 = vunpack.c.l.b16 %v6575
        %v6672 = vunpack.c.l.b16 %v6576
        %v6673 = vunpack.c.l.b16 %v6577
        %v6674 = vunpack.c.l.b16 %v6578
        %v6675 = vunpack.c.l.b16 %v6579
        %v6676 = vunpack.c.l.b16 %v6580
        %v6677 = vunpack.c.l.b16 %v6581
        %v6678 = vunpack.c.l.b16 %v6582
        %v6679 = vunpack.c.l.b16 %v6583
        %v6680 = vunpack.c.l.b16 %v6584
        %v6681 = vpack.c.b16 %v6666, %v6665
        %v6682 = vpack.c.b16 %v6668, %v6667
        %v6683 = vpack.c.b16 %v6670, %v6669
        %v6684 = vpack.c.b16 %v6672, %v6671
        %v6685 = vpack.c.b16 %v6674, %v6673
        %v6686 = vpack.c.b16 %v6676, %v6675
        %v6687 = vpack.c.b16 %v6678, %v6677
        %v6688 = vpack.c.b16 %v6680, %v6679
        %6697 = vmatprep.subr.bf16.mxu0 0
        %6698 = vmatpush1.bf16.msra.mxu0 %v6681
        %6699 = vmatprep.subr.bf16.mxu0 0
        %6700 = vmatpush1.bf16.msra.mxu0 %v6682
        %6701 = vmatprep.subr.bf16.mxu0 0
        %6702 = vmatpush1.bf16.msra.mxu0 %v6683
        %6703 = vmatprep.subr.bf16.mxu0 0
        %6704 = vmatpush1.bf16.msra.mxu0 %v6684
        %6705 = vmatprep.subr.bf16.mxu0 0
        %6706 = vmatpush1.bf16.msra.mxu0 %v6685
        %6707 = vmatprep.subr.bf16.mxu0 0
        %6708 = vmatpush1.bf16.msra.mxu0 %v6686
        %6709 = vmatprep.subr.bf16.mxu0 0
        %6710 = vmatpush1.bf16.msra.mxu0 %v6687
        %6711 = vmatprep.subr.bf16.mxu0 0
        %6712 = vmatpush1.bf16.msra.mxu0 %v6688
        %6713 = vmatprep.subr.bf16.mxu0 0
        %6714 = vmatpush1.bf16.msra.mxu0 0
        %6715 = vmatprep.subr.bf16.mxu0 0
        %6716 = vmatpush1.bf16.msra.mxu0 0
        %6717 = vmatprep.subr.bf16.mxu0 0
        %6718 = vmatpush1.bf16.msra.mxu0 0
        %6719 = vmatprep.subr.bf16.mxu0 0
        %6720 = vmatpush1.bf16.msra.mxu0 0
        %6721 = vmatprep.subr.bf16.mxu0 0
        %6722 = vmatpush1.bf16.msra.mxu0 0
        %6723 = vmatprep.subr.bf16.mxu0 0
        %6724 = vmatpush1.bf16.msra.mxu0 0
        %6725 = vmatprep.subr.bf16.mxu0 0
        %6726 = vmatpush1.bf16.msra.mxu0 0
        %6727 = vmatprep.subr.bf16.mxu0 0
        %6728 = vmatpush1.bf16.msra.mxu0 0
        %6729 = vmatprep.mubr.bf16.mxu0 0
        %6730 = vmatmul.mubr.bf16.gmra.mrb[0].mxu0 %v6617
        %v6731 = vpop.f32.mrb[0].mxu0
        %v6732 = vadd.f32 0.0, %v6731
        %v6733 = vpop.f32.mrb[0].mxu0
        %v6734 = vpop.f32.mrb[0].mxu0
        %v6735 = vadd.f32 0.0, %v6734
        %v6736 = vpop.f32.mrb[0].mxu0
        %6737 = vmatprep.mubr.bf16.mxu0 0
        %6738 = vmatmul.mubr.bf16.gmra.mrb[0].mxu0 %v6618
        %v6739 = vpop.f32.mrb[0].mxu0
        %v6740 = vadd.f32 0.0, %v6739
        %v6741 = vpop.f32.mrb[0].mxu0
        %v6742 = vpop.f32.mrb[0].mxu0
        %v6743 = vadd.f32 0.0, %v6742
        %v6744 = vpop.f32.mrb[0].mxu0
        %6745 = vmatprep.mubr.bf16.mxu0 0
        %6746 = vmatmul.mubr.bf16.gmra.mrb[0].mxu0 %v6619
        %v6747 = vpop.f32.mrb[0].mxu0
        %v6748 = vadd.f32 0.0, %v6747
        %v6749 = vpop.f32.mrb[0].mxu0
        %v6750 = vpop.f32.mrb[0].mxu0
        %v6751 = vadd.f32 0.0, %v6750
        %v6752 = vpop.f32.mrb[0].mxu0
        %6753 = vmatprep.mubr.bf16.mxu0 0
        %6754 = vmatmul.mubr.bf16.gmra.mrb[0].mxu0 %v6620
        %v6755 = vpop.f32.mrb[0].mxu0
        %v6756 = vadd.f32 0.0, %v6755
        %v6757 = vpop.f32.mrb[0].mxu0
        %v6758 = vpop.f32.mrb[0].mxu0
        %v6759 = vadd.f32 0.0, %v6758
        %v6760 = vpop.f32.mrb[0].mxu0
        %6761 = vmatprep.mubr.bf16.mxu0 0
        %6762 = vmatmul.mubr.bf16.gmra.mrb[0].mxu0 %v6621
        %v6763 = vpop.f32.mrb[0].mxu0
        %v6764 = vadd.f32 0.0, %v6763
        %v6765 = vpop.f32.mrb[0].mxu0
        %v6766 = vpop.f32.mrb[0].mxu0
        %v6767 = vadd.f32 0.0, %v6766
        %v6768 = vpop.f32.mrb[0].mxu0
        %6769 = vmatprep.mubr.bf16.mxu0 0
        %6770 = vmatmul.mubr.bf16.gmra.mrb[0].mxu0 %v6622
        %v6771 = vpop.f32.mrb[0].mxu0
        %v6772 = vadd.f32 0.0, %v6771
        %v6773 = vpop.f32.mrb[0].mxu0
        %v6774 = vpop.f32.mrb[0].mxu0
        %v6775 = vadd.f32 0.0, %v6774
        %v6776 = vpop.f32.mrb[0].mxu0
        %6777 = vmatprep.mubr.bf16.mxu0 0
        %6778 = vmatmul.mubr.bf16.gmra.mrb[0].mxu0 %v6623
        %v6779 = vpop.f32.mrb[0].mxu0
        %v6780 = vadd.f32 0.0, %v6779
        %v6781 = vpop.f32.mrb[0].mxu0
        %v6782 = vpop.f32.mrb[0].mxu0
        %v6783 = vadd.f32 0.0, %v6782
        %v6784 = vpop.f32.mrb[0].mxu0
        %6785 = vmatprep.mubr.bf16.mxu0 0
        %6786 = vmatmul.mubr.bf16.gmra.mrb[0].mxu0 %v6624
        %v6787 = vpop.f32.mrb[0].mxu0
        %v6788 = vadd.f32 0.0, %v6787
        %v6789 = vpop.f32.mrb[0].mxu0
        %v6790 = vpop.f32.mrb[0].mxu0
        %v6791 = vadd.f32 0.0, %v6790
        %v6792 = vpop.f32.mrb[0].mxu0
        %6793 = vmatprep.mubr.bf16.mxu0 0
        %6794 = vmatmul.mubr.bf16.gmra.mrb[0].mxu0 %v6625
        %v6795 = vpop.f32.mrb[0].mxu0
        %v6796 = vadd.f32 0.0, %v6795
        %v6797 = vpop.f32.mrb[0].mxu0
        %v6798 = vpop.f32.mrb[0].mxu0
        %v6799 = vadd.f32 0.0, %v6798
        %v6800 = vpop.f32.mrb[0].mxu0
        %6801 = vmatprep.mubr.bf16.mxu0 0
        %6802 = vmatmul.mubr.bf16.gmra.mrb[0].mxu0 %v6626
        %v6803 = vpop.f32.mrb[0].mxu0
        %v6804 = vadd.f32 0.0, %v6803
        %v6805 = vpop.f32.mrb[0].mxu0
        %v6806 = vpop.f32.mrb[0].mxu0
        %v6807 = vadd.f32 0.0, %v6806
        %v6808 = vpop.f32.mrb[0].mxu0
        %6809 = vmatprep.mubr.bf16.mxu0 0
        %6810 = vmatmul.mubr.bf16.gmra.mrb[0].mxu0 %v6627
        %v6811 = vpop.f32.mrb[0].mxu0
        %v6812 = vadd.f32 0.0, %v6811
        %v6813 = vpop.f32.mrb[0].mxu0
        %v6814 = vpop.f32.mrb[0].mxu0
        %v6815 = vadd.f32 0.0, %v6814
        %v6816 = vpop.f32.mrb[0].mxu0
        %6817 = vmatprep.mubr.bf16.mxu0 0
        %6818 = vmatmul.mubr.bf16.gmra.mrb[0].mxu0 %v6628
        %v6819 = vpop.f32.mrb[0].mxu0
        %v6820 = vadd.f32 0.0, %v6819
        %v6821 = vpop.f32.mrb[0].mxu0
        %v6822 = vpop.f32.mrb[0].mxu0
        %v6823 = vadd.f32 0.0, %v6822
        %v6824 = vpop.f32.mrb[0].mxu0
        %6825 = vmatprep.mubr.bf16.mxu0 0
        %6826 = vmatmul.mubr.bf16.gmra.mrb[0].mxu0 %v6629
        %v6827 = vpop.f32.mrb[0].mxu0
        %v6828 = vadd.f32 0.0, %v6827
        %v6829 = vpop.f32.mrb[0].mxu0
        %v6830 = vpop.f32.mrb[0].mxu0
        %v6831 = vadd.f32 0.0, %v6830
        %v6832 = vpop.f32.mrb[0].mxu0
        %6833 = vmatprep.mubr.bf16.mxu0 0
        %6834 = vmatmul.mubr.bf16.gmra.mrb[0].mxu0 %v6630
        %v6835 = vpop.f32.mrb[0].mxu0
        %v6836 = vadd.f32 0.0, %v6835
        %v6837 = vpop.f32.mrb[0].mxu0
        %v6838 = vpop.f32.mrb[0].mxu0
        %v6839 = vadd.f32 0.0, %v6838
        %v6840 = vpop.f32.mrb[0].mxu0
        %6841 = vmatprep.mubr.bf16.mxu0 0
        %6842 = vmatmul.mubr.bf16.gmra.mrb[0].mxu0 %v6631
        %v6843 = vpop.f32.mrb[0].mxu0
        %v6844 = vadd.f32 0.0, %v6843
        %v6845 = vpop.f32.mrb[0].mxu0
        %v6846 = vpop.f32.mrb[0].mxu0
        %v6847 = vadd.f32 0.0, %v6846
        %v6848 = vpop.f32.mrb[0].mxu0
        %6849 = vmatprep.mubr.bf16.mxu0 0
        %6850 = vmatmul.mubr.bf16.gmra.mrb[0].mxu0 %v6632
        %v6851 = vpop.f32.mrb[0].mxu0
        %v6852 = vadd.f32 0.0, %v6851
        %v6853 = vpop.f32.mrb[0].mxu0
        %v6854 = vpop.f32.mrb[0].mxu0
        %v6855 = vadd.f32 0.0, %v6854
        %v6856 = vpop.f32.mrb[0].mxu0
        %6857 = vdwg.mxu0
        %v6858 = vadd.f32 %v6152, %v6732
        %v6859 = vadd.f32 %v6153, %v6735
        %v6860 = vadd.f32 %v6154, %v6740
        %v6861 = vadd.f32 %v6155, %v6743
        %v6862 = vadd.f32 %v6156, %v6748
        %v6863 = vadd.f32 %v6157, %v6751
        %v6864 = vadd.f32 %v6158, %v6756
        %v6865 = vadd.f32 %v6159, %v6759
        %v6866 = vadd.f32 %v6160, %v6764
        %v6867 = vadd.f32 %v6161, %v6767
        %v6868 = vadd.f32 %v6162, %v6772
        %v6869 = vadd.f32 %v6163, %v6775
        %v6870 = vadd.f32 %v6164, %v6780
        %v6871 = vadd.f32 %v6165, %v6783
        %v6872 = vadd.f32 %v6166, %v6788
        %v6873 = vadd.f32 %v6167, %v6791
        %v6874 = vadd.f32 %v6168, %v6796
        %v6875 = vadd.f32 %v6169, %v6799
        %v6876 = vadd.f32 %v6170, %v6804
        %v6877 = vadd.f32 %v6171, %v6807
        %v6878 = vadd.f32 %v6172, %v6812
        %v6879 = vadd.f32 %v6173, %v6815
        %v6880 = vadd.f32 %v6174, %v6820
        %v6881 = vadd.f32 %v6175, %v6823
        %v6882 = vadd.f32 %v6176, %v6828
        %v6883 = vadd.f32 %v6177, %v6831
        %v6884 = vadd.f32 %v6178, %v6836
        %v6885 = vadd.f32 %v6179, %v6839
        %v6886 = vadd.f32 %v6180, %v6844
        %v6887 = vadd.f32 %v6181, %v6847
        %v6888 = vadd.f32 %v6182, %v6852
        %v6889 = vadd.f32 %v6183, %v6855
        %v6891 = vlaneseq
        %v6892 = vshrl.u32 %v6891, 7
        %v6893 = vsub.s32 0, %v6892
        %v6894 = vrot.slane %v1053, %v6893
        %v6896 = vadd.f32 %v6858, %v6894
        %v6897 = vadd.f32 %v6859, %v6894
        %v6898 = vadd.f32 %v6860, %v6894
        %v6899 = vadd.f32 %v6861, %v6894
        %v6900 = vadd.f32 %v6862, %v6894
        %v6901 = vadd.f32 %v6863, %v6894
        %v6902 = vadd.f32 %v6864, %v6894
        %v6903 = vadd.f32 %v6865, %v6894
        %v6904 = vadd.f32 %v6866, %v6894
        %v6905 = vadd.f32 %v6867, %v6894
        %v6906 = vadd.f32 %v6868, %v6894
        %v6907 = vadd.f32 %v6869, %v6894
        %v6908 = vadd.f32 %v6870, %v6894
        %v6909 = vadd.f32 %v6871, %v6894
        %v6910 = vadd.f32 %v6872, %v6894
        %v6911 = vadd.f32 %v6873, %v6894
        %v6912 = vadd.f32 %v6874, %v6894
        %v6913 = vadd.f32 %v6875, %v6894
        %v6914 = vadd.f32 %v6876, %v6894
        %v6915 = vadd.f32 %v6877, %v6894
        %v6916 = vadd.f32 %v6878, %v6894
        %v6917 = vadd.f32 %v6879, %v6894
        %v6918 = vadd.f32 %v6880, %v6894
        %v6919 = vadd.f32 %v6881, %v6894
        %v6920 = vadd.f32 %v6882, %v6894
        %v6921 = vadd.f32 %v6883, %v6894
        %v6922 = vadd.f32 %v6884, %v6894
        %v6923 = vadd.f32 %v6885, %v6894
        %v6924 = vadd.f32 %v6886, %v6894
        %v6925 = vadd.f32 %v6887, %v6894
        %v6926 = vadd.f32 %v6888, %v6894
        %v6927 = vadd.f32 %v6889, %v6894
        %v6928 = vmax.f32 %v6896, 0.0
        %v6929 = vmax.f32 %v6897, 0.0
        %v6930 = vmax.f32 %v6898, 0.0
        %v6931 = vmax.f32 %v6899, 0.0
        %v6932 = vmax.f32 %v6900, 0.0
        %v6933 = vmax.f32 %v6901, 0.0
        %v6934 = vmax.f32 %v6902, 0.0
        %v6935 = vmax.f32 %v6903, 0.0
        %v6936 = vmax.f32 %v6904, 0.0
        %v6937 = vmax.f32 %v6905, 0.0
        %v6938 = vmax.f32 %v6906, 0.0
        %v6939 = vmax.f32 %v6907, 0.0
        %v6940 = vmax.f32 %v6908, 0.0
        %v6941 = vmax.f32 %v6909, 0.0
        %v6942 = vmax.f32 %v6910, 0.0
        %v6943 = vmax.f32 %v6911, 0.0
        %v6944 = vmax.f32 %v6912, 0.0
        %v6945 = vmax.f32 %v6913, 0.0
        %v6946 = vmax.f32 %v6914, 0.0
        %v6947 = vmax.f32 %v6915, 0.0
        %v6948 = vmax.f32 %v6916, 0.0
        %v6949 = vmax.f32 %v6917, 0.0
        %v6950 = vmax.f32 %v6918, 0.0
        %v6951 = vmax.f32 %v6919, 0.0
        %v6952 = vmax.f32 %v6920, 0.0
        %v6953 = vmax.f32 %v6921, 0.0
        %v6954 = vmax.f32 %v6922, 0.0
        %v6955 = vmax.f32 %v6923, 0.0
        %v6956 = vmax.f32 %v6924, 0.0
        %v6957 = vmax.f32 %v6925, 0.0
        %v6958 = vmax.f32 %v6926, 0.0
        %v6959 = vmax.f32 %v6927, 0.0
        %v6960 = vpack.c.bf16 %v6929, %v6928
        %v6961 = vpack.c.bf16 %v6931, %v6930
        %v6962 = vpack.c.bf16 %v6933, %v6932
        %v6963 = vpack.c.bf16 %v6935, %v6934
        %v6964 = vpack.c.bf16 %v6937, %v6936
        %v6965 = vpack.c.bf16 %v6939, %v6938
        %v6966 = vpack.c.bf16 %v6941, %v6940
        %v6967 = vpack.c.bf16 %v6943, %v6942
        %v6968 = vpack.c.bf16 %v6945, %v6944
        %v6969 = vpack.c.bf16 %v6947, %v6946
        %v6970 = vpack.c.bf16 %v6949, %v6948
        %v6971 = vpack.c.bf16 %v6951, %v6950
        %v6972 = vpack.c.bf16 %v6953, %v6952
        %v6973 = vpack.c.bf16 %v6955, %v6954
        %v6974 = vpack.c.bf16 %v6957, %v6956
        %v6975 = vpack.c.bf16 %v6959, %v6958
        %v6977 = vlaneseq
        %v6978 = vshrl.u32 %v6977, 7
        %v6979 = vsub.s32 0, %v6978
        %v6980 = vrot.slane %v1070, %v6979
        %v6998 = vunpack.c.l.b16 %v1054
        %v6999 = vunpack.c.l.b16 %v1055
        %v7000 = vunpack.c.l.b16 %v1056
        %v7001 = vunpack.c.l.b16 %v1057
        %v7002 = vunpack.c.l.b16 %v1058
        %v7003 = vunpack.c.l.b16 %v1059
        %v7004 = vunpack.c.l.b16 %v1060
        %v7005 = vunpack.c.l.b16 %v1061
        %v7006 = vunpack.c.l.b16 %v1062
        %v7007 = vunpack.c.l.b16 %v1063
        %v7008 = vunpack.c.l.b16 %v1064
        %v7009 = vunpack.c.l.b16 %v1065
        %v7010 = vunpack.c.l.b16 %v1066
        %v7011 = vunpack.c.l.b16 %v1067
        %v7012 = vunpack.c.l.b16 %v1068
        %v7013 = vunpack.c.l.b16 %v1069
        %v7014 = vpack.c.b16 %v6999, %v6998
        %v7015 = vpack.c.b16 %v7001, %v7000
        %v7016 = vpack.c.b16 %v7003, %v7002
        %v7017 = vpack.c.b16 %v7005, %v7004
        %v7018 = vpack.c.b16 %v7007, %v7006
        %v7019 = vpack.c.b16 %v7009, %v7008
        %v7020 = vpack.c.b16 %v7011, %v7010
        %v7021 = vpack.c.b16 %v7013, %v7012
        %7030 = vmatprep.subr.bf16.mxu0 0
        %7031 = vmatpush1.bf16.msra.mxu0 %v7014
        %7032 = vmatprep.subr.bf16.mxu0 0
        %7033 = vmatpush1.bf16.msra.mxu0 %v7015
        %7034 = vmatprep.subr.bf16.mxu0 0
        %7035 = vmatpush1.bf16.msra.mxu0 %v7016
        %7036 = vmatprep.subr.bf16.mxu0 0
        %7037 = vmatpush1.bf16.msra.mxu0 %v7017
        %7038 = vmatprep.subr.bf16.mxu0 0
        %7039 = vmatpush1.bf16.msra.mxu0 %v7018
        %7040 = vmatprep.subr.bf16.mxu0 0
        %7041 = vmatpush1.bf16.msra.mxu0 %v7019
        %7042 = vmatprep.subr.bf16.mxu0 0
        %7043 = vmatpush1.bf16.msra.mxu0 %v7020
        %7044 = vmatprep.subr.bf16.mxu0 0
        %7045 = vmatpush1.bf16.msra.mxu0 %v7021
        %7046 = vmatprep.subr.bf16.mxu0 0
        %7047 = vmatpush1.bf16.msra.mxu0 0
        %7048 = vmatprep.subr.bf16.mxu0 0
        %7049 = vmatpush1.bf16.msra.mxu0 0
        %7050 = vmatprep.subr.bf16.mxu0 0
        %7051 = vmatpush1.bf16.msra.mxu0 0
        %7052 = vmatprep.subr.bf16.mxu0 0
        %7053 = vmatpush1.bf16.msra.mxu0 0
        %7054 = vmatprep.subr.bf16.mxu0 0
        %7055 = vmatpush1.bf16.msra.mxu0 0
        %7056 = vmatprep.subr.bf16.mxu0 0
        %7057 = vmatpush1.bf16.msra.mxu0 0
        %7058 = vmatprep.subr.bf16.mxu0 0
        %7059 = vmatpush1.bf16.msra.mxu0 0
        %7060 = vmatprep.subr.bf16.mxu0 0
        %7061 = vmatpush1.bf16.msra.mxu0 0
        %7062 = vmatprep.mubr.bf16.mxu0 0
        %7063 = vmatmul.mubr.bf16.gmra.mrb[0].mxu0 %v6960
        %v7064 = vpop.f32.mrb[0].mxu0
        %v7065 = vadd.f32 %v6980, %v7064
        %v7066 = vpop.f32.mrb[0].mxu0
        %v7067 = vpop.f32.mrb[0].mxu0
        %v7068 = vadd.f32 %v6980, %v7067
        %v7069 = vpop.f32.mrb[0].mxu0
        %7070 = vmatprep.mubr.bf16.mxu0 0
        %7071 = vmatmul.mubr.bf16.gmra.mrb[0].mxu0 %v6961
        %v7072 = vpop.f32.mrb[0].mxu0
        %v7073 = vadd.f32 %v6980, %v7072
        %v7074 = vpop.f32.mrb[0].mxu0
        %v7075 = vpop.f32.mrb[0].mxu0
        %v7076 = vadd.f32 %v6980, %v7075
        %v7077 = vpop.f32.mrb[0].mxu0
        %7078 = vmatprep.mubr.bf16.mxu0 0
        %7079 = vmatmul.mubr.bf16.gmra.mrb[0].mxu0 %v6962
        %v7080 = vpop.f32.mrb[0].mxu0
        %v7081 = vadd.f32 %v6980, %v7080
        %v7082 = vpop.f32.mrb[0].mxu0
        %v7083 = vpop.f32.mrb[0].mxu0
        %v7084 = vadd.f32 %v6980, %v7083
        %v7085 = vpop.f32.mrb[0].mxu0
        %7086 = vmatprep.mubr.bf16.mxu0 0
        %7087 = vmatmul.mubr.bf16.gmra.mrb[0].mxu0 %v6963
        %v7088 = vpop.f32.mrb[0].mxu0
        %v7089 = vadd.f32 %v6980, %v7088
        %v7090 = vpop.f32.mrb[0].mxu0
        %v7091 = vpop.f32.mrb[0].mxu0
        %v7092 = vadd.f32 %v6980, %v7091
        %v7093 = vpop.f32.mrb[0].mxu0
        %7094 = vmatprep.mubr.bf16.mxu0 0
        %7095 = vmatmul.mubr.bf16.gmra.mrb[0].mxu0 %v6964
        %v7096 = vpop.f32.mrb[0].mxu0
        %v7097 = vadd.f32 %v6980, %v7096
        %v7098 = vpop.f32.mrb[0].mxu0
        %v7099 = vpop.f32.mrb[0].mxu0
        %v7100 = vadd.f32 %v6980, %v7099
        %v7101 = vpop.f32.mrb[0].mxu0
        %7102 = vmatprep.mubr.bf16.mxu0 0
        %7103 = vmatmul.mubr.bf16.gmra.mrb[0].mxu0 %v6965
        %v7104 = vpop.f32.mrb[0].mxu0
        %v7105 = vadd.f32 %v6980, %v7104
        %v7106 = vpop.f32.mrb[0].mxu0
        %v7107 = vpop.f32.mrb[0].mxu0
        %v7108 = vadd.f32 %v6980, %v7107
        %v7109 = vpop.f32.mrb[0].mxu0
        %7110 = vmatprep.mubr.bf16.mxu0 0
        %7111 = vmatmul.mubr.bf16.gmra.mrb[0].mxu0 %v6966
        %v7112 = vpop.f32.mrb[0].mxu0
        %v7113 = vadd.f32 %v6980, %v7112
        %v7114 = vpop.f32.mrb[0].mxu0
        %v7115 = vpop.f32.mrb[0].mxu0
        %v7116 = vadd.f32 %v6980, %v7115
        %v7117 = vpop.f32.mrb[0].mxu0
        %7118 = vmatprep.mubr.bf16.mxu0 0
        %7119 = vmatmul.mubr.bf16.gmra.mrb[0].mxu0 %v6967
        %v7120 = vpop.f32.mrb[0].mxu0
        %v7121 = vadd.f32 %v6980, %v7120
        %v7122 = vpop.f32.mrb[0].mxu0
        %v7123 = vpop.f32.mrb[0].mxu0
        %v7124 = vadd.f32 %v6980, %v7123
        %v7125 = vpop.f32.mrb[0].mxu0
        %7126 = vmatprep.mubr.bf16.mxu0 0
        %7127 = vmatmul.mubr.bf16.gmra.mrb[0].mxu0 %v6968
        %v7128 = vpop.f32.mrb[0].mxu0
        %v7129 = vadd.f32 %v6980, %v7128
        %v7130 = vpop.f32.mrb[0].mxu0
        %v7131 = vpop.f32.mrb[0].mxu0
        %v7132 = vadd.f32 %v6980, %v7131
        %v7133 = vpop.f32.mrb[0].mxu0
        %7134 = vmatprep.mubr.bf16.mxu0 0
        %7135 = vmatmul.mubr.bf16.gmra.mrb[0].mxu0 %v6969
        %v7136 = vpop.f32.mrb[0].mxu0
        %v7137 = vadd.f32 %v6980, %v7136
        %v7138 = vpop.f32.mrb[0].mxu0
        %v7139 = vpop.f32.mrb[0].mxu0
        %v7140 = vadd.f32 %v6980, %v7139
        %v7141 = vpop.f32.mrb[0].mxu0
        %7142 = vmatprep.mubr.bf16.mxu0 0
        %7143 = vmatmul.mubr.bf16.gmra.mrb[0].mxu0 %v6970
        %v7144 = vpop.f32.mrb[0].mxu0
        %v7145 = vadd.f32 %v6980, %v7144
        %v7146 = vpop.f32.mrb[0].mxu0
        %v7147 = vpop.f32.mrb[0].mxu0
        %v7148 = vadd.f32 %v6980, %v7147
        %v7149 = vpop.f32.mrb[0].mxu0
        %7150 = vmatprep.mubr.bf16.mxu0 0
        %7151 = vmatmul.mubr.bf16.gmra.mrb[0].mxu0 %v6971
        %v7152 = vpop.f32.mrb[0].mxu0
        %v7153 = vadd.f32 %v6980, %v7152
        %v7154 = vpop.f32.mrb[0].mxu0
        %v7155 = vpop.f32.mrb[0].mxu0
        %v7156 = vadd.f32 %v6980, %v7155
        %v7157 = vpop.f32.mrb[0].mxu0
        %7158 = vmatprep.mubr.bf16.mxu0 0
        %7159 = vmatmul.mubr.bf16.gmra.mrb[0].mxu0 %v6972
        %v7160 = vpop.f32.mrb[0].mxu0
        %v7161 = vadd.f32 %v6980, %v7160
        %v7162 = vpop.f32.mrb[0].mxu0
        %v7163 = vpop.f32.mrb[0].mxu0
        %v7164 = vadd.f32 %v6980, %v7163
        %v7165 = vpop.f32.mrb[0].mxu0
        %7166 = vmatprep.mubr.bf16.mxu0 0
        %7167 = vmatmul.mubr.bf16.gmra.mrb[0].mxu0 %v6973
        %v7168 = vpop.f32.mrb[0].mxu0
        %v7169 = vadd.f32 %v6980, %v7168
        %v7170 = vpop.f32.mrb[0].mxu0
        %v7171 = vpop.f32.mrb[0].mxu0
        %v7172 = vadd.f32 %v6980, %v7171
        %v7173 = vpop.f32.mrb[0].mxu0
        %7174 = vmatprep.mubr.bf16.mxu0 0
        %7175 = vmatmul.mubr.bf16.gmra.mrb[0].mxu0 %v6974
        %v7176 = vpop.f32.mrb[0].mxu0
        %v7177 = vadd.f32 %v6980, %v7176
        %v7178 = vpop.f32.mrb[0].mxu0
        %v7179 = vpop.f32.mrb[0].mxu0
        %v7180 = vadd.f32 %v6980, %v7179
        %v7181 = vpop.f32.mrb[0].mxu0
        %7182 = vmatprep.mubr.bf16.mxu0 0
        %7183 = vmatmul.mubr.bf16.gmra.mrb[0].mxu0 %v6975
        %v7184 = vpop.f32.mrb[0].mxu0
        %v7185 = vadd.f32 %v6980, %v7184
        %v7186 = vpop.f32.mrb[0].mxu0
        %v7187 = vpop.f32.mrb[0].mxu0
        %v7188 = vadd.f32 %v6980, %v7187
        %v7189 = vpop.f32.mrb[0].mxu0
        %7190 = vdwg.mxu0
        %v7191 = vmax.f32 %v7065, 0.0
        %v7192 = vmax.f32 %v7068, 0.0
        %v7193 = vmax.f32 %v7073, 0.0
        %v7194 = vmax.f32 %v7076, 0.0
        %v7195 = vmax.f32 %v7081, 0.0
        %v7196 = vmax.f32 %v7084, 0.0
        %v7197 = vmax.f32 %v7089, 0.0
        %v7198 = vmax.f32 %v7092, 0.0
        %v7199 = vmax.f32 %v7097, 0.0
        %v7200 = vmax.f32 %v7100, 0.0
        %v7201 = vmax.f32 %v7105, 0.0
        %v7202 = vmax.f32 %v7108, 0.0
        %v7203 = vmax.f32 %v7113, 0.0
        %v7204 = vmax.f32 %v7116, 0.0
        %v7205 = vmax.f32 %v7121, 0.0
        %v7206 = vmax.f32 %v7124, 0.0
        %v7207 = vmax.f32 %v7129, 0.0
        %v7208 = vmax.f32 %v7132, 0.0
        %v7209 = vmax.f32 %v7137, 0.0
        %v7210 = vmax.f32 %v7140, 0.0
        %v7211 = vmax.f32 %v7145, 0.0
        %v7212 = vmax.f32 %v7148, 0.0
        %v7213 = vmax.f32 %v7153, 0.0
        %v7214 = vmax.f32 %v7156, 0.0
        %v7215 = vmax.f32 %v7161, 0.0
        %v7216 = vmax.f32 %v7164, 0.0
        %v7217 = vmax.f32 %v7169, 0.0
        %v7218 = vmax.f32 %v7172, 0.0
        %v7219 = vmax.f32 %v7177, 0.0
        %v7220 = vmax.f32 %v7180, 0.0
        %v7221 = vmax.f32 %v7185, 0.0
        %v7222 = vmax.f32 %v7188, 0.0
        %v7223 = vld [vmem:[%s298] sm:$0xf]
        %v7224 = vld [vmem:[%s298 + $0x4] sm:$0xf]
        %v7225 = vld [vmem:[%s298 + $0x8] sm:$0xf]
        %v7226 = vld [vmem:[%s298 + $0xc] sm:$0xf]
        %v7227 = vld [vmem:[%s298 + $0x10] sm:$0xf]
        %v7228 = vld [vmem:[%s298 + $0x14] sm:$0xf]
        %v7229 = vld [vmem:[%s298 + $0x18] sm:$0xf]
        %v7230 = vld [vmem:[%s298 + $0x1c] sm:$0xf]
        %v7231 = vld [vmem:[%s298 + $0x20] sm:$0xf]
        %v7232 = vld [vmem:[%s298 + $0x24] sm:$0xf]
        %v7233 = vld [vmem:[%s298 + $0x28] sm:$0xf]
        %v7234 = vld [vmem:[%s298 + $0x2c] sm:$0xf]
        %v7235 = vld [vmem:[%s298 + $0x30] sm:$0xf]
        %v7236 = vld [vmem:[%s298 + $0x34] sm:$0xf]
        %v7237 = vld [vmem:[%s298 + $0x38] sm:$0xf]
        %v7238 = vld [vmem:[%s298 + $0x3c] sm:$0xf]
        %v7239 = vld [vmem:[%s298 + $0x40] sm:$0xf]
        %v7240 = vld [vmem:[%s298 + $0x44] sm:$0xf]
        %v7241 = vld [vmem:[%s298 + $0x48] sm:$0xf]
        %v7242 = vld [vmem:[%s298 + $0x4c] sm:$0xf]
        %v7243 = vld [vmem:[%s298 + $0x50] sm:$0xf]
        %v7244 = vld [vmem:[%s298 + $0x54] sm:$0xf]
        %v7245 = vld [vmem:[%s298 + $0x58] sm:$0xf]
        %v7246 = vld [vmem:[%s298 + $0x5c] sm:$0xf]
        %v7247 = vld [vmem:[%s298 + $0x60] sm:$0xf]
        %v7248 = vld [vmem:[%s298 + $0x64] sm:$0xf]
        %v7249 = vld [vmem:[%s298 + $0x68] sm:$0xf]
        %v7250 = vld [vmem:[%s298 + $0x6c] sm:$0xf]
        %v7251 = vld [vmem:[%s298 + $0x70] sm:$0xf]
        %v7252 = vld [vmem:[%s298 + $0x74] sm:$0xf]
        %v7253 = vld [vmem:[%s298 + $0x78] sm:$0xf]
        %v7254 = vld [vmem:[%s298 + $0x7c] sm:$0xf]
        %v7255 = vunpack.c.l.bf16 %v7223
        %v7256 = vunpack.c.l.bf16 %v7224
        %v7257 = vunpack.c.l.bf16 %v7225
        %v7258 = vunpack.c.l.bf16 %v7226
        %v7259 = vunpack.c.l.bf16 %v7227
        %v7260 = vunpack.c.l.bf16 %v7228
        %v7261 = vunpack.c.l.bf16 %v7229
        %v7262 = vunpack.c.l.bf16 %v7230
        %v7263 = vunpack.c.l.bf16 %v7231
        %v7264 = vunpack.c.l.bf16 %v7232
        %v7265 = vunpack.c.l.bf16 %v7233
        %v7266 = vunpack.c.l.bf16 %v7234
        %v7267 = vunpack.c.l.bf16 %v7235
        %v7268 = vunpack.c.l.bf16 %v7236
        %v7269 = vunpack.c.l.bf16 %v7237
        %v7270 = vunpack.c.l.bf16 %v7238
        %v7271 = vunpack.c.l.bf16 %v7239
        %v7272 = vunpack.c.l.bf16 %v7240
        %v7273 = vunpack.c.l.bf16 %v7241
        %v7274 = vunpack.c.l.bf16 %v7242
        %v7275 = vunpack.c.l.bf16 %v7243
        %v7276 = vunpack.c.l.bf16 %v7244
        %v7277 = vunpack.c.l.bf16 %v7245
        %v7278 = vunpack.c.l.bf16 %v7246
        %v7279 = vunpack.c.l.bf16 %v7247
        %v7280 = vunpack.c.l.bf16 %v7248
        %v7281 = vunpack.c.l.bf16 %v7249
        %v7282 = vunpack.c.l.bf16 %v7250
        %v7283 = vunpack.c.l.bf16 %v7251
        %v7284 = vunpack.c.l.bf16 %v7252
        %v7285 = vunpack.c.l.bf16 %v7253
        %v7286 = vunpack.c.l.bf16 %v7254
        %v7287 = vadd.f32 %v7191, %v7255
        %v7288 = vadd.f32 %v7192, %v7256
        %v7289 = vadd.f32 %v7193, %v7257
        %v7290 = vadd.f32 %v7194, %v7258
        %v7291 = vadd.f32 %v7195, %v7259
        %v7292 = vadd.f32 %v7196, %v7260
        %v7293 = vadd.f32 %v7197, %v7261
        %v7294 = vadd.f32 %v7198, %v7262
        %v7295 = vadd.f32 %v7199, %v7263
        %v7296 = vadd.f32 %v7200, %v7264
        %v7297 = vadd.f32 %v7201, %v7265
        %v7298 = vadd.f32 %v7202, %v7266
        %v7299 = vadd.f32 %v7203, %v7267
        %v7300 = vadd.f32 %v7204, %v7268
        %v7301 = vadd.f32 %v7205, %v7269
        %v7302 = vadd.f32 %v7206, %v7270
        %v7303 = vadd.f32 %v7207, %v7271
        %v7304 = vadd.f32 %v7208, %v7272
        %v7305 = vadd.f32 %v7209, %v7273
        %v7306 = vadd.f32 %v7210, %v7274
        %v7307 = vadd.f32 %v7211, %v7275
        %v7308 = vadd.f32 %v7212, %v7276
        %v7309 = vadd.f32 %v7213, %v7277
        %v7310 = vadd.f32 %v7214, %v7278
        %v7311 = vadd.f32 %v7215, %v7279
        %v7312 = vadd.f32 %v7216, %v7280
        %v7313 = vadd.f32 %v7217, %v7281
        %v7314 = vadd.f32 %v7218, %v7282
        %v7315 = vadd.f32 %v7219, %v7283
        %v7316 = vadd.f32 %v7220, %v7284
        %v7317 = vadd.f32 %v7221, %v7285
        %v7318 = vadd.f32 %v7222, %v7286
        %7319 = vst [vmem:[%s340] sm:$0xff] %v7287
        %7320 = vst [vmem:[%s340 + $0x8] sm:$0xff] %v7288
        %7321 = vst [vmem:[%s340 + $0x10] sm:$0xff] %v7289
        %7322 = vst [vmem:[%s340 + $0x18] sm:$0xff] %v7290
        %7323 = vst [vmem:[%s340 + $0x20] sm:$0xff] %v7291
        %7324 = vst [vmem:[%s340 + $0x28] sm:$0xff] %v7292
        %7325 = vst [vmem:[%s340 + $0x30] sm:$0xff] %v7293
        %7326 = vst [vmem:[%s340 + $0x38] sm:$0xff] %v7294
        %7327 = vst [vmem:[%s340 + $0x40] sm:$0xff] %v7295
        %7328 = vst [vmem:[%s340 + $0x48] sm:$0xff] %v7296
        %7329 = vst [vmem:[%s340 + $0x50] sm:$0xff] %v7297
        %7330 = vst [vmem:[%s340 + $0x58] sm:$0xff] %v7298
        %7331 = vst [vmem:[%s340 + $0x60] sm:$0xff] %v7299
        %7332 = vst [vmem:[%s340 + $0x68] sm:$0xff] %v7300
        %7333 = vst [vmem:[%s340 + $0x70] sm:$0xff] %v7301
        %7334 = vst [vmem:[%s340 + $0x78] sm:$0xff] %v7302
        %7335 = vst [vmem:[%s340 + $0x80] sm:$0xff] %v7303
        %7336 = vst [vmem:[%s340 + $0x88] sm:$0xff] %v7304
        %7337 = vst [vmem:[%s340 + $0x90] sm:$0xff] %v7305
        %7338 = vst [vmem:[%s340 + $0x98] sm:$0xff] %v7306
        %7339 = vst [vmem:[%s340 + $0xa0] sm:$0xff] %v7307
        %7340 = vst [vmem:[%s340 + $0xa8] sm:$0xff] %v7308
        %7341 = vst [vmem:[%s340 + $0xb0] sm:$0xff] %v7309
        %7342 = vst [vmem:[%s340 + $0xb8] sm:$0xff] %v7310
        %7343 = vst [vmem:[%s340 + $0xc0] sm:$0xff] %v7311
        %7344 = vst [vmem:[%s340 + $0xc8] sm:$0xff] %v7312
        %7345 = vst [vmem:[%s340 + $0xd0] sm:$0xff] %v7313
        %7346 = vst [vmem:[%s340 + $0xd8] sm:$0xff] %v7314
        %7347 = vst [vmem:[%s340 + $0xe0] sm:$0xff] %v7315
        %7348 = vst [vmem:[%s340 + $0xe8] sm:$0xff] %v7316
        %7349 = vst [vmem:[%s340 + $0xf0] sm:$0xff] %v7317
        %7350 = vst [vmem:[%s340 + $0xf8] sm:$0xff] %v7318
        %s7351 = sand.u32 %s186, 1
        %s7352 = scalar_lea.sflag [#allocation5], %s7351
        %s7353 = sand.u32 %s186, 1
        %s7354 = smul.addr %s7353, 256
        %s7355 = scalar_lea.vmem [#allocation11], %s7354
        // Predicated region
        $region65: #{tpu_custom_call.1} parent=47 // pred_check
          %p7356 = pneg %p196
        $region66: #{tpu_custom_call.1} parent=47 // pred_check_branch
          %7358 = sbr.rel (%p7356) target = $region68
        $region67: #{tpu_custom_call.1} parent=47 // pred_region
          %s7360 = ssub.s32 4096, 4096
          %7361 = vsyncadd %s7352, %s7360
          %s7362 = smul.addr %s26, 32
          %s7363 = smul.addr %s7362, 128
          %s7364 = scalar_lea.hbm %s7, %s7363
          %s7365 = sshll.u32 %s7355, 4
          %s7366 = int_to_ptr.vmem [resolvable:$true] %s7365
          %7371 = dma.vmem_to_hbm [thread:$0]  %s7366, 4096, %s7364, %s7352, 128, 128, 8
        $region68: #{tpu_custom_call.1} parent=47 // pred_fallthru
          _
      $region48: #{tpu_custom_call.1} parent=5 // pred_fallthru
        _
      %p7372 = scmp.le.s32.totalorder 2, %s21
      // Predicated region
      $region69: #{tpu_custom_call.1} parent=5 // pred_check
        %p7373 = pneg %p7372
      $region70: #{tpu_custom_call.1} parent=5 // pred_check_branch
        %7375 = sbr.rel (%p7373) target = $region72
      $region71: #{tpu_custom_call.1} parent=5 // pred_region
        %s7376 = ssub.s32 %s21, 2
        // Predicated region
        $region73: #{tpu_custom_call.1} parent=71 // pred_check
          %p7377 = pneg %p202
        $region74: #{tpu_custom_call.1} parent=71 // pred_check_branch
          %7379 = sbr.rel (%p7377) target = $region76
        $region75: #{tpu_custom_call.1} parent=71 // pred_region
          %s7380 = sand.u32 %s187, 1
          %s7381 = scalar_lea.sflag [#allocation5], %s7380
          %s7382 = sand.u32 %s187, 1
          %s7383 = smul.addr %s7382, 256
          %s7384 = scalar_lea.vmem [#allocation11], %s7383
          %7385 = dma.done %s7381, 4096
        $region76: #{tpu_custom_call.1} parent=71 // pred_fallthru
          _
      $region72: #{tpu_custom_call.1} parent=5 // pred_fallthru
        _
    $region6: #{tpu_custom_call.1} parent=1 // loop_footer
      %s25 = sadd.s32 1, %s21
    $region7: #{tpu_custom_call.1} parent=1 // loop_footer_branch
      %20 = sbr.rel target = $region3
    $region8: #{tpu_custom_call.1} parent=1 // loop_exit
      _
    %7386 = vsyncpa [#allocation4], 1
    %s7387 = scalar_lea.sflag [#allocation4], 1
    %7388 = vsyncpa %s7387, 1
    %7389 = vsyncpa [#allocation7], 1
    %7390 = vsyncpa [#allocation10], 1
    %7391 = vsyncpa [#allocation5], 1
    %s7392 = scalar_lea.sflag [#allocation5], 1
    %7393 = vsyncpa %s7392, 1

</llo_original>
